<compile_context>
chip_gen: v6e
topology: v6e:2x2x1
jax: 0.10.0
libtpu: 0.0.40
codegen_flags: <defaults>
</compile_context>

<pallas_src>
import functools

import jax
import jax.numpy as jnp
import numpy as np
from jax import lax
from jax.experimental import pallas as pl
from jax.experimental.pallas import tpu as pltpu


def _round_up(x, m):
    return ((x + m - 1) // m) * m


# -----------------------------------------------------------------------------
# Fused kernel: all LSTM layers + final Linear in ONE pallas_call (no grid).
# -----------------------------------------------------------------------------
def _fused_lstm_kernel(x_ref, wih0_ref, b0_ref, wih_r_ref, b_r_ref, whh_ref,
                       linw_ref, linb_ref, out_ref, hseq_scr, proj_scr,
                       *, num_layers, T, B_pad, H_pad, D_pad):
    G = 4 * H_pad

    h_last = None
    for layer in range(num_layers):
        # ---- input projection for this layer: ONE big GEMM over (T*B, K) ----
        if layer == 0:
            x_in = x_ref[...].reshape(T * B_pad, D_pad)        # (T*B, D_pad)
            w_in = wih0_ref[...]                               # (D_pad, 4H)
            bias = b0_ref[...]                                 # (1, 4H)
        else:
            x_in = hseq_scr[...].reshape(T * B_pad, H_pad)     # (T*B, H_pad)
            w_in = wih_r_ref[layer - 1]                        # (H_pad, 4H)
            bias = b_r_ref[layer - 1]                          # (1, 4H)
        proj = jnp.dot(x_in, w_in, preferred_element_type=jnp.float32) + bias
        proj_scr[...] = proj.reshape(T, B_pad, G)

        # ---- time recurrence: only h @ W_hh stays on the serial path ----
        def step(t, carry, layer=layer):
            h, c = carry
            gates = proj_scr[t] + jnp.dot(
                h, whh_ref[layer], preferred_element_type=jnp.float32)
            i_g = jax.nn.sigmoid(gates[:, 0 * H_pad:1 * H_pad])
            f_g = jax.nn.sigmoid(gates[:, 1 * H_pad:2 * H_pad])
            g_g = jnp.tanh(gates[:, 2 * H_pad:3 * H_pad])
            o_g = jax.nn.sigmoid(gates[:, 3 * H_pad:4 * H_pad])
            c_n = f_g * c + i_g * g_g
            h_n = o_g * jnp.tanh(c_n)
            hseq_scr[t] = h_n
            return (h_n, c_n)

        init = (jnp.zeros((B_pad, H_pad), jnp.float32),
                jnp.zeros((B_pad, H_pad), jnp.float32))
        h_last, _ = lax.fori_loop(0, T, step, init, unroll=True)

    # ---- final Linear(H, 1), output lane-padded to 128 (column 0 is real) ----
    out_ref[...] = (
        jnp.dot(h_last, linw_ref[...], preferred_element_type=jnp.float32)
        + linb_ref[...]
    )


# -----------------------------------------------------------------------------
# Wrapper: pad to TPU-friendly shapes, single pallas_call, slice padding off.
# -----------------------------------------------------------------------------
def multivariate_lstm_forward(params, x):
    """x: (B, T, input_size) batch_first, like the PyTorch module. -> (B, 1)."""
    B, T, D_in = x.shape
    H = params["hidden_size"]
    L = params["num_layers"]

    B_pad = _round_up(B, 8)
    H_pad = _round_up(H, 128)
    D_pad = _round_up(D_in, 128)
    G = 4 * H_pad

    # Time-major, zero-padded input: (T, B_pad, D_pad).
    x_seq = jnp.transpose(x.astype(jnp.float32), (1, 0, 2))
    x_seq = jnp.pad(x_seq, ((0, 0), (0, B_pad - B), (0, D_pad - D_in)))

    kernel = functools.partial(
        _fused_lstm_kernel, num_layers=L, T=T, B_pad=B_pad, H_pad=H_pad,
        D_pad=D_pad)

    out = pl.pallas_call(
        kernel,
        out_shape=jax.ShapeDtypeStruct((B_pad, 128), jnp.float32),
        in_specs=[pl.BlockSpec(memory_space=pltpu.MemorySpace.VMEM)
                  for _ in range(8)],
        out_specs=pl.BlockSpec(memory_space=pltpu.MemorySpace.VMEM),
        scratch_shapes=[
            pltpu.VMEM((T, B_pad, H_pad), jnp.float32),   # hidden sequence
            pltpu.VMEM((T, B_pad, G), jnp.float32),       # input projections
        ],
    )(x_seq, params["wih0"], params["b0"], params["wih_rest"],
      params["b_rest"], params["whh"], params["lin_w"], params["lin_b"])

    return out[:B, :1]


# -----------------------------------------------------------------------------
# Parameter init (deterministic, PyTorch-style uniform(-1/sqrt(H), 1/sqrt(H)))
# and packing into padded, transposed, gate-padded kernel layout.
# -----------------------------------------------------------------------------
def init_raw_params(key, input_size, hidden_size, num_layers):
    bound = 1.0 / float(np.sqrt(hidden_size))
    layers = []
    for layer in range(num_layers):
        d_in = input_size if layer == 0 else hidden_size
        key, k1, k2, k3, k4 = jax.random.split(key, 5)
        layers.append(dict(
            w_ih=jax.random.uniform(k1, (4 * hidden_size, d_in),
                                    minval=-bound, maxval=bound,
                                    dtype=jnp.float32),
            w_hh=jax.random.uniform(k2, (4 * hidden_size, hidden_size),
                                    minval=-bound, maxval=bound,
                                    dtype=jnp.float32),
            b_ih=jax.random.uniform(k3, (4 * hidden_size,),
                                    minval=-bound, maxval=bound,
                                    dtype=jnp.float32),
            b_hh=jax.random.uniform(k4, (4 * hidden_size,),
                                    minval=-bound, maxval=bound,
                                    dtype=jnp.float32),
        ))
    key, k5, k6 = jax.random.split(key, 3)
    lin_w = jax.random.uniform(k5, (1, hidden_size), minval=-bound,
                               maxval=bound, dtype=jnp.float32)
    lin_b = jax.random.uniform(k6, (1,), minval=-bound, maxval=bound,
                               dtype=jnp.float32)
    return dict(layers=layers, lin_w=lin_w, lin_b=lin_b,
                hidden_size=hidden_size, num_layers=num_layers,
                input_size=input_size)


def _pad_gate_matrix(w, H, H_pad, d_in, d_pad):
    """w: (4H, d_in) PyTorch layout -> transposed + gate-padded (d_pad, 4*H_pad)."""
    out = np.zeros((d_pad, 4 * H_pad), np.float32)
    w = np.asarray(w)
    for g in range(4):
        out[:d_in, g * H_pad:g * H_pad + H] = w[g * H:(g + 1) * H, :].T
    return jnp.asarray(out)


def _pad_gate_bias(b, H, H_pad):
    out = np.zeros((1, 4 * H_pad), np.float32)
    b = np.asarray(b)
    for g in range(4):
        out[0, g * H_pad:g * H_pad + H] = b[g * H:(g + 1) * H]
    return jnp.asarray(out)


def pack_params(raw):
    H = raw["hidden_size"]
    L = raw["num_layers"]
    D_in = raw["input_size"]
    H_pad = _round_up(H, 128)
    D_pad = _round_up(D_in, 128)
    layers = raw["layers"]

    wih0 = _pad_gate_matrix(layers[0]["w_ih"], H, H_pad, D_in, D_pad)
    b0 = _pad_gate_bias(layers[0]["b_ih"] + layers[0]["b_hh"], H, H_pad)

    if L > 1:
        wih_rest = jnp.stack([
            _pad_gate_matrix(layers[l]["w_ih"], H, H_pad, H, H_pad)
            for l in range(1, L)])                          # (L-1, H_pad, 4H_pad)
        b_rest = jnp.stack([
            _pad_gate_bias(layers[l]["b_ih"] + layers[l]["b_hh"], H, H_pad)
            for l in range(1, L)])                          # (L-1, 1, 4H_pad)
    else:  # dummies, never read by the kernel
        wih_rest = jnp.zeros((1, H_pad, 4 * H_pad), jnp.float32)
        b_rest = jnp.zeros((1, 1, 4 * H_pad), jnp.float32)

    whh = jnp.stack([
        _pad_gate_matrix(layers[l]["w_hh"], H, H_pad, H, H_pad)
        for l in range(L)])                                 # (L, H_pad, 4H_pad)

    lin_w = np.zeros((H_pad, 128), np.float32)
    lin_w[:H, 0] = np.asarray(raw["lin_w"])[0]
    lin_b = np.zeros((1, 128), np.float32)
    lin_b[0, 0] = float(np.asarray(raw["lin_b"])[0])

    return dict(hidden_size=H, num_layers=L,
                wih0=wih0, b0=b0, wih_rest=wih_rest, b_rest=b_rest, whh=whh,
                lin_w=jnp.asarray(lin_w), lin_b=jnp.asarray(lin_b))


# -----------------------------------------------------------------------------
# Pure-JAX reference (lax.scan, unpadded) for a correctness sanity check.
# -----------------------------------------------------------------------------
def reference_forward(raw, x):
    H = raw["hidden_size"]
    B = x.shape[0]
    x_seq = jnp.transpose(x.astype(jnp.float32), (1, 0, 2))
    for lp in raw["layers"]:
        w_ih_t = lp["w_ih"].T
        w_hh_t = lp["w_hh"].T
        bias = (lp["b_ih"] + lp["b_hh"])[None, :]

        def step(carry, x_t, w_ih_t=w_ih_t, w_hh_t=w_hh_t, bias=bias):
            h, c = carry
            gates = x_t @ w_ih_t + h @ w_hh_t + bias
            i = jax.nn.sigmoid(gates[:, 0 * H:1 * H])
            f = jax.nn.sigmoid(gates[:, 1 * H:2 * H])
            g = jnp.tanh(gates[:, 2 * H:3 * H])
            o = jax.nn.sigmoid(gates[:, 3 * H:4 * H])
            c = f * c + i * g
            h = o * jnp.tanh(c)
            return (h, c), h

        init = (jnp.zeros((B, H), jnp.float32), jnp.zeros((B, H), jnp.float32))
        _, x_seq = jax.lax.scan(step, init, x_seq)
    return x_seq[-1] @ raw["lin_w"].T + raw["lin_b"]


if __name__ == "__main__":
    # Small shapes consistent with the module.
    batch, seq_len, input_size = 2, 8, 4
    hidden_size, num_layers = 32, 2
    # dropout_rate is never used on the forward path (nn.LSTM gets no dropout
    # kwarg in the original module), so it is intentionally not modeled.

    key = jax.random.PRNGKey(0)
    key, xk = jax.random.split(key)
    x = jax.random.normal(xk, (batch, seq_len, input_size), dtype=jnp.float32)

    raw = init_raw_params(key, input_size, hidden_size, num_layers)
    params = pack_params(raw)

    out = jax.block_until_ready(multivariate_lstm_forward(params, x))
    ref = jax.block_until_ready(reference_forward(raw, x))

    assert out.shape == (batch, 1), out.shape
    np.testing.assert_allclose(np.asarray(out), np.asarray(ref),
                               rtol=1e-4, atol=1e-5)

    print("KERNEL_OK")
</pallas_src>

<mosaic_0001>
module attributes {stable_mosaic.version = 11 : i64} {
  func.func @_fused_lstm_kernel(%arg0: memref<8x8x128xf32, #tpu.memory_space<vmem>>, %arg1: memref<128x512xf32, #tpu.memory_space<vmem>>, %arg2: memref<1x512xf32, #tpu.memory_space<vmem>>, %arg3: memref<1x128x512xf32, #tpu.memory_space<vmem>>, %arg4: memref<1x1x512xf32, #tpu.memory_space<vmem>>, %arg5: memref<2x128x512xf32, #tpu.memory_space<vmem>>, %arg6: memref<128x128xf32, #tpu.memory_space<vmem>>, %arg7: memref<1x128xf32, #tpu.memory_space<vmem>>, %arg8: memref<8x128xf32, #tpu.memory_space<vmem>>, %arg9: memref<8x8x128xf32, #tpu.memory_space<vmem>>, %arg10: memref<8x8x512xf32, #tpu.memory_space<vmem>>) attributes {dimension_semantics = [], scalar_prefetch = 0 : i64, scratch_operands = 2 : i64, tpu.core_type = #tpu.core_type<tc>} {
    %c0 = arith.constant 0 : index
    %c0_0 = arith.constant 0 : index
    %c0_1 = arith.constant 0 : index
    %0 = vector.load %arg0[%c0, %c0_0, %c0_1] : memref<8x8x128xf32, #tpu.memory_space<vmem>>, vector<8x8x128xf32>
    %1 = vector.shape_cast %0 : vector<8x8x128xf32> to vector<64x128xf32>
    %c0_2 = arith.constant 0 : index
    %c0_3 = arith.constant 0 : index
    %2 = vector.load %arg1[%c0_2, %c0_3] : memref<128x512xf32, #tpu.memory_space<vmem>>, vector<128x512xf32>
    %c0_4 = arith.constant 0 : index
    %c0_5 = arith.constant 0 : index
    %3 = vector.load %arg2[%c0_4, %c0_5] : memref<1x512xf32, #tpu.memory_space<vmem>>, vector<1x512xf32>
    %cst = arith.constant dense<0.000000e+00> : vector<64x512xf32>
    %4 = tpu.matmul %1, %2, %cst {dimension_numbers = #tpu.dot_dimension_numbers<[1], [0], [0], [1], [0, 0, 1, 1], [], []>} : vector<64x128xf32>, vector<128x512xf32>, vector<64x512xf32> -> vector<64x512xf32>
    %5 = vector.broadcast %3 : vector<1x512xf32> to vector<64x512xf32>
    %6 = arith.addf %4, %5 : vector<64x512xf32>
    %7 = vector.shape_cast %6 : vector<64x512xf32> to vector<8x8x512xf32>
    %c0_6 = arith.constant 0 : index
    %c0_7 = arith.constant 0 : index
    %c0_8 = arith.constant 0 : index
    %8 = vector.load %arg10[%c0_6, %c0_7, %c0_8] : memref<8x8x512xf32, #tpu.memory_space<vmem>>, vector<8x8x512xf32>
    tpu.vector_store %arg10[%c0_6, %c0_7, %c0_8], %7 {strides = array<i32>} : memref<8x8x512xf32, #tpu.memory_space<vmem>>, vector<8x8x512xf32>,
    %cst_9 = arith.constant 0.000000e+00 : f32
    %9 = vector.broadcast %cst_9 : f32 to vector<8x128xf32>
    %cst_10 = arith.constant 0.000000e+00 : f32
    %10 = vector.broadcast %cst_10 : f32 to vector<8x128xf32>
    %c0_i32 = arith.constant 0 : i32
    %11 = arith.index_cast %c0_i32 : i32 to index
    %c0_11 = arith.constant 0 : index
    %c0_12 = arith.constant 0 : index
    %12 = vector.load %arg10[%11, %c0_11, %c0_12] : memref<8x8x512xf32, #tpu.memory_space<vmem>>, vector<1x8x512xf32>
    %13 = vector.shape_cast %12 : vector<1x8x512xf32> to vector<8x512xf32>
    %c0_13 = arith.constant 0 : index
    %c0_14 = arith.constant 0 : index
    %c0_15 = arith.constant 0 : index
    %14 = vector.load %arg5[%c0_13, %c0_14, %c0_15] : memref<2x128x512xf32, #tpu.memory_space<vmem>>, vector<1x128x512xf32>
    %15 = vector.shape_cast %14 : vector<1x128x512xf32> to vector<128x512xf32>
    %cst_16 = arith.constant dense<0.000000e+00> : vector<8x512xf32>
    %16 = tpu.matmul %9, %15, %cst_16 {dimension_numbers = #tpu.dot_dimension_numbers<[1], [0], [0], [1], [0, 0, 1, 1], [], []>} : vector<8x128xf32>, vector<128x512xf32>, vector<8x512xf32> -> vector<8x512xf32>
    %17 = arith.addf %13, %16 : vector<8x512xf32>
    %18 = vector.extract_strided_slice %17 {offsets = [0, 0], sizes = [8, 128], strides = [1, 1]} : vector<8x512xf32> to vector<8x128xf32>
    %19 = arith.negf %18 : vector<8x128xf32>
    %20 = math.exp %19 : vector<8x128xf32>
    %cst_17 = arith.constant 1.000000e+00 : f32
    %21 = vector.broadcast %cst_17 : f32 to vector<8x128xf32>
    %22 = arith.addf %21, %20 : vector<8x128xf32>
    %23 = arith.divf %21, %22 : vector<8x128xf32>
    %24 = vector.extract_strided_slice %17 {offsets = [0, 128], sizes = [8, 128], strides = [1, 1]} : vector<8x512xf32> to vector<8x128xf32>
    %25 = arith.negf %24 : vector<8x128xf32>
    %26 = math.exp %25 : vector<8x128xf32>
    %cst_18 = arith.constant 1.000000e+00 : f32
    %27 = vector.broadcast %cst_18 : f32 to vector<8x128xf32>
    %28 = arith.addf %27, %26 : vector<8x128xf32>
    %29 = arith.divf %27, %28 : vector<8x128xf32>
    %30 = vector.extract_strided_slice %17 {offsets = [0, 256], sizes = [8, 128], strides = [1, 1]} : vector<8x512xf32> to vector<8x128xf32>
    %31 = math.tanh %30 : vector<8x128xf32>
    %32 = vector.extract_strided_slice %17 {offsets = [0, 384], sizes = [8, 128], strides = [1, 1]} : vector<8x512xf32> to vector<8x128xf32>
    %33 = arith.negf %32 : vector<8x128xf32>
    %34 = math.exp %33 : vector<8x128xf32>
    %cst_19 = arith.constant 1.000000e+00 : f32
    %35 = vector.broadcast %cst_19 : f32 to vector<8x128xf32>
    %36 = arith.addf %35, %34 : vector<8x128xf32>
    %37 = arith.divf %35, %36 : vector<8x128xf32>
    %38 = arith.mulf %29, %10 : vector<8x128xf32>
    %39 = arith.mulf %23, %31 : vector<8x128xf32>
    %40 = arith.addf %38, %39 : vector<8x128xf32>
    %41 = math.tanh %40 : vector<8x128xf32>
    %42 = arith.mulf %37, %41 : vector<8x128xf32>
    %43 = arith.index_cast %c0_i32 : i32 to index
    %c0_20 = arith.constant 0 : index
    %c0_21 = arith.constant 0 : index
    %44 = vector.load %arg9[%43, %c0_20, %c0_21] : memref<8x8x128xf32, #tpu.memory_space<vmem>>, vector<1x8x128xf32>
    %45 = vector.shape_cast %44 : vector<1x8x128xf32> to vector<8x128xf32>
    %46 = vector.shape_cast %42 : vector<8x128xf32> to vector<1x8x128xf32>
    tpu.vector_store %arg9[%43, %c0_20, %c0_21], %46 {strides = array<i32>} : memref<8x8x128xf32, #tpu.memory_space<vmem>>, vector<1x8x128xf32>,
    %c1_i32 = arith.constant 1 : i32
    %47 = arith.index_cast %c1_i32 : i32 to index
    %c0_22 = arith.constant 0 : index
    %c0_23 = arith.constant 0 : index
    %48 = vector.load %arg10[%47, %c0_22, %c0_23] : memref<8x8x512xf32, #tpu.memory_space<vmem>>, vector<1x8x512xf32>
    %49 = vector.shape_cast %48 : vector<1x8x512xf32> to vector<8x512xf32>
    %c0_24 = arith.constant 0 : index
    %c0_25 = arith.constant 0 : index
    %c0_26 = arith.constant 0 : index
    %50 = vector.load %arg5[%c0_24, %c0_25, %c0_26] : memref<2x128x512xf32, #tpu.memory_space<vmem>>, vector<1x128x512xf32>
    %51 = vector.shape_cast %50 : vector<1x128x512xf32> to vector<128x512xf32>
    %cst_27 = arith.constant dense<0.000000e+00> : vector<8x512xf32>
    %52 = tpu.matmul %42, %51, %cst_27 {dimension_numbers = #tpu.dot_dimension_numbers<[1], [0], [0], [1], [0, 0, 1, 1], [], []>} : vector<8x128xf32>, vector<128x512xf32>, vector<8x512xf32> -> vector<8x512xf32>
    %53 = arith.addf %49, %52 : vector<8x512xf32>
    %54 = vector.extract_strided_slice %53 {offsets = [0, 0], sizes = [8, 128], strides = [1, 1]} : vector<8x512xf32> to vector<8x128xf32>
    %55 = arith.negf %54 : vector<8x128xf32>
    %56 = math.exp %55 : vector<8x128xf32>
    %cst_28 = arith.constant 1.000000e+00 : f32
    %57 = vector.broadcast %cst_28 : f32 to vector<8x128xf32>
    %58 = arith.addf %57, %56 : vector<8x128xf32>
    %59 = arith.divf %57, %58 : vector<8x128xf32>
    %60 = vector.extract_strided_slice %53 {offsets = [0, 128], sizes = [8, 128], strides = [1, 1]} : vector<8x512xf32> to vector<8x128xf32>
    %61 = arith.negf %60 : vector<8x128xf32>
    %62 = math.exp %61 : vector<8x128xf32>
    %cst_29 = arith.constant 1.000000e+00 : f32
    %63 = vector.broadcast %cst_29 : f32 to vector<8x128xf32>
    %64 = arith.addf %63, %62 : vector<8x128xf32>
    %65 = arith.divf %63, %64 : vector<8x128xf32>
    %66 = vector.extract_strided_slice %53 {offsets = [0, 256], sizes = [8, 128], strides = [1, 1]} : vector<8x512xf32> to vector<8x128xf32>
    %67 = math.tanh %66 : vector<8x128xf32>
    %68 = vector.extract_strided_slice %53 {offsets = [0, 384], sizes = [8, 128], strides = [1, 1]} : vector<8x512xf32> to vector<8x128xf32>
    %69 = arith.negf %68 : vector<8x128xf32>
    %70 = math.exp %69 : vector<8x128xf32>
    %cst_30 = arith.constant 1.000000e+00 : f32
    %71 = vector.broadcast %cst_30 : f32 to vector<8x128xf32>
    %72 = arith.addf %71, %70 : vector<8x128xf32>
    %73 = arith.divf %71, %72 : vector<8x128xf32>
    %74 = arith.mulf %65, %40 : vector<8x128xf32>
    %75 = arith.mulf %59, %67 : vector<8x128xf32>
    %76 = arith.addf %74, %75 : vector<8x128xf32>
    %77 = math.tanh %76 : vector<8x128xf32>
    %78 = arith.mulf %73, %77 : vector<8x128xf32>
    %79 = arith.index_cast %c1_i32 : i32 to index
    %c0_31 = arith.constant 0 : index
    %c0_32 = arith.constant 0 : index
    %80 = vector.load %arg9[%79, %c0_31, %c0_32] : memref<8x8x128xf32, #tpu.memory_space<vmem>>, vector<1x8x128xf32>
    %81 = vector.shape_cast %80 : vector<1x8x128xf32> to vector<8x128xf32>
    %82 = vector.shape_cast %78 : vector<8x128xf32> to vector<1x8x128xf32>
    tpu.vector_store %arg9[%79, %c0_31, %c0_32], %82 {strides = array<i32>} : memref<8x8x128xf32, #tpu.memory_space<vmem>>, vector<1x8x128xf32>,
    %c2_i32 = arith.constant 2 : i32
    %83 = arith.index_cast %c2_i32 : i32 to index
    %c0_33 = arith.constant 0 : index
    %c0_34 = arith.constant 0 : index
    %84 = vector.load %arg10[%83, %c0_33, %c0_34] : memref<8x8x512xf32, #tpu.memory_space<vmem>>, vector<1x8x512xf32>
    %85 = vector.shape_cast %84 : vector<1x8x512xf32> to vector<8x512xf32>
    %c0_35 = arith.constant 0 : index
    %c0_36 = arith.constant 0 : index
    %c0_37 = arith.constant 0 : index
    %86 = vector.load %arg5[%c0_35, %c0_36, %c0_37] : memref<2x128x512xf32, #tpu.memory_space<vmem>>, vector<1x128x512xf32>
    %87 = vector.shape_cast %86 : vector<1x128x512xf32> to vector<128x512xf32>
    %cst_38 = arith.constant dense<0.000000e+00> : vector<8x512xf32>
    %88 = tpu.matmul %78, %87, %cst_38 {dimension_numbers = #tpu.dot_dimension_numbers<[1], [0], [0], [1], [0, 0, 1, 1], [], []>} : vector<8x128xf32>, vector<128x512xf32>, vector<8x512xf32> -> vector<8x512xf32>
    %89 = arith.addf %85, %88 : vector<8x512xf32>
    %90 = vector.extract_strided_slice %89 {offsets = [0, 0], sizes = [8, 128], strides = [1, 1]} : vector<8x512xf32> to vector<8x128xf32>
    %91 = arith.negf %90 : vector<8x128xf32>
    %92 = math.exp %91 : vector<8x128xf32>
    %cst_39 = arith.constant 1.000000e+00 : f32
    %93 = vector.broadcast %cst_39 : f32 to vector<8x128xf32>
    %94 = arith.addf %93, %92 : vector<8x128xf32>
    %95 = arith.divf %93, %94 : vector<8x128xf32>
    %96 = vector.extract_strided_slice %89 {offsets = [0, 128], sizes = [8, 128], strides = [1, 1]} : vector<8x512xf32> to vector<8x128xf32>
    %97 = arith.negf %96 : vector<8x128xf32>
    %98 = math.exp %97 : vector<8x128xf32>
    %cst_40 = arith.constant 1.000000e+00 : f32
    %99 = vector.broadcast %cst_40 : f32 to vector<8x128xf32>
    %100 = arith.addf %99, %98 : vector<8x128xf32>
    %101 = arith.divf %99, %100 : vector<8x128xf32>
    %102 = vector.extract_strided_slice %89 {offsets = [0, 256], sizes = [8, 128], strides = [1, 1]} : vector<8x512xf32> to vector<8x128xf32>
    %103 = math.tanh %102 : vector<8x128xf32>
    %104 = vector.extract_strided_slice %89 {offsets = [0, 384], sizes = [8, 128], strides = [1, 1]} : vector<8x512xf32> to vector<8x128xf32>
    %105 = arith.negf %104 : vector<8x128xf32>
    %106 = math.exp %105 : vector<8x128xf32>
    %cst_41 = arith.constant 1.000000e+00 : f32
    %107 = vector.broadcast %cst_41 : f32 to vector<8x128xf32>
    %108 = arith.addf %107, %106 : vector<8x128xf32>
    %109 = arith.divf %107, %108 : vector<8x128xf32>
    %110 = arith.mulf %101, %76 : vector<8x128xf32>
    %111 = arith.mulf %95, %103 : vector<8x128xf32>
    %112 = arith.addf %110, %111 : vector<8x128xf32>
    %113 = math.tanh %112 : vector<8x128xf32>
    %114 = arith.mulf %109, %113 : vector<8x128xf32>
    %115 = arith.index_cast %c2_i32 : i32 to index
    %c0_42 = arith.constant 0 : index
    %c0_43 = arith.constant 0 : index
    %116 = vector.load %arg9[%115, %c0_42, %c0_43] : memref<8x8x128xf32, #tpu.memory_space<vmem>>, vector<1x8x128xf32>
    %117 = vector.shape_cast %116 : vector<1x8x128xf32> to vector<8x128xf32>
    %118 = vector.shape_cast %114 : vector<8x128xf32> to vector<1x8x128xf32>
    tpu.vector_store %arg9[%115, %c0_42, %c0_43], %118 {strides = array<i32>} : memref<8x8x128xf32, #tpu.memory_space<vmem>>, vector<1x8x128xf32>,
    %c3_i32 = arith.constant 3 : i32
    %119 = arith.index_cast %c3_i32 : i32 to index
    %c0_44 = arith.constant 0 : index
    %c0_45 = arith.constant 0 : index
    %120 = vector.load %arg10[%119, %c0_44, %c0_45] : memref<8x8x512xf32, #tpu.memory_space<vmem>>, vector<1x8x512xf32>
    %121 = vector.shape_cast %120 : vector<1x8x512xf32> to vector<8x512xf32>
    %c0_46 = arith.constant 0 : index
    %c0_47 = arith.constant 0 : index
    %c0_48 = arith.constant 0 : index
    %122 = vector.load %arg5[%c0_46, %c0_47, %c0_48] : memref<2x128x512xf32, #tpu.memory_space<vmem>>, vector<1x128x512xf32>
    %123 = vector.shape_cast %122 : vector<1x128x512xf32> to vector<128x512xf32>
    %cst_49 = arith.constant dense<0.000000e+00> : vector<8x512xf32>
    %124 = tpu.matmul %114, %123, %cst_49 {dimension_numbers = #tpu.dot_dimension_numbers<[1], [0], [0], [1], [0, 0, 1, 1], [], []>} : vector<8x128xf32>, vector<128x512xf32>, vector<8x512xf32> -> vector<8x512xf32>
    %125 = arith.addf %121, %124 : vector<8x512xf32>
    %126 = vector.extract_strided_slice %125 {offsets = [0, 0], sizes = [8, 128], strides = [1, 1]} : vector<8x512xf32> to vector<8x128xf32>
    %127 = arith.negf %126 : vector<8x128xf32>
    %128 = math.exp %127 : vector<8x128xf32>
    %cst_50 = arith.constant 1.000000e+00 : f32
    %129 = vector.broadcast %cst_50 : f32 to vector<8x128xf32>
    %130 = arith.addf %129, %128 : vector<8x128xf32>
    %131 = arith.divf %129, %130 : vector<8x128xf32>
    %132 = vector.extract_strided_slice %125 {offsets = [0, 128], sizes = [8, 128], strides = [1, 1]} : vector<8x512xf32> to vector<8x128xf32>
    %133 = arith.negf %132 : vector<8x128xf32>
    %134 = math.exp %133 : vector<8x128xf32>
    %cst_51 = arith.constant 1.000000e+00 : f32
    %135 = vector.broadcast %cst_51 : f32 to vector<8x128xf32>
    %136 = arith.addf %135, %134 : vector<8x128xf32>
    %137 = arith.divf %135, %136 : vector<8x128xf32>
    %138 = vector.extract_strided_slice %125 {offsets = [0, 256], sizes = [8, 128], strides = [1, 1]} : vector<8x512xf32> to vector<8x128xf32>
    %139 = math.tanh %138 : vector<8x128xf32>
    %140 = vector.extract_strided_slice %125 {offsets = [0, 384], sizes = [8, 128], strides = [1, 1]} : vector<8x512xf32> to vector<8x128xf32>
    %141 = arith.negf %140 : vector<8x128xf32>
    %142 = math.exp %141 : vector<8x128xf32>
    %cst_52 = arith.constant 1.000000e+00 : f32
    %143 = vector.broadcast %cst_52 : f32 to vector<8x128xf32>
    %144 = arith.addf %143, %142 : vector<8x128xf32>
    %145 = arith.divf %143, %144 : vector<8x128xf32>
    %146 = arith.mulf %137, %112 : vector<8x128xf32>
    %147 = arith.mulf %131, %139 : vector<8x128xf32>
    %148 = arith.addf %146, %147 : vector<8x128xf32>
    %149 = math.tanh %148 : vector<8x128xf32>
    %150 = arith.mulf %145, %149 : vector<8x128xf32>
    %151 = arith.index_cast %c3_i32 : i32 to index
    %c0_53 = arith.constant 0 : index
    %c0_54 = arith.constant 0 : index
    %152 = vector.load %arg9[%151, %c0_53, %c0_54] : memref<8x8x128xf32, #tpu.memory_space<vmem>>, vector<1x8x128xf32>
    %153 = vector.shape_cast %152 : vector<1x8x128xf32> to vector<8x128xf32>
    %154 = vector.shape_cast %150 : vector<8x128xf32> to vector<1x8x128xf32>
    tpu.vector_store %arg9[%151, %c0_53, %c0_54], %154 {strides = array<i32>} : memref<8x8x128xf32, #tpu.memory_space<vmem>>, vector<1x8x128xf32>,
    %c4_i32 = arith.constant 4 : i32
    %155 = arith.index_cast %c4_i32 : i32 to index
    %c0_55 = arith.constant 0 : index
    %c0_56 = arith.constant 0 : index
    %156 = vector.load %arg10[%155, %c0_55, %c0_56] : memref<8x8x512xf32, #tpu.memory_space<vmem>>, vector<1x8x512xf32>
    %157 = vector.shape_cast %156 : vector<1x8x512xf32> to vector<8x512xf32>
    %c0_57 = arith.constant 0 : index
    %c0_58 = arith.constant 0 : index
    %c0_59 = arith.constant 0 : index
    %158 = vector.load %arg5[%c0_57, %c0_58, %c0_59] : memref<2x128x512xf32, #tpu.memory_space<vmem>>, vector<1x128x512xf32>
    %159 = vector.shape_cast %158 : vector<1x128x512xf32> to vector<128x512xf32>
    %cst_60 = arith.constant dense<0.000000e+00> : vector<8x512xf32>
    %160 = tpu.matmul %150, %159, %cst_60 {dimension_numbers = #tpu.dot_dimension_numbers<[1], [0], [0], [1], [0, 0, 1, 1], [], []>} : vector<8x128xf32>, vector<128x512xf32>, vector<8x512xf32> -> vector<8x512xf32>
    %161 = arith.addf %157, %160 : vector<8x512xf32>
    %162 = vector.extract_strided_slice %161 {offsets = [0, 0], sizes = [8, 128], strides = [1, 1]} : vector<8x512xf32> to vector<8x128xf32>
    %163 = arith.negf %162 : vector<8x128xf32>
    %164 = math.exp %163 : vector<8x128xf32>
    %cst_61 = arith.constant 1.000000e+00 : f32
    %165 = vector.broadcast %cst_61 : f32 to vector<8x128xf32>
    %166 = arith.addf %165, %164 : vector<8x128xf32>
    %167 = arith.divf %165, %166 : vector<8x128xf32>
    %168 = vector.extract_strided_slice %161 {offsets = [0, 128], sizes = [8, 128], strides = [1, 1]} : vector<8x512xf32> to vector<8x128xf32>
    %169 = arith.negf %168 : vector<8x128xf32>
    %170 = math.exp %169 : vector<8x128xf32>
    %cst_62 = arith.constant 1.000000e+00 : f32
    %171 = vector.broadcast %cst_62 : f32 to vector<8x128xf32>
    %172 = arith.addf %171, %170 : vector<8x128xf32>
    %173 = arith.divf %171, %172 : vector<8x128xf32>
    %174 = vector.extract_strided_slice %161 {offsets = [0, 256], sizes = [8, 128], strides = [1, 1]} : vector<8x512xf32> to vector<8x128xf32>
    %175 = math.tanh %174 : vector<8x128xf32>
    %176 = vector.extract_strided_slice %161 {offsets = [0, 384], sizes = [8, 128], strides = [1, 1]} : vector<8x512xf32> to vector<8x128xf32>
    %177 = arith.negf %176 : vector<8x128xf32>
    %178 = math.exp %177 : vector<8x128xf32>
    %cst_63 = arith.constant 1.000000e+00 : f32
    %179 = vector.broadcast %cst_63 : f32 to vector<8x128xf32>
    %180 = arith.addf %179, %178 : vector<8x128xf32>
    %181 = arith.divf %179, %180 : vector<8x128xf32>
    %182 = arith.mulf %173, %148 : vector<8x128xf32>
    %183 = arith.mulf %167, %175 : vector<8x128xf32>
    %184 = arith.addf %182, %183 : vector<8x128xf32>
    %185 = math.tanh %184 : vector<8x128xf32>
    %186 = arith.mulf %181, %185 : vector<8x128xf32>
    %187 = arith.index_cast %c4_i32 : i32 to index
    %c0_64 = arith.constant 0 : index
    %c0_65 = arith.constant 0 : index
    %188 = vector.load %arg9[%187, %c0_64, %c0_65] : memref<8x8x128xf32, #tpu.memory_space<vmem>>, vector<1x8x128xf32>
    %189 = vector.shape_cast %188 : vector<1x8x128xf32> to vector<8x128xf32>
    %190 = vector.shape_cast %186 : vector<8x128xf32> to vector<1x8x128xf32>
    tpu.vector_store %arg9[%187, %c0_64, %c0_65], %190 {strides = array<i32>} : memref<8x8x128xf32, #tpu.memory_space<vmem>>, vector<1x8x128xf32>,
    %c5_i32 = arith.constant 5 : i32
    %191 = arith.index_cast %c5_i32 : i32 to index
    %c0_66 = arith.constant 0 : index
    %c0_67 = arith.constant 0 : index
    %192 = vector.load %arg10[%191, %c0_66, %c0_67] : memref<8x8x512xf32, #tpu.memory_space<vmem>>, vector<1x8x512xf32>
    %193 = vector.shape_cast %192 : vector<1x8x512xf32> to vector<8x512xf32>
    %c0_68 = arith.constant 0 : index
    %c0_69 = arith.constant 0 : index
    %c0_70 = arith.constant 0 : index
    %194 = vector.load %arg5[%c0_68, %c0_69, %c0_70] : memref<2x128x512xf32, #tpu.memory_space<vmem>>, vector<1x128x512xf32>
    %195 = vector.shape_cast %194 : vector<1x128x512xf32> to vector<128x512xf32>
    %cst_71 = arith.constant dense<0.000000e+00> : vector<8x512xf32>
    %196 = tpu.matmul %186, %195, %cst_71 {dimension_numbers = #tpu.dot_dimension_numbers<[1], [0], [0], [1], [0, 0, 1, 1], [], []>} : vector<8x128xf32>, vector<128x512xf32>, vector<8x512xf32> -> vector<8x512xf32>
    %197 = arith.addf %193, %196 : vector<8x512xf32>
    %198 = vector.extract_strided_slice %197 {offsets = [0, 0], sizes = [8, 128], strides = [1, 1]} : vector<8x512xf32> to vector<8x128xf32>
    %199 = arith.negf %198 : vector<8x128xf32>
    %200 = math.exp %199 : vector<8x128xf32>
    %cst_72 = arith.constant 1.000000e+00 : f32
    %201 = vector.broadcast %cst_72 : f32 to vector<8x128xf32>
    %202 = arith.addf %201, %200 : vector<8x128xf32>
    %203 = arith.divf %201, %202 : vector<8x128xf32>
    %204 = vector.extract_strided_slice %197 {offsets = [0, 128], sizes = [8, 128], strides = [1, 1]} : vector<8x512xf32> to vector<8x128xf32>
    %205 = arith.negf %204 : vector<8x128xf32>
    %206 = math.exp %205 : vector<8x128xf32>
    %cst_73 = arith.constant 1.000000e+00 : f32
    %207 = vector.broadcast %cst_73 : f32 to vector<8x128xf32>
    %208 = arith.addf %207, %206 : vector<8x128xf32>
    %209 = arith.divf %207, %208 : vector<8x128xf32>
    %210 = vector.extract_strided_slice %197 {offsets = [0, 256], sizes = [8, 128], strides = [1, 1]} : vector<8x512xf32> to vector<8x128xf32>
    %211 = math.tanh %210 : vector<8x128xf32>
    %212 = vector.extract_strided_slice %197 {offsets = [0, 384], sizes = [8, 128], strides = [1, 1]} : vector<8x512xf32> to vector<8x128xf32>
    %213 = arith.negf %212 : vector<8x128xf32>
    %214 = math.exp %213 : vector<8x128xf32>
    %cst_74 = arith.constant 1.000000e+00 : f32
    %215 = vector.broadcast %cst_74 : f32 to vector<8x128xf32>
    %216 = arith.addf %215, %214 : vector<8x128xf32>
    %217 = arith.divf %215, %216 : vector<8x128xf32>
    %218 = arith.mulf %209, %184 : vector<8x128xf32>
    %219 = arith.mulf %203, %211 : vector<8x128xf32>
    %220 = arith.addf %218, %219 : vector<8x128xf32>
    %221 = math.tanh %220 : vector<8x128xf32>
    %222 = arith.mulf %217, %221 : vector<8x128xf32>
    %223 = arith.index_cast %c5_i32 : i32 to index
    %c0_75 = arith.constant 0 : index
    %c0_76 = arith.constant 0 : index
    %224 = vector.load %arg9[%223, %c0_75, %c0_76] : memref<8x8x128xf32, #tpu.memory_space<vmem>>, vector<1x8x128xf32>
    %225 = vector.shape_cast %224 : vector<1x8x128xf32> to vector<8x128xf32>
    %226 = vector.shape_cast %222 : vector<8x128xf32> to vector<1x8x128xf32>
    tpu.vector_store %arg9[%223, %c0_75, %c0_76], %226 {strides = array<i32>} : memref<8x8x128xf32, #tpu.memory_space<vmem>>, vector<1x8x128xf32>,
    %c6_i32 = arith.constant 6 : i32
    %227 = arith.index_cast %c6_i32 : i32 to index
    %c0_77 = arith.constant 0 : index
    %c0_78 = arith.constant 0 : index
    %228 = vector.load %arg10[%227, %c0_77, %c0_78] : memref<8x8x512xf32, #tpu.memory_space<vmem>>, vector<1x8x512xf32>
    %229 = vector.shape_cast %228 : vector<1x8x512xf32> to vector<8x512xf32>
    %c0_79 = arith.constant 0 : index
    %c0_80 = arith.constant 0 : index
    %c0_81 = arith.constant 0 : index
    %230 = vector.load %arg5[%c0_79, %c0_80, %c0_81] : memref<2x128x512xf32, #tpu.memory_space<vmem>>, vector<1x128x512xf32>
    %231 = vector.shape_cast %230 : vector<1x128x512xf32> to vector<128x512xf32>
    %cst_82 = arith.constant dense<0.000000e+00> : vector<8x512xf32>
    %232 = tpu.matmul %222, %231, %cst_82 {dimension_numbers = #tpu.dot_dimension_numbers<[1], [0], [0], [1], [0, 0, 1, 1], [], []>} : vector<8x128xf32>, vector<128x512xf32>, vector<8x512xf32> -> vector<8x512xf32>
    %233 = arith.addf %229, %232 : vector<8x512xf32>
    %234 = vector.extract_strided_slice %233 {offsets = [0, 0], sizes = [8, 128], strides = [1, 1]} : vector<8x512xf32> to vector<8x128xf32>
    %235 = arith.negf %234 : vector<8x128xf32>
    %236 = math.exp %235 : vector<8x128xf32>
    %cst_83 = arith.constant 1.000000e+00 : f32
    %237 = vector.broadcast %cst_83 : f32 to vector<8x128xf32>
    %238 = arith.addf %237, %236 : vector<8x128xf32>
    %239 = arith.divf %237, %238 : vector<8x128xf32>
    %240 = vector.extract_strided_slice %233 {offsets = [0, 128], sizes = [8, 128], strides = [1, 1]} : vector<8x512xf32> to vector<8x128xf32>
    %241 = arith.negf %240 : vector<8x128xf32>
    %242 = math.exp %241 : vector<8x128xf32>
    %cst_84 = arith.constant 1.000000e+00 : f32
    %243 = vector.broadcast %cst_84 : f32 to vector<8x128xf32>
    %244 = arith.addf %243, %242 : vector<8x128xf32>
    %245 = arith.divf %243, %244 : vector<8x128xf32>
    %246 = vector.extract_strided_slice %233 {offsets = [0, 256], sizes = [8, 128], strides = [1, 1]} : vector<8x512xf32> to vector<8x128xf32>
    %247 = math.tanh %246 : vector<8x128xf32>
    %248 = vector.extract_strided_slice %233 {offsets = [0, 384], sizes = [8, 128], strides = [1, 1]} : vector<8x512xf32> to vector<8x128xf32>
    %249 = arith.negf %248 : vector<8x128xf32>
    %250 = math.exp %249 : vector<8x128xf32>
    %cst_85 = arith.constant 1.000000e+00 : f32
    %251 = vector.broadcast %cst_85 : f32 to vector<8x128xf32>
    %252 = arith.addf %251, %250 : vector<8x128xf32>
    %253 = arith.divf %251, %252 : vector<8x128xf32>
    %254 = arith.mulf %245, %220 : vector<8x128xf32>
    %255 = arith.mulf %239, %247 : vector<8x128xf32>
    %256 = arith.addf %254, %255 : vector<8x128xf32>
    %257 = math.tanh %256 : vector<8x128xf32>
    %258 = arith.mulf %253, %257 : vector<8x128xf32>
    %259 = arith.index_cast %c6_i32 : i32 to index
    %c0_86 = arith.constant 0 : index
    %c0_87 = arith.constant 0 : index
    %260 = vector.load %arg9[%259, %c0_86, %c0_87] : memref<8x8x128xf32, #tpu.memory_space<vmem>>, vector<1x8x128xf32>
    %261 = vector.shape_cast %260 : vector<1x8x128xf32> to vector<8x128xf32>
    %262 = vector.shape_cast %258 : vector<8x128xf32> to vector<1x8x128xf32>
    tpu.vector_store %arg9[%259, %c0_86, %c0_87], %262 {strides = array<i32>} : memref<8x8x128xf32, #tpu.memory_space<vmem>>, vector<1x8x128xf32>,
    %c7_i32 = arith.constant 7 : i32
    %263 = arith.index_cast %c7_i32 : i32 to index
    %c0_88 = arith.constant 0 : index
    %c0_89 = arith.constant 0 : index
    %264 = vector.load %arg10[%263, %c0_88, %c0_89] : memref<8x8x512xf32, #tpu.memory_space<vmem>>, vector<1x8x512xf32>
    %265 = vector.shape_cast %264 : vector<1x8x512xf32> to vector<8x512xf32>
    %c0_90 = arith.constant 0 : index
    %c0_91 = arith.constant 0 : index
    %c0_92 = arith.constant 0 : index
    %266 = vector.load %arg5[%c0_90, %c0_91, %c0_92] : memref<2x128x512xf32, #tpu.memory_space<vmem>>, vector<1x128x512xf32>
    %267 = vector.shape_cast %266 : vector<1x128x512xf32> to vector<128x512xf32>
    %cst_93 = arith.constant dense<0.000000e+00> : vector<8x512xf32>
    %268 = tpu.matmul %258, %267, %cst_93 {dimension_numbers = #tpu.dot_dimension_numbers<[1], [0], [0], [1], [0, 0, 1, 1], [], []>} : vector<8x128xf32>, vector<128x512xf32>, vector<8x512xf32> -> vector<8x512xf32>
    %269 = arith.addf %265, %268 : vector<8x512xf32>
    %270 = vector.extract_strided_slice %269 {offsets = [0, 0], sizes = [8, 128], strides = [1, 1]} : vector<8x512xf32> to vector<8x128xf32>
    %271 = arith.negf %270 : vector<8x128xf32>
    %272 = math.exp %271 : vector<8x128xf32>
    %cst_94 = arith.constant 1.000000e+00 : f32
    %273 = vector.broadcast %cst_94 : f32 to vector<8x128xf32>
    %274 = arith.addf %273, %272 : vector<8x128xf32>
    %275 = arith.divf %273, %274 : vector<8x128xf32>
    %276 = vector.extract_strided_slice %269 {offsets = [0, 128], sizes = [8, 128], strides = [1, 1]} : vector<8x512xf32> to vector<8x128xf32>
    %277 = arith.negf %276 : vector<8x128xf32>
    %278 = math.exp %277 : vector<8x128xf32>
    %cst_95 = arith.constant 1.000000e+00 : f32
    %279 = vector.broadcast %cst_95 : f32 to vector<8x128xf32>
    %280 = arith.addf %279, %278 : vector<8x128xf32>
    %281 = arith.divf %279, %280 : vector<8x128xf32>
    %282 = vector.extract_strided_slice %269 {offsets = [0, 256], sizes = [8, 128], strides = [1, 1]} : vector<8x512xf32> to vector<8x128xf32>
    %283 = math.tanh %282 : vector<8x128xf32>
    %284 = vector.extract_strided_slice %269 {offsets = [0, 384], sizes = [8, 128], strides = [1, 1]} : vector<8x512xf32> to vector<8x128xf32>
    %285 = arith.negf %284 : vector<8x128xf32>
    %286 = math.exp %285 : vector<8x128xf32>
    %cst_96 = arith.constant 1.000000e+00 : f32
    %287 = vector.broadcast %cst_96 : f32 to vector<8x128xf32>
    %288 = arith.addf %287, %286 : vector<8x128xf32>
    %289 = arith.divf %287, %288 : vector<8x128xf32>
    %290 = arith.mulf %281, %256 : vector<8x128xf32>
    %291 = arith.mulf %275, %283 : vector<8x128xf32>
    %292 = arith.addf %290, %291 : vector<8x128xf32>
    %293 = math.tanh %292 : vector<8x128xf32>
    %294 = arith.mulf %289, %293 : vector<8x128xf32>
    %295 = arith.index_cast %c7_i32 : i32 to index
    %c0_97 = arith.constant 0 : index
    %c0_98 = arith.constant 0 : index
    %296 = vector.load %arg9[%295, %c0_97, %c0_98] : memref<8x8x128xf32, #tpu.memory_space<vmem>>, vector<1x8x128xf32>
    %297 = vector.shape_cast %296 : vector<1x8x128xf32> to vector<8x128xf32>
    %298 = vector.shape_cast %294 : vector<8x128xf32> to vector<1x8x128xf32>
    tpu.vector_store %arg9[%295, %c0_97, %c0_98], %298 {strides = array<i32>} : memref<8x8x128xf32, #tpu.memory_space<vmem>>, vector<1x8x128xf32>,
    %c8_i32 = arith.constant 8 : i32
    %c0_99 = arith.constant 0 : index
    %c0_100 = arith.constant 0 : index
    %c0_101 = arith.constant 0 : index
    %299 = vector.load %arg9[%c0_99, %c0_100, %c0_101] : memref<8x8x128xf32, #tpu.memory_space<vmem>>, vector<8x8x128xf32>
    %300 = vector.shape_cast %299 : vector<8x8x128xf32> to vector<64x128xf32>
    %c0_102 = arith.constant 0 : index
    %c0_103 = arith.constant 0 : index
    %c0_104 = arith.constant 0 : index
    %301 = vector.load %arg3[%c0_102, %c0_103, %c0_104] : memref<1x128x512xf32, #tpu.memory_space<vmem>>, vector<1x128x512xf32>
    %302 = vector.shape_cast %301 : vector<1x128x512xf32> to vector<128x512xf32>
    %c0_105 = arith.constant 0 : index
    %c0_106 = arith.constant 0 : index
    %c0_107 = arith.constant 0 : index
    %303 = vector.load %arg4[%c0_105, %c0_106, %c0_107] : memref<1x1x512xf32, #tpu.memory_space<vmem>>, vector<1x1x512xf32>
    %304 = vector.shape_cast %303 : vector<1x1x512xf32> to vector<1x512xf32>
    %cst_108 = arith.constant dense<0.000000e+00> : vector<64x512xf32>
    %305 = tpu.matmul %300, %302, %cst_108 {dimension_numbers = #tpu.dot_dimension_numbers<[1], [0], [0], [1], [0, 0, 1, 1], [], []>} : vector<64x128xf32>, vector<128x512xf32>, vector<64x512xf32> -> vector<64x512xf32>
    %306 = vector.broadcast %304 : vector<1x512xf32> to vector<64x512xf32>
    %307 = arith.addf %305, %306 : vector<64x512xf32>
    %308 = vector.shape_cast %307 : vector<64x512xf32> to vector<8x8x512xf32>
    %c0_109 = arith.constant 0 : index
    %c0_110 = arith.constant 0 : index
    %c0_111 = arith.constant 0 : index
    %309 = vector.load %arg10[%c0_109, %c0_110, %c0_111] : memref<8x8x512xf32, #tpu.memory_space<vmem>>, vector<8x8x512xf32>
    tpu.vector_store %arg10[%c0_109, %c0_110, %c0_111], %308 {strides = array<i32>} : memref<8x8x512xf32, #tpu.memory_space<vmem>>, vector<8x8x512xf32>,
    %cst_112 = arith.constant 0.000000e+00 : f32
    %310 = vector.broadcast %cst_112 : f32 to vector<8x128xf32>
    %cst_113 = arith.constant 0.000000e+00 : f32
    %311 = vector.broadcast %cst_113 : f32 to vector<8x128xf32>
    %c0_i32_114 = arith.constant 0 : i32
    %312 = arith.index_cast %c0_i32_114 : i32 to index
    %c0_115 = arith.constant 0 : index
    %c0_116 = arith.constant 0 : index
    %313 = vector.load %arg10[%312, %c0_115, %c0_116] : memref<8x8x512xf32, #tpu.memory_space<vmem>>, vector<1x8x512xf32>
    %314 = vector.shape_cast %313 : vector<1x8x512xf32> to vector<8x512xf32>
    %c1 = arith.constant 1 : index
    %c0_117 = arith.constant 0 : index
    %c0_118 = arith.constant 0 : index
    %315 = vector.load %arg5[%c1, %c0_117, %c0_118] : memref<2x128x512xf32, #tpu.memory_space<vmem>>, vector<1x128x512xf32>
    %316 = vector.shape_cast %315 : vector<1x128x512xf32> to vector<128x512xf32>
    %cst_119 = arith.constant dense<0.000000e+00> : vector<8x512xf32>
    %317 = tpu.matmul %310, %316, %cst_119 {dimension_numbers = #tpu.dot_dimension_numbers<[1], [0], [0], [1], [0, 0, 1, 1], [], []>} : vector<8x128xf32>, vector<128x512xf32>, vector<8x512xf32> -> vector<8x512xf32>
    %318 = arith.addf %314, %317 : vector<8x512xf32>
    %319 = vector.extract_strided_slice %318 {offsets = [0, 0], sizes = [8, 128], strides = [1, 1]} : vector<8x512xf32> to vector<8x128xf32>
    %320 = arith.negf %319 : vector<8x128xf32>
    %321 = math.exp %320 : vector<8x128xf32>
    %cst_120 = arith.constant 1.000000e+00 : f32
    %322 = vector.broadcast %cst_120 : f32 to vector<8x128xf32>
    %323 = arith.addf %322, %321 : vector<8x128xf32>
    %324 = arith.divf %322, %323 : vector<8x128xf32>
    %325 = vector.extract_strided_slice %318 {offsets = [0, 128], sizes = [8, 128], strides = [1, 1]} : vector<8x512xf32> to vector<8x128xf32>
    %326 = arith.negf %325 : vector<8x128xf32>
    %327 = math.exp %326 : vector<8x128xf32>
    %cst_121 = arith.constant 1.000000e+00 : f32
    %328 = vector.broadcast %cst_121 : f32 to vector<8x128xf32>
    %329 = arith.addf %328, %327 : vector<8x128xf32>
    %330 = arith.divf %328, %329 : vector<8x128xf32>
    %331 = vector.extract_strided_slice %318 {offsets = [0, 256], sizes = [8, 128], strides = [1, 1]} : vector<8x512xf32> to vector<8x128xf32>
    %332 = math.tanh %331 : vector<8x128xf32>
    %333 = vector.extract_strided_slice %318 {offsets = [0, 384], sizes = [8, 128], strides = [1, 1]} : vector<8x512xf32> to vector<8x128xf32>
    %334 = arith.negf %333 : vector<8x128xf32>
    %335 = math.exp %334 : vector<8x128xf32>
    %cst_122 = arith.constant 1.000000e+00 : f32
    %336 = vector.broadcast %cst_122 : f32 to vector<8x128xf32>
    %337 = arith.addf %336, %335 : vector<8x128xf32>
    %338 = arith.divf %336, %337 : vector<8x128xf32>
    %339 = arith.mulf %330, %311 : vector<8x128xf32>
    %340 = arith.mulf %324, %332 : vector<8x128xf32>
    %341 = arith.addf %339, %340 : vector<8x128xf32>
    %342 = math.tanh %341 : vector<8x128xf32>
    %343 = arith.mulf %338, %342 : vector<8x128xf32>
    %344 = arith.index_cast %c0_i32_114 : i32 to index
    %c0_123 = arith.constant 0 : index
    %c0_124 = arith.constant 0 : index
    %345 = vector.load %arg9[%344, %c0_123, %c0_124] : memref<8x8x128xf32, #tpu.memory_space<vmem>>, vector<1x8x128xf32>
    %346 = vector.shape_cast %345 : vector<1x8x128xf32> to vector<8x128xf32>
    %347 = vector.shape_cast %343 : vector<8x128xf32> to vector<1x8x128xf32>
    tpu.vector_store %arg9[%344, %c0_123, %c0_124], %347 {strides = array<i32>} : memref<8x8x128xf32, #tpu.memory_space<vmem>>, vector<1x8x128xf32>,
    %c1_i32_125 = arith.constant 1 : i32
    %348 = arith.index_cast %c1_i32_125 : i32 to index
    %c0_126 = arith.constant 0 : index
    %c0_127 = arith.constant 0 : index
    %349 = vector.load %arg10[%348, %c0_126, %c0_127] : memref<8x8x512xf32, #tpu.memory_space<vmem>>, vector<1x8x512xf32>
    %350 = vector.shape_cast %349 : vector<1x8x512xf32> to vector<8x512xf32>
    %c1_128 = arith.constant 1 : index
    %c0_129 = arith.constant 0 : index
    %c0_130 = arith.constant 0 : index
    %351 = vector.load %arg5[%c1_128, %c0_129, %c0_130] : memref<2x128x512xf32, #tpu.memory_space<vmem>>, vector<1x128x512xf32>
    %352 = vector.shape_cast %351 : vector<1x128x512xf32> to vector<128x512xf32>
    %cst_131 = arith.constant dense<0.000000e+00> : vector<8x512xf32>
    %353 = tpu.matmul %343, %352, %cst_131 {dimension_numbers = #tpu.dot_dimension_numbers<[1], [0], [0], [1], [0, 0, 1, 1], [], []>} : vector<8x128xf32>, vector<128x512xf32>, vector<8x512xf32> -> vector<8x512xf32>
    %354 = arith.addf %350, %353 : vector<8x512xf32>
    %355 = vector.extract_strided_slice %354 {offsets = [0, 0], sizes = [8, 128], strides = [1, 1]} : vector<8x512xf32> to vector<8x128xf32>
    %356 = arith.negf %355 : vector<8x128xf32>
    %357 = math.exp %356 : vector<8x128xf32>
    %cst_132 = arith.constant 1.000000e+00 : f32
    %358 = vector.broadcast %cst_132 : f32 to vector<8x128xf32>
    %359 = arith.addf %358, %357 : vector<8x128xf32>
    %360 = arith.divf %358, %359 : vector<8x128xf32>
    %361 = vector.extract_strided_slice %354 {offsets = [0, 128], sizes = [8, 128], strides = [1, 1]} : vector<8x512xf32> to vector<8x128xf32>
    %362 = arith.negf %361 : vector<8x128xf32>
    %363 = math.exp %362 : vector<8x128xf32>
    %cst_133 = arith.constant 1.000000e+00 : f32
    %364 = vector.broadcast %cst_133 : f32 to vector<8x128xf32>
    %365 = arith.addf %364, %363 : vector<8x128xf32>
    %366 = arith.divf %364, %365 : vector<8x128xf32>
    %367 = vector.extract_strided_slice %354 {offsets = [0, 256], sizes = [8, 128], strides = [1, 1]} : vector<8x512xf32> to vector<8x128xf32>
    %368 = math.tanh %367 : vector<8x128xf32>
    %369 = vector.extract_strided_slice %354 {offsets = [0, 384], sizes = [8, 128], strides = [1, 1]} : vector<8x512xf32> to vector<8x128xf32>
    %370 = arith.negf %369 : vector<8x128xf32>
    %371 = math.exp %370 : vector<8x128xf32>
    %cst_134 = arith.constant 1.000000e+00 : f32
    %372 = vector.broadcast %cst_134 : f32 to vector<8x128xf32>
    %373 = arith.addf %372, %371 : vector<8x128xf32>
    %374 = arith.divf %372, %373 : vector<8x128xf32>
    %375 = arith.mulf %366, %341 : vector<8x128xf32>
    %376 = arith.mulf %360, %368 : vector<8x128xf32>
    %377 = arith.addf %375, %376 : vector<8x128xf32>
    %378 = math.tanh %377 : vector<8x128xf32>
    %379 = arith.mulf %374, %378 : vector<8x128xf32>
    %380 = arith.index_cast %c1_i32_125 : i32 to index
    %c0_135 = arith.constant 0 : index
    %c0_136 = arith.constant 0 : index
    %381 = vector.load %arg9[%380, %c0_135, %c0_136] : memref<8x8x128xf32, #tpu.memory_space<vmem>>, vector<1x8x128xf32>
    %382 = vector.shape_cast %381 : vector<1x8x128xf32> to vector<8x128xf32>
    %383 = vector.shape_cast %379 : vector<8x128xf32> to vector<1x8x128xf32>
    tpu.vector_store %arg9[%380, %c0_135, %c0_136], %383 {strides = array<i32>} : memref<8x8x128xf32, #tpu.memory_space<vmem>>, vector<1x8x128xf32>,
    %c2_i32_137 = arith.constant 2 : i32
    %384 = arith.index_cast %c2_i32_137 : i32 to index
    %c0_138 = arith.constant 0 : index
    %c0_139 = arith.constant 0 : index
    %385 = vector.load %arg10[%384, %c0_138, %c0_139] : memref<8x8x512xf32, #tpu.memory_space<vmem>>, vector<1x8x512xf32>
    %386 = vector.shape_cast %385 : vector<1x8x512xf32> to vector<8x512xf32>
    %c1_140 = arith.constant 1 : index
    %c0_141 = arith.constant 0 : index
    %c0_142 = arith.constant 0 : index
    %387 = vector.load %arg5[%c1_140, %c0_141, %c0_142] : memref<2x128x512xf32, #tpu.memory_space<vmem>>, vector<1x128x512xf32>
    %388 = vector.shape_cast %387 : vector<1x128x512xf32> to vector<128x512xf32>
    %cst_143 = arith.constant dense<0.000000e+00> : vector<8x512xf32>
    %389 = tpu.matmul %379, %388, %cst_143 {dimension_numbers = #tpu.dot_dimension_numbers<[1], [0], [0], [1], [0, 0, 1, 1], [], []>} : vector<8x128xf32>, vector<128x512xf32>, vector<8x512xf32> -> vector<8x512xf32>
    %390 = arith.addf %386, %389 : vector<8x512xf32>
    %391 = vector.extract_strided_slice %390 {offsets = [0, 0], sizes = [8, 128], strides = [1, 1]} : vector<8x512xf32> to vector<8x128xf32>
    %392 = arith.negf %391 : vector<8x128xf32>
    %393 = math.exp %392 : vector<8x128xf32>
    %cst_144 = arith.constant 1.000000e+00 : f32
    %394 = vector.broadcast %cst_144 : f32 to vector<8x128xf32>
    %395 = arith.addf %394, %393 : vector<8x128xf32>
    %396 = arith.divf %394, %395 : vector<8x128xf32>
    %397 = vector.extract_strided_slice %390 {offsets = [0, 128], sizes = [8, 128], strides = [1, 1]} : vector<8x512xf32> to vector<8x128xf32>
    %398 = arith.negf %397 : vector<8x128xf32>
    %399 = math.exp %398 : vector<8x128xf32>
    %cst_145 = arith.constant 1.000000e+00 : f32
    %400 = vector.broadcast %cst_145 : f32 to vector<8x128xf32>
    %401 = arith.addf %400, %399 : vector<8x128xf32>
    %402 = arith.divf %400, %401 : vector<8x128xf32>
    %403 = vector.extract_strided_slice %390 {offsets = [0, 256], sizes = [8, 128], strides = [1, 1]} : vector<8x512xf32> to vector<8x128xf32>
    %404 = math.tanh %403 : vector<8x128xf32>
    %405 = vector.extract_strided_slice %390 {offsets = [0, 384], sizes = [8, 128], strides = [1, 1]} : vector<8x512xf32> to vector<8x128xf32>
    %406 = arith.negf %405 : vector<8x128xf32>
    %407 = math.exp %406 : vector<8x128xf32>
    %cst_146 = arith.constant 1.000000e+00 : f32
    %408 = vector.broadcast %cst_146 : f32 to vector<8x128xf32>
    %409 = arith.addf %408, %407 : vector<8x128xf32>
    %410 = arith.divf %408, %409 : vector<8x128xf32>
    %411 = arith.mulf %402, %377 : vector<8x128xf32>
    %412 = arith.mulf %396, %404 : vector<8x128xf32>
    %413 = arith.addf %411, %412 : vector<8x128xf32>
    %414 = math.tanh %413 : vector<8x128xf32>
    %415 = arith.mulf %410, %414 : vector<8x128xf32>
    %416 = arith.index_cast %c2_i32_137 : i32 to index
    %c0_147 = arith.constant 0 : index
    %c0_148 = arith.constant 0 : index
    %417 = vector.load %arg9[%416, %c0_147, %c0_148] : memref<8x8x128xf32, #tpu.memory_space<vmem>>, vector<1x8x128xf32>
    %418 = vector.shape_cast %417 : vector<1x8x128xf32> to vector<8x128xf32>
    %419 = vector.shape_cast %415 : vector<8x128xf32> to vector<1x8x128xf32>
    tpu.vector_store %arg9[%416, %c0_147, %c0_148], %419 {strides = array<i32>} : memref<8x8x128xf32, #tpu.memory_space<vmem>>, vector<1x8x128xf32>,
    %c3_i32_149 = arith.constant 3 : i32
    %420 = arith.index_cast %c3_i32_149 : i32 to index
    %c0_150 = arith.constant 0 : index
    %c0_151 = arith.constant 0 : index
    %421 = vector.load %arg10[%420, %c0_150, %c0_151] : memref<8x8x512xf32, #tpu.memory_space<vmem>>, vector<1x8x512xf32>
    %422 = vector.shape_cast %421 : vector<1x8x512xf32> to vector<8x512xf32>
    %c1_152 = arith.constant 1 : index
    %c0_153 = arith.constant 0 : index
    %c0_154 = arith.constant 0 : index
    %423 = vector.load %arg5[%c1_152, %c0_153, %c0_154] : memref<2x128x512xf32, #tpu.memory_space<vmem>>, vector<1x128x512xf32>
    %424 = vector.shape_cast %423 : vector<1x128x512xf32> to vector<128x512xf32>
    %cst_155 = arith.constant dense<0.000000e+00> : vector<8x512xf32>
    %425 = tpu.matmul %415, %424, %cst_155 {dimension_numbers = #tpu.dot_dimension_numbers<[1], [0], [0], [1], [0, 0, 1, 1], [], []>} : vector<8x128xf32>, vector<128x512xf32>, vector<8x512xf32> -> vector<8x512xf32>
    %426 = arith.addf %422, %425 : vector<8x512xf32>
    %427 = vector.extract_strided_slice %426 {offsets = [0, 0], sizes = [8, 128], strides = [1, 1]} : vector<8x512xf32> to vector<8x128xf32>
    %428 = arith.negf %427 : vector<8x128xf32>
    %429 = math.exp %428 : vector<8x128xf32>
    %cst_156 = arith.constant 1.000000e+00 : f32
    %430 = vector.broadcast %cst_156 : f32 to vector<8x128xf32>
    %431 = arith.addf %430, %429 : vector<8x128xf32>
    %432 = arith.divf %430, %431 : vector<8x128xf32>
    %433 = vector.extract_strided_slice %426 {offsets = [0, 128], sizes = [8, 128], strides = [1, 1]} : vector<8x512xf32> to vector<8x128xf32>
    %434 = arith.negf %433 : vector<8x128xf32>
    %435 = math.exp %434 : vector<8x128xf32>
    %cst_157 = arith.constant 1.000000e+00 : f32
    %436 = vector.broadcast %cst_157 : f32 to vector<8x128xf32>
    %437 = arith.addf %436, %435 : vector<8x128xf32>
    %438 = arith.divf %436, %437 : vector<8x128xf32>
    %439 = vector.extract_strided_slice %426 {offsets = [0, 256], sizes = [8, 128], strides = [1, 1]} : vector<8x512xf32> to vector<8x128xf32>
    %440 = math.tanh %439 : vector<8x128xf32>
    %441 = vector.extract_strided_slice %426 {offsets = [0, 384], sizes = [8, 128], strides = [1, 1]} : vector<8x512xf32> to vector<8x128xf32>
    %442 = arith.negf %441 : vector<8x128xf32>
    %443 = math.exp %442 : vector<8x128xf32>
    %cst_158 = arith.constant 1.000000e+00 : f32
    %444 = vector.broadcast %cst_158 : f32 to vector<8x128xf32>
    %445 = arith.addf %444, %443 : vector<8x128xf32>
    %446 = arith.divf %444, %445 : vector<8x128xf32>
    %447 = arith.mulf %438, %413 : vector<8x128xf32>
    %448 = arith.mulf %432, %440 : vector<8x128xf32>
    %449 = arith.addf %447, %448 : vector<8x128xf32>
    %450 = math.tanh %449 : vector<8x128xf32>
    %451 = arith.mulf %446, %450 : vector<8x128xf32>
    %452 = arith.index_cast %c3_i32_149 : i32 to index
    %c0_159 = arith.constant 0 : index
    %c0_160 = arith.constant 0 : index
    %453 = vector.load %arg9[%452, %c0_159, %c0_160] : memref<8x8x128xf32, #tpu.memory_space<vmem>>, vector<1x8x128xf32>
    %454 = vector.shape_cast %453 : vector<1x8x128xf32> to vector<8x128xf32>
    %455 = vector.shape_cast %451 : vector<8x128xf32> to vector<1x8x128xf32>
    tpu.vector_store %arg9[%452, %c0_159, %c0_160], %455 {strides = array<i32>} : memref<8x8x128xf32, #tpu.memory_space<vmem>>, vector<1x8x128xf32>,
    %c4_i32_161 = arith.constant 4 : i32
    %456 = arith.index_cast %c4_i32_161 : i32 to index
    %c0_162 = arith.constant 0 : index
    %c0_163 = arith.constant 0 : index
    %457 = vector.load %arg10[%456, %c0_162, %c0_163] : memref<8x8x512xf32, #tpu.memory_space<vmem>>, vector<1x8x512xf32>
    %458 = vector.shape_cast %457 : vector<1x8x512xf32> to vector<8x512xf32>
    %c1_164 = arith.constant 1 : index
    %c0_165 = arith.constant 0 : index
    %c0_166 = arith.constant 0 : index
    %459 = vector.load %arg5[%c1_164, %c0_165, %c0_166] : memref<2x128x512xf32, #tpu.memory_space<vmem>>, vector<1x128x512xf32>
    %460 = vector.shape_cast %459 : vector<1x128x512xf32> to vector<128x512xf32>
    %cst_167 = arith.constant dense<0.000000e+00> : vector<8x512xf32>
    %461 = tpu.matmul %451, %460, %cst_167 {dimension_numbers = #tpu.dot_dimension_numbers<[1], [0], [0], [1], [0, 0, 1, 1], [], []>} : vector<8x128xf32>, vector<128x512xf32>, vector<8x512xf32> -> vector<8x512xf32>
    %462 = arith.addf %458, %461 : vector<8x512xf32>
    %463 = vector.extract_strided_slice %462 {offsets = [0, 0], sizes = [8, 128], strides = [1, 1]} : vector<8x512xf32> to vector<8x128xf32>
    %464 = arith.negf %463 : vector<8x128xf32>
    %465 = math.exp %464 : vector<8x128xf32>
    %cst_168 = arith.constant 1.000000e+00 : f32
    %466 = vector.broadcast %cst_168 : f32 to vector<8x128xf32>
    %467 = arith.addf %466, %465 : vector<8x128xf32>
    %468 = arith.divf %466, %467 : vector<8x128xf32>
    %469 = vector.extract_strided_slice %462 {offsets = [0, 128], sizes = [8, 128], strides = [1, 1]} : vector<8x512xf32> to vector<8x128xf32>
    %470 = arith.negf %469 : vector<8x128xf32>
    %471 = math.exp %470 : vector<8x128xf32>
    %cst_169 = arith.constant 1.000000e+00 : f32
    %472 = vector.broadcast %cst_169 : f32 to vector<8x128xf32>
    %473 = arith.addf %472, %471 : vector<8x128xf32>
    %474 = arith.divf %472, %473 : vector<8x128xf32>
    %475 = vector.extract_strided_slice %462 {offsets = [0, 256], sizes = [8, 128], strides = [1, 1]} : vector<8x512xf32> to vector<8x128xf32>
    %476 = math.tanh %475 : vector<8x128xf32>
    %477 = vector.extract_strided_slice %462 {offsets = [0, 384], sizes = [8, 128], strides = [1, 1]} : vector<8x512xf32> to vector<8x128xf32>
    %478 = arith.negf %477 : vector<8x128xf32>
    %479 = math.exp %478 : vector<8x128xf32>
    %cst_170 = arith.constant 1.000000e+00 : f32
    %480 = vector.broadcast %cst_170 : f32 to vector<8x128xf32>
    %481 = arith.addf %480, %479 : vector<8x128xf32>
    %482 = arith.divf %480, %481 : vector<8x128xf32>
    %483 = arith.mulf %474, %449 : vector<8x128xf32>
    %484 = arith.mulf %468, %476 : vector<8x128xf32>
    %485 = arith.addf %483, %484 : vector<8x128xf32>
    %486 = math.tanh %485 : vector<8x128xf32>
    %487 = arith.mulf %482, %486 : vector<8x128xf32>
    %488 = arith.index_cast %c4_i32_161 : i32 to index
    %c0_171 = arith.constant 0 : index
    %c0_172 = arith.constant 0 : index
    %489 = vector.load %arg9[%488, %c0_171, %c0_172] : memref<8x8x128xf32, #tpu.memory_space<vmem>>, vector<1x8x128xf32>
    %490 = vector.shape_cast %489 : vector<1x8x128xf32> to vector<8x128xf32>
    %491 = vector.shape_cast %487 : vector<8x128xf32> to vector<1x8x128xf32>
    tpu.vector_store %arg9[%488, %c0_171, %c0_172], %491 {strides = array<i32>} : memref<8x8x128xf32, #tpu.memory_space<vmem>>, vector<1x8x128xf32>,
    %c5_i32_173 = arith.constant 5 : i32
    %492 = arith.index_cast %c5_i32_173 : i32 to index
    %c0_174 = arith.constant 0 : index
    %c0_175 = arith.constant 0 : index
    %493 = vector.load %arg10[%492, %c0_174, %c0_175] : memref<8x8x512xf32, #tpu.memory_space<vmem>>, vector<1x8x512xf32>
    %494 = vector.shape_cast %493 : vector<1x8x512xf32> to vector<8x512xf32>
    %c1_176 = arith.constant 1 : index
    %c0_177 = arith.constant 0 : index
    %c0_178 = arith.constant 0 : index
    %495 = vector.load %arg5[%c1_176, %c0_177, %c0_178] : memref<2x128x512xf32, #tpu.memory_space<vmem>>, vector<1x128x512xf32>
    %496 = vector.shape_cast %495 : vector<1x128x512xf32> to vector<128x512xf32>
    %cst_179 = arith.constant dense<0.000000e+00> : vector<8x512xf32>
    %497 = tpu.matmul %487, %496, %cst_179 {dimension_numbers = #tpu.dot_dimension_numbers<[1], [0], [0], [1], [0, 0, 1, 1], [], []>} : vector<8x128xf32>, vector<128x512xf32>, vector<8x512xf32> -> vector<8x512xf32>
    %498 = arith.addf %494, %497 : vector<8x512xf32>
    %499 = vector.extract_strided_slice %498 {offsets = [0, 0], sizes = [8, 128], strides = [1, 1]} : vector<8x512xf32> to vector<8x128xf32>
    %500 = arith.negf %499 : vector<8x128xf32>
    %501 = math.exp %500 : vector<8x128xf32>
    %cst_180 = arith.constant 1.000000e+00 : f32
    %502 = vector.broadcast %cst_180 : f32 to vector<8x128xf32>
    %503 = arith.addf %502, %501 : vector<8x128xf32>
    %504 = arith.divf %502, %503 : vector<8x128xf32>
    %505 = vector.extract_strided_slice %498 {offsets = [0, 128], sizes = [8, 128], strides = [1, 1]} : vector<8x512xf32> to vector<8x128xf32>
    %506 = arith.negf %505 : vector<8x128xf32>
    %507 = math.exp %506 : vector<8x128xf32>
    %cst_181 = arith.constant 1.000000e+00 : f32
    %508 = vector.broadcast %cst_181 : f32 to vector<8x128xf32>
    %509 = arith.addf %508, %507 : vector<8x128xf32>
    %510 = arith.divf %508, %509 : vector<8x128xf32>
    %511 = vector.extract_strided_slice %498 {offsets = [0, 256], sizes = [8, 128], strides = [1, 1]} : vector<8x512xf32> to vector<8x128xf32>
    %512 = math.tanh %511 : vector<8x128xf32>
    %513 = vector.extract_strided_slice %498 {offsets = [0, 384], sizes = [8, 128], strides = [1, 1]} : vector<8x512xf32> to vector<8x128xf32>
    %514 = arith.negf %513 : vector<8x128xf32>
    %515 = math.exp %514 : vector<8x128xf32>
    %cst_182 = arith.constant 1.000000e+00 : f32
    %516 = vector.broadcast %cst_182 : f32 to vector<8x128xf32>
    %517 = arith.addf %516, %515 : vector<8x128xf32>
    %518 = arith.divf %516, %517 : vector<8x128xf32>
    %519 = arith.mulf %510, %485 : vector<8x128xf32>
    %520 = arith.mulf %504, %512 : vector<8x128xf32>
    %521 = arith.addf %519, %520 : vector<8x128xf32>
    %522 = math.tanh %521 : vector<8x128xf32>
    %523 = arith.mulf %518, %522 : vector<8x128xf32>
    %524 = arith.index_cast %c5_i32_173 : i32 to index
    %c0_183 = arith.constant 0 : index
    %c0_184 = arith.constant 0 : index
    %525 = vector.load %arg9[%524, %c0_183, %c0_184] : memref<8x8x128xf32, #tpu.memory_space<vmem>>, vector<1x8x128xf32>
    %526 = vector.shape_cast %525 : vector<1x8x128xf32> to vector<8x128xf32>
    %527 = vector.shape_cast %523 : vector<8x128xf32> to vector<1x8x128xf32>
    tpu.vector_store %arg9[%524, %c0_183, %c0_184], %527 {strides = array<i32>} : memref<8x8x128xf32, #tpu.memory_space<vmem>>, vector<1x8x128xf32>,
    %c6_i32_185 = arith.constant 6 : i32
    %528 = arith.index_cast %c6_i32_185 : i32 to index
    %c0_186 = arith.constant 0 : index
    %c0_187 = arith.constant 0 : index
    %529 = vector.load %arg10[%528, %c0_186, %c0_187] : memref<8x8x512xf32, #tpu.memory_space<vmem>>, vector<1x8x512xf32>
    %530 = vector.shape_cast %529 : vector<1x8x512xf32> to vector<8x512xf32>
    %c1_188 = arith.constant 1 : index
    %c0_189 = arith.constant 0 : index
    %c0_190 = arith.constant 0 : index
    %531 = vector.load %arg5[%c1_188, %c0_189, %c0_190] : memref<2x128x512xf32, #tpu.memory_space<vmem>>, vector<1x128x512xf32>
    %532 = vector.shape_cast %531 : vector<1x128x512xf32> to vector<128x512xf32>
    %cst_191 = arith.constant dense<0.000000e+00> : vector<8x512xf32>
    %533 = tpu.matmul %523, %532, %cst_191 {dimension_numbers = #tpu.dot_dimension_numbers<[1], [0], [0], [1], [0, 0, 1, 1], [], []>} : vector<8x128xf32>, vector<128x512xf32>, vector<8x512xf32> -> vector<8x512xf32>
    %534 = arith.addf %530, %533 : vector<8x512xf32>
    %535 = vector.extract_strided_slice %534 {offsets = [0, 0], sizes = [8, 128], strides = [1, 1]} : vector<8x512xf32> to vector<8x128xf32>
    %536 = arith.negf %535 : vector<8x128xf32>
    %537 = math.exp %536 : vector<8x128xf32>
    %cst_192 = arith.constant 1.000000e+00 : f32
    %538 = vector.broadcast %cst_192 : f32 to vector<8x128xf32>
    %539 = arith.addf %538, %537 : vector<8x128xf32>
    %540 = arith.divf %538, %539 : vector<8x128xf32>
    %541 = vector.extract_strided_slice %534 {offsets = [0, 128], sizes = [8, 128], strides = [1, 1]} : vector<8x512xf32> to vector<8x128xf32>
    %542 = arith.negf %541 : vector<8x128xf32>
    %543 = math.exp %542 : vector<8x128xf32>
    %cst_193 = arith.constant 1.000000e+00 : f32
    %544 = vector.broadcast %cst_193 : f32 to vector<8x128xf32>
    %545 = arith.addf %544, %543 : vector<8x128xf32>
    %546 = arith.divf %544, %545 : vector<8x128xf32>
    %547 = vector.extract_strided_slice %534 {offsets = [0, 256], sizes = [8, 128], strides = [1, 1]} : vector<8x512xf32> to vector<8x128xf32>
    %548 = math.tanh %547 : vector<8x128xf32>
    %549 = vector.extract_strided_slice %534 {offsets = [0, 384], sizes = [8, 128], strides = [1, 1]} : vector<8x512xf32> to vector<8x128xf32>
    %550 = arith.negf %549 : vector<8x128xf32>
    %551 = math.exp %550 : vector<8x128xf32>
    %cst_194 = arith.constant 1.000000e+00 : f32
    %552 = vector.broadcast %cst_194 : f32 to vector<8x128xf32>
    %553 = arith.addf %552, %551 : vector<8x128xf32>
    %554 = arith.divf %552, %553 : vector<8x128xf32>
    %555 = arith.mulf %546, %521 : vector<8x128xf32>
    %556 = arith.mulf %540, %548 : vector<8x128xf32>
    %557 = arith.addf %555, %556 : vector<8x128xf32>
    %558 = math.tanh %557 : vector<8x128xf32>
    %559 = arith.mulf %554, %558 : vector<8x128xf32>
    %560 = arith.index_cast %c6_i32_185 : i32 to index
    %c0_195 = arith.constant 0 : index
    %c0_196 = arith.constant 0 : index
    %561 = vector.load %arg9[%560, %c0_195, %c0_196] : memref<8x8x128xf32, #tpu.memory_space<vmem>>, vector<1x8x128xf32>
    %562 = vector.shape_cast %561 : vector<1x8x128xf32> to vector<8x128xf32>
    %563 = vector.shape_cast %559 : vector<8x128xf32> to vector<1x8x128xf32>
    tpu.vector_store %arg9[%560, %c0_195, %c0_196], %563 {strides = array<i32>} : memref<8x8x128xf32, #tpu.memory_space<vmem>>, vector<1x8x128xf32>,
    %c7_i32_197 = arith.constant 7 : i32
    %564 = arith.index_cast %c7_i32_197 : i32 to index
    %c0_198 = arith.constant 0 : index
    %c0_199 = arith.constant 0 : index
    %565 = vector.load %arg10[%564, %c0_198, %c0_199] : memref<8x8x512xf32, #tpu.memory_space<vmem>>, vector<1x8x512xf32>
    %566 = vector.shape_cast %565 : vector<1x8x512xf32> to vector<8x512xf32>
    %c1_200 = arith.constant 1 : index
    %c0_201 = arith.constant 0 : index
    %c0_202 = arith.constant 0 : index
    %567 = vector.load %arg5[%c1_200, %c0_201, %c0_202] : memref<2x128x512xf32, #tpu.memory_space<vmem>>, vector<1x128x512xf32>
    %568 = vector.shape_cast %567 : vector<1x128x512xf32> to vector<128x512xf32>
    %cst_203 = arith.constant dense<0.000000e+00> : vector<8x512xf32>
    %569 = tpu.matmul %559, %568, %cst_203 {dimension_numbers = #tpu.dot_dimension_numbers<[1], [0], [0], [1], [0, 0, 1, 1], [], []>} : vector<8x128xf32>, vector<128x512xf32>, vector<8x512xf32> -> vector<8x512xf32>
    %570 = arith.addf %566, %569 : vector<8x512xf32>
    %571 = vector.extract_strided_slice %570 {offsets = [0, 0], sizes = [8, 128], strides = [1, 1]} : vector<8x512xf32> to vector<8x128xf32>
    %572 = arith.negf %571 : vector<8x128xf32>
    %573 = math.exp %572 : vector<8x128xf32>
    %cst_204 = arith.constant 1.000000e+00 : f32
    %574 = vector.broadcast %cst_204 : f32 to vector<8x128xf32>
    %575 = arith.addf %574, %573 : vector<8x128xf32>
    %576 = arith.divf %574, %575 : vector<8x128xf32>
    %577 = vector.extract_strided_slice %570 {offsets = [0, 128], sizes = [8, 128], strides = [1, 1]} : vector<8x512xf32> to vector<8x128xf32>
    %578 = arith.negf %577 : vector<8x128xf32>
    %579 = math.exp %578 : vector<8x128xf32>
    %cst_205 = arith.constant 1.000000e+00 : f32
    %580 = vector.broadcast %cst_205 : f32 to vector<8x128xf32>
    %581 = arith.addf %580, %579 : vector<8x128xf32>
    %582 = arith.divf %580, %581 : vector<8x128xf32>
    %583 = vector.extract_strided_slice %570 {offsets = [0, 256], sizes = [8, 128], strides = [1, 1]} : vector<8x512xf32> to vector<8x128xf32>
    %584 = math.tanh %583 : vector<8x128xf32>
    %585 = vector.extract_strided_slice %570 {offsets = [0, 384], sizes = [8, 128], strides = [1, 1]} : vector<8x512xf32> to vector<8x128xf32>
    %586 = arith.negf %585 : vector<8x128xf32>
    %587 = math.exp %586 : vector<8x128xf32>
    %cst_206 = arith.constant 1.000000e+00 : f32
    %588 = vector.broadcast %cst_206 : f32 to vector<8x128xf32>
    %589 = arith.addf %588, %587 : vector<8x128xf32>
    %590 = arith.divf %588, %589 : vector<8x128xf32>
    %591 = arith.mulf %582, %557 : vector<8x128xf32>
    %592 = arith.mulf %576, %584 : vector<8x128xf32>
    %593 = arith.addf %591, %592 : vector<8x128xf32>
    %594 = math.tanh %593 : vector<8x128xf32>
    %595 = arith.mulf %590, %594 : vector<8x128xf32>
    %596 = arith.index_cast %c7_i32_197 : i32 to index
    %c0_207 = arith.constant 0 : index
    %c0_208 = arith.constant 0 : index
    %597 = vector.load %arg9[%596, %c0_207, %c0_208] : memref<8x8x128xf32, #tpu.memory_space<vmem>>, vector<1x8x128xf32>
    %598 = vector.shape_cast %597 : vector<1x8x128xf32> to vector<8x128xf32>
    %599 = vector.shape_cast %595 : vector<8x128xf32> to vector<1x8x128xf32>
    tpu.vector_store %arg9[%596, %c0_207, %c0_208], %599 {strides = array<i32>} : memref<8x8x128xf32, #tpu.memory_space<vmem>>, vector<1x8x128xf32>,
    %c8_i32_209 = arith.constant 8 : i32
    %c0_210 = arith.constant 0 : index
    %c0_211 = arith.constant 0 : index
    %600 = vector.load %arg6[%c0_210, %c0_211] : memref<128x128xf32, #tpu.memory_space<vmem>>, vector<128x128xf32>
    %cst_212 = arith.constant dense<0.000000e+00> : vector<8x128xf32>
    %601 = tpu.matmul %595, %600, %cst_212 {dimension_numbers = #tpu.dot_dimension_numbers<[1], [0], [0], [1], [0, 0, 1, 1], [], []>} : vector<8x128xf32>, vector<128x128xf32>, vector<8x128xf32> -> vector<8x128xf32>
    %c0_213 = arith.constant 0 : index
    %c0_214 = arith.constant 0 : index
    %602 = vector.load %arg7[%c0_213, %c0_214] : memref<1x128xf32, #tpu.memory_space<vmem>>, vector<1x128xf32>
    %603 = vector.broadcast %602 : vector<1x128xf32> to vector<8x128xf32>
    %604 = arith.addf %601, %603 : vector<8x128xf32>
    %c0_215 = arith.constant 0 : index
    %c0_216 = arith.constant 0 : index
    %605 = vector.load %arg8[%c0_215, %c0_216] : memref<8x128xf32, #tpu.memory_space<vmem>>, vector<8x128xf32>
    tpu.vector_store %arg8[%c0_215, %c0_216], %604 {strides = array<i32>} : memref<8x128xf32, #tpu.memory_space<vmem>>, vector<8x128xf32>,
    return
  }
}

</mosaic_0001>

<llo_original>
// kernel: tpu_custom_call.1
$region0: #{tpu_custom_call.1}
  #allocation0 [shape = 'u32[]', space=smem, size = 0x4, offset = 0x4, fixed_abs, tag = 'smem constant byte address 0x4 - core index']
  #allocation1 [shape = 'u32[144,128]{1,0:T(1,128)}', space=vmem, size = 0x12000, scoped, tag = 'internal scratch']
  #allocation2 [shape = 'f32[8,8,128]{2,1,0:T(8,128)}', space=vmem, size = 0x8000, scoped, tag = 'scratch operand']
  #allocation3 [shape = 'f32[8,8,512]{2,1,0:T(8,128)}', space=vmem, size = 0x20000, scoped, tag = 'scratch operand']
  %s0 = inlined_call_operand.hbm [shape: f32[8,8,128], index: 0, kind: input, shape index: {}]
  %s1 = inlined_call_operand.hbm [shape: f32[128,512], index: 1, kind: input, shape index: {}]
  %s2 = inlined_call_operand.hbm [shape: f32[1,512], index: 2, kind: input, shape index: {}]
  %s3 = inlined_call_operand.hbm [shape: f32[1,128,512], index: 3, kind: input, shape index: {}]
  %s4 = inlined_call_operand.vmem [shape: f32[1,1,512], index: 4, kind: input, shape index: {}]
  %s5 = inlined_call_operand.hbm [shape: f32[2,128,512], index: 5, kind: input, shape index: {}]
  %s6 = inlined_call_operand.hbm [shape: f32[128,128], index: 6, kind: input, shape index: {}]
  %s7 = inlined_call_operand.vmem [shape: f32[1,128], index: 7, kind: input, shape index: {}]
  %s8 = inlined_call_operand.hbm [shape: f32[8,128], index: 8, kind: output, shape index: {}]
  %s9 = sld [smem:[#allocation0]]
  $region66: #{tpu_custom_call.1} parent=0
    _
  %s11 = ssub.s32 1, %s9
  %s12 = scalar_select 0, %s11, %s9
  $region1: #{tpu_custom_call.1} parent=0
    #allocation4 [shape = 'u8[32768]{0}', space=vmem, size = 0x8000, scoped, tag = 'input window, operand 0, single buffered']
    #allocation5 [shape = 's32[1]{0}', space=sflag, size = 0x4, scoped, tag = 'scoped memory for tpu_custom_call.1']
    #allocation6 [shape = 's32[1]{0}', space=sflag, size = 0x4, scoped, tag = 'scoped memory for tpu_custom_call.1']
    #allocation7 [shape = 'u8[262144]{0}', space=vmem, size = 0x40000, scoped, tag = 'input window, operand 1, single buffered']
    #allocation8 [shape = 's32[1]{0}', space=sflag, size = 0x4, scoped, tag = 'scoped memory for tpu_custom_call.1']
    #allocation9 [shape = 'u8[2048]{0}', space=vmem, size = 0x800, scoped, tag = 'input window, operand 2, single buffered']
    #allocation10 [shape = 'u8[262144]{0}', space=vmem, size = 0x40000, scoped, tag = 'input window, operand 3, single buffered']
    #allocation11 [shape = 's32[1]{0}', space=sflag, size = 0x4, scoped, tag = 'scoped memory for tpu_custom_call.1']
    #allocation12 [shape = 'u8[524288]{0}', space=vmem, size = 0x80000, scoped, tag = 'input window, operand 5, single buffered']
    #allocation13 [shape = 'u8[65536]{0}', space=vmem, size = 0x10000, scoped, tag = 'input window, operand 6, single buffered']
    #allocation14 [shape = 's32[1]{0}', space=sflag, size = 0x4, scoped, tag = 'scoped memory for tpu_custom_call.1']
    #allocation15 [shape = 'u8[4096]{0}', space=vmem, size = 0x1000, scoped, tag = 'output window, operand 0, single buffered']
    %13 = vsyncpa [#allocation5], 0
    %14 = vsyncpa [#allocation8], 0
    %15 = vsyncpa [#allocation11], 0
    %16 = vsyncpa [#allocation14], 0
    %17 = vsyncpa [#allocation6], 0
    // Predicated region
    $region2: #{tpu_custom_call.1} parent=1 // pred_check
      _
    $region3: #{tpu_custom_call.1} parent=1 // pred_check_branch
      %19 = sbr.rel (0) target = $region5
    $region4: #{tpu_custom_call.1} parent=1 // pred_region
      %s21 = ssub.s32 1024, 1024
      %22 = vsyncadd [#allocation5], %s21
      %s23 = sshll.u32 [#allocation4], 4
      %s24 = int_to_ptr.vmem [resolvable:$true] %s23
      %29 = dma.hbm_to_vmem [thread:$0]  %s0, 1024, %s24, [#allocation5], 128, 128, 8
    $region5: #{tpu_custom_call.1} parent=1 // pred_fallthru
      _
    // Predicated region
    $region6: #{tpu_custom_call.1} parent=1 // pred_check
      _
    $region7: #{tpu_custom_call.1} parent=1 // pred_check_branch
      %31 = sbr.rel (0) target = $region9
    $region8: #{tpu_custom_call.1} parent=1 // pred_region
      %s33 = ssub.s32 8192, 8192
      %34 = vsyncadd [#allocation8], %s33
      %s35 = sshll.u32 [#allocation7], 4
      %s36 = int_to_ptr.vmem [resolvable:$true] %s35
      %41 = dma.hbm_to_vmem [thread:$0]  %s1, 8192, %s36, [#allocation8], 512, 512, 32
    $region9: #{tpu_custom_call.1} parent=1 // pred_fallthru
      _
    // Predicated region
    $region10: #{tpu_custom_call.1} parent=1 // pred_check
      _
    $region11: #{tpu_custom_call.1} parent=1 // pred_check_branch
      %43 = sbr.rel (0) target = $region13
    $region12: #{tpu_custom_call.1} parent=1 // pred_region
      %s45 = ssub.s32 64, 64
      %46 = vsyncadd [#allocation8], %s45
      %s48 = sshll.u32 [#allocation9], 4
      %s49 = int_to_ptr.vmem [resolvable:$true] %s48
      %51 = dma.hbm_to_vmem [thread:$0]  %s2, 64, %s49, [#allocation8]
    $region13: #{tpu_custom_call.1} parent=1 // pred_fallthru
      _
    // Predicated region
    $region14: #{tpu_custom_call.1} parent=1 // pred_check
      _
    $region15: #{tpu_custom_call.1} parent=1 // pred_check_branch
      %53 = sbr.rel (0) target = $region17
    $region16: #{tpu_custom_call.1} parent=1 // pred_region
      %s55 = ssub.s32 8192, 8192
      %56 = vsyncadd [#allocation11], %s55
      %s57 = sshll.u32 [#allocation10], 4
      %s58 = int_to_ptr.vmem [resolvable:$true] %s57
      %63 = dma.hbm_to_vmem [thread:$0]  %s3, 8192, %s58, [#allocation11], 512, 512, 32
    $region17: #{tpu_custom_call.1} parent=1 // pred_fallthru
      _
    // Predicated region
    $region18: #{tpu_custom_call.1} parent=1 // pred_check
      _
    $region19: #{tpu_custom_call.1} parent=1 // pred_check_branch
      %65 = sbr.rel (0) target = $region21
    $region20: #{tpu_custom_call.1} parent=1 // pred_region
      _
    $region21: #{tpu_custom_call.1} parent=1 // pred_fallthru
      _
    // Predicated region
    $region22: #{tpu_custom_call.1} parent=1 // pred_check
      _
    $region23: #{tpu_custom_call.1} parent=1 // pred_check_branch
      %67 = sbr.rel (0) target = $region25
    $region24: #{tpu_custom_call.1} parent=1 // pred_region
      %s69 = ssub.s32 16384, 16384
      %70 = vsyncadd [#allocation11], %s69
      %s71 = sshll.u32 [#allocation12], 4
      %s72 = int_to_ptr.vmem [resolvable:$true] %s71
      %77 = dma.hbm_to_vmem [thread:$0]  %s5, 16384, %s72, [#allocation11], 512, 512, 32
    $region25: #{tpu_custom_call.1} parent=1 // pred_fallthru
      _
    // Predicated region
    $region26: #{tpu_custom_call.1} parent=1 // pred_check
      _
    $region27: #{tpu_custom_call.1} parent=1 // pred_check_branch
      %79 = sbr.rel (0) target = $region29
    $region28: #{tpu_custom_call.1} parent=1 // pred_region
      %s81 = ssub.s32 2048, 2048
      %82 = vsyncadd [#allocation14], %s81
      %s83 = sshll.u32 [#allocation13], 4
      %s84 = int_to_ptr.vmem [resolvable:$true] %s83
      %89 = dma.hbm_to_vmem [thread:$0]  %s6, 2048, %s84, [#allocation14], 128, 128, 8
    $region29: #{tpu_custom_call.1} parent=1 // pred_fallthru
      _
    // Predicated region
    $region30: #{tpu_custom_call.1} parent=1 // pred_check
      _
    $region31: #{tpu_custom_call.1} parent=1 // pred_check_branch
      %91 = sbr.rel (0) target = $region33
    $region32: #{tpu_custom_call.1} parent=1 // pred_region
      _
    $region33: #{tpu_custom_call.1} parent=1 // pred_fallthru
      _
    // Predicated region
    $region34: #{tpu_custom_call.1} parent=1 // pred_check
      _
    $region35: #{tpu_custom_call.1} parent=1 // pred_check_branch
      %93 = sbr.rel (0) target = $region37
    $region36: #{tpu_custom_call.1} parent=1 // pred_region
      %94 = dma.done [#allocation5], 1024
    $region37: #{tpu_custom_call.1} parent=1 // pred_fallthru
      _
    // Predicated region
    $region38: #{tpu_custom_call.1} parent=1 // pred_check
      _
    $region39: #{tpu_custom_call.1} parent=1 // pred_check_branch
      %96 = sbr.rel (0) target = $region41
    $region40: #{tpu_custom_call.1} parent=1 // pred_region
      %97 = dma.done [#allocation8], 8192
    $region41: #{tpu_custom_call.1} parent=1 // pred_fallthru
      _
    // Predicated region
    $region42: #{tpu_custom_call.1} parent=1 // pred_check
      _
    $region43: #{tpu_custom_call.1} parent=1 // pred_check_branch
      %99 = sbr.rel (0) target = $region45
    $region44: #{tpu_custom_call.1} parent=1 // pred_region
      %100 = dma.done [#allocation8], 64
    $region45: #{tpu_custom_call.1} parent=1 // pred_fallthru
      _
    // Predicated region
    $region46: #{tpu_custom_call.1} parent=1 // pred_check
      _
    $region47: #{tpu_custom_call.1} parent=1 // pred_check_branch
      %102 = sbr.rel (0) target = $region49
    $region48: #{tpu_custom_call.1} parent=1 // pred_region
      %103 = dma.done [#allocation11], 8192
    $region49: #{tpu_custom_call.1} parent=1 // pred_fallthru
      _
    // Predicated region
    $region50: #{tpu_custom_call.1} parent=1 // pred_check
      _
    $region51: #{tpu_custom_call.1} parent=1 // pred_check_branch
      %105 = sbr.rel (0) target = $region53
    $region52: #{tpu_custom_call.1} parent=1 // pred_region
      %106 = dma.done [#allocation11], 16384
    $region53: #{tpu_custom_call.1} parent=1 // pred_fallthru
      _
    // Predicated region
    $region54: #{tpu_custom_call.1} parent=1 // pred_check
      _
    $region55: #{tpu_custom_call.1} parent=1 // pred_check_branch
      %108 = sbr.rel (0) target = $region57
    $region56: #{tpu_custom_call.1} parent=1 // pred_region
      %109 = dma.done [#allocation14], 2048
    $region57: #{tpu_custom_call.1} parent=1 // pred_fallthru
      _
    %v110 = vld [vmem:[#allocation4] sm:$0xff]
    %v111 = vld [vmem:[#allocation4 + $0x8] sm:$0xff]
    %v112 = vld [vmem:[#allocation4 + $0x10] sm:$0xff]
    %v113 = vld [vmem:[#allocation4 + $0x18] sm:$0xff]
    %v114 = vld [vmem:[#allocation4 + $0x20] sm:$0xff]
    %v115 = vld [vmem:[#allocation4 + $0x28] sm:$0xff]
    %v116 = vld [vmem:[#allocation4 + $0x30] sm:$0xff]
    %v117 = vld [vmem:[#allocation4 + $0x38] sm:$0xff]
    %v118 = vld [vmem:[#allocation7] sm:$0xff]
    %v119 = vld [vmem:[#allocation7 + $0x8] sm:$0xff]
    %v120 = vld [vmem:[#allocation7 + $0x10] sm:$0xff]
    %v121 = vld [vmem:[#allocation7 + $0x18] sm:$0xff]
    %v122 = vld [vmem:[#allocation7 + $0x20] sm:$0xff]
    %v123 = vld [vmem:[#allocation7 + $0x28] sm:$0xff]
    %v124 = vld [vmem:[#allocation7 + $0x30] sm:$0xff]
    %v125 = vld [vmem:[#allocation7 + $0x38] sm:$0xff]
    %v126 = vld [vmem:[#allocation7 + $0x40] sm:$0xff]
    %v127 = vld [vmem:[#allocation7 + $0x48] sm:$0xff]
    %v128 = vld [vmem:[#allocation7 + $0x50] sm:$0xff]
    %v129 = vld [vmem:[#allocation7 + $0x58] sm:$0xff]
    %v130 = vld [vmem:[#allocation7 + $0x60] sm:$0xff]
    %v131 = vld [vmem:[#allocation7 + $0x68] sm:$0xff]
    %v132 = vld [vmem:[#allocation7 + $0x70] sm:$0xff]
    %v133 = vld [vmem:[#allocation7 + $0x78] sm:$0xff]
    %v134 = vld [vmem:[#allocation7 + $0x80] sm:$0xff]
    %v135 = vld [vmem:[#allocation7 + $0x88] sm:$0xff]
    %v136 = vld [vmem:[#allocation7 + $0x90] sm:$0xff]
    %v137 = vld [vmem:[#allocation7 + $0x98] sm:$0xff]
    %v138 = vld [vmem:[#allocation7 + $0xa0] sm:$0xff]
    %v139 = vld [vmem:[#allocation7 + $0xa8] sm:$0xff]
    %v140 = vld [vmem:[#allocation7 + $0xb0] sm:$0xff]
    %v141 = vld [vmem:[#allocation7 + $0xb8] sm:$0xff]
    %v142 = vld [vmem:[#allocation7 + $0xc0] sm:$0xff]
    %v143 = vld [vmem:[#allocation7 + $0xc8] sm:$0xff]
    %v144 = vld [vmem:[#allocation7 + $0xd0] sm:$0xff]
    %v145 = vld [vmem:[#allocation7 + $0xd8] sm:$0xff]
    %v146 = vld [vmem:[#allocation7 + $0xe0] sm:$0xff]
    %v147 = vld [vmem:[#allocation7 + $0xe8] sm:$0xff]
    %v148 = vld [vmem:[#allocation7 + $0xf0] sm:$0xff]
    %v149 = vld [vmem:[#allocation7 + $0xf8] sm:$0xff]
    %v150 = vld [vmem:[#allocation7 + $0x100] sm:$0xff]
    %v151 = vld [vmem:[#allocation7 + $0x108] sm:$0xff]
    %v152 = vld [vmem:[#allocation7 + $0x110] sm:$0xff]
    %v153 = vld [vmem:[#allocation7 + $0x118] sm:$0xff]
    %v154 = vld [vmem:[#allocation7 + $0x120] sm:$0xff]
    %v155 = vld [vmem:[#allocation7 + $0x128] sm:$0xff]
    %v156 = vld [vmem:[#allocation7 + $0x130] sm:$0xff]
    %v157 = vld [vmem:[#allocation7 + $0x138] sm:$0xff]
    %v158 = vld [vmem:[#allocation7 + $0x140] sm:$0xff]
    %v159 = vld [vmem:[#allocation7 + $0x148] sm:$0xff]
    %v160 = vld [vmem:[#allocation7 + $0x150] sm:$0xff]
    %v161 = vld [vmem:[#allocation7 + $0x158] sm:$0xff]
    %v162 = vld [vmem:[#allocation7 + $0x160] sm:$0xff]
    %v163 = vld [vmem:[#allocation7 + $0x168] sm:$0xff]
    %v164 = vld [vmem:[#allocation7 + $0x170] sm:$0xff]
    %v165 = vld [vmem:[#allocation7 + $0x178] sm:$0xff]
    %v166 = vld [vmem:[#allocation7 + $0x180] sm:$0xff]
    %v167 = vld [vmem:[#allocation7 + $0x188] sm:$0xff]
    %v168 = vld [vmem:[#allocation7 + $0x190] sm:$0xff]
    %v169 = vld [vmem:[#allocation7 + $0x198] sm:$0xff]
    %v170 = vld [vmem:[#allocation7 + $0x1a0] sm:$0xff]
    %v171 = vld [vmem:[#allocation7 + $0x1a8] sm:$0xff]
    %v172 = vld [vmem:[#allocation7 + $0x1b0] sm:$0xff]
    %v173 = vld [vmem:[#allocation7 + $0x1b8] sm:$0xff]
    %v174 = vld [vmem:[#allocation7 + $0x1c0] sm:$0xff]
    %v175 = vld [vmem:[#allocation7 + $0x1c8] sm:$0xff]
    %v176 = vld [vmem:[#allocation7 + $0x1d0] sm:$0xff]
    %v177 = vld [vmem:[#allocation7 + $0x1d8] sm:$0xff]
    %v178 = vld [vmem:[#allocation7 + $0x1e0] sm:$0xff]
    %v179 = vld [vmem:[#allocation7 + $0x1e8] sm:$0xff]
    %v180 = vld [vmem:[#allocation7 + $0x1f0] sm:$0xff]
    %v181 = vld [vmem:[#allocation7 + $0x1f8] sm:$0xff]
    %v182 = vld [vmem:[#allocation9] sm:$0xf]
    %v184 = vlaneseq
    %v185 = vshrl.u32 %v184, 7
    %v186 = vsub.s32 0, %v185
    %v187 = vrot.slane %v182, %v186
    %v188 = vlaneseq
    %v189 = vshrl.u32 %v188, 7
    %v190 = vsub.s32 1, %v189
    %v191 = vrot.slane %v182, %v190
    %v192 = vlaneseq
    %v193 = vshrl.u32 %v192, 7
    %v194 = vsub.s32 2, %v193
    %v195 = vrot.slane %v182, %v194
    %v196 = vlaneseq
    %v197 = vshrl.u32 %v196, 7
    %v198 = vsub.s32 3, %v197
    %v199 = vrot.slane %v182, %v198
    %204 = vmatprep.subr.mxu0 %v179
    %205 = vmatpush1.msra.mxu0 %v178
    %206 = vmatprep.subr.mxu0 %v175
    %207 = vmatpush1.msra.mxu0 %v174
    %208 = vmatprep.subr.mxu0 %v171
    %209 = vmatpush1.msra.mxu0 %v170
    %210 = vmatprep.subr.mxu0 %v167
    %211 = vmatpush1.msra.mxu0 %v166
    %212 = vmatprep.subr.mxu0 %v163
    %213 = vmatpush1.msra.mxu0 %v162
    %214 = vmatprep.subr.mxu0 %v159
    %215 = vmatpush1.msra.mxu0 %v158
    %216 = vmatprep.subr.mxu0 %v155
    %217 = vmatpush1.msra.mxu0 %v154
    %218 = vmatprep.subr.mxu0 %v151
    %219 = vmatpush1.msra.mxu0 %v150
    %220 = vmatprep.subr.mxu0 %v147
    %221 = vmatpush1.msra.mxu0 %v146
    %222 = vmatprep.subr.mxu0 %v143
    %223 = vmatpush1.msra.mxu0 %v142
    %224 = vmatprep.subr.mxu0 %v139
    %225 = vmatpush1.msra.mxu0 %v138
    %226 = vmatprep.subr.mxu0 %v135
    %227 = vmatpush1.msra.mxu0 %v134
    %228 = vmatprep.subr.mxu0 %v131
    %229 = vmatpush1.msra.mxu0 %v130
    %230 = vmatprep.subr.mxu0 %v127
    %231 = vmatpush1.msra.mxu0 %v126
    %232 = vmatprep.subr.mxu0 %v123
    %233 = vmatpush1.msra.mxu0 %v122
    %234 = vmatprep.subr.mxu0 %v119
    %235 = vmatpush1.msra.mxu0 %v118
    %236 = vmatprep.subr.mxu0 0.0
    %237 = vmatpush2.msra.mxu0 0.0
    %238 = vmatprep.subr.mxu0 0.0
    %239 = vmatpush2.msra.mxu0 0.0
    %240 = vmatprep.subr.mxu0 0.0
    %241 = vmatpush2.msra.mxu0 0.0
    %242 = vmatprep.subr.mxu0 0.0
    %243 = vmatpush2.msra.mxu0 0.0
    %244 = vmatprep.subr.mxu0 0.0
    %245 = vmatpush2.msra.mxu0 0.0
    %246 = vmatprep.subr.mxu0 0.0
    %247 = vmatpush2.msra.mxu0 0.0
    %248 = vmatprep.subr.mxu0 0.0
    %249 = vmatpush2.msra.mxu0 0.0
    %250 = vmatprep.subr.mxu0 0.0
    %251 = vmatpush2.msra.mxu0 0.0
    %252 = vmatprep.subr.mxu0 0.0
    %253 = vmatpush2.msra.mxu0 0.0
    %254 = vmatprep.subr.mxu0 0.0
    %255 = vmatpush2.msra.mxu0 0.0
    %256 = vmatprep.subr.mxu0 0.0
    %257 = vmatpush2.msra.mxu0 0.0
    %258 = vmatprep.subr.mxu0 0.0
    %259 = vmatpush2.msra.mxu0 0.0
    %260 = vmatprep.subr.mxu0 0.0
    %261 = vmatpush2.msra.mxu0 0.0
    %262 = vmatprep.subr.mxu0 0.0
    %263 = vmatpush2.msra.mxu0 0.0
    %264 = vmatprep.subr.mxu0 0.0
    %265 = vmatpush2.msra.mxu0 0.0
    %266 = vmatprep.subr.mxu0 0.0
    %267 = vmatpush2.msra.mxu0 0.0
    %268 = vmatprep.mubr.f32.mxu0 0.0
    %269 = vmatmul.mubr.f32.gmra.mxu0 %v110
    %v270 = vpop.f32.mrf.mxu0
    %v271 = vadd.f32 %v187, %v270
    %v272 = vpop.f32.mrf.mxu0
    %v273 = vadd.f32 %v191, %v272
    %274 = vmatprep.mubr.f32.mxu0 0.0
    %275 = vmatmul.mubr.f32.gmra.mxu0 %v111
    %v276 = vpop.f32.mrf.mxu0
    %v277 = vadd.f32 %v187, %v276
    %v278 = vpop.f32.mrf.mxu0
    %v279 = vadd.f32 %v191, %v278
    %280 = vmatprep.mubr.f32.mxu0 0.0
    %281 = vmatmul.mubr.f32.gmra.mxu0 %v112
    %v282 = vpop.f32.mrf.mxu0
    %v283 = vadd.f32 %v187, %v282
    %v284 = vpop.f32.mrf.mxu0
    %v285 = vadd.f32 %v191, %v284
    %286 = vmatprep.mubr.f32.mxu0 0.0
    %287 = vmatmul.mubr.f32.gmra.mxu0 %v113
    %v288 = vpop.f32.mrf.mxu0
    %v289 = vadd.f32 %v187, %v288
    %v290 = vpop.f32.mrf.mxu0
    %v291 = vadd.f32 %v191, %v290
    %292 = vmatprep.mubr.f32.mxu0 0.0
    %293 = vmatmul.mubr.f32.gmra.mxu0 %v114
    %v294 = vpop.f32.mrf.mxu0
    %v295 = vadd.f32 %v187, %v294
    %v296 = vpop.f32.mrf.mxu0
    %v297 = vadd.f32 %v191, %v296
    %298 = vmatprep.mubr.f32.mxu0 0.0
    %299 = vmatmul.mubr.f32.gmra.mxu0 %v115
    %v300 = vpop.f32.mrf.mxu0
    %v301 = vadd.f32 %v187, %v300
    %v302 = vpop.f32.mrf.mxu0
    %v303 = vadd.f32 %v191, %v302
    %304 = vmatprep.mubr.f32.mxu0 0.0
    %305 = vmatmul.mubr.f32.gmra.mxu0 %v116
    %v306 = vpop.f32.mrf.mxu0
    %v307 = vadd.f32 %v187, %v306
    %v308 = vpop.f32.mrf.mxu0
    %v309 = vadd.f32 %v191, %v308
    %310 = vmatprep.mubr.f32.mxu0 0.0
    %311 = vmatmul.mubr.f32.gmra.mxu0 %v117
    %v312 = vpop.f32.mrf.mxu0
    %v313 = vadd.f32 %v187, %v312
    %v314 = vpop.f32.mrf.mxu0
    %v315 = vadd.f32 %v191, %v314
    %316 = vdwg.mxu0
    %317 = vmatprep.subr.mxu0 %v181
    %318 = vmatpush1.msra.mxu0 %v180
    %319 = vmatprep.subr.mxu0 %v177
    %320 = vmatpush1.msra.mxu0 %v176
    %321 = vmatprep.subr.mxu0 %v173
    %322 = vmatpush1.msra.mxu0 %v172
    %323 = vmatprep.subr.mxu0 %v169
    %324 = vmatpush1.msra.mxu0 %v168
    %325 = vmatprep.subr.mxu0 %v165
    %326 = vmatpush1.msra.mxu0 %v164
    %327 = vmatprep.subr.mxu0 %v161
    %328 = vmatpush1.msra.mxu0 %v160
    %329 = vmatprep.subr.mxu0 %v157
    %330 = vmatpush1.msra.mxu0 %v156
    %331 = vmatprep.subr.mxu0 %v153
    %332 = vmatpush1.msra.mxu0 %v152
    %333 = vmatprep.subr.mxu0 %v149
    %334 = vmatpush1.msra.mxu0 %v148
    %335 = vmatprep.subr.mxu0 %v145
    %336 = vmatpush1.msra.mxu0 %v144
    %337 = vmatprep.subr.mxu0 %v141
    %338 = vmatpush1.msra.mxu0 %v140
    %339 = vmatprep.subr.mxu0 %v137
    %340 = vmatpush1.msra.mxu0 %v136
    %341 = vmatprep.subr.mxu0 %v133
    %342 = vmatpush1.msra.mxu0 %v132
    %343 = vmatprep.subr.mxu0 %v129
    %344 = vmatpush1.msra.mxu0 %v128
    %345 = vmatprep.subr.mxu0 %v125
    %346 = vmatpush1.msra.mxu0 %v124
    %347 = vmatprep.subr.mxu0 %v121
    %348 = vmatpush1.msra.mxu0 %v120
    %349 = vmatprep.subr.mxu0 0.0
    %350 = vmatpush2.msra.mxu0 0.0
    %351 = vmatprep.subr.mxu0 0.0
    %352 = vmatpush2.msra.mxu0 0.0
    %353 = vmatprep.subr.mxu0 0.0
    %354 = vmatpush2.msra.mxu0 0.0
    %355 = vmatprep.subr.mxu0 0.0
    %356 = vmatpush2.msra.mxu0 0.0
    %357 = vmatprep.subr.mxu0 0.0
    %358 = vmatpush2.msra.mxu0 0.0
    %359 = vmatprep.subr.mxu0 0.0
    %360 = vmatpush2.msra.mxu0 0.0
    %361 = vmatprep.subr.mxu0 0.0
    %362 = vmatpush2.msra.mxu0 0.0
    %363 = vmatprep.subr.mxu0 0.0
    %364 = vmatpush2.msra.mxu0 0.0
    %365 = vmatprep.subr.mxu0 0.0
    %366 = vmatpush2.msra.mxu0 0.0
    %367 = vmatprep.subr.mxu0 0.0
    %368 = vmatpush2.msra.mxu0 0.0
    %369 = vmatprep.subr.mxu0 0.0
    %370 = vmatpush2.msra.mxu0 0.0
    %371 = vmatprep.subr.mxu0 0.0
    %372 = vmatpush2.msra.mxu0 0.0
    %373 = vmatprep.subr.mxu0 0.0
    %374 = vmatpush2.msra.mxu0 0.0
    %375 = vmatprep.subr.mxu0 0.0
    %376 = vmatpush2.msra.mxu0 0.0
    %377 = vmatprep.subr.mxu0 0.0
    %378 = vmatpush2.msra.mxu0 0.0
    %379 = vmatprep.subr.mxu0 0.0
    %380 = vmatpush2.msra.mxu0 0.0
    %381 = vmatprep.mubr.f32.mxu0 0.0
    %382 = vmatmul.mubr.f32.gmra.mxu0 %v110
    %v383 = vpop.f32.mrf.mxu0
    %v384 = vadd.f32 %v195, %v383
    %v385 = vpop.f32.mrf.mxu0
    %v386 = vadd.f32 %v199, %v385
    %387 = vmatprep.mubr.f32.mxu0 0.0
    %388 = vmatmul.mubr.f32.gmra.mxu0 %v111
    %v389 = vpop.f32.mrf.mxu0
    %v390 = vadd.f32 %v195, %v389
    %v391 = vpop.f32.mrf.mxu0
    %v392 = vadd.f32 %v199, %v391
    %393 = vmatprep.mubr.f32.mxu0 0.0
    %394 = vmatmul.mubr.f32.gmra.mxu0 %v112
    %v395 = vpop.f32.mrf.mxu0
    %v396 = vadd.f32 %v195, %v395
    %v397 = vpop.f32.mrf.mxu0
    %v398 = vadd.f32 %v199, %v397
    %399 = vmatprep.mubr.f32.mxu0 0.0
    %400 = vmatmul.mubr.f32.gmra.mxu0 %v113
    %v401 = vpop.f32.mrf.mxu0
    %v402 = vadd.f32 %v195, %v401
    %v403 = vpop.f32.mrf.mxu0
    %v404 = vadd.f32 %v199, %v403
    %405 = vmatprep.mubr.f32.mxu0 0.0
    %406 = vmatmul.mubr.f32.gmra.mxu0 %v114
    %v407 = vpop.f32.mrf.mxu0
    %v408 = vadd.f32 %v195, %v407
    %v409 = vpop.f32.mrf.mxu0
    %v410 = vadd.f32 %v199, %v409
    %411 = vmatprep.mubr.f32.mxu0 0.0
    %412 = vmatmul.mubr.f32.gmra.mxu0 %v115
    %v413 = vpop.f32.mrf.mxu0
    %v414 = vadd.f32 %v195, %v413
    %v415 = vpop.f32.mrf.mxu0
    %v416 = vadd.f32 %v199, %v415
    %417 = vmatprep.mubr.f32.mxu0 0.0
    %418 = vmatmul.mubr.f32.gmra.mxu0 %v116
    %v419 = vpop.f32.mrf.mxu0
    %v420 = vadd.f32 %v195, %v419
    %v421 = vpop.f32.mrf.mxu0
    %v422 = vadd.f32 %v199, %v421
    %423 = vmatprep.mubr.f32.mxu0 0.0
    %424 = vmatmul.mubr.f32.gmra.mxu0 %v117
    %v425 = vpop.f32.mrf.mxu0
    %v426 = vadd.f32 %v195, %v425
    %v427 = vpop.f32.mrf.mxu0
    %v428 = vadd.f32 %v199, %v427
    %429 = vdwg.mxu0
    %430 = vst [vmem:[#allocation3] sm:$0xff] %v271
    %431 = vst [vmem:[#allocation3 + $0x8] sm:$0xff] %v273
    %432 = vst [vmem:[#allocation3 + $0x10] sm:$0xff] %v384
    %433 = vst [vmem:[#allocation3 + $0x18] sm:$0xff] %v386
    %434 = vst [vmem:[#allocation3 + $0x20] sm:$0xff] %v277
    %435 = vst [vmem:[#allocation3 + $0x28] sm:$0xff] %v279
    %436 = vst [vmem:[#allocation3 + $0x30] sm:$0xff] %v390
    %437 = vst [vmem:[#allocation3 + $0x38] sm:$0xff] %v392
    %438 = vst [vmem:[#allocation3 + $0x40] sm:$0xff] %v283
    %439 = vst [vmem:[#allocation3 + $0x48] sm:$0xff] %v285
    %440 = vst [vmem:[#allocation3 + $0x50] sm:$0xff] %v396
    %441 = vst [vmem:[#allocation3 + $0x58] sm:$0xff] %v398
    %442 = vst [vmem:[#allocation3 + $0x60] sm:$0xff] %v289
    %443 = vst [vmem:[#allocation3 + $0x68] sm:$0xff] %v291
    %444 = vst [vmem:[#allocation3 + $0x70] sm:$0xff] %v402
    %445 = vst [vmem:[#allocation3 + $0x78] sm:$0xff] %v404
    %446 = vst [vmem:[#allocation3 + $0x80] sm:$0xff] %v295
    %447 = vst [vmem:[#allocation3 + $0x88] sm:$0xff] %v297
    %448 = vst [vmem:[#allocation3 + $0x90] sm:$0xff] %v408
    %449 = vst [vmem:[#allocation3 + $0x98] sm:$0xff] %v410
    %450 = vst [vmem:[#allocation3 + $0xa0] sm:$0xff] %v301
    %451 = vst [vmem:[#allocation3 + $0xa8] sm:$0xff] %v303
    %452 = vst [vmem:[#allocation3 + $0xb0] sm:$0xff] %v414
    %453 = vst [vmem:[#allocation3 + $0xb8] sm:$0xff] %v416
    %454 = vst [vmem:[#allocation3 + $0xc0] sm:$0xff] %v307
    %455 = vst [vmem:[#allocation3 + $0xc8] sm:$0xff] %v309
    %456 = vst [vmem:[#allocation3 + $0xd0] sm:$0xff] %v420
    %457 = vst [vmem:[#allocation3 + $0xd8] sm:$0xff] %v422
    %458 = vst [vmem:[#allocation3 + $0xe0] sm:$0xff] %v313
    %459 = vst [vmem:[#allocation3 + $0xe8] sm:$0xff] %v315
    %460 = vst [vmem:[#allocation3 + $0xf0] sm:$0xff] %v426
    %461 = vst [vmem:[#allocation3 + $0xf8] sm:$0xff] %v428
    %v462 = vld [vmem:[#allocation3] sm:$0xff]
    %v463 = vld [vmem:[#allocation3 + $0x8] sm:$0xff]
    %v464 = vld [vmem:[#allocation3 + $0x10] sm:$0xff]
    %v465 = vld [vmem:[#allocation3 + $0x18] sm:$0xff]
    %v466 = vld [vmem:[#allocation12] sm:$0xff]
    %v467 = vld [vmem:[#allocation12 + $0x8] sm:$0xff]
    %v468 = vld [vmem:[#allocation12 + $0x10] sm:$0xff]
    %v469 = vld [vmem:[#allocation12 + $0x18] sm:$0xff]
    %v470 = vld [vmem:[#allocation12 + $0x20] sm:$0xff]
    %v471 = vld [vmem:[#allocation12 + $0x28] sm:$0xff]
    %v472 = vld [vmem:[#allocation12 + $0x30] sm:$0xff]
    %v473 = vld [vmem:[#allocation12 + $0x38] sm:$0xff]
    %v474 = vld [vmem:[#allocation12 + $0x40] sm:$0xff]
    %v475 = vld [vmem:[#allocation12 + $0x48] sm:$0xff]
    %v476 = vld [vmem:[#allocation12 + $0x50] sm:$0xff]
    %v477 = vld [vmem:[#allocation12 + $0x58] sm:$0xff]
    %v478 = vld [vmem:[#allocation12 + $0x60] sm:$0xff]
    %v479 = vld [vmem:[#allocation12 + $0x68] sm:$0xff]
    %v480 = vld [vmem:[#allocation12 + $0x70] sm:$0xff]
    %v481 = vld [vmem:[#allocation12 + $0x78] sm:$0xff]
    %v482 = vld [vmem:[#allocation12 + $0x80] sm:$0xff]
    %v483 = vld [vmem:[#allocation12 + $0x88] sm:$0xff]
    %v484 = vld [vmem:[#allocation12 + $0x90] sm:$0xff]
    %v485 = vld [vmem:[#allocation12 + $0x98] sm:$0xff]
    %v486 = vld [vmem:[#allocation12 + $0xa0] sm:$0xff]
    %v487 = vld [vmem:[#allocation12 + $0xa8] sm:$0xff]
    %v488 = vld [vmem:[#allocation12 + $0xb0] sm:$0xff]
    %v489 = vld [vmem:[#allocation12 + $0xb8] sm:$0xff]
    %v490 = vld [vmem:[#allocation12 + $0xc0] sm:$0xff]
    %v491 = vld [vmem:[#allocation12 + $0xc8] sm:$0xff]
    %v492 = vld [vmem:[#allocation12 + $0xd0] sm:$0xff]
    %v493 = vld [vmem:[#allocation12 + $0xd8] sm:$0xff]
    %v494 = vld [vmem:[#allocation12 + $0xe0] sm:$0xff]
    %v495 = vld [vmem:[#allocation12 + $0xe8] sm:$0xff]
    %v496 = vld [vmem:[#allocation12 + $0xf0] sm:$0xff]
    %v497 = vld [vmem:[#allocation12 + $0xf8] sm:$0xff]
    %v498 = vld [vmem:[#allocation12 + $0x100] sm:$0xff]
    %v499 = vld [vmem:[#allocation12 + $0x108] sm:$0xff]
    %v500 = vld [vmem:[#allocation12 + $0x110] sm:$0xff]
    %v501 = vld [vmem:[#allocation12 + $0x118] sm:$0xff]
    %v502 = vld [vmem:[#allocation12 + $0x120] sm:$0xff]
    %v503 = vld [vmem:[#allocation12 + $0x128] sm:$0xff]
    %v504 = vld [vmem:[#allocation12 + $0x130] sm:$0xff]
    %v505 = vld [vmem:[#allocation12 + $0x138] sm:$0xff]
    %v506 = vld [vmem:[#allocation12 + $0x140] sm:$0xff]
    %v507 = vld [vmem:[#allocation12 + $0x148] sm:$0xff]
    %v508 = vld [vmem:[#allocation12 + $0x150] sm:$0xff]
    %v509 = vld [vmem:[#allocation12 + $0x158] sm:$0xff]
    %v510 = vld [vmem:[#allocation12 + $0x160] sm:$0xff]
    %v511 = vld [vmem:[#allocation12 + $0x168] sm:$0xff]
    %v512 = vld [vmem:[#allocation12 + $0x170] sm:$0xff]
    %v513 = vld [vmem:[#allocation12 + $0x178] sm:$0xff]
    %v514 = vld [vmem:[#allocation12 + $0x180] sm:$0xff]
    %v515 = vld [vmem:[#allocation12 + $0x188] sm:$0xff]
    %v516 = vld [vmem:[#allocation12 + $0x190] sm:$0xff]
    %v517 = vld [vmem:[#allocation12 + $0x198] sm:$0xff]
    %v518 = vld [vmem:[#allocation12 + $0x1a0] sm:$0xff]
    %v519 = vld [vmem:[#allocation12 + $0x1a8] sm:$0xff]
    %v520 = vld [vmem:[#allocation12 + $0x1b0] sm:$0xff]
    %v521 = vld [vmem:[#allocation12 + $0x1b8] sm:$0xff]
    %v522 = vld [vmem:[#allocation12 + $0x1c0] sm:$0xff]
    %v523 = vld [vmem:[#allocation12 + $0x1c8] sm:$0xff]
    %v524 = vld [vmem:[#allocation12 + $0x1d0] sm:$0xff]
    %v525 = vld [vmem:[#allocation12 + $0x1d8] sm:$0xff]
    %v526 = vld [vmem:[#allocation12 + $0x1e0] sm:$0xff]
    %v527 = vld [vmem:[#allocation12 + $0x1e8] sm:$0xff]
    %v528 = vld [vmem:[#allocation12 + $0x1f0] sm:$0xff]
    %v529 = vld [vmem:[#allocation12 + $0x1f8] sm:$0xff]
    %530 = vmatprep.subr.mxu0 %v527
    %531 = vmatpush1.msra.mxu0 %v526
    %532 = vmatprep.subr.mxu0 %v523
    %533 = vmatpush1.msra.mxu0 %v522
    %534 = vmatprep.subr.mxu0 %v519
    %535 = vmatpush1.msra.mxu0 %v518
    %536 = vmatprep.subr.mxu0 %v515
    %537 = vmatpush1.msra.mxu0 %v514
    %538 = vmatprep.subr.mxu0 %v511
    %539 = vmatpush1.msra.mxu0 %v510
    %540 = vmatprep.subr.mxu0 %v507
    %541 = vmatpush1.msra.mxu0 %v506
    %542 = vmatprep.subr.mxu0 %v503
    %543 = vmatpush1.msra.mxu0 %v502
    %544 = vmatprep.subr.mxu0 %v499
    %545 = vmatpush1.msra.mxu0 %v498
    %546 = vmatprep.subr.mxu0 %v495
    %547 = vmatpush1.msra.mxu0 %v494
    %548 = vmatprep.subr.mxu0 %v491
    %549 = vmatpush1.msra.mxu0 %v490
    %550 = vmatprep.subr.mxu0 %v487
    %551 = vmatpush1.msra.mxu0 %v486
    %552 = vmatprep.subr.mxu0 %v483
    %553 = vmatpush1.msra.mxu0 %v482
    %554 = vmatprep.subr.mxu0 %v479
    %555 = vmatpush1.msra.mxu0 %v478
    %556 = vmatprep.subr.mxu0 %v475
    %557 = vmatpush1.msra.mxu0 %v474
    %558 = vmatprep.subr.mxu0 %v471
    %559 = vmatpush1.msra.mxu0 %v470
    %560 = vmatprep.subr.mxu0 %v467
    %561 = vmatpush1.msra.mxu0 %v466
    %562 = vmatprep.subr.mxu0 0.0
    %563 = vmatpush2.msra.mxu0 0.0
    %564 = vmatprep.subr.mxu0 0.0
    %565 = vmatpush2.msra.mxu0 0.0
    %566 = vmatprep.subr.mxu0 0.0
    %567 = vmatpush2.msra.mxu0 0.0
    %568 = vmatprep.subr.mxu0 0.0
    %569 = vmatpush2.msra.mxu0 0.0
    %570 = vmatprep.subr.mxu0 0.0
    %571 = vmatpush2.msra.mxu0 0.0
    %572 = vmatprep.subr.mxu0 0.0
    %573 = vmatpush2.msra.mxu0 0.0
    %574 = vmatprep.subr.mxu0 0.0
    %575 = vmatpush2.msra.mxu0 0.0
    %576 = vmatprep.subr.mxu0 0.0
    %577 = vmatpush2.msra.mxu0 0.0
    %578 = vmatprep.subr.mxu0 0.0
    %579 = vmatpush2.msra.mxu0 0.0
    %580 = vmatprep.subr.mxu0 0.0
    %581 = vmatpush2.msra.mxu0 0.0
    %582 = vmatprep.subr.mxu0 0.0
    %583 = vmatpush2.msra.mxu0 0.0
    %584 = vmatprep.subr.mxu0 0.0
    %585 = vmatpush2.msra.mxu0 0.0
    %586 = vmatprep.subr.mxu0 0.0
    %587 = vmatpush2.msra.mxu0 0.0
    %588 = vmatprep.subr.mxu0 0.0
    %589 = vmatpush2.msra.mxu0 0.0
    %590 = vmatprep.subr.mxu0 0.0
    %591 = vmatpush2.msra.mxu0 0.0
    %592 = vmatprep.subr.mxu0 0.0
    %593 = vmatpush2.msra.mxu0 0.0
    %594 = vmatprep.mubr.f32.mxu0 0.0
    %595 = vmatmul.mubr.f32.gmra.mxu0 0.0
    %v596 = vpop.f32.mrf.mxu0
    %v597 = vadd.f32 0.0, %v596
    %v598 = vpop.f32.mrf.mxu0
    %v599 = vadd.f32 0.0, %v598
    %600 = vdwg.mxu0
    %601 = vmatprep.subr.mxu0 %v529
    %602 = vmatpush1.msra.mxu0 %v528
    %603 = vmatprep.subr.mxu0 %v525
    %604 = vmatpush1.msra.mxu0 %v524
    %605 = vmatprep.subr.mxu0 %v521
    %606 = vmatpush1.msra.mxu0 %v520
    %607 = vmatprep.subr.mxu0 %v517
    %608 = vmatpush1.msra.mxu0 %v516
    %609 = vmatprep.subr.mxu0 %v513
    %610 = vmatpush1.msra.mxu0 %v512
    %611 = vmatprep.subr.mxu0 %v509
    %612 = vmatpush1.msra.mxu0 %v508
    %613 = vmatprep.subr.mxu0 %v505
    %614 = vmatpush1.msra.mxu0 %v504
    %615 = vmatprep.subr.mxu0 %v501
    %616 = vmatpush1.msra.mxu0 %v500
    %617 = vmatprep.subr.mxu0 %v497
    %618 = vmatpush1.msra.mxu0 %v496
    %619 = vmatprep.subr.mxu0 %v493
    %620 = vmatpush1.msra.mxu0 %v492
    %621 = vmatprep.subr.mxu0 %v489
    %622 = vmatpush1.msra.mxu0 %v488
    %623 = vmatprep.subr.mxu0 %v485
    %624 = vmatpush1.msra.mxu0 %v484
    %625 = vmatprep.subr.mxu0 %v481
    %626 = vmatpush1.msra.mxu0 %v480
    %627 = vmatprep.subr.mxu0 %v477
    %628 = vmatpush1.msra.mxu0 %v476
    %629 = vmatprep.subr.mxu0 %v473
    %630 = vmatpush1.msra.mxu0 %v472
    %631 = vmatprep.subr.mxu0 %v469
    %632 = vmatpush1.msra.mxu0 %v468
    %633 = vmatprep.subr.mxu0 0.0
    %634 = vmatpush2.msra.mxu0 0.0
    %635 = vmatprep.subr.mxu0 0.0
    %636 = vmatpush2.msra.mxu0 0.0
    %637 = vmatprep.subr.mxu0 0.0
    %638 = vmatpush2.msra.mxu0 0.0
    %639 = vmatprep.subr.mxu0 0.0
    %640 = vmatpush2.msra.mxu0 0.0
    %641 = vmatprep.subr.mxu0 0.0
    %642 = vmatpush2.msra.mxu0 0.0
    %643 = vmatprep.subr.mxu0 0.0
    %644 = vmatpush2.msra.mxu0 0.0
    %645 = vmatprep.subr.mxu0 0.0
    %646 = vmatpush2.msra.mxu0 0.0
    %647 = vmatprep.subr.mxu0 0.0
    %648 = vmatpush2.msra.mxu0 0.0
    %649 = vmatprep.subr.mxu0 0.0
    %650 = vmatpush2.msra.mxu0 0.0
    %651 = vmatprep.subr.mxu0 0.0
    %652 = vmatpush2.msra.mxu0 0.0
    %653 = vmatprep.subr.mxu0 0.0
    %654 = vmatpush2.msra.mxu0 0.0
    %655 = vmatprep.subr.mxu0 0.0
    %656 = vmatpush2.msra.mxu0 0.0
    %657 = vmatprep.subr.mxu0 0.0
    %658 = vmatpush2.msra.mxu0 0.0
    %659 = vmatprep.subr.mxu0 0.0
    %660 = vmatpush2.msra.mxu0 0.0
    %661 = vmatprep.subr.mxu0 0.0
    %662 = vmatpush2.msra.mxu0 0.0
    %663 = vmatprep.subr.mxu0 0.0
    %664 = vmatpush2.msra.mxu0 0.0
    %665 = vmatprep.mubr.f32.mxu0 0.0
    %666 = vmatmul.mubr.f32.gmra.mxu0 0.0
    %v667 = vpop.f32.mrf.mxu0
    %v668 = vadd.f32 0.0, %v667
    %v669 = vpop.f32.mrf.mxu0
    %v670 = vadd.f32 0.0, %v669
    %671 = vdwg.mxu0
    %v672 = vadd.f32 %v462, %v597
    %v673 = vadd.f32 %v463, %v599
    %v674 = vadd.f32 %v464, %v668
    %v675 = vadd.f32 %v465, %v670
    %v676 = vxor.u32 %v672, 2147483648
    %v677 = vmul.f32 %v676, 1.442695
    %v678 = vpow.pop %v677
    %v679 = vadd.f32 %v678, 1.0
    %v680 = vrcp.pop %v679
    %v681 = vmul.f32 1.0, %v680
    %v682 = vxor.u32 %v673, 2147483648
    %v683 = vmul.f32 %v682, 1.442695
    %v684 = vpow.pop %v683
    %v685 = vadd.f32 %v684, 1.0
    %v686 = vrcp.pop %v685
    %v687 = vmul.f32 1.0, %v686
    %v688 = vtanh.pop %v674
    %v689 = vxor.u32 %v675, 2147483648
    %v690 = vmul.f32 %v689, 1.442695
    %v691 = vpow.pop %v690
    %v692 = vadd.f32 %v691, 1.0
    %v693 = vrcp.pop %v692
    %v694 = vmul.f32 1.0, %v693
    %v695 = vmul.f32 %v687, 0.0
    %v696 = vmul.f32 %v681, %v688
    %v697 = vadd.f32 %v695, %v696
    %v698 = vtanh.pop %v697
    %v699 = vmul.f32 %v694, %v698
    %700 = vst [vmem:[#allocation2] sm:$0xff] %v699
    %s701 = scalar_lea.vmem [#allocation3], 32
    %v702 = vld [vmem:[%s701] sm:$0xff]
    %v703 = vld [vmem:[%s701 + $0x8] sm:$0xff]
    %v704 = vld [vmem:[%s701 + $0x10] sm:$0xff]
    %v705 = vld [vmem:[%s701 + $0x18] sm:$0xff]
    %v706 = vld [vmem:[#allocation12] sm:$0xff]
    %v707 = vld [vmem:[#allocation12 + $0x8] sm:$0xff]
    %v708 = vld [vmem:[#allocation12 + $0x10] sm:$0xff]
    %v709 = vld [vmem:[#allocation12 + $0x18] sm:$0xff]
    %v710 = vld [vmem:[#allocation12 + $0x20] sm:$0xff]
    %v711 = vld [vmem:[#allocation12 + $0x28] sm:$0xff]
    %v712 = vld [vmem:[#allocation12 + $0x30] sm:$0xff]
    %v713 = vld [vmem:[#allocation12 + $0x38] sm:$0xff]
    %v714 = vld [vmem:[#allocation12 + $0x40] sm:$0xff]
    %v715 = vld [vmem:[#allocation12 + $0x48] sm:$0xff]
    %v716 = vld [vmem:[#allocation12 + $0x50] sm:$0xff]
    %v717 = vld [vmem:[#allocation12 + $0x58] sm:$0xff]
    %v718 = vld [vmem:[#allocation12 + $0x60] sm:$0xff]
    %v719 = vld [vmem:[#allocation12 + $0x68] sm:$0xff]
    %v720 = vld [vmem:[#allocation12 + $0x70] sm:$0xff]
    %v721 = vld [vmem:[#allocation12 + $0x78] sm:$0xff]
    %v722 = vld [vmem:[#allocation12 + $0x80] sm:$0xff]
    %v723 = vld [vmem:[#allocation12 + $0x88] sm:$0xff]
    %v724 = vld [vmem:[#allocation12 + $0x90] sm:$0xff]
    %v725 = vld [vmem:[#allocation12 + $0x98] sm:$0xff]
    %v726 = vld [vmem:[#allocation12 + $0xa0] sm:$0xff]
    %v727 = vld [vmem:[#allocation12 + $0xa8] sm:$0xff]
    %v728 = vld [vmem:[#allocation12 + $0xb0] sm:$0xff]
    %v729 = vld [vmem:[#allocation12 + $0xb8] sm:$0xff]
    %v730 = vld [vmem:[#allocation12 + $0xc0] sm:$0xff]
    %v731 = vld [vmem:[#allocation12 + $0xc8] sm:$0xff]
    %v732 = vld [vmem:[#allocation12 + $0xd0] sm:$0xff]
    %v733 = vld [vmem:[#allocation12 + $0xd8] sm:$0xff]
    %v734 = vld [vmem:[#allocation12 + $0xe0] sm:$0xff]
    %v735 = vld [vmem:[#allocation12 + $0xe8] sm:$0xff]
    %v736 = vld [vmem:[#allocation12 + $0xf0] sm:$0xff]
    %v737 = vld [vmem:[#allocation12 + $0xf8] sm:$0xff]
    %v738 = vld [vmem:[#allocation12 + $0x100] sm:$0xff]
    %v739 = vld [vmem:[#allocation12 + $0x108] sm:$0xff]
    %v740 = vld [vmem:[#allocation12 + $0x110] sm:$0xff]
    %v741 = vld [vmem:[#allocation12 + $0x118] sm:$0xff]
    %v742 = vld [vmem:[#allocation12 + $0x120] sm:$0xff]
    %v743 = vld [vmem:[#allocation12 + $0x128] sm:$0xff]
    %v744 = vld [vmem:[#allocation12 + $0x130] sm:$0xff]
    %v745 = vld [vmem:[#allocation12 + $0x138] sm:$0xff]
    %v746 = vld [vmem:[#allocation12 + $0x140] sm:$0xff]
    %v747 = vld [vmem:[#allocation12 + $0x148] sm:$0xff]
    %v748 = vld [vmem:[#allocation12 + $0x150] sm:$0xff]
    %v749 = vld [vmem:[#allocation12 + $0x158] sm:$0xff]
    %v750 = vld [vmem:[#allocation12 + $0x160] sm:$0xff]
    %v751 = vld [vmem:[#allocation12 + $0x168] sm:$0xff]
    %v752 = vld [vmem:[#allocation12 + $0x170] sm:$0xff]
    %v753 = vld [vmem:[#allocation12 + $0x178] sm:$0xff]
    %v754 = vld [vmem:[#allocation12 + $0x180] sm:$0xff]
    %v755 = vld [vmem:[#allocation12 + $0x188] sm:$0xff]
    %v756 = vld [vmem:[#allocation12 + $0x190] sm:$0xff]
    %v757 = vld [vmem:[#allocation12 + $0x198] sm:$0xff]
    %v758 = vld [vmem:[#allocation12 + $0x1a0] sm:$0xff]
    %v759 = vld [vmem:[#allocation12 + $0x1a8] sm:$0xff]
    %v760 = vld [vmem:[#allocation12 + $0x1b0] sm:$0xff]
    %v761 = vld [vmem:[#allocation12 + $0x1b8] sm:$0xff]
    %v762 = vld [vmem:[#allocation12 + $0x1c0] sm:$0xff]
    %v763 = vld [vmem:[#allocation12 + $0x1c8] sm:$0xff]
    %v764 = vld [vmem:[#allocation12 + $0x1d0] sm:$0xff]
    %v765 = vld [vmem:[#allocation12 + $0x1d8] sm:$0xff]
    %v766 = vld [vmem:[#allocation12 + $0x1e0] sm:$0xff]
    %v767 = vld [vmem:[#allocation12 + $0x1e8] sm:$0xff]
    %v768 = vld [vmem:[#allocation12 + $0x1f0] sm:$0xff]
    %v769 = vld [vmem:[#allocation12 + $0x1f8] sm:$0xff]
    %770 = vmatprep.subr.mxu0 %v767
    %771 = vmatpush1.msra.mxu0 %v766
    %772 = vmatprep.subr.mxu0 %v763
    %773 = vmatpush1.msra.mxu0 %v762
    %774 = vmatprep.subr.mxu0 %v759
    %775 = vmatpush1.msra.mxu0 %v758
    %776 = vmatprep.subr.mxu0 %v755
    %777 = vmatpush1.msra.mxu0 %v754
    %778 = vmatprep.subr.mxu0 %v751
    %779 = vmatpush1.msra.mxu0 %v750
    %780 = vmatprep.subr.mxu0 %v747
    %781 = vmatpush1.msra.mxu0 %v746
    %782 = vmatprep.subr.mxu0 %v743
    %783 = vmatpush1.msra.mxu0 %v742
    %784 = vmatprep.subr.mxu0 %v739
    %785 = vmatpush1.msra.mxu0 %v738
    %786 = vmatprep.subr.mxu0 %v735
    %787 = vmatpush1.msra.mxu0 %v734
    %788 = vmatprep.subr.mxu0 %v731
    %789 = vmatpush1.msra.mxu0 %v730
    %790 = vmatprep.subr.mxu0 %v727
    %791 = vmatpush1.msra.mxu0 %v726
    %792 = vmatprep.subr.mxu0 %v723
    %793 = vmatpush1.msra.mxu0 %v722
    %794 = vmatprep.subr.mxu0 %v719
    %795 = vmatpush1.msra.mxu0 %v718
    %796 = vmatprep.subr.mxu0 %v715
    %797 = vmatpush1.msra.mxu0 %v714
    %798 = vmatprep.subr.mxu0 %v711
    %799 = vmatpush1.msra.mxu0 %v710
    %800 = vmatprep.subr.mxu0 %v707
    %801 = vmatpush1.msra.mxu0 %v706
    %802 = vmatprep.subr.mxu0 0.0
    %803 = vmatpush2.msra.mxu0 0.0
    %804 = vmatprep.subr.mxu0 0.0
    %805 = vmatpush2.msra.mxu0 0.0
    %806 = vmatprep.subr.mxu0 0.0
    %807 = vmatpush2.msra.mxu0 0.0
    %808 = vmatprep.subr.mxu0 0.0
    %809 = vmatpush2.msra.mxu0 0.0
    %810 = vmatprep.subr.mxu0 0.0
    %811 = vmatpush2.msra.mxu0 0.0
    %812 = vmatprep.subr.mxu0 0.0
    %813 = vmatpush2.msra.mxu0 0.0
    %814 = vmatprep.subr.mxu0 0.0
    %815 = vmatpush2.msra.mxu0 0.0
    %816 = vmatprep.subr.mxu0 0.0
    %817 = vmatpush2.msra.mxu0 0.0
    %818 = vmatprep.subr.mxu0 0.0
    %819 = vmatpush2.msra.mxu0 0.0
    %820 = vmatprep.subr.mxu0 0.0
    %821 = vmatpush2.msra.mxu0 0.0
    %822 = vmatprep.subr.mxu0 0.0
    %823 = vmatpush2.msra.mxu0 0.0
    %824 = vmatprep.subr.mxu0 0.0
    %825 = vmatpush2.msra.mxu0 0.0
    %826 = vmatprep.subr.mxu0 0.0
    %827 = vmatpush2.msra.mxu0 0.0
    %828 = vmatprep.subr.mxu0 0.0
    %829 = vmatpush2.msra.mxu0 0.0
    %830 = vmatprep.subr.mxu0 0.0
    %831 = vmatpush2.msra.mxu0 0.0
    %832 = vmatprep.subr.mxu0 0.0
    %833 = vmatpush2.msra.mxu0 0.0
    %834 = vmatprep.mubr.f32.mxu0 0.0
    %835 = vmatmul.mubr.f32.gmra.mxu0 %v699
    %v836 = vpop.f32.mrf.mxu0
    %v837 = vadd.f32 0.0, %v836
    %v838 = vpop.f32.mrf.mxu0
    %v839 = vadd.f32 0.0, %v838
    %840 = vdwg.mxu0
    %841 = vmatprep.subr.mxu0 %v769
    %842 = vmatpush1.msra.mxu0 %v768
    %843 = vmatprep.subr.mxu0 %v765
    %844 = vmatpush1.msra.mxu0 %v764
    %845 = vmatprep.subr.mxu0 %v761
    %846 = vmatpush1.msra.mxu0 %v760
    %847 = vmatprep.subr.mxu0 %v757
    %848 = vmatpush1.msra.mxu0 %v756
    %849 = vmatprep.subr.mxu0 %v753
    %850 = vmatpush1.msra.mxu0 %v752
    %851 = vmatprep.subr.mxu0 %v749
    %852 = vmatpush1.msra.mxu0 %v748
    %853 = vmatprep.subr.mxu0 %v745
    %854 = vmatpush1.msra.mxu0 %v744
    %855 = vmatprep.subr.mxu0 %v741
    %856 = vmatpush1.msra.mxu0 %v740
    %857 = vmatprep.subr.mxu0 %v737
    %858 = vmatpush1.msra.mxu0 %v736
    %859 = vmatprep.subr.mxu0 %v733
    %860 = vmatpush1.msra.mxu0 %v732
    %861 = vmatprep.subr.mxu0 %v729
    %862 = vmatpush1.msra.mxu0 %v728
    %863 = vmatprep.subr.mxu0 %v725
    %864 = vmatpush1.msra.mxu0 %v724
    %865 = vmatprep.subr.mxu0 %v721
    %866 = vmatpush1.msra.mxu0 %v720
    %867 = vmatprep.subr.mxu0 %v717
    %868 = vmatpush1.msra.mxu0 %v716
    %869 = vmatprep.subr.mxu0 %v713
    %870 = vmatpush1.msra.mxu0 %v712
    %871 = vmatprep.subr.mxu0 %v709
    %872 = vmatpush1.msra.mxu0 %v708
    %873 = vmatprep.subr.mxu0 0.0
    %874 = vmatpush2.msra.mxu0 0.0
    %875 = vmatprep.subr.mxu0 0.0
    %876 = vmatpush2.msra.mxu0 0.0
    %877 = vmatprep.subr.mxu0 0.0
    %878 = vmatpush2.msra.mxu0 0.0
    %879 = vmatprep.subr.mxu0 0.0
    %880 = vmatpush2.msra.mxu0 0.0
    %881 = vmatprep.subr.mxu0 0.0
    %882 = vmatpush2.msra.mxu0 0.0
    %883 = vmatprep.subr.mxu0 0.0
    %884 = vmatpush2.msra.mxu0 0.0
    %885 = vmatprep.subr.mxu0 0.0
    %886 = vmatpush2.msra.mxu0 0.0
    %887 = vmatprep.subr.mxu0 0.0
    %888 = vmatpush2.msra.mxu0 0.0
    %889 = vmatprep.subr.mxu0 0.0
    %890 = vmatpush2.msra.mxu0 0.0
    %891 = vmatprep.subr.mxu0 0.0
    %892 = vmatpush2.msra.mxu0 0.0
    %893 = vmatprep.subr.mxu0 0.0
    %894 = vmatpush2.msra.mxu0 0.0
    %895 = vmatprep.subr.mxu0 0.0
    %896 = vmatpush2.msra.mxu0 0.0
    %897 = vmatprep.subr.mxu0 0.0
    %898 = vmatpush2.msra.mxu0 0.0
    %899 = vmatprep.subr.mxu0 0.0
    %900 = vmatpush2.msra.mxu0 0.0
    %901 = vmatprep.subr.mxu0 0.0
    %902 = vmatpush2.msra.mxu0 0.0
    %903 = vmatprep.subr.mxu0 0.0
    %904 = vmatpush2.msra.mxu0 0.0
    %905 = vmatprep.mubr.f32.mxu0 0.0
    %906 = vmatmul.mubr.f32.gmra.mxu0 %v699
    %v907 = vpop.f32.mrf.mxu0
    %v908 = vadd.f32 0.0, %v907
    %v909 = vpop.f32.mrf.mxu0
    %v910 = vadd.f32 0.0, %v909
    %911 = vdwg.mxu0
    %v912 = vadd.f32 %v702, %v837
    %v913 = vadd.f32 %v703, %v839
    %v914 = vadd.f32 %v704, %v908
    %v915 = vadd.f32 %v705, %v910
    %v916 = vxor.u32 %v912, 2147483648
    %v917 = vmul.f32 %v916, 1.442695
    %v918 = vpow.pop %v917
    %v919 = vadd.f32 %v918, 1.0
    %v920 = vrcp.pop %v919
    %v921 = vmul.f32 1.0, %v920
    %v922 = vxor.u32 %v913, 2147483648
    %v923 = vmul.f32 %v922, 1.442695
    %v924 = vpow.pop %v923
    %v925 = vadd.f32 %v924, 1.0
    %v926 = vrcp.pop %v925
    %v927 = vmul.f32 1.0, %v926
    %v928 = vtanh.pop %v914
    %v929 = vxor.u32 %v915, 2147483648
    %v930 = vmul.f32 %v929, 1.442695
    %v931 = vpow.pop %v930
    %v932 = vadd.f32 %v931, 1.0
    %v933 = vrcp.pop %v932
    %v934 = vmul.f32 1.0, %v933
    %v935 = vmul.f32 %v927, %v697
    %v936 = vmul.f32 %v921, %v928
    %v937 = vadd.f32 %v935, %v936
    %v938 = vtanh.pop %v937
    %v939 = vmul.f32 %v934, %v938
    %s940 = scalar_lea.vmem [#allocation2], 8
    %941 = vst [vmem:[%s940] sm:$0xff] %v939
    %s942 = scalar_lea.vmem [#allocation3], 64
    %v943 = vld [vmem:[%s942] sm:$0xff]
    %v944 = vld [vmem:[%s942 + $0x8] sm:$0xff]
    %v945 = vld [vmem:[%s942 + $0x10] sm:$0xff]
    %v946 = vld [vmem:[%s942 + $0x18] sm:$0xff]
    %v947 = vld [vmem:[#allocation12] sm:$0xff]
    %v948 = vld [vmem:[#allocation12 + $0x8] sm:$0xff]
    %v949 = vld [vmem:[#allocation12 + $0x10] sm:$0xff]
    %v950 = vld [vmem:[#allocation12 + $0x18] sm:$0xff]
    %v951 = vld [vmem:[#allocation12 + $0x20] sm:$0xff]
    %v952 = vld [vmem:[#allocation12 + $0x28] sm:$0xff]
    %v953 = vld [vmem:[#allocation12 + $0x30] sm:$0xff]
    %v954 = vld [vmem:[#allocation12 + $0x38] sm:$0xff]
    %v955 = vld [vmem:[#allocation12 + $0x40] sm:$0xff]
    %v956 = vld [vmem:[#allocation12 + $0x48] sm:$0xff]
    %v957 = vld [vmem:[#allocation12 + $0x50] sm:$0xff]
    %v958 = vld [vmem:[#allocation12 + $0x58] sm:$0xff]
    %v959 = vld [vmem:[#allocation12 + $0x60] sm:$0xff]
    %v960 = vld [vmem:[#allocation12 + $0x68] sm:$0xff]
    %v961 = vld [vmem:[#allocation12 + $0x70] sm:$0xff]
    %v962 = vld [vmem:[#allocation12 + $0x78] sm:$0xff]
    %v963 = vld [vmem:[#allocation12 + $0x80] sm:$0xff]
    %v964 = vld [vmem:[#allocation12 + $0x88] sm:$0xff]
    %v965 = vld [vmem:[#allocation12 + $0x90] sm:$0xff]
    %v966 = vld [vmem:[#allocation12 + $0x98] sm:$0xff]
    %v967 = vld [vmem:[#allocation12 + $0xa0] sm:$0xff]
    %v968 = vld [vmem:[#allocation12 + $0xa8] sm:$0xff]
    %v969 = vld [vmem:[#allocation12 + $0xb0] sm:$0xff]
    %v970 = vld [vmem:[#allocation12 + $0xb8] sm:$0xff]
    %v971 = vld [vmem:[#allocation12 + $0xc0] sm:$0xff]
    %v972 = vld [vmem:[#allocation12 + $0xc8] sm:$0xff]
    %v973 = vld [vmem:[#allocation12 + $0xd0] sm:$0xff]
    %v974 = vld [vmem:[#allocation12 + $0xd8] sm:$0xff]
    %v975 = vld [vmem:[#allocation12 + $0xe0] sm:$0xff]
    %v976 = vld [vmem:[#allocation12 + $0xe8] sm:$0xff]
    %v977 = vld [vmem:[#allocation12 + $0xf0] sm:$0xff]
    %v978 = vld [vmem:[#allocation12 + $0xf8] sm:$0xff]
    %v979 = vld [vmem:[#allocation12 + $0x100] sm:$0xff]
    %v980 = vld [vmem:[#allocation12 + $0x108] sm:$0xff]
    %v981 = vld [vmem:[#allocation12 + $0x110] sm:$0xff]
    %v982 = vld [vmem:[#allocation12 + $0x118] sm:$0xff]
    %v983 = vld [vmem:[#allocation12 + $0x120] sm:$0xff]
    %v984 = vld [vmem:[#allocation12 + $0x128] sm:$0xff]
    %v985 = vld [vmem:[#allocation12 + $0x130] sm:$0xff]
    %v986 = vld [vmem:[#allocation12 + $0x138] sm:$0xff]
    %v987 = vld [vmem:[#allocation12 + $0x140] sm:$0xff]
    %v988 = vld [vmem:[#allocation12 + $0x148] sm:$0xff]
    %v989 = vld [vmem:[#allocation12 + $0x150] sm:$0xff]
    %v990 = vld [vmem:[#allocation12 + $0x158] sm:$0xff]
    %v991 = vld [vmem:[#allocation12 + $0x160] sm:$0xff]
    %v992 = vld [vmem:[#allocation12 + $0x168] sm:$0xff]
    %v993 = vld [vmem:[#allocation12 + $0x170] sm:$0xff]
    %v994 = vld [vmem:[#allocation12 + $0x178] sm:$0xff]
    %v995 = vld [vmem:[#allocation12 + $0x180] sm:$0xff]
    %v996 = vld [vmem:[#allocation12 + $0x188] sm:$0xff]
    %v997 = vld [vmem:[#allocation12 + $0x190] sm:$0xff]
    %v998 = vld [vmem:[#allocation12 + $0x198] sm:$0xff]
    %v999 = vld [vmem:[#allocation12 + $0x1a0] sm:$0xff]
    %v1000 = vld [vmem:[#allocation12 + $0x1a8] sm:$0xff]
    %v1001 = vld [vmem:[#allocation12 + $0x1b0] sm:$0xff]
    %v1002 = vld [vmem:[#allocation12 + $0x1b8] sm:$0xff]
    %v1003 = vld [vmem:[#allocation12 + $0x1c0] sm:$0xff]
    %v1004 = vld [vmem:[#allocation12 + $0x1c8] sm:$0xff]
    %v1005 = vld [vmem:[#allocation12 + $0x1d0] sm:$0xff]
    %v1006 = vld [vmem:[#allocation12 + $0x1d8] sm:$0xff]
    %v1007 = vld [vmem:[#allocation12 + $0x1e0] sm:$0xff]
    %v1008 = vld [vmem:[#allocation12 + $0x1e8] sm:$0xff]
    %v1009 = vld [vmem:[#allocation12 + $0x1f0] sm:$0xff]
    %v1010 = vld [vmem:[#allocation12 + $0x1f8] sm:$0xff]
    %1011 = vmatprep.subr.mxu0 %v1008
    %1012 = vmatpush1.msra.mxu0 %v1007
    %1013 = vmatprep.subr.mxu0 %v1004
    %1014 = vmatpush1.msra.mxu0 %v1003
    %1015 = vmatprep.subr.mxu0 %v1000
    %1016 = vmatpush1.msra.mxu0 %v999
    %1017 = vmatprep.subr.mxu0 %v996
    %1018 = vmatpush1.msra.mxu0 %v995
    %1019 = vmatprep.subr.mxu0 %v992
    %1020 = vmatpush1.msra.mxu0 %v991
    %1021 = vmatprep.subr.mxu0 %v988
    %1022 = vmatpush1.msra.mxu0 %v987
    %1023 = vmatprep.subr.mxu0 %v984
    %1024 = vmatpush1.msra.mxu0 %v983
    %1025 = vmatprep.subr.mxu0 %v980
    %1026 = vmatpush1.msra.mxu0 %v979
    %1027 = vmatprep.subr.mxu0 %v976
    %1028 = vmatpush1.msra.mxu0 %v975
    %1029 = vmatprep.subr.mxu0 %v972
    %1030 = vmatpush1.msra.mxu0 %v971
    %1031 = vmatprep.subr.mxu0 %v968
    %1032 = vmatpush1.msra.mxu0 %v967
    %1033 = vmatprep.subr.mxu0 %v964
    %1034 = vmatpush1.msra.mxu0 %v963
    %1035 = vmatprep.subr.mxu0 %v960
    %1036 = vmatpush1.msra.mxu0 %v959
    %1037 = vmatprep.subr.mxu0 %v956
    %1038 = vmatpush1.msra.mxu0 %v955
    %1039 = vmatprep.subr.mxu0 %v952
    %1040 = vmatpush1.msra.mxu0 %v951
    %1041 = vmatprep.subr.mxu0 %v948
    %1042 = vmatpush1.msra.mxu0 %v947
    %1043 = vmatprep.subr.mxu0 0.0
    %1044 = vmatpush2.msra.mxu0 0.0
    %1045 = vmatprep.subr.mxu0 0.0
    %1046 = vmatpush2.msra.mxu0 0.0
    %1047 = vmatprep.subr.mxu0 0.0
    %1048 = vmatpush2.msra.mxu0 0.0
    %1049 = vmatprep.subr.mxu0 0.0
    %1050 = vmatpush2.msra.mxu0 0.0
    %1051 = vmatprep.subr.mxu0 0.0
    %1052 = vmatpush2.msra.mxu0 0.0
    %1053 = vmatprep.subr.mxu0 0.0
    %1054 = vmatpush2.msra.mxu0 0.0
    %1055 = vmatprep.subr.mxu0 0.0
    %1056 = vmatpush2.msra.mxu0 0.0
    %1057 = vmatprep.subr.mxu0 0.0
    %1058 = vmatpush2.msra.mxu0 0.0
    %1059 = vmatprep.subr.mxu0 0.0
    %1060 = vmatpush2.msra.mxu0 0.0
    %1061 = vmatprep.subr.mxu0 0.0
    %1062 = vmatpush2.msra.mxu0 0.0
    %1063 = vmatprep.subr.mxu0 0.0
    %1064 = vmatpush2.msra.mxu0 0.0
    %1065 = vmatprep.subr.mxu0 0.0
    %1066 = vmatpush2.msra.mxu0 0.0
    %1067 = vmatprep.subr.mxu0 0.0
    %1068 = vmatpush2.msra.mxu0 0.0
    %1069 = vmatprep.subr.mxu0 0.0
    %1070 = vmatpush2.msra.mxu0 0.0
    %1071 = vmatprep.subr.mxu0 0.0
    %1072 = vmatpush2.msra.mxu0 0.0
    %1073 = vmatprep.subr.mxu0 0.0
    %1074 = vmatpush2.msra.mxu0 0.0
    %1075 = vmatprep.mubr.f32.mxu0 0.0
    %1076 = vmatmul.mubr.f32.gmra.mxu0 %v939
    %v1077 = vpop.f32.mrf.mxu0
    %v1078 = vadd.f32 0.0, %v1077
    %v1079 = vpop.f32.mrf.mxu0
    %v1080 = vadd.f32 0.0, %v1079
    %1081 = vdwg.mxu0
    %1082 = vmatprep.subr.mxu0 %v1010
    %1083 = vmatpush1.msra.mxu0 %v1009
    %1084 = vmatprep.subr.mxu0 %v1006
    %1085 = vmatpush1.msra.mxu0 %v1005
    %1086 = vmatprep.subr.mxu0 %v1002
    %1087 = vmatpush1.msra.mxu0 %v1001
    %1088 = vmatprep.subr.mxu0 %v998
    %1089 = vmatpush1.msra.mxu0 %v997
    %1090 = vmatprep.subr.mxu0 %v994
    %1091 = vmatpush1.msra.mxu0 %v993
    %1092 = vmatprep.subr.mxu0 %v990
    %1093 = vmatpush1.msra.mxu0 %v989
    %1094 = vmatprep.subr.mxu0 %v986
    %1095 = vmatpush1.msra.mxu0 %v985
    %1096 = vmatprep.subr.mxu0 %v982
    %1097 = vmatpush1.msra.mxu0 %v981
    %1098 = vmatprep.subr.mxu0 %v978
    %1099 = vmatpush1.msra.mxu0 %v977
    %1100 = vmatprep.subr.mxu0 %v974
    %1101 = vmatpush1.msra.mxu0 %v973
    %1102 = vmatprep.subr.mxu0 %v970
    %1103 = vmatpush1.msra.mxu0 %v969
    %1104 = vmatprep.subr.mxu0 %v966
    %1105 = vmatpush1.msra.mxu0 %v965
    %1106 = vmatprep.subr.mxu0 %v962
    %1107 = vmatpush1.msra.mxu0 %v961
    %1108 = vmatprep.subr.mxu0 %v958
    %1109 = vmatpush1.msra.mxu0 %v957
    %1110 = vmatprep.subr.mxu0 %v954
    %1111 = vmatpush1.msra.mxu0 %v953
    %1112 = vmatprep.subr.mxu0 %v950
    %1113 = vmatpush1.msra.mxu0 %v949
    %1114 = vmatprep.subr.mxu0 0.0
    %1115 = vmatpush2.msra.mxu0 0.0
    %1116 = vmatprep.subr.mxu0 0.0
    %1117 = vmatpush2.msra.mxu0 0.0
    %1118 = vmatprep.subr.mxu0 0.0
    %1119 = vmatpush2.msra.mxu0 0.0
    %1120 = vmatprep.subr.mxu0 0.0
    %1121 = vmatpush2.msra.mxu0 0.0
    %1122 = vmatprep.subr.mxu0 0.0
    %1123 = vmatpush2.msra.mxu0 0.0
    %1124 = vmatprep.subr.mxu0 0.0
    %1125 = vmatpush2.msra.mxu0 0.0
    %1126 = vmatprep.subr.mxu0 0.0
    %1127 = vmatpush2.msra.mxu0 0.0
    %1128 = vmatprep.subr.mxu0 0.0
    %1129 = vmatpush2.msra.mxu0 0.0
    %1130 = vmatprep.subr.mxu0 0.0
    %1131 = vmatpush2.msra.mxu0 0.0
    %1132 = vmatprep.subr.mxu0 0.0
    %1133 = vmatpush2.msra.mxu0 0.0
    %1134 = vmatprep.subr.mxu0 0.0
    %1135 = vmatpush2.msra.mxu0 0.0
    %1136 = vmatprep.subr.mxu0 0.0
    %1137 = vmatpush2.msra.mxu0 0.0
    %1138 = vmatprep.subr.mxu0 0.0
    %1139 = vmatpush2.msra.mxu0 0.0
    %1140 = vmatprep.subr.mxu0 0.0
    %1141 = vmatpush2.msra.mxu0 0.0
    %1142 = vmatprep.subr.mxu0 0.0
    %1143 = vmatpush2.msra.mxu0 0.0
    %1144 = vmatprep.subr.mxu0 0.0
    %1145 = vmatpush2.msra.mxu0 0.0
    %1146 = vmatprep.mubr.f32.mxu0 0.0
    %1147 = vmatmul.mubr.f32.gmra.mxu0 %v939
    %v1148 = vpop.f32.mrf.mxu0
    %v1149 = vadd.f32 0.0, %v1148
    %v1150 = vpop.f32.mrf.mxu0
    %v1151 = vadd.f32 0.0, %v1150
    %1152 = vdwg.mxu0
    %v1153 = vadd.f32 %v943, %v1078
    %v1154 = vadd.f32 %v944, %v1080
    %v1155 = vadd.f32 %v945, %v1149
    %v1156 = vadd.f32 %v946, %v1151
    %v1157 = vxor.u32 %v1153, 2147483648
    %v1158 = vmul.f32 %v1157, 1.442695
    %v1159 = vpow.pop %v1158
    %v1160 = vadd.f32 %v1159, 1.0
    %v1161 = vrcp.pop %v1160
    %v1162 = vmul.f32 1.0, %v1161
    %v1163 = vxor.u32 %v1154, 2147483648
    %v1164 = vmul.f32 %v1163, 1.442695
    %v1165 = vpow.pop %v1164
    %v1166 = vadd.f32 %v1165, 1.0
    %v1167 = vrcp.pop %v1166
    %v1168 = vmul.f32 1.0, %v1167
    %v1169 = vtanh.pop %v1155
    %v1170 = vxor.u32 %v1156, 2147483648
    %v1171 = vmul.f32 %v1170, 1.442695
    %v1172 = vpow.pop %v1171
    %v1173 = vadd.f32 %v1172, 1.0
    %v1174 = vrcp.pop %v1173
    %v1175 = vmul.f32 1.0, %v1174
    %v1176 = vmul.f32 %v1168, %v937
    %v1177 = vmul.f32 %v1162, %v1169
    %v1178 = vadd.f32 %v1176, %v1177
    %v1179 = vtanh.pop %v1178
    %v1180 = vmul.f32 %v1175, %v1179
    %s1181 = scalar_lea.vmem [#allocation2], 16
    %1182 = vst [vmem:[%s1181] sm:$0xff] %v1180
    %s1183 = scalar_lea.vmem [#allocation3], 96
    %v1184 = vld [vmem:[%s1183] sm:$0xff]
    %v1185 = vld [vmem:[%s1183 + $0x8] sm:$0xff]
    %v1186 = vld [vmem:[%s1183 + $0x10] sm:$0xff]
    %v1187 = vld [vmem:[%s1183 + $0x18] sm:$0xff]
    %v1188 = vld [vmem:[#allocation12] sm:$0xff]
    %v1189 = vld [vmem:[#allocation12 + $0x8] sm:$0xff]
    %v1190 = vld [vmem:[#allocation12 + $0x10] sm:$0xff]
    %v1191 = vld [vmem:[#allocation12 + $0x18] sm:$0xff]
    %v1192 = vld [vmem:[#allocation12 + $0x20] sm:$0xff]
    %v1193 = vld [vmem:[#allocation12 + $0x28] sm:$0xff]
    %v1194 = vld [vmem:[#allocation12 + $0x30] sm:$0xff]
    %v1195 = vld [vmem:[#allocation12 + $0x38] sm:$0xff]
    %v1196 = vld [vmem:[#allocation12 + $0x40] sm:$0xff]
    %v1197 = vld [vmem:[#allocation12 + $0x48] sm:$0xff]
    %v1198 = vld [vmem:[#allocation12 + $0x50] sm:$0xff]
    %v1199 = vld [vmem:[#allocation12 + $0x58] sm:$0xff]
    %v1200 = vld [vmem:[#allocation12 + $0x60] sm:$0xff]
    %v1201 = vld [vmem:[#allocation12 + $0x68] sm:$0xff]
    %v1202 = vld [vmem:[#allocation12 + $0x70] sm:$0xff]
    %v1203 = vld [vmem:[#allocation12 + $0x78] sm:$0xff]
    %v1204 = vld [vmem:[#allocation12 + $0x80] sm:$0xff]
    %v1205 = vld [vmem:[#allocation12 + $0x88] sm:$0xff]
    %v1206 = vld [vmem:[#allocation12 + $0x90] sm:$0xff]
    %v1207 = vld [vmem:[#allocation12 + $0x98] sm:$0xff]
    %v1208 = vld [vmem:[#allocation12 + $0xa0] sm:$0xff]
    %v1209 = vld [vmem:[#allocation12 + $0xa8] sm:$0xff]
    %v1210 = vld [vmem:[#allocation12 + $0xb0] sm:$0xff]
    %v1211 = vld [vmem:[#allocation12 + $0xb8] sm:$0xff]
    %v1212 = vld [vmem:[#allocation12 + $0xc0] sm:$0xff]
    %v1213 = vld [vmem:[#allocation12 + $0xc8] sm:$0xff]
    %v1214 = vld [vmem:[#allocation12 + $0xd0] sm:$0xff]
    %v1215 = vld [vmem:[#allocation12 + $0xd8] sm:$0xff]
    %v1216 = vld [vmem:[#allocation12 + $0xe0] sm:$0xff]
    %v1217 = vld [vmem:[#allocation12 + $0xe8] sm:$0xff]
    %v1218 = vld [vmem:[#allocation12 + $0xf0] sm:$0xff]
    %v1219 = vld [vmem:[#allocation12 + $0xf8] sm:$0xff]
    %v1220 = vld [vmem:[#allocation12 + $0x100] sm:$0xff]
    %v1221 = vld [vmem:[#allocation12 + $0x108] sm:$0xff]
    %v1222 = vld [vmem:[#allocation12 + $0x110] sm:$0xff]
    %v1223 = vld [vmem:[#allocation12 + $0x118] sm:$0xff]
    %v1224 = vld [vmem:[#allocation12 + $0x120] sm:$0xff]
    %v1225 = vld [vmem:[#allocation12 + $0x128] sm:$0xff]
    %v1226 = vld [vmem:[#allocation12 + $0x130] sm:$0xff]
    %v1227 = vld [vmem:[#allocation12 + $0x138] sm:$0xff]
    %v1228 = vld [vmem:[#allocation12 + $0x140] sm:$0xff]
    %v1229 = vld [vmem:[#allocation12 + $0x148] sm:$0xff]
    %v1230 = vld [vmem:[#allocation12 + $0x150] sm:$0xff]
    %v1231 = vld [vmem:[#allocation12 + $0x158] sm:$0xff]
    %v1232 = vld [vmem:[#allocation12 + $0x160] sm:$0xff]
    %v1233 = vld [vmem:[#allocation12 + $0x168] sm:$0xff]
    %v1234 = vld [vmem:[#allocation12 + $0x170] sm:$0xff]
    %v1235 = vld [vmem:[#allocation12 + $0x178] sm:$0xff]
    %v1236 = vld [vmem:[#allocation12 + $0x180] sm:$0xff]
    %v1237 = vld [vmem:[#allocation12 + $0x188] sm:$0xff]
    %v1238 = vld [vmem:[#allocation12 + $0x190] sm:$0xff]
    %v1239 = vld [vmem:[#allocation12 + $0x198] sm:$0xff]
    %v1240 = vld [vmem:[#allocation12 + $0x1a0] sm:$0xff]
    %v1241 = vld [vmem:[#allocation12 + $0x1a8] sm:$0xff]
    %v1242 = vld [vmem:[#allocation12 + $0x1b0] sm:$0xff]
    %v1243 = vld [vmem:[#allocation12 + $0x1b8] sm:$0xff]
    %v1244 = vld [vmem:[#allocation12 + $0x1c0] sm:$0xff]
    %v1245 = vld [vmem:[#allocation12 + $0x1c8] sm:$0xff]
    %v1246 = vld [vmem:[#allocation12 + $0x1d0] sm:$0xff]
    %v1247 = vld [vmem:[#allocation12 + $0x1d8] sm:$0xff]
    %v1248 = vld [vmem:[#allocation12 + $0x1e0] sm:$0xff]
    %v1249 = vld [vmem:[#allocation12 + $0x1e8] sm:$0xff]
    %v1250 = vld [vmem:[#allocation12 + $0x1f0] sm:$0xff]
    %v1251 = vld [vmem:[#allocation12 + $0x1f8] sm:$0xff]
    %1252 = vmatprep.subr.mxu0 %v1249
    %1253 = vmatpush1.msra.mxu0 %v1248
    %1254 = vmatprep.subr.mxu0 %v1245
    %1255 = vmatpush1.msra.mxu0 %v1244
    %1256 = vmatprep.subr.mxu0 %v1241
    %1257 = vmatpush1.msra.mxu0 %v1240
    %1258 = vmatprep.subr.mxu0 %v1237
    %1259 = vmatpush1.msra.mxu0 %v1236
    %1260 = vmatprep.subr.mxu0 %v1233
    %1261 = vmatpush1.msra.mxu0 %v1232
    %1262 = vmatprep.subr.mxu0 %v1229
    %1263 = vmatpush1.msra.mxu0 %v1228
    %1264 = vmatprep.subr.mxu0 %v1225
    %1265 = vmatpush1.msra.mxu0 %v1224
    %1266 = vmatprep.subr.mxu0 %v1221
    %1267 = vmatpush1.msra.mxu0 %v1220
    %1268 = vmatprep.subr.mxu0 %v1217
    %1269 = vmatpush1.msra.mxu0 %v1216
    %1270 = vmatprep.subr.mxu0 %v1213
    %1271 = vmatpush1.msra.mxu0 %v1212
    %1272 = vmatprep.subr.mxu0 %v1209
    %1273 = vmatpush1.msra.mxu0 %v1208
    %1274 = vmatprep.subr.mxu0 %v1205
    %1275 = vmatpush1.msra.mxu0 %v1204
    %1276 = vmatprep.subr.mxu0 %v1201
    %1277 = vmatpush1.msra.mxu0 %v1200
    %1278 = vmatprep.subr.mxu0 %v1197
    %1279 = vmatpush1.msra.mxu0 %v1196
    %1280 = vmatprep.subr.mxu0 %v1193
    %1281 = vmatpush1.msra.mxu0 %v1192
    %1282 = vmatprep.subr.mxu0 %v1189
    %1283 = vmatpush1.msra.mxu0 %v1188
    %1284 = vmatprep.subr.mxu0 0.0
    %1285 = vmatpush2.msra.mxu0 0.0
    %1286 = vmatprep.subr.mxu0 0.0
    %1287 = vmatpush2.msra.mxu0 0.0
    %1288 = vmatprep.subr.mxu0 0.0
    %1289 = vmatpush2.msra.mxu0 0.0
    %1290 = vmatprep.subr.mxu0 0.0
    %1291 = vmatpush2.msra.mxu0 0.0
    %1292 = vmatprep.subr.mxu0 0.0
    %1293 = vmatpush2.msra.mxu0 0.0
    %1294 = vmatprep.subr.mxu0 0.0
    %1295 = vmatpush2.msra.mxu0 0.0
    %1296 = vmatprep.subr.mxu0 0.0
    %1297 = vmatpush2.msra.mxu0 0.0
    %1298 = vmatprep.subr.mxu0 0.0
    %1299 = vmatpush2.msra.mxu0 0.0
    %1300 = vmatprep.subr.mxu0 0.0
    %1301 = vmatpush2.msra.mxu0 0.0
    %1302 = vmatprep.subr.mxu0 0.0
    %1303 = vmatpush2.msra.mxu0 0.0
    %1304 = vmatprep.subr.mxu0 0.0
    %1305 = vmatpush2.msra.mxu0 0.0
    %1306 = vmatprep.subr.mxu0 0.0
    %1307 = vmatpush2.msra.mxu0 0.0
    %1308 = vmatprep.subr.mxu0 0.0
    %1309 = vmatpush2.msra.mxu0 0.0
    %1310 = vmatprep.subr.mxu0 0.0
    %1311 = vmatpush2.msra.mxu0 0.0
    %1312 = vmatprep.subr.mxu0 0.0
    %1313 = vmatpush2.msra.mxu0 0.0
    %1314 = vmatprep.subr.mxu0 0.0
    %1315 = vmatpush2.msra.mxu0 0.0
    %1316 = vmatprep.mubr.f32.mxu0 0.0
    %1317 = vmatmul.mubr.f32.gmra.mxu0 %v1180
    %v1318 = vpop.f32.mrf.mxu0
    %v1319 = vadd.f32 0.0, %v1318
    %v1320 = vpop.f32.mrf.mxu0
    %v1321 = vadd.f32 0.0, %v1320
    %1322 = vdwg.mxu0
    %1323 = vmatprep.subr.mxu0 %v1251
    %1324 = vmatpush1.msra.mxu0 %v1250
    %1325 = vmatprep.subr.mxu0 %v1247
    %1326 = vmatpush1.msra.mxu0 %v1246
    %1327 = vmatprep.subr.mxu0 %v1243
    %1328 = vmatpush1.msra.mxu0 %v1242
    %1329 = vmatprep.subr.mxu0 %v1239
    %1330 = vmatpush1.msra.mxu0 %v1238
    %1331 = vmatprep.subr.mxu0 %v1235
    %1332 = vmatpush1.msra.mxu0 %v1234
    %1333 = vmatprep.subr.mxu0 %v1231
    %1334 = vmatpush1.msra.mxu0 %v1230
    %1335 = vmatprep.subr.mxu0 %v1227
    %1336 = vmatpush1.msra.mxu0 %v1226
    %1337 = vmatprep.subr.mxu0 %v1223
    %1338 = vmatpush1.msra.mxu0 %v1222
    %1339 = vmatprep.subr.mxu0 %v1219
    %1340 = vmatpush1.msra.mxu0 %v1218
    %1341 = vmatprep.subr.mxu0 %v1215
    %1342 = vmatpush1.msra.mxu0 %v1214
    %1343 = vmatprep.subr.mxu0 %v1211
    %1344 = vmatpush1.msra.mxu0 %v1210
    %1345 = vmatprep.subr.mxu0 %v1207
    %1346 = vmatpush1.msra.mxu0 %v1206
    %1347 = vmatprep.subr.mxu0 %v1203
    %1348 = vmatpush1.msra.mxu0 %v1202
    %1349 = vmatprep.subr.mxu0 %v1199
    %1350 = vmatpush1.msra.mxu0 %v1198
    %1351 = vmatprep.subr.mxu0 %v1195
    %1352 = vmatpush1.msra.mxu0 %v1194
    %1353 = vmatprep.subr.mxu0 %v1191
    %1354 = vmatpush1.msra.mxu0 %v1190
    %1355 = vmatprep.subr.mxu0 0.0
    %1356 = vmatpush2.msra.mxu0 0.0
    %1357 = vmatprep.subr.mxu0 0.0
    %1358 = vmatpush2.msra.mxu0 0.0
    %1359 = vmatprep.subr.mxu0 0.0
    %1360 = vmatpush2.msra.mxu0 0.0
    %1361 = vmatprep.subr.mxu0 0.0
    %1362 = vmatpush2.msra.mxu0 0.0
    %1363 = vmatprep.subr.mxu0 0.0
    %1364 = vmatpush2.msra.mxu0 0.0
    %1365 = vmatprep.subr.mxu0 0.0
    %1366 = vmatpush2.msra.mxu0 0.0
    %1367 = vmatprep.subr.mxu0 0.0
    %1368 = vmatpush2.msra.mxu0 0.0
    %1369 = vmatprep.subr.mxu0 0.0
    %1370 = vmatpush2.msra.mxu0 0.0
    %1371 = vmatprep.subr.mxu0 0.0
    %1372 = vmatpush2.msra.mxu0 0.0
    %1373 = vmatprep.subr.mxu0 0.0
    %1374 = vmatpush2.msra.mxu0 0.0
    %1375 = vmatprep.subr.mxu0 0.0
    %1376 = vmatpush2.msra.mxu0 0.0
    %1377 = vmatprep.subr.mxu0 0.0
    %1378 = vmatpush2.msra.mxu0 0.0
    %1379 = vmatprep.subr.mxu0 0.0
    %1380 = vmatpush2.msra.mxu0 0.0
    %1381 = vmatprep.subr.mxu0 0.0
    %1382 = vmatpush2.msra.mxu0 0.0
    %1383 = vmatprep.subr.mxu0 0.0
    %1384 = vmatpush2.msra.mxu0 0.0
    %1385 = vmatprep.subr.mxu0 0.0
    %1386 = vmatpush2.msra.mxu0 0.0
    %1387 = vmatprep.mubr.f32.mxu0 0.0
    %1388 = vmatmul.mubr.f32.gmra.mxu0 %v1180
    %v1389 = vpop.f32.mrf.mxu0
    %v1390 = vadd.f32 0.0, %v1389
    %v1391 = vpop.f32.mrf.mxu0
    %v1392 = vadd.f32 0.0, %v1391
    %1393 = vdwg.mxu0
    %v1394 = vadd.f32 %v1184, %v1319
    %v1395 = vadd.f32 %v1185, %v1321
    %v1396 = vadd.f32 %v1186, %v1390
    %v1397 = vadd.f32 %v1187, %v1392
    %v1398 = vxor.u32 %v1394, 2147483648
    %v1399 = vmul.f32 %v1398, 1.442695
    %v1400 = vpow.pop %v1399
    %v1401 = vadd.f32 %v1400, 1.0
    %v1402 = vrcp.pop %v1401
    %v1403 = vmul.f32 1.0, %v1402
    %v1404 = vxor.u32 %v1395, 2147483648
    %v1405 = vmul.f32 %v1404, 1.442695
    %v1406 = vpow.pop %v1405
    %v1407 = vadd.f32 %v1406, 1.0
    %v1408 = vrcp.pop %v1407
    %v1409 = vmul.f32 1.0, %v1408
    %v1410 = vtanh.pop %v1396
    %v1411 = vxor.u32 %v1397, 2147483648
    %v1412 = vmul.f32 %v1411, 1.442695
    %v1413 = vpow.pop %v1412
    %v1414 = vadd.f32 %v1413, 1.0
    %v1415 = vrcp.pop %v1414
    %v1416 = vmul.f32 1.0, %v1415
    %v1417 = vmul.f32 %v1409, %v1178
    %v1418 = vmul.f32 %v1403, %v1410
    %v1419 = vadd.f32 %v1417, %v1418
    %v1420 = vtanh.pop %v1419
    %v1421 = vmul.f32 %v1416, %v1420
    %s1422 = scalar_lea.vmem [#allocation2], 24
    %1423 = vst [vmem:[%s1422] sm:$0xff] %v1421
    %s1424 = scalar_lea.vmem [#allocation3], 128
    %v1425 = vld [vmem:[%s1424] sm:$0xff]
    %v1426 = vld [vmem:[%s1424 + $0x8] sm:$0xff]
    %v1427 = vld [vmem:[%s1424 + $0x10] sm:$0xff]
    %v1428 = vld [vmem:[%s1424 + $0x18] sm:$0xff]
    %v1429 = vld [vmem:[#allocation12] sm:$0xff]
    %v1430 = vld [vmem:[#allocation12 + $0x8] sm:$0xff]
    %v1431 = vld [vmem:[#allocation12 + $0x10] sm:$0xff]
    %v1432 = vld [vmem:[#allocation12 + $0x18] sm:$0xff]
    %v1433 = vld [vmem:[#allocation12 + $0x20] sm:$0xff]
    %v1434 = vld [vmem:[#allocation12 + $0x28] sm:$0xff]
    %v1435 = vld [vmem:[#allocation12 + $0x30] sm:$0xff]
    %v1436 = vld [vmem:[#allocation12 + $0x38] sm:$0xff]
    %v1437 = vld [vmem:[#allocation12 + $0x40] sm:$0xff]
    %v1438 = vld [vmem:[#allocation12 + $0x48] sm:$0xff]
    %v1439 = vld [vmem:[#allocation12 + $0x50] sm:$0xff]
    %v1440 = vld [vmem:[#allocation12 + $0x58] sm:$0xff]
    %v1441 = vld [vmem:[#allocation12 + $0x60] sm:$0xff]
    %v1442 = vld [vmem:[#allocation12 + $0x68] sm:$0xff]
    %v1443 = vld [vmem:[#allocation12 + $0x70] sm:$0xff]
    %v1444 = vld [vmem:[#allocation12 + $0x78] sm:$0xff]
    %v1445 = vld [vmem:[#allocation12 + $0x80] sm:$0xff]
    %v1446 = vld [vmem:[#allocation12 + $0x88] sm:$0xff]
    %v1447 = vld [vmem:[#allocation12 + $0x90] sm:$0xff]
    %v1448 = vld [vmem:[#allocation12 + $0x98] sm:$0xff]
    %v1449 = vld [vmem:[#allocation12 + $0xa0] sm:$0xff]
    %v1450 = vld [vmem:[#allocation12 + $0xa8] sm:$0xff]
    %v1451 = vld [vmem:[#allocation12 + $0xb0] sm:$0xff]
    %v1452 = vld [vmem:[#allocation12 + $0xb8] sm:$0xff]
    %v1453 = vld [vmem:[#allocation12 + $0xc0] sm:$0xff]
    %v1454 = vld [vmem:[#allocation12 + $0xc8] sm:$0xff]
    %v1455 = vld [vmem:[#allocation12 + $0xd0] sm:$0xff]
    %v1456 = vld [vmem:[#allocation12 + $0xd8] sm:$0xff]
    %v1457 = vld [vmem:[#allocation12 + $0xe0] sm:$0xff]
    %v1458 = vld [vmem:[#allocation12 + $0xe8] sm:$0xff]
    %v1459 = vld [vmem:[#allocation12 + $0xf0] sm:$0xff]
    %v1460 = vld [vmem:[#allocation12 + $0xf8] sm:$0xff]
    %v1461 = vld [vmem:[#allocation12 + $0x100] sm:$0xff]
    %v1462 = vld [vmem:[#allocation12 + $0x108] sm:$0xff]
    %v1463 = vld [vmem:[#allocation12 + $0x110] sm:$0xff]
    %v1464 = vld [vmem:[#allocation12 + $0x118] sm:$0xff]
    %v1465 = vld [vmem:[#allocation12 + $0x120] sm:$0xff]
    %v1466 = vld [vmem:[#allocation12 + $0x128] sm:$0xff]
    %v1467 = vld [vmem:[#allocation12 + $0x130] sm:$0xff]
    %v1468 = vld [vmem:[#allocation12 + $0x138] sm:$0xff]
    %v1469 = vld [vmem:[#allocation12 + $0x140] sm:$0xff]
    %v1470 = vld [vmem:[#allocation12 + $0x148] sm:$0xff]
    %v1471 = vld [vmem:[#allocation12 + $0x150] sm:$0xff]
    %v1472 = vld [vmem:[#allocation12 + $0x158] sm:$0xff]
    %v1473 = vld [vmem:[#allocation12 + $0x160] sm:$0xff]
    %v1474 = vld [vmem:[#allocation12 + $0x168] sm:$0xff]
    %v1475 = vld [vmem:[#allocation12 + $0x170] sm:$0xff]
    %v1476 = vld [vmem:[#allocation12 + $0x178] sm:$0xff]
    %v1477 = vld [vmem:[#allocation12 + $0x180] sm:$0xff]
    %v1478 = vld [vmem:[#allocation12 + $0x188] sm:$0xff]
    %v1479 = vld [vmem:[#allocation12 + $0x190] sm:$0xff]
    %v1480 = vld [vmem:[#allocation12 + $0x198] sm:$0xff]
    %v1481 = vld [vmem:[#allocation12 + $0x1a0] sm:$0xff]
    %v1482 = vld [vmem:[#allocation12 + $0x1a8] sm:$0xff]
    %v1483 = vld [vmem:[#allocation12 + $0x1b0] sm:$0xff]
    %v1484 = vld [vmem:[#allocation12 + $0x1b8] sm:$0xff]
    %v1485 = vld [vmem:[#allocation12 + $0x1c0] sm:$0xff]
    %v1486 = vld [vmem:[#allocation12 + $0x1c8] sm:$0xff]
    %v1487 = vld [vmem:[#allocation12 + $0x1d0] sm:$0xff]
    %v1488 = vld [vmem:[#allocation12 + $0x1d8] sm:$0xff]
    %v1489 = vld [vmem:[#allocation12 + $0x1e0] sm:$0xff]
    %v1490 = vld [vmem:[#allocation12 + $0x1e8] sm:$0xff]
    %v1491 = vld [vmem:[#allocation12 + $0x1f0] sm:$0xff]
    %v1492 = vld [vmem:[#allocation12 + $0x1f8] sm:$0xff]
    %1493 = vmatprep.subr.mxu0 %v1490
    %1494 = vmatpush1.msra.mxu0 %v1489
    %1495 = vmatprep.subr.mxu0 %v1486
    %1496 = vmatpush1.msra.mxu0 %v1485
    %1497 = vmatprep.subr.mxu0 %v1482
    %1498 = vmatpush1.msra.mxu0 %v1481
    %1499 = vmatprep.subr.mxu0 %v1478
    %1500 = vmatpush1.msra.mxu0 %v1477
    %1501 = vmatprep.subr.mxu0 %v1474
    %1502 = vmatpush1.msra.mxu0 %v1473
    %1503 = vmatprep.subr.mxu0 %v1470
    %1504 = vmatpush1.msra.mxu0 %v1469
    %1505 = vmatprep.subr.mxu0 %v1466
    %1506 = vmatpush1.msra.mxu0 %v1465
    %1507 = vmatprep.subr.mxu0 %v1462
    %1508 = vmatpush1.msra.mxu0 %v1461
    %1509 = vmatprep.subr.mxu0 %v1458
    %1510 = vmatpush1.msra.mxu0 %v1457
    %1511 = vmatprep.subr.mxu0 %v1454
    %1512 = vmatpush1.msra.mxu0 %v1453
    %1513 = vmatprep.subr.mxu0 %v1450
    %1514 = vmatpush1.msra.mxu0 %v1449
    %1515 = vmatprep.subr.mxu0 %v1446
    %1516 = vmatpush1.msra.mxu0 %v1445
    %1517 = vmatprep.subr.mxu0 %v1442
    %1518 = vmatpush1.msra.mxu0 %v1441
    %1519 = vmatprep.subr.mxu0 %v1438
    %1520 = vmatpush1.msra.mxu0 %v1437
    %1521 = vmatprep.subr.mxu0 %v1434
    %1522 = vmatpush1.msra.mxu0 %v1433
    %1523 = vmatprep.subr.mxu0 %v1430
    %1524 = vmatpush1.msra.mxu0 %v1429
    %1525 = vmatprep.subr.mxu0 0.0
    %1526 = vmatpush2.msra.mxu0 0.0
    %1527 = vmatprep.subr.mxu0 0.0
    %1528 = vmatpush2.msra.mxu0 0.0
    %1529 = vmatprep.subr.mxu0 0.0
    %1530 = vmatpush2.msra.mxu0 0.0
    %1531 = vmatprep.subr.mxu0 0.0
    %1532 = vmatpush2.msra.mxu0 0.0
    %1533 = vmatprep.subr.mxu0 0.0
    %1534 = vmatpush2.msra.mxu0 0.0
    %1535 = vmatprep.subr.mxu0 0.0
    %1536 = vmatpush2.msra.mxu0 0.0
    %1537 = vmatprep.subr.mxu0 0.0
    %1538 = vmatpush2.msra.mxu0 0.0
    %1539 = vmatprep.subr.mxu0 0.0
    %1540 = vmatpush2.msra.mxu0 0.0
    %1541 = vmatprep.subr.mxu0 0.0
    %1542 = vmatpush2.msra.mxu0 0.0
    %1543 = vmatprep.subr.mxu0 0.0
    %1544 = vmatpush2.msra.mxu0 0.0
    %1545 = vmatprep.subr.mxu0 0.0
    %1546 = vmatpush2.msra.mxu0 0.0
    %1547 = vmatprep.subr.mxu0 0.0
    %1548 = vmatpush2.msra.mxu0 0.0
    %1549 = vmatprep.subr.mxu0 0.0
    %1550 = vmatpush2.msra.mxu0 0.0
    %1551 = vmatprep.subr.mxu0 0.0
    %1552 = vmatpush2.msra.mxu0 0.0
    %1553 = vmatprep.subr.mxu0 0.0
    %1554 = vmatpush2.msra.mxu0 0.0
    %1555 = vmatprep.subr.mxu0 0.0
    %1556 = vmatpush2.msra.mxu0 0.0
    %1557 = vmatprep.mubr.f32.mxu0 0.0
    %1558 = vmatmul.mubr.f32.gmra.mxu0 %v1421
    %v1559 = vpop.f32.mrf.mxu0
    %v1560 = vadd.f32 0.0, %v1559
    %v1561 = vpop.f32.mrf.mxu0
    %v1562 = vadd.f32 0.0, %v1561
    %1563 = vdwg.mxu0
    %1564 = vmatprep.subr.mxu0 %v1492
    %1565 = vmatpush1.msra.mxu0 %v1491
    %1566 = vmatprep.subr.mxu0 %v1488
    %1567 = vmatpush1.msra.mxu0 %v1487
    %1568 = vmatprep.subr.mxu0 %v1484
    %1569 = vmatpush1.msra.mxu0 %v1483
    %1570 = vmatprep.subr.mxu0 %v1480
    %1571 = vmatpush1.msra.mxu0 %v1479
    %1572 = vmatprep.subr.mxu0 %v1476
    %1573 = vmatpush1.msra.mxu0 %v1475
    %1574 = vmatprep.subr.mxu0 %v1472
    %1575 = vmatpush1.msra.mxu0 %v1471
    %1576 = vmatprep.subr.mxu0 %v1468
    %1577 = vmatpush1.msra.mxu0 %v1467
    %1578 = vmatprep.subr.mxu0 %v1464
    %1579 = vmatpush1.msra.mxu0 %v1463
    %1580 = vmatprep.subr.mxu0 %v1460
    %1581 = vmatpush1.msra.mxu0 %v1459
    %1582 = vmatprep.subr.mxu0 %v1456
    %1583 = vmatpush1.msra.mxu0 %v1455
    %1584 = vmatprep.subr.mxu0 %v1452
    %1585 = vmatpush1.msra.mxu0 %v1451
    %1586 = vmatprep.subr.mxu0 %v1448
    %1587 = vmatpush1.msra.mxu0 %v1447
    %1588 = vmatprep.subr.mxu0 %v1444
    %1589 = vmatpush1.msra.mxu0 %v1443
    %1590 = vmatprep.subr.mxu0 %v1440
    %1591 = vmatpush1.msra.mxu0 %v1439
    %1592 = vmatprep.subr.mxu0 %v1436
    %1593 = vmatpush1.msra.mxu0 %v1435
    %1594 = vmatprep.subr.mxu0 %v1432
    %1595 = vmatpush1.msra.mxu0 %v1431
    %1596 = vmatprep.subr.mxu0 0.0
    %1597 = vmatpush2.msra.mxu0 0.0
    %1598 = vmatprep.subr.mxu0 0.0
    %1599 = vmatpush2.msra.mxu0 0.0
    %1600 = vmatprep.subr.mxu0 0.0
    %1601 = vmatpush2.msra.mxu0 0.0
    %1602 = vmatprep.subr.mxu0 0.0
    %1603 = vmatpush2.msra.mxu0 0.0
    %1604 = vmatprep.subr.mxu0 0.0
    %1605 = vmatpush2.msra.mxu0 0.0
    %1606 = vmatprep.subr.mxu0 0.0
    %1607 = vmatpush2.msra.mxu0 0.0
    %1608 = vmatprep.subr.mxu0 0.0
    %1609 = vmatpush2.msra.mxu0 0.0
    %1610 = vmatprep.subr.mxu0 0.0
    %1611 = vmatpush2.msra.mxu0 0.0
    %1612 = vmatprep.subr.mxu0 0.0
    %1613 = vmatpush2.msra.mxu0 0.0
    %1614 = vmatprep.subr.mxu0 0.0
    %1615 = vmatpush2.msra.mxu0 0.0
    %1616 = vmatprep.subr.mxu0 0.0
    %1617 = vmatpush2.msra.mxu0 0.0
    %1618 = vmatprep.subr.mxu0 0.0
    %1619 = vmatpush2.msra.mxu0 0.0
    %1620 = vmatprep.subr.mxu0 0.0
    %1621 = vmatpush2.msra.mxu0 0.0
    %1622 = vmatprep.subr.mxu0 0.0
    %1623 = vmatpush2.msra.mxu0 0.0
    %1624 = vmatprep.subr.mxu0 0.0
    %1625 = vmatpush2.msra.mxu0 0.0
    %1626 = vmatprep.subr.mxu0 0.0
    %1627 = vmatpush2.msra.mxu0 0.0
    %1628 = vmatprep.mubr.f32.mxu0 0.0
    %1629 = vmatmul.mubr.f32.gmra.mxu0 %v1421
    %v1630 = vpop.f32.mrf.mxu0
    %v1631 = vadd.f32 0.0, %v1630
    %v1632 = vpop.f32.mrf.mxu0
    %v1633 = vadd.f32 0.0, %v1632
    %1634 = vdwg.mxu0
    %v1635 = vadd.f32 %v1425, %v1560
    %v1636 = vadd.f32 %v1426, %v1562
    %v1637 = vadd.f32 %v1427, %v1631
    %v1638 = vadd.f32 %v1428, %v1633
    %v1639 = vxor.u32 %v1635, 2147483648
    %v1640 = vmul.f32 %v1639, 1.442695
    %v1641 = vpow.pop %v1640
    %v1642 = vadd.f32 %v1641, 1.0
    %v1643 = vrcp.pop %v1642
    %v1644 = vmul.f32 1.0, %v1643
    %v1645 = vxor.u32 %v1636, 2147483648
    %v1646 = vmul.f32 %v1645, 1.442695
    %v1647 = vpow.pop %v1646
    %v1648 = vadd.f32 %v1647, 1.0
    %v1649 = vrcp.pop %v1648
    %v1650 = vmul.f32 1.0, %v1649
    %v1651 = vtanh.pop %v1637
    %v1652 = vxor.u32 %v1638, 2147483648
    %v1653 = vmul.f32 %v1652, 1.442695
    %v1654 = vpow.pop %v1653
    %v1655 = vadd.f32 %v1654, 1.0
    %v1656 = vrcp.pop %v1655
    %v1657 = vmul.f32 1.0, %v1656
    %v1658 = vmul.f32 %v1650, %v1419
    %v1659 = vmul.f32 %v1644, %v1651
    %v1660 = vadd.f32 %v1658, %v1659
    %v1661 = vtanh.pop %v1660
    %v1662 = vmul.f32 %v1657, %v1661
    %s1663 = scalar_lea.vmem [#allocation2], 32
    %1664 = vst [vmem:[%s1663] sm:$0xff] %v1662
    %s1665 = scalar_lea.vmem [#allocation3], 160
    %v1666 = vld [vmem:[%s1665] sm:$0xff]
    %v1667 = vld [vmem:[%s1665 + $0x8] sm:$0xff]
    %v1668 = vld [vmem:[%s1665 + $0x10] sm:$0xff]
    %v1669 = vld [vmem:[%s1665 + $0x18] sm:$0xff]
    %v1670 = vld [vmem:[#allocation12] sm:$0xff]
    %v1671 = vld [vmem:[#allocation12 + $0x8] sm:$0xff]
    %v1672 = vld [vmem:[#allocation12 + $0x10] sm:$0xff]
    %v1673 = vld [vmem:[#allocation12 + $0x18] sm:$0xff]
    %v1674 = vld [vmem:[#allocation12 + $0x20] sm:$0xff]
    %v1675 = vld [vmem:[#allocation12 + $0x28] sm:$0xff]
    %v1676 = vld [vmem:[#allocation12 + $0x30] sm:$0xff]
    %v1677 = vld [vmem:[#allocation12 + $0x38] sm:$0xff]
    %v1678 = vld [vmem:[#allocation12 + $0x40] sm:$0xff]
    %v1679 = vld [vmem:[#allocation12 + $0x48] sm:$0xff]
    %v1680 = vld [vmem:[#allocation12 + $0x50] sm:$0xff]
    %v1681 = vld [vmem:[#allocation12 + $0x58] sm:$0xff]
    %v1682 = vld [vmem:[#allocation12 + $0x60] sm:$0xff]
    %v1683 = vld [vmem:[#allocation12 + $0x68] sm:$0xff]
    %v1684 = vld [vmem:[#allocation12 + $0x70] sm:$0xff]
    %v1685 = vld [vmem:[#allocation12 + $0x78] sm:$0xff]
    %v1686 = vld [vmem:[#allocation12 + $0x80] sm:$0xff]
    %v1687 = vld [vmem:[#allocation12 + $0x88] sm:$0xff]
    %v1688 = vld [vmem:[#allocation12 + $0x90] sm:$0xff]
    %v1689 = vld [vmem:[#allocation12 + $0x98] sm:$0xff]
    %v1690 = vld [vmem:[#allocation12 + $0xa0] sm:$0xff]
    %v1691 = vld [vmem:[#allocation12 + $0xa8] sm:$0xff]
    %v1692 = vld [vmem:[#allocation12 + $0xb0] sm:$0xff]
    %v1693 = vld [vmem:[#allocation12 + $0xb8] sm:$0xff]
    %v1694 = vld [vmem:[#allocation12 + $0xc0] sm:$0xff]
    %v1695 = vld [vmem:[#allocation12 + $0xc8] sm:$0xff]
    %v1696 = vld [vmem:[#allocation12 + $0xd0] sm:$0xff]
    %v1697 = vld [vmem:[#allocation12 + $0xd8] sm:$0xff]
    %v1698 = vld [vmem:[#allocation12 + $0xe0] sm:$0xff]
    %v1699 = vld [vmem:[#allocation12 + $0xe8] sm:$0xff]
    %v1700 = vld [vmem:[#allocation12 + $0xf0] sm:$0xff]
    %v1701 = vld [vmem:[#allocation12 + $0xf8] sm:$0xff]
    %v1702 = vld [vmem:[#allocation12 + $0x100] sm:$0xff]
    %v1703 = vld [vmem:[#allocation12 + $0x108] sm:$0xff]
    %v1704 = vld [vmem:[#allocation12 + $0x110] sm:$0xff]
    %v1705 = vld [vmem:[#allocation12 + $0x118] sm:$0xff]
    %v1706 = vld [vmem:[#allocation12 + $0x120] sm:$0xff]
    %v1707 = vld [vmem:[#allocation12 + $0x128] sm:$0xff]
    %v1708 = vld [vmem:[#allocation12 + $0x130] sm:$0xff]
    %v1709 = vld [vmem:[#allocation12 + $0x138] sm:$0xff]
    %v1710 = vld [vmem:[#allocation12 + $0x140] sm:$0xff]
    %v1711 = vld [vmem:[#allocation12 + $0x148] sm:$0xff]
    %v1712 = vld [vmem:[#allocation12 + $0x150] sm:$0xff]
    %v1713 = vld [vmem:[#allocation12 + $0x158] sm:$0xff]
    %v1714 = vld [vmem:[#allocation12 + $0x160] sm:$0xff]
    %v1715 = vld [vmem:[#allocation12 + $0x168] sm:$0xff]
    %v1716 = vld [vmem:[#allocation12 + $0x170] sm:$0xff]
    %v1717 = vld [vmem:[#allocation12 + $0x178] sm:$0xff]
    %v1718 = vld [vmem:[#allocation12 + $0x180] sm:$0xff]
    %v1719 = vld [vmem:[#allocation12 + $0x188] sm:$0xff]
    %v1720 = vld [vmem:[#allocation12 + $0x190] sm:$0xff]
    %v1721 = vld [vmem:[#allocation12 + $0x198] sm:$0xff]
    %v1722 = vld [vmem:[#allocation12 + $0x1a0] sm:$0xff]
    %v1723 = vld [vmem:[#allocation12 + $0x1a8] sm:$0xff]
    %v1724 = vld [vmem:[#allocation12 + $0x1b0] sm:$0xff]
    %v1725 = vld [vmem:[#allocation12 + $0x1b8] sm:$0xff]
    %v1726 = vld [vmem:[#allocation12 + $0x1c0] sm:$0xff]
    %v1727 = vld [vmem:[#allocation12 + $0x1c8] sm:$0xff]
    %v1728 = vld [vmem:[#allocation12 + $0x1d0] sm:$0xff]
    %v1729 = vld [vmem:[#allocation12 + $0x1d8] sm:$0xff]
    %v1730 = vld [vmem:[#allocation12 + $0x1e0] sm:$0xff]
    %v1731 = vld [vmem:[#allocation12 + $0x1e8] sm:$0xff]
    %v1732 = vld [vmem:[#allocation12 + $0x1f0] sm:$0xff]
    %v1733 = vld [vmem:[#allocation12 + $0x1f8] sm:$0xff]
    %1734 = vmatprep.subr.mxu0 %v1731
    %1735 = vmatpush1.msra.mxu0 %v1730
    %1736 = vmatprep.subr.mxu0 %v1727
    %1737 = vmatpush1.msra.mxu0 %v1726
    %1738 = vmatprep.subr.mxu0 %v1723
    %1739 = vmatpush1.msra.mxu0 %v1722
    %1740 = vmatprep.subr.mxu0 %v1719
    %1741 = vmatpush1.msra.mxu0 %v1718
    %1742 = vmatprep.subr.mxu0 %v1715
    %1743 = vmatpush1.msra.mxu0 %v1714
    %1744 = vmatprep.subr.mxu0 %v1711
    %1745 = vmatpush1.msra.mxu0 %v1710
    %1746 = vmatprep.subr.mxu0 %v1707
    %1747 = vmatpush1.msra.mxu0 %v1706
    %1748 = vmatprep.subr.mxu0 %v1703
    %1749 = vmatpush1.msra.mxu0 %v1702
    %1750 = vmatprep.subr.mxu0 %v1699
    %1751 = vmatpush1.msra.mxu0 %v1698
    %1752 = vmatprep.subr.mxu0 %v1695
    %1753 = vmatpush1.msra.mxu0 %v1694
    %1754 = vmatprep.subr.mxu0 %v1691
    %1755 = vmatpush1.msra.mxu0 %v1690
    %1756 = vmatprep.subr.mxu0 %v1687
    %1757 = vmatpush1.msra.mxu0 %v1686
    %1758 = vmatprep.subr.mxu0 %v1683
    %1759 = vmatpush1.msra.mxu0 %v1682
    %1760 = vmatprep.subr.mxu0 %v1679
    %1761 = vmatpush1.msra.mxu0 %v1678
    %1762 = vmatprep.subr.mxu0 %v1675
    %1763 = vmatpush1.msra.mxu0 %v1674
    %1764 = vmatprep.subr.mxu0 %v1671
    %1765 = vmatpush1.msra.mxu0 %v1670
    %1766 = vmatprep.subr.mxu0 0.0
    %1767 = vmatpush2.msra.mxu0 0.0
    %1768 = vmatprep.subr.mxu0 0.0
    %1769 = vmatpush2.msra.mxu0 0.0
    %1770 = vmatprep.subr.mxu0 0.0
    %1771 = vmatpush2.msra.mxu0 0.0
    %1772 = vmatprep.subr.mxu0 0.0
    %1773 = vmatpush2.msra.mxu0 0.0
    %1774 = vmatprep.subr.mxu0 0.0
    %1775 = vmatpush2.msra.mxu0 0.0
    %1776 = vmatprep.subr.mxu0 0.0
    %1777 = vmatpush2.msra.mxu0 0.0
    %1778 = vmatprep.subr.mxu0 0.0
    %1779 = vmatpush2.msra.mxu0 0.0
    %1780 = vmatprep.subr.mxu0 0.0
    %1781 = vmatpush2.msra.mxu0 0.0
    %1782 = vmatprep.subr.mxu0 0.0
    %1783 = vmatpush2.msra.mxu0 0.0
    %1784 = vmatprep.subr.mxu0 0.0
    %1785 = vmatpush2.msra.mxu0 0.0
    %1786 = vmatprep.subr.mxu0 0.0
    %1787 = vmatpush2.msra.mxu0 0.0
    %1788 = vmatprep.subr.mxu0 0.0
    %1789 = vmatpush2.msra.mxu0 0.0
    %1790 = vmatprep.subr.mxu0 0.0
    %1791 = vmatpush2.msra.mxu0 0.0
    %1792 = vmatprep.subr.mxu0 0.0
    %1793 = vmatpush2.msra.mxu0 0.0
    %1794 = vmatprep.subr.mxu0 0.0
    %1795 = vmatpush2.msra.mxu0 0.0
    %1796 = vmatprep.subr.mxu0 0.0
    %1797 = vmatpush2.msra.mxu0 0.0
    %1798 = vmatprep.mubr.f32.mxu0 0.0
    %1799 = vmatmul.mubr.f32.gmra.mxu0 %v1662
    %v1800 = vpop.f32.mrf.mxu0
    %v1801 = vadd.f32 0.0, %v1800
    %v1802 = vpop.f32.mrf.mxu0
    %v1803 = vadd.f32 0.0, %v1802
    %1804 = vdwg.mxu0
    %1805 = vmatprep.subr.mxu0 %v1733
    %1806 = vmatpush1.msra.mxu0 %v1732
    %1807 = vmatprep.subr.mxu0 %v1729
    %1808 = vmatpush1.msra.mxu0 %v1728
    %1809 = vmatprep.subr.mxu0 %v1725
    %1810 = vmatpush1.msra.mxu0 %v1724
    %1811 = vmatprep.subr.mxu0 %v1721
    %1812 = vmatpush1.msra.mxu0 %v1720
    %1813 = vmatprep.subr.mxu0 %v1717
    %1814 = vmatpush1.msra.mxu0 %v1716
    %1815 = vmatprep.subr.mxu0 %v1713
    %1816 = vmatpush1.msra.mxu0 %v1712
    %1817 = vmatprep.subr.mxu0 %v1709
    %1818 = vmatpush1.msra.mxu0 %v1708
    %1819 = vmatprep.subr.mxu0 %v1705
    %1820 = vmatpush1.msra.mxu0 %v1704
    %1821 = vmatprep.subr.mxu0 %v1701
    %1822 = vmatpush1.msra.mxu0 %v1700
    %1823 = vmatprep.subr.mxu0 %v1697
    %1824 = vmatpush1.msra.mxu0 %v1696
    %1825 = vmatprep.subr.mxu0 %v1693
    %1826 = vmatpush1.msra.mxu0 %v1692
    %1827 = vmatprep.subr.mxu0 %v1689
    %1828 = vmatpush1.msra.mxu0 %v1688
    %1829 = vmatprep.subr.mxu0 %v1685
    %1830 = vmatpush1.msra.mxu0 %v1684
    %1831 = vmatprep.subr.mxu0 %v1681
    %1832 = vmatpush1.msra.mxu0 %v1680
    %1833 = vmatprep.subr.mxu0 %v1677
    %1834 = vmatpush1.msra.mxu0 %v1676
    %1835 = vmatprep.subr.mxu0 %v1673
    %1836 = vmatpush1.msra.mxu0 %v1672
    %1837 = vmatprep.subr.mxu0 0.0
    %1838 = vmatpush2.msra.mxu0 0.0
    %1839 = vmatprep.subr.mxu0 0.0
    %1840 = vmatpush2.msra.mxu0 0.0
    %1841 = vmatprep.subr.mxu0 0.0
    %1842 = vmatpush2.msra.mxu0 0.0
    %1843 = vmatprep.subr.mxu0 0.0
    %1844 = vmatpush2.msra.mxu0 0.0
    %1845 = vmatprep.subr.mxu0 0.0
    %1846 = vmatpush2.msra.mxu0 0.0
    %1847 = vmatprep.subr.mxu0 0.0
    %1848 = vmatpush2.msra.mxu0 0.0
    %1849 = vmatprep.subr.mxu0 0.0
    %1850 = vmatpush2.msra.mxu0 0.0
    %1851 = vmatprep.subr.mxu0 0.0
    %1852 = vmatpush2.msra.mxu0 0.0
    %1853 = vmatprep.subr.mxu0 0.0
    %1854 = vmatpush2.msra.mxu0 0.0
    %1855 = vmatprep.subr.mxu0 0.0
    %1856 = vmatpush2.msra.mxu0 0.0
    %1857 = vmatprep.subr.mxu0 0.0
    %1858 = vmatpush2.msra.mxu0 0.0
    %1859 = vmatprep.subr.mxu0 0.0
    %1860 = vmatpush2.msra.mxu0 0.0
    %1861 = vmatprep.subr.mxu0 0.0
    %1862 = vmatpush2.msra.mxu0 0.0
    %1863 = vmatprep.subr.mxu0 0.0
    %1864 = vmatpush2.msra.mxu0 0.0
    %1865 = vmatprep.subr.mxu0 0.0
    %1866 = vmatpush2.msra.mxu0 0.0
    %1867 = vmatprep.subr.mxu0 0.0
    %1868 = vmatpush2.msra.mxu0 0.0
    %1869 = vmatprep.mubr.f32.mxu0 0.0
    %1870 = vmatmul.mubr.f32.gmra.mxu0 %v1662
    %v1871 = vpop.f32.mrf.mxu0
    %v1872 = vadd.f32 0.0, %v1871
    %v1873 = vpop.f32.mrf.mxu0
    %v1874 = vadd.f32 0.0, %v1873
    %1875 = vdwg.mxu0
    %v1876 = vadd.f32 %v1666, %v1801
    %v1877 = vadd.f32 %v1667, %v1803
    %v1878 = vadd.f32 %v1668, %v1872
    %v1879 = vadd.f32 %v1669, %v1874
    %v1880 = vxor.u32 %v1876, 2147483648
    %v1881 = vmul.f32 %v1880, 1.442695
    %v1882 = vpow.pop %v1881
    %v1883 = vadd.f32 %v1882, 1.0
    %v1884 = vrcp.pop %v1883
    %v1885 = vmul.f32 1.0, %v1884
    %v1886 = vxor.u32 %v1877, 2147483648
    %v1887 = vmul.f32 %v1886, 1.442695
    %v1888 = vpow.pop %v1887
    %v1889 = vadd.f32 %v1888, 1.0
    %v1890 = vrcp.pop %v1889
    %v1891 = vmul.f32 1.0, %v1890
    %v1892 = vtanh.pop %v1878
    %v1893 = vxor.u32 %v1879, 2147483648
    %v1894 = vmul.f32 %v1893, 1.442695
    %v1895 = vpow.pop %v1894
    %v1896 = vadd.f32 %v1895, 1.0
    %v1897 = vrcp.pop %v1896
    %v1898 = vmul.f32 1.0, %v1897
    %v1899 = vmul.f32 %v1891, %v1660
    %v1900 = vmul.f32 %v1885, %v1892
    %v1901 = vadd.f32 %v1899, %v1900
    %v1902 = vtanh.pop %v1901
    %v1903 = vmul.f32 %v1898, %v1902
    %s1904 = scalar_lea.vmem [#allocation2], 40
    %1905 = vst [vmem:[%s1904] sm:$0xff] %v1903
    %s1906 = scalar_lea.vmem [#allocation3], 192
    %v1907 = vld [vmem:[%s1906] sm:$0xff]
    %v1908 = vld [vmem:[%s1906 + $0x8] sm:$0xff]
    %v1909 = vld [vmem:[%s1906 + $0x10] sm:$0xff]
    %v1910 = vld [vmem:[%s1906 + $0x18] sm:$0xff]
    %v1911 = vld [vmem:[#allocation12] sm:$0xff]
    %v1912 = vld [vmem:[#allocation12 + $0x8] sm:$0xff]
    %v1913 = vld [vmem:[#allocation12 + $0x10] sm:$0xff]
    %v1914 = vld [vmem:[#allocation12 + $0x18] sm:$0xff]
    %v1915 = vld [vmem:[#allocation12 + $0x20] sm:$0xff]
    %v1916 = vld [vmem:[#allocation12 + $0x28] sm:$0xff]
    %v1917 = vld [vmem:[#allocation12 + $0x30] sm:$0xff]
    %v1918 = vld [vmem:[#allocation12 + $0x38] sm:$0xff]
    %v1919 = vld [vmem:[#allocation12 + $0x40] sm:$0xff]
    %v1920 = vld [vmem:[#allocation12 + $0x48] sm:$0xff]
    %v1921 = vld [vmem:[#allocation12 + $0x50] sm:$0xff]
    %v1922 = vld [vmem:[#allocation12 + $0x58] sm:$0xff]
    %v1923 = vld [vmem:[#allocation12 + $0x60] sm:$0xff]
    %v1924 = vld [vmem:[#allocation12 + $0x68] sm:$0xff]
    %v1925 = vld [vmem:[#allocation12 + $0x70] sm:$0xff]
    %v1926 = vld [vmem:[#allocation12 + $0x78] sm:$0xff]
    %v1927 = vld [vmem:[#allocation12 + $0x80] sm:$0xff]
    %v1928 = vld [vmem:[#allocation12 + $0x88] sm:$0xff]
    %v1929 = vld [vmem:[#allocation12 + $0x90] sm:$0xff]
    %v1930 = vld [vmem:[#allocation12 + $0x98] sm:$0xff]
    %v1931 = vld [vmem:[#allocation12 + $0xa0] sm:$0xff]
    %v1932 = vld [vmem:[#allocation12 + $0xa8] sm:$0xff]
    %v1933 = vld [vmem:[#allocation12 + $0xb0] sm:$0xff]
    %v1934 = vld [vmem:[#allocation12 + $0xb8] sm:$0xff]
    %v1935 = vld [vmem:[#allocation12 + $0xc0] sm:$0xff]
    %v1936 = vld [vmem:[#allocation12 + $0xc8] sm:$0xff]
    %v1937 = vld [vmem:[#allocation12 + $0xd0] sm:$0xff]
    %v1938 = vld [vmem:[#allocation12 + $0xd8] sm:$0xff]
    %v1939 = vld [vmem:[#allocation12 + $0xe0] sm:$0xff]
    %v1940 = vld [vmem:[#allocation12 + $0xe8] sm:$0xff]
    %v1941 = vld [vmem:[#allocation12 + $0xf0] sm:$0xff]
    %v1942 = vld [vmem:[#allocation12 + $0xf8] sm:$0xff]
    %v1943 = vld [vmem:[#allocation12 + $0x100] sm:$0xff]
    %v1944 = vld [vmem:[#allocation12 + $0x108] sm:$0xff]
    %v1945 = vld [vmem:[#allocation12 + $0x110] sm:$0xff]
    %v1946 = vld [vmem:[#allocation12 + $0x118] sm:$0xff]
    %v1947 = vld [vmem:[#allocation12 + $0x120] sm:$0xff]
    %v1948 = vld [vmem:[#allocation12 + $0x128] sm:$0xff]
    %v1949 = vld [vmem:[#allocation12 + $0x130] sm:$0xff]
    %v1950 = vld [vmem:[#allocation12 + $0x138] sm:$0xff]
    %v1951 = vld [vmem:[#allocation12 + $0x140] sm:$0xff]
    %v1952 = vld [vmem:[#allocation12 + $0x148] sm:$0xff]
    %v1953 = vld [vmem:[#allocation12 + $0x150] sm:$0xff]
    %v1954 = vld [vmem:[#allocation12 + $0x158] sm:$0xff]
    %v1955 = vld [vmem:[#allocation12 + $0x160] sm:$0xff]
    %v1956 = vld [vmem:[#allocation12 + $0x168] sm:$0xff]
    %v1957 = vld [vmem:[#allocation12 + $0x170] sm:$0xff]
    %v1958 = vld [vmem:[#allocation12 + $0x178] sm:$0xff]
    %v1959 = vld [vmem:[#allocation12 + $0x180] sm:$0xff]
    %v1960 = vld [vmem:[#allocation12 + $0x188] sm:$0xff]
    %v1961 = vld [vmem:[#allocation12 + $0x190] sm:$0xff]
    %v1962 = vld [vmem:[#allocation12 + $0x198] sm:$0xff]
    %v1963 = vld [vmem:[#allocation12 + $0x1a0] sm:$0xff]
    %v1964 = vld [vmem:[#allocation12 + $0x1a8] sm:$0xff]
    %v1965 = vld [vmem:[#allocation12 + $0x1b0] sm:$0xff]
    %v1966 = vld [vmem:[#allocation12 + $0x1b8] sm:$0xff]
    %v1967 = vld [vmem:[#allocation12 + $0x1c0] sm:$0xff]
    %v1968 = vld [vmem:[#allocation12 + $0x1c8] sm:$0xff]
    %v1969 = vld [vmem:[#allocation12 + $0x1d0] sm:$0xff]
    %v1970 = vld [vmem:[#allocation12 + $0x1d8] sm:$0xff]
    %v1971 = vld [vmem:[#allocation12 + $0x1e0] sm:$0xff]
    %v1972 = vld [vmem:[#allocation12 + $0x1e8] sm:$0xff]
    %v1973 = vld [vmem:[#allocation12 + $0x1f0] sm:$0xff]
    %v1974 = vld [vmem:[#allocation12 + $0x1f8] sm:$0xff]
    %1975 = vmatprep.subr.mxu0 %v1972
    %1976 = vmatpush1.msra.mxu0 %v1971
    %1977 = vmatprep.subr.mxu0 %v1968
    %1978 = vmatpush1.msra.mxu0 %v1967
    %1979 = vmatprep.subr.mxu0 %v1964
    %1980 = vmatpush1.msra.mxu0 %v1963
    %1981 = vmatprep.subr.mxu0 %v1960
    %1982 = vmatpush1.msra.mxu0 %v1959
    %1983 = vmatprep.subr.mxu0 %v1956
    %1984 = vmatpush1.msra.mxu0 %v1955
    %1985 = vmatprep.subr.mxu0 %v1952
    %1986 = vmatpush1.msra.mxu0 %v1951
    %1987 = vmatprep.subr.mxu0 %v1948
    %1988 = vmatpush1.msra.mxu0 %v1947
    %1989 = vmatprep.subr.mxu0 %v1944
    %1990 = vmatpush1.msra.mxu0 %v1943
    %1991 = vmatprep.subr.mxu0 %v1940
    %1992 = vmatpush1.msra.mxu0 %v1939
    %1993 = vmatprep.subr.mxu0 %v1936
    %1994 = vmatpush1.msra.mxu0 %v1935
    %1995 = vmatprep.subr.mxu0 %v1932
    %1996 = vmatpush1.msra.mxu0 %v1931
    %1997 = vmatprep.subr.mxu0 %v1928
    %1998 = vmatpush1.msra.mxu0 %v1927
    %1999 = vmatprep.subr.mxu0 %v1924
    %2000 = vmatpush1.msra.mxu0 %v1923
    %2001 = vmatprep.subr.mxu0 %v1920
    %2002 = vmatpush1.msra.mxu0 %v1919
    %2003 = vmatprep.subr.mxu0 %v1916
    %2004 = vmatpush1.msra.mxu0 %v1915
    %2005 = vmatprep.subr.mxu0 %v1912
    %2006 = vmatpush1.msra.mxu0 %v1911
    %2007 = vmatprep.subr.mxu0 0.0
    %2008 = vmatpush2.msra.mxu0 0.0
    %2009 = vmatprep.subr.mxu0 0.0
    %2010 = vmatpush2.msra.mxu0 0.0
    %2011 = vmatprep.subr.mxu0 0.0
    %2012 = vmatpush2.msra.mxu0 0.0
    %2013 = vmatprep.subr.mxu0 0.0
    %2014 = vmatpush2.msra.mxu0 0.0
    %2015 = vmatprep.subr.mxu0 0.0
    %2016 = vmatpush2.msra.mxu0 0.0
    %2017 = vmatprep.subr.mxu0 0.0
    %2018 = vmatpush2.msra.mxu0 0.0
    %2019 = vmatprep.subr.mxu0 0.0
    %2020 = vmatpush2.msra.mxu0 0.0
    %2021 = vmatprep.subr.mxu0 0.0
    %2022 = vmatpush2.msra.mxu0 0.0
    %2023 = vmatprep.subr.mxu0 0.0
    %2024 = vmatpush2.msra.mxu0 0.0
    %2025 = vmatprep.subr.mxu0 0.0
    %2026 = vmatpush2.msra.mxu0 0.0
    %2027 = vmatprep.subr.mxu0 0.0
    %2028 = vmatpush2.msra.mxu0 0.0
    %2029 = vmatprep.subr.mxu0 0.0
    %2030 = vmatpush2.msra.mxu0 0.0
    %2031 = vmatprep.subr.mxu0 0.0
    %2032 = vmatpush2.msra.mxu0 0.0
    %2033 = vmatprep.subr.mxu0 0.0
    %2034 = vmatpush2.msra.mxu0 0.0
    %2035 = vmatprep.subr.mxu0 0.0
    %2036 = vmatpush2.msra.mxu0 0.0
    %2037 = vmatprep.subr.mxu0 0.0
    %2038 = vmatpush2.msra.mxu0 0.0
    %2039 = vmatprep.mubr.f32.mxu0 0.0
    %2040 = vmatmul.mubr.f32.gmra.mxu0 %v1903
    %v2041 = vpop.f32.mrf.mxu0
    %v2042 = vadd.f32 0.0, %v2041
    %v2043 = vpop.f32.mrf.mxu0
    %v2044 = vadd.f32 0.0, %v2043
    %2045 = vdwg.mxu0
    %2046 = vmatprep.subr.mxu0 %v1974
    %2047 = vmatpush1.msra.mxu0 %v1973
    %2048 = vmatprep.subr.mxu0 %v1970
    %2049 = vmatpush1.msra.mxu0 %v1969
    %2050 = vmatprep.subr.mxu0 %v1966
    %2051 = vmatpush1.msra.mxu0 %v1965
    %2052 = vmatprep.subr.mxu0 %v1962
    %2053 = vmatpush1.msra.mxu0 %v1961
    %2054 = vmatprep.subr.mxu0 %v1958
    %2055 = vmatpush1.msra.mxu0 %v1957
    %2056 = vmatprep.subr.mxu0 %v1954
    %2057 = vmatpush1.msra.mxu0 %v1953
    %2058 = vmatprep.subr.mxu0 %v1950
    %2059 = vmatpush1.msra.mxu0 %v1949
    %2060 = vmatprep.subr.mxu0 %v1946
    %2061 = vmatpush1.msra.mxu0 %v1945
    %2062 = vmatprep.subr.mxu0 %v1942
    %2063 = vmatpush1.msra.mxu0 %v1941
    %2064 = vmatprep.subr.mxu0 %v1938
    %2065 = vmatpush1.msra.mxu0 %v1937
    %2066 = vmatprep.subr.mxu0 %v1934
    %2067 = vmatpush1.msra.mxu0 %v1933
    %2068 = vmatprep.subr.mxu0 %v1930
    %2069 = vmatpush1.msra.mxu0 %v1929
    %2070 = vmatprep.subr.mxu0 %v1926
    %2071 = vmatpush1.msra.mxu0 %v1925
    %2072 = vmatprep.subr.mxu0 %v1922
    %2073 = vmatpush1.msra.mxu0 %v1921
    %2074 = vmatprep.subr.mxu0 %v1918
    %2075 = vmatpush1.msra.mxu0 %v1917
    %2076 = vmatprep.subr.mxu0 %v1914
    %2077 = vmatpush1.msra.mxu0 %v1913
    %2078 = vmatprep.subr.mxu0 0.0
    %2079 = vmatpush2.msra.mxu0 0.0
    %2080 = vmatprep.subr.mxu0 0.0
    %2081 = vmatpush2.msra.mxu0 0.0
    %2082 = vmatprep.subr.mxu0 0.0
    %2083 = vmatpush2.msra.mxu0 0.0
    %2084 = vmatprep.subr.mxu0 0.0
    %2085 = vmatpush2.msra.mxu0 0.0
    %2086 = vmatprep.subr.mxu0 0.0
    %2087 = vmatpush2.msra.mxu0 0.0
    %2088 = vmatprep.subr.mxu0 0.0
    %2089 = vmatpush2.msra.mxu0 0.0
    %2090 = vmatprep.subr.mxu0 0.0
    %2091 = vmatpush2.msra.mxu0 0.0
    %2092 = vmatprep.subr.mxu0 0.0
    %2093 = vmatpush2.msra.mxu0 0.0
    %2094 = vmatprep.subr.mxu0 0.0
    %2095 = vmatpush2.msra.mxu0 0.0
    %2096 = vmatprep.subr.mxu0 0.0
    %2097 = vmatpush2.msra.mxu0 0.0
    %2098 = vmatprep.subr.mxu0 0.0
    %2099 = vmatpush2.msra.mxu0 0.0
    %2100 = vmatprep.subr.mxu0 0.0
    %2101 = vmatpush2.msra.mxu0 0.0
    %2102 = vmatprep.subr.mxu0 0.0
    %2103 = vmatpush2.msra.mxu0 0.0
    %2104 = vmatprep.subr.mxu0 0.0
    %2105 = vmatpush2.msra.mxu0 0.0
    %2106 = vmatprep.subr.mxu0 0.0
    %2107 = vmatpush2.msra.mxu0 0.0
    %2108 = vmatprep.subr.mxu0 0.0
    %2109 = vmatpush2.msra.mxu0 0.0
    %2110 = vmatprep.mubr.f32.mxu0 0.0
    %2111 = vmatmul.mubr.f32.gmra.mxu0 %v1903
    %v2112 = vpop.f32.mrf.mxu0
    %v2113 = vadd.f32 0.0, %v2112
    %v2114 = vpop.f32.mrf.mxu0
    %v2115 = vadd.f32 0.0, %v2114
    %2116 = vdwg.mxu0
    %v2117 = vadd.f32 %v1907, %v2042
    %v2118 = vadd.f32 %v1908, %v2044
    %v2119 = vadd.f32 %v1909, %v2113
    %v2120 = vadd.f32 %v1910, %v2115
    %v2121 = vxor.u32 %v2117, 2147483648
    %v2122 = vmul.f32 %v2121, 1.442695
    %v2123 = vpow.pop %v2122
    %v2124 = vadd.f32 %v2123, 1.0
    %v2125 = vrcp.pop %v2124
    %v2126 = vmul.f32 1.0, %v2125
    %v2127 = vxor.u32 %v2118, 2147483648
    %v2128 = vmul.f32 %v2127, 1.442695
    %v2129 = vpow.pop %v2128
    %v2130 = vadd.f32 %v2129, 1.0
    %v2131 = vrcp.pop %v2130
    %v2132 = vmul.f32 1.0, %v2131
    %v2133 = vtanh.pop %v2119
    %v2134 = vxor.u32 %v2120, 2147483648
    %v2135 = vmul.f32 %v2134, 1.442695
    %v2136 = vpow.pop %v2135
    %v2137 = vadd.f32 %v2136, 1.0
    %v2138 = vrcp.pop %v2137
    %v2139 = vmul.f32 1.0, %v2138
    %v2140 = vmul.f32 %v2132, %v1901
    %v2141 = vmul.f32 %v2126, %v2133
    %v2142 = vadd.f32 %v2140, %v2141
    %v2143 = vtanh.pop %v2142
    %v2144 = vmul.f32 %v2139, %v2143
    %s2145 = scalar_lea.vmem [#allocation2], 48
    %2146 = vst [vmem:[%s2145] sm:$0xff] %v2144
    %s2147 = scalar_lea.vmem [#allocation3], 224
    %v2148 = vld [vmem:[%s2147] sm:$0xff]
    %v2149 = vld [vmem:[%s2147 + $0x8] sm:$0xff]
    %v2150 = vld [vmem:[%s2147 + $0x10] sm:$0xff]
    %v2151 = vld [vmem:[%s2147 + $0x18] sm:$0xff]
    %v2152 = vld [vmem:[#allocation12] sm:$0xff]
    %v2153 = vld [vmem:[#allocation12 + $0x8] sm:$0xff]
    %v2154 = vld [vmem:[#allocation12 + $0x10] sm:$0xff]
    %v2155 = vld [vmem:[#allocation12 + $0x18] sm:$0xff]
    %v2156 = vld [vmem:[#allocation12 + $0x20] sm:$0xff]
    %v2157 = vld [vmem:[#allocation12 + $0x28] sm:$0xff]
    %v2158 = vld [vmem:[#allocation12 + $0x30] sm:$0xff]
    %v2159 = vld [vmem:[#allocation12 + $0x38] sm:$0xff]
    %v2160 = vld [vmem:[#allocation12 + $0x40] sm:$0xff]
    %v2161 = vld [vmem:[#allocation12 + $0x48] sm:$0xff]
    %v2162 = vld [vmem:[#allocation12 + $0x50] sm:$0xff]
    %v2163 = vld [vmem:[#allocation12 + $0x58] sm:$0xff]
    %v2164 = vld [vmem:[#allocation12 + $0x60] sm:$0xff]
    %v2165 = vld [vmem:[#allocation12 + $0x68] sm:$0xff]
    %v2166 = vld [vmem:[#allocation12 + $0x70] sm:$0xff]
    %v2167 = vld [vmem:[#allocation12 + $0x78] sm:$0xff]
    %v2168 = vld [vmem:[#allocation12 + $0x80] sm:$0xff]
    %v2169 = vld [vmem:[#allocation12 + $0x88] sm:$0xff]
    %v2170 = vld [vmem:[#allocation12 + $0x90] sm:$0xff]
    %v2171 = vld [vmem:[#allocation12 + $0x98] sm:$0xff]
    %v2172 = vld [vmem:[#allocation12 + $0xa0] sm:$0xff]
    %v2173 = vld [vmem:[#allocation12 + $0xa8] sm:$0xff]
    %v2174 = vld [vmem:[#allocation12 + $0xb0] sm:$0xff]
    %v2175 = vld [vmem:[#allocation12 + $0xb8] sm:$0xff]
    %v2176 = vld [vmem:[#allocation12 + $0xc0] sm:$0xff]
    %v2177 = vld [vmem:[#allocation12 + $0xc8] sm:$0xff]
    %v2178 = vld [vmem:[#allocation12 + $0xd0] sm:$0xff]
    %v2179 = vld [vmem:[#allocation12 + $0xd8] sm:$0xff]
    %v2180 = vld [vmem:[#allocation12 + $0xe0] sm:$0xff]
    %v2181 = vld [vmem:[#allocation12 + $0xe8] sm:$0xff]
    %v2182 = vld [vmem:[#allocation12 + $0xf0] sm:$0xff]
    %v2183 = vld [vmem:[#allocation12 + $0xf8] sm:$0xff]
    %v2184 = vld [vmem:[#allocation12 + $0x100] sm:$0xff]
    %v2185 = vld [vmem:[#allocation12 + $0x108] sm:$0xff]
    %v2186 = vld [vmem:[#allocation12 + $0x110] sm:$0xff]
    %v2187 = vld [vmem:[#allocation12 + $0x118] sm:$0xff]
    %v2188 = vld [vmem:[#allocation12 + $0x120] sm:$0xff]
    %v2189 = vld [vmem:[#allocation12 + $0x128] sm:$0xff]
    %v2190 = vld [vmem:[#allocation12 + $0x130] sm:$0xff]
    %v2191 = vld [vmem:[#allocation12 + $0x138] sm:$0xff]
    %v2192 = vld [vmem:[#allocation12 + $0x140] sm:$0xff]
    %v2193 = vld [vmem:[#allocation12 + $0x148] sm:$0xff]
    %v2194 = vld [vmem:[#allocation12 + $0x150] sm:$0xff]
    %v2195 = vld [vmem:[#allocation12 + $0x158] sm:$0xff]
    %v2196 = vld [vmem:[#allocation12 + $0x160] sm:$0xff]
    %v2197 = vld [vmem:[#allocation12 + $0x168] sm:$0xff]
    %v2198 = vld [vmem:[#allocation12 + $0x170] sm:$0xff]
    %v2199 = vld [vmem:[#allocation12 + $0x178] sm:$0xff]
    %v2200 = vld [vmem:[#allocation12 + $0x180] sm:$0xff]
    %v2201 = vld [vmem:[#allocation12 + $0x188] sm:$0xff]
    %v2202 = vld [vmem:[#allocation12 + $0x190] sm:$0xff]
    %v2203 = vld [vmem:[#allocation12 + $0x198] sm:$0xff]
    %v2204 = vld [vmem:[#allocation12 + $0x1a0] sm:$0xff]
    %v2205 = vld [vmem:[#allocation12 + $0x1a8] sm:$0xff]
    %v2206 = vld [vmem:[#allocation12 + $0x1b0] sm:$0xff]
    %v2207 = vld [vmem:[#allocation12 + $0x1b8] sm:$0xff]
    %v2208 = vld [vmem:[#allocation12 + $0x1c0] sm:$0xff]
    %v2209 = vld [vmem:[#allocation12 + $0x1c8] sm:$0xff]
    %v2210 = vld [vmem:[#allocation12 + $0x1d0] sm:$0xff]
    %v2211 = vld [vmem:[#allocation12 + $0x1d8] sm:$0xff]
    %v2212 = vld [vmem:[#allocation12 + $0x1e0] sm:$0xff]
    %v2213 = vld [vmem:[#allocation12 + $0x1e8] sm:$0xff]
    %v2214 = vld [vmem:[#allocation12 + $0x1f0] sm:$0xff]
    %v2215 = vld [vmem:[#allocation12 + $0x1f8] sm:$0xff]
    %2216 = vmatprep.subr.mxu0 %v2213
    %2217 = vmatpush1.msra.mxu0 %v2212
    %2218 = vmatprep.subr.mxu0 %v2209
    %2219 = vmatpush1.msra.mxu0 %v2208
    %2220 = vmatprep.subr.mxu0 %v2205
    %2221 = vmatpush1.msra.mxu0 %v2204
    %2222 = vmatprep.subr.mxu0 %v2201
    %2223 = vmatpush1.msra.mxu0 %v2200
    %2224 = vmatprep.subr.mxu0 %v2197
    %2225 = vmatpush1.msra.mxu0 %v2196
    %2226 = vmatprep.subr.mxu0 %v2193
    %2227 = vmatpush1.msra.mxu0 %v2192
    %2228 = vmatprep.subr.mxu0 %v2189
    %2229 = vmatpush1.msra.mxu0 %v2188
    %2230 = vmatprep.subr.mxu0 %v2185
    %2231 = vmatpush1.msra.mxu0 %v2184
    %2232 = vmatprep.subr.mxu0 %v2181
    %2233 = vmatpush1.msra.mxu0 %v2180
    %2234 = vmatprep.subr.mxu0 %v2177
    %2235 = vmatpush1.msra.mxu0 %v2176
    %2236 = vmatprep.subr.mxu0 %v2173
    %2237 = vmatpush1.msra.mxu0 %v2172
    %2238 = vmatprep.subr.mxu0 %v2169
    %2239 = vmatpush1.msra.mxu0 %v2168
    %2240 = vmatprep.subr.mxu0 %v2165
    %2241 = vmatpush1.msra.mxu0 %v2164
    %2242 = vmatprep.subr.mxu0 %v2161
    %2243 = vmatpush1.msra.mxu0 %v2160
    %2244 = vmatprep.subr.mxu0 %v2157
    %2245 = vmatpush1.msra.mxu0 %v2156
    %2246 = vmatprep.subr.mxu0 %v2153
    %2247 = vmatpush1.msra.mxu0 %v2152
    %2248 = vmatprep.subr.mxu0 0.0
    %2249 = vmatpush2.msra.mxu0 0.0
    %2250 = vmatprep.subr.mxu0 0.0
    %2251 = vmatpush2.msra.mxu0 0.0
    %2252 = vmatprep.subr.mxu0 0.0
    %2253 = vmatpush2.msra.mxu0 0.0
    %2254 = vmatprep.subr.mxu0 0.0
    %2255 = vmatpush2.msra.mxu0 0.0
    %2256 = vmatprep.subr.mxu0 0.0
    %2257 = vmatpush2.msra.mxu0 0.0
    %2258 = vmatprep.subr.mxu0 0.0
    %2259 = vmatpush2.msra.mxu0 0.0
    %2260 = vmatprep.subr.mxu0 0.0
    %2261 = vmatpush2.msra.mxu0 0.0
    %2262 = vmatprep.subr.mxu0 0.0
    %2263 = vmatpush2.msra.mxu0 0.0
    %2264 = vmatprep.subr.mxu0 0.0
    %2265 = vmatpush2.msra.mxu0 0.0
    %2266 = vmatprep.subr.mxu0 0.0
    %2267 = vmatpush2.msra.mxu0 0.0
    %2268 = vmatprep.subr.mxu0 0.0
    %2269 = vmatpush2.msra.mxu0 0.0
    %2270 = vmatprep.subr.mxu0 0.0
    %2271 = vmatpush2.msra.mxu0 0.0
    %2272 = vmatprep.subr.mxu0 0.0
    %2273 = vmatpush2.msra.mxu0 0.0
    %2274 = vmatprep.subr.mxu0 0.0
    %2275 = vmatpush2.msra.mxu0 0.0
    %2276 = vmatprep.subr.mxu0 0.0
    %2277 = vmatpush2.msra.mxu0 0.0
    %2278 = vmatprep.subr.mxu0 0.0
    %2279 = vmatpush2.msra.mxu0 0.0
    %2280 = vmatprep.mubr.f32.mxu0 0.0
    %2281 = vmatmul.mubr.f32.gmra.mxu0 %v2144
    %v2282 = vpop.f32.mrf.mxu0
    %v2283 = vadd.f32 0.0, %v2282
    %v2284 = vpop.f32.mrf.mxu0
    %v2285 = vadd.f32 0.0, %v2284
    %2286 = vdwg.mxu0
    %2287 = vmatprep.subr.mxu0 %v2215
    %2288 = vmatpush1.msra.mxu0 %v2214
    %2289 = vmatprep.subr.mxu0 %v2211
    %2290 = vmatpush1.msra.mxu0 %v2210
    %2291 = vmatprep.subr.mxu0 %v2207
    %2292 = vmatpush1.msra.mxu0 %v2206
    %2293 = vmatprep.subr.mxu0 %v2203
    %2294 = vmatpush1.msra.mxu0 %v2202
    %2295 = vmatprep.subr.mxu0 %v2199
    %2296 = vmatpush1.msra.mxu0 %v2198
    %2297 = vmatprep.subr.mxu0 %v2195
    %2298 = vmatpush1.msra.mxu0 %v2194
    %2299 = vmatprep.subr.mxu0 %v2191
    %2300 = vmatpush1.msra.mxu0 %v2190
    %2301 = vmatprep.subr.mxu0 %v2187
    %2302 = vmatpush1.msra.mxu0 %v2186
    %2303 = vmatprep.subr.mxu0 %v2183
    %2304 = vmatpush1.msra.mxu0 %v2182
    %2305 = vmatprep.subr.mxu0 %v2179
    %2306 = vmatpush1.msra.mxu0 %v2178
    %2307 = vmatprep.subr.mxu0 %v2175
    %2308 = vmatpush1.msra.mxu0 %v2174
    %2309 = vmatprep.subr.mxu0 %v2171
    %2310 = vmatpush1.msra.mxu0 %v2170
    %2311 = vmatprep.subr.mxu0 %v2167
    %2312 = vmatpush1.msra.mxu0 %v2166
    %2313 = vmatprep.subr.mxu0 %v2163
    %2314 = vmatpush1.msra.mxu0 %v2162
    %2315 = vmatprep.subr.mxu0 %v2159
    %2316 = vmatpush1.msra.mxu0 %v2158
    %2317 = vmatprep.subr.mxu0 %v2155
    %2318 = vmatpush1.msra.mxu0 %v2154
    %2319 = vmatprep.subr.mxu0 0.0
    %2320 = vmatpush2.msra.mxu0 0.0
    %2321 = vmatprep.subr.mxu0 0.0
    %2322 = vmatpush2.msra.mxu0 0.0
    %2323 = vmatprep.subr.mxu0 0.0
    %2324 = vmatpush2.msra.mxu0 0.0
    %2325 = vmatprep.subr.mxu0 0.0
    %2326 = vmatpush2.msra.mxu0 0.0
    %2327 = vmatprep.subr.mxu0 0.0
    %2328 = vmatpush2.msra.mxu0 0.0
    %2329 = vmatprep.subr.mxu0 0.0
    %2330 = vmatpush2.msra.mxu0 0.0
    %2331 = vmatprep.subr.mxu0 0.0
    %2332 = vmatpush2.msra.mxu0 0.0
    %2333 = vmatprep.subr.mxu0 0.0
    %2334 = vmatpush2.msra.mxu0 0.0
    %2335 = vmatprep.subr.mxu0 0.0
    %2336 = vmatpush2.msra.mxu0 0.0
    %2337 = vmatprep.subr.mxu0 0.0
    %2338 = vmatpush2.msra.mxu0 0.0
    %2339 = vmatprep.subr.mxu0 0.0
    %2340 = vmatpush2.msra.mxu0 0.0
    %2341 = vmatprep.subr.mxu0 0.0
    %2342 = vmatpush2.msra.mxu0 0.0
    %2343 = vmatprep.subr.mxu0 0.0
    %2344 = vmatpush2.msra.mxu0 0.0
    %2345 = vmatprep.subr.mxu0 0.0
    %2346 = vmatpush2.msra.mxu0 0.0
    %2347 = vmatprep.subr.mxu0 0.0
    %2348 = vmatpush2.msra.mxu0 0.0
    %2349 = vmatprep.subr.mxu0 0.0
    %2350 = vmatpush2.msra.mxu0 0.0
    %2351 = vmatprep.mubr.f32.mxu0 0.0
    %2352 = vmatmul.mubr.f32.gmra.mxu0 %v2144
    %v2353 = vpop.f32.mrf.mxu0
    %v2354 = vadd.f32 0.0, %v2353
    %v2355 = vpop.f32.mrf.mxu0
    %v2356 = vadd.f32 0.0, %v2355
    %2357 = vdwg.mxu0
    %v2358 = vadd.f32 %v2148, %v2283
    %v2359 = vadd.f32 %v2149, %v2285
    %v2360 = vadd.f32 %v2150, %v2354
    %v2361 = vadd.f32 %v2151, %v2356
    %v2362 = vxor.u32 %v2358, 2147483648
    %v2363 = vmul.f32 %v2362, 1.442695
    %v2364 = vpow.pop %v2363
    %v2365 = vadd.f32 %v2364, 1.0
    %v2366 = vrcp.pop %v2365
    %v2367 = vmul.f32 1.0, %v2366
    %v2368 = vxor.u32 %v2359, 2147483648
    %v2369 = vmul.f32 %v2368, 1.442695
    %v2370 = vpow.pop %v2369
    %v2371 = vadd.f32 %v2370, 1.0
    %v2372 = vrcp.pop %v2371
    %v2373 = vmul.f32 1.0, %v2372
    %v2374 = vtanh.pop %v2360
    %v2375 = vxor.u32 %v2361, 2147483648
    %v2376 = vmul.f32 %v2375, 1.442695
    %v2377 = vpow.pop %v2376
    %v2378 = vadd.f32 %v2377, 1.0
    %v2379 = vrcp.pop %v2378
    %v2380 = vmul.f32 1.0, %v2379
    %v2381 = vmul.f32 %v2373, %v2142
    %v2382 = vmul.f32 %v2367, %v2374
    %v2383 = vadd.f32 %v2381, %v2382
    %v2384 = vtanh.pop %v2383
    %v2385 = vmul.f32 %v2380, %v2384
    %s2386 = scalar_lea.vmem [#allocation2], 56
    %2387 = vst [vmem:[%s2386] sm:$0xff] %v2385
    %v2388 = vld [vmem:[#allocation2] sm:$0xff]
    %v2389 = vld [vmem:[#allocation2 + $0x8] sm:$0xff]
    %v2390 = vld [vmem:[#allocation2 + $0x10] sm:$0xff]
    %v2391 = vld [vmem:[#allocation2 + $0x18] sm:$0xff]
    %v2392 = vld [vmem:[#allocation2 + $0x20] sm:$0xff]
    %v2393 = vld [vmem:[#allocation2 + $0x28] sm:$0xff]
    %v2394 = vld [vmem:[#allocation2 + $0x30] sm:$0xff]
    %v2395 = vld [vmem:[#allocation2 + $0x38] sm:$0xff]
    %v2396 = vld [vmem:[#allocation10] sm:$0xff]
    %v2397 = vld [vmem:[#allocation10 + $0x8] sm:$0xff]
    %v2398 = vld [vmem:[#allocation10 + $0x10] sm:$0xff]
    %v2399 = vld [vmem:[#allocation10 + $0x18] sm:$0xff]
    %v2400 = vld [vmem:[#allocation10 + $0x20] sm:$0xff]
    %v2401 = vld [vmem:[#allocation10 + $0x28] sm:$0xff]
    %v2402 = vld [vmem:[#allocation10 + $0x30] sm:$0xff]
    %v2403 = vld [vmem:[#allocation10 + $0x38] sm:$0xff]
    %v2404 = vld [vmem:[#allocation10 + $0x40] sm:$0xff]
    %v2405 = vld [vmem:[#allocation10 + $0x48] sm:$0xff]
    %v2406 = vld [vmem:[#allocation10 + $0x50] sm:$0xff]
    %v2407 = vld [vmem:[#allocation10 + $0x58] sm:$0xff]
    %v2408 = vld [vmem:[#allocation10 + $0x60] sm:$0xff]
    %v2409 = vld [vmem:[#allocation10 + $0x68] sm:$0xff]
    %v2410 = vld [vmem:[#allocation10 + $0x70] sm:$0xff]
    %v2411 = vld [vmem:[#allocation10 + $0x78] sm:$0xff]
    %v2412 = vld [vmem:[#allocation10 + $0x80] sm:$0xff]
    %v2413 = vld [vmem:[#allocation10 + $0x88] sm:$0xff]
    %v2414 = vld [vmem:[#allocation10 + $0x90] sm:$0xff]
    %v2415 = vld [vmem:[#allocation10 + $0x98] sm:$0xff]
    %v2416 = vld [vmem:[#allocation10 + $0xa0] sm:$0xff]
    %v2417 = vld [vmem:[#allocation10 + $0xa8] sm:$0xff]
    %v2418 = vld [vmem:[#allocation10 + $0xb0] sm:$0xff]
    %v2419 = vld [vmem:[#allocation10 + $0xb8] sm:$0xff]
    %v2420 = vld [vmem:[#allocation10 + $0xc0] sm:$0xff]
    %v2421 = vld [vmem:[#allocation10 + $0xc8] sm:$0xff]
    %v2422 = vld [vmem:[#allocation10 + $0xd0] sm:$0xff]
    %v2423 = vld [vmem:[#allocation10 + $0xd8] sm:$0xff]
    %v2424 = vld [vmem:[#allocation10 + $0xe0] sm:$0xff]
    %v2425 = vld [vmem:[#allocation10 + $0xe8] sm:$0xff]
    %v2426 = vld [vmem:[#allocation10 + $0xf0] sm:$0xff]
    %v2427 = vld [vmem:[#allocation10 + $0xf8] sm:$0xff]
    %v2428 = vld [vmem:[#allocation10 + $0x100] sm:$0xff]
    %v2429 = vld [vmem:[#allocation10 + $0x108] sm:$0xff]
    %v2430 = vld [vmem:[#allocation10 + $0x110] sm:$0xff]
    %v2431 = vld [vmem:[#allocation10 + $0x118] sm:$0xff]
    %v2432 = vld [vmem:[#allocation10 + $0x120] sm:$0xff]
    %v2433 = vld [vmem:[#allocation10 + $0x128] sm:$0xff]
    %v2434 = vld [vmem:[#allocation10 + $0x130] sm:$0xff]
    %v2435 = vld [vmem:[#allocation10 + $0x138] sm:$0xff]
    %v2436 = vld [vmem:[#allocation10 + $0x140] sm:$0xff]
    %v2437 = vld [vmem:[#allocation10 + $0x148] sm:$0xff]
    %v2438 = vld [vmem:[#allocation10 + $0x150] sm:$0xff]
    %v2439 = vld [vmem:[#allocation10 + $0x158] sm:$0xff]
    %v2440 = vld [vmem:[#allocation10 + $0x160] sm:$0xff]
    %v2441 = vld [vmem:[#allocation10 + $0x168] sm:$0xff]
    %v2442 = vld [vmem:[#allocation10 + $0x170] sm:$0xff]
    %v2443 = vld [vmem:[#allocation10 + $0x178] sm:$0xff]
    %v2444 = vld [vmem:[#allocation10 + $0x180] sm:$0xff]
    %v2445 = vld [vmem:[#allocation10 + $0x188] sm:$0xff]
    %v2446 = vld [vmem:[#allocation10 + $0x190] sm:$0xff]
    %v2447 = vld [vmem:[#allocation10 + $0x198] sm:$0xff]
    %v2448 = vld [vmem:[#allocation10 + $0x1a0] sm:$0xff]
    %v2449 = vld [vmem:[#allocation10 + $0x1a8] sm:$0xff]
    %v2450 = vld [vmem:[#allocation10 + $0x1b0] sm:$0xff]
    %v2451 = vld [vmem:[#allocation10 + $0x1b8] sm:$0xff]
    %v2452 = vld [vmem:[#allocation10 + $0x1c0] sm:$0xff]
    %v2453 = vld [vmem:[#allocation10 + $0x1c8] sm:$0xff]
    %v2454 = vld [vmem:[#allocation10 + $0x1d0] sm:$0xff]
    %v2455 = vld [vmem:[#allocation10 + $0x1d8] sm:$0xff]
    %v2456 = vld [vmem:[#allocation10 + $0x1e0] sm:$0xff]
    %v2457 = vld [vmem:[#allocation10 + $0x1e8] sm:$0xff]
    %v2458 = vld [vmem:[#allocation10 + $0x1f0] sm:$0xff]
    %v2459 = vld [vmem:[#allocation10 + $0x1f8] sm:$0xff]
    %v2460 = vld [vmem:[%s4] sm:$0xf]
    %v2462 = vlaneseq
    %v2463 = vshrl.u32 %v2462, 7
    %v2464 = vsub.s32 0, %v2463
    %v2465 = vrot.slane %v2460, %v2464
    %v2466 = vlaneseq
    %v2467 = vshrl.u32 %v2466, 7
    %v2468 = vsub.s32 1, %v2467
    %v2469 = vrot.slane %v2460, %v2468
    %v2470 = vlaneseq
    %v2471 = vshrl.u32 %v2470, 7
    %v2472 = vsub.s32 2, %v2471
    %v2473 = vrot.slane %v2460, %v2472
    %v2474 = vlaneseq
    %v2475 = vshrl.u32 %v2474, 7
    %v2476 = vsub.s32 3, %v2475
    %v2477 = vrot.slane %v2460, %v2476
    %2482 = vmatprep.subr.mxu0 %v2457
    %2483 = vmatpush1.msra.mxu0 %v2456
    %2484 = vmatprep.subr.mxu0 %v2453
    %2485 = vmatpush1.msra.mxu0 %v2452
    %2486 = vmatprep.subr.mxu0 %v2449
    %2487 = vmatpush1.msra.mxu0 %v2448
    %2488 = vmatprep.subr.mxu0 %v2445
    %2489 = vmatpush1.msra.mxu0 %v2444
    %2490 = vmatprep.subr.mxu0 %v2441
    %2491 = vmatpush1.msra.mxu0 %v2440
    %2492 = vmatprep.subr.mxu0 %v2437
    %2493 = vmatpush1.msra.mxu0 %v2436
    %2494 = vmatprep.subr.mxu0 %v2433
    %2495 = vmatpush1.msra.mxu0 %v2432
    %2496 = vmatprep.subr.mxu0 %v2429
    %2497 = vmatpush1.msra.mxu0 %v2428
    %2498 = vmatprep.subr.mxu0 %v2425
    %2499 = vmatpush1.msra.mxu0 %v2424
    %2500 = vmatprep.subr.mxu0 %v2421
    %2501 = vmatpush1.msra.mxu0 %v2420
    %2502 = vmatprep.subr.mxu0 %v2417
    %2503 = vmatpush1.msra.mxu0 %v2416
    %2504 = vmatprep.subr.mxu0 %v2413
    %2505 = vmatpush1.msra.mxu0 %v2412
    %2506 = vmatprep.subr.mxu0 %v2409
    %2507 = vmatpush1.msra.mxu0 %v2408
    %2508 = vmatprep.subr.mxu0 %v2405
    %2509 = vmatpush1.msra.mxu0 %v2404
    %2510 = vmatprep.subr.mxu0 %v2401
    %2511 = vmatpush1.msra.mxu0 %v2400
    %2512 = vmatprep.subr.mxu0 %v2397
    %2513 = vmatpush1.msra.mxu0 %v2396
    %2514 = vmatprep.subr.mxu0 0.0
    %2515 = vmatpush2.msra.mxu0 0.0
    %2516 = vmatprep.subr.mxu0 0.0
    %2517 = vmatpush2.msra.mxu0 0.0
    %2518 = vmatprep.subr.mxu0 0.0
    %2519 = vmatpush2.msra.mxu0 0.0
    %2520 = vmatprep.subr.mxu0 0.0
    %2521 = vmatpush2.msra.mxu0 0.0
    %2522 = vmatprep.subr.mxu0 0.0
    %2523 = vmatpush2.msra.mxu0 0.0
    %2524 = vmatprep.subr.mxu0 0.0
    %2525 = vmatpush2.msra.mxu0 0.0
    %2526 = vmatprep.subr.mxu0 0.0
    %2527 = vmatpush2.msra.mxu0 0.0
    %2528 = vmatprep.subr.mxu0 0.0
    %2529 = vmatpush2.msra.mxu0 0.0
    %2530 = vmatprep.subr.mxu0 0.0
    %2531 = vmatpush2.msra.mxu0 0.0
    %2532 = vmatprep.subr.mxu0 0.0
    %2533 = vmatpush2.msra.mxu0 0.0
    %2534 = vmatprep.subr.mxu0 0.0
    %2535 = vmatpush2.msra.mxu0 0.0
    %2536 = vmatprep.subr.mxu0 0.0
    %2537 = vmatpush2.msra.mxu0 0.0
    %2538 = vmatprep.subr.mxu0 0.0
    %2539 = vmatpush2.msra.mxu0 0.0
    %2540 = vmatprep.subr.mxu0 0.0
    %2541 = vmatpush2.msra.mxu0 0.0
    %2542 = vmatprep.subr.mxu0 0.0
    %2543 = vmatpush2.msra.mxu0 0.0
    %2544 = vmatprep.subr.mxu0 0.0
    %2545 = vmatpush2.msra.mxu0 0.0
    %2546 = vmatprep.mubr.f32.mxu0 0.0
    %2547 = vmatmul.mubr.f32.gmra.mxu0 %v2388
    %v2548 = vpop.f32.mrf.mxu0
    %v2549 = vadd.f32 %v2465, %v2548
    %v2550 = vpop.f32.mrf.mxu0
    %v2551 = vadd.f32 %v2469, %v2550
    %2552 = vmatprep.mubr.f32.mxu0 0.0
    %2553 = vmatmul.mubr.f32.gmra.mxu0 %v2389
    %v2554 = vpop.f32.mrf.mxu0
    %v2555 = vadd.f32 %v2465, %v2554
    %v2556 = vpop.f32.mrf.mxu0
    %v2557 = vadd.f32 %v2469, %v2556
    %2558 = vmatprep.mubr.f32.mxu0 0.0
    %2559 = vmatmul.mubr.f32.gmra.mxu0 %v2390
    %v2560 = vpop.f32.mrf.mxu0
    %v2561 = vadd.f32 %v2465, %v2560
    %v2562 = vpop.f32.mrf.mxu0
    %v2563 = vadd.f32 %v2469, %v2562
    %2564 = vmatprep.mubr.f32.mxu0 0.0
    %2565 = vmatmul.mubr.f32.gmra.mxu0 %v2391
    %v2566 = vpop.f32.mrf.mxu0
    %v2567 = vadd.f32 %v2465, %v2566
    %v2568 = vpop.f32.mrf.mxu0
    %v2569 = vadd.f32 %v2469, %v2568
    %2570 = vmatprep.mubr.f32.mxu0 0.0
    %2571 = vmatmul.mubr.f32.gmra.mxu0 %v2392
    %v2572 = vpop.f32.mrf.mxu0
    %v2573 = vadd.f32 %v2465, %v2572
    %v2574 = vpop.f32.mrf.mxu0
    %v2575 = vadd.f32 %v2469, %v2574
    %2576 = vmatprep.mubr.f32.mxu0 0.0
    %2577 = vmatmul.mubr.f32.gmra.mxu0 %v2393
    %v2578 = vpop.f32.mrf.mxu0
    %v2579 = vadd.f32 %v2465, %v2578
    %v2580 = vpop.f32.mrf.mxu0
    %v2581 = vadd.f32 %v2469, %v2580
    %2582 = vmatprep.mubr.f32.mxu0 0.0
    %2583 = vmatmul.mubr.f32.gmra.mxu0 %v2394
    %v2584 = vpop.f32.mrf.mxu0
    %v2585 = vadd.f32 %v2465, %v2584
    %v2586 = vpop.f32.mrf.mxu0
    %v2587 = vadd.f32 %v2469, %v2586
    %2588 = vmatprep.mubr.f32.mxu0 0.0
    %2589 = vmatmul.mubr.f32.gmra.mxu0 %v2395
    %v2590 = vpop.f32.mrf.mxu0
    %v2591 = vadd.f32 %v2465, %v2590
    %v2592 = vpop.f32.mrf.mxu0
    %v2593 = vadd.f32 %v2469, %v2592
    %2594 = vdwg.mxu0
    %2595 = vmatprep.subr.mxu0 %v2459
    %2596 = vmatpush1.msra.mxu0 %v2458
    %2597 = vmatprep.subr.mxu0 %v2455
    %2598 = vmatpush1.msra.mxu0 %v2454
    %2599 = vmatprep.subr.mxu0 %v2451
    %2600 = vmatpush1.msra.mxu0 %v2450
    %2601 = vmatprep.subr.mxu0 %v2447
    %2602 = vmatpush1.msra.mxu0 %v2446
    %2603 = vmatprep.subr.mxu0 %v2443
    %2604 = vmatpush1.msra.mxu0 %v2442
    %2605 = vmatprep.subr.mxu0 %v2439
    %2606 = vmatpush1.msra.mxu0 %v2438
    %2607 = vmatprep.subr.mxu0 %v2435
    %2608 = vmatpush1.msra.mxu0 %v2434
    %2609 = vmatprep.subr.mxu0 %v2431
    %2610 = vmatpush1.msra.mxu0 %v2430
    %2611 = vmatprep.subr.mxu0 %v2427
    %2612 = vmatpush1.msra.mxu0 %v2426
    %2613 = vmatprep.subr.mxu0 %v2423
    %2614 = vmatpush1.msra.mxu0 %v2422
    %2615 = vmatprep.subr.mxu0 %v2419
    %2616 = vmatpush1.msra.mxu0 %v2418
    %2617 = vmatprep.subr.mxu0 %v2415
    %2618 = vmatpush1.msra.mxu0 %v2414
    %2619 = vmatprep.subr.mxu0 %v2411
    %2620 = vmatpush1.msra.mxu0 %v2410
    %2621 = vmatprep.subr.mxu0 %v2407
    %2622 = vmatpush1.msra.mxu0 %v2406
    %2623 = vmatprep.subr.mxu0 %v2403
    %2624 = vmatpush1.msra.mxu0 %v2402
    %2625 = vmatprep.subr.mxu0 %v2399
    %2626 = vmatpush1.msra.mxu0 %v2398
    %2627 = vmatprep.subr.mxu0 0.0
    %2628 = vmatpush2.msra.mxu0 0.0
    %2629 = vmatprep.subr.mxu0 0.0
    %2630 = vmatpush2.msra.mxu0 0.0
    %2631 = vmatprep.subr.mxu0 0.0
    %2632 = vmatpush2.msra.mxu0 0.0
    %2633 = vmatprep.subr.mxu0 0.0
    %2634 = vmatpush2.msra.mxu0 0.0
    %2635 = vmatprep.subr.mxu0 0.0
    %2636 = vmatpush2.msra.mxu0 0.0
    %2637 = vmatprep.subr.mxu0 0.0
    %2638 = vmatpush2.msra.mxu0 0.0
    %2639 = vmatprep.subr.mxu0 0.0
    %2640 = vmatpush2.msra.mxu0 0.0
    %2641 = vmatprep.subr.mxu0 0.0
    %2642 = vmatpush2.msra.mxu0 0.0
    %2643 = vmatprep.subr.mxu0 0.0
    %2644 = vmatpush2.msra.mxu0 0.0
    %2645 = vmatprep.subr.mxu0 0.0
    %2646 = vmatpush2.msra.mxu0 0.0
    %2647 = vmatprep.subr.mxu0 0.0
    %2648 = vmatpush2.msra.mxu0 0.0
    %2649 = vmatprep.subr.mxu0 0.0
    %2650 = vmatpush2.msra.mxu0 0.0
    %2651 = vmatprep.subr.mxu0 0.0
    %2652 = vmatpush2.msra.mxu0 0.0
    %2653 = vmatprep.subr.mxu0 0.0
    %2654 = vmatpush2.msra.mxu0 0.0
    %2655 = vmatprep.subr.mxu0 0.0
    %2656 = vmatpush2.msra.mxu0 0.0
    %2657 = vmatprep.subr.mxu0 0.0
    %2658 = vmatpush2.msra.mxu0 0.0
    %2659 = vmatprep.mubr.f32.mxu0 0.0
    %2660 = vmatmul.mubr.f32.gmra.mxu0 %v2388
    %v2661 = vpop.f32.mrf.mxu0
    %v2662 = vadd.f32 %v2473, %v2661
    %v2663 = vpop.f32.mrf.mxu0
    %v2664 = vadd.f32 %v2477, %v2663
    %2665 = vmatprep.mubr.f32.mxu0 0.0
    %2666 = vmatmul.mubr.f32.gmra.mxu0 %v2389
    %v2667 = vpop.f32.mrf.mxu0
    %v2668 = vadd.f32 %v2473, %v2667
    %v2669 = vpop.f32.mrf.mxu0
    %v2670 = vadd.f32 %v2477, %v2669
    %2671 = vmatprep.mubr.f32.mxu0 0.0
    %2672 = vmatmul.mubr.f32.gmra.mxu0 %v2390
    %v2673 = vpop.f32.mrf.mxu0
    %v2674 = vadd.f32 %v2473, %v2673
    %v2675 = vpop.f32.mrf.mxu0
    %v2676 = vadd.f32 %v2477, %v2675
    %2677 = vmatprep.mubr.f32.mxu0 0.0
    %2678 = vmatmul.mubr.f32.gmra.mxu0 %v2391
    %v2679 = vpop.f32.mrf.mxu0
    %v2680 = vadd.f32 %v2473, %v2679
    %v2681 = vpop.f32.mrf.mxu0
    %v2682 = vadd.f32 %v2477, %v2681
    %2683 = vmatprep.mubr.f32.mxu0 0.0
    %2684 = vmatmul.mubr.f32.gmra.mxu0 %v2392
    %v2685 = vpop.f32.mrf.mxu0
    %v2686 = vadd.f32 %v2473, %v2685
    %v2687 = vpop.f32.mrf.mxu0
    %v2688 = vadd.f32 %v2477, %v2687
    %2689 = vmatprep.mubr.f32.mxu0 0.0
    %2690 = vmatmul.mubr.f32.gmra.mxu0 %v2393
    %v2691 = vpop.f32.mrf.mxu0
    %v2692 = vadd.f32 %v2473, %v2691
    %v2693 = vpop.f32.mrf.mxu0
    %v2694 = vadd.f32 %v2477, %v2693
    %2695 = vmatprep.mubr.f32.mxu0 0.0
    %2696 = vmatmul.mubr.f32.gmra.mxu0 %v2394
    %v2697 = vpop.f32.mrf.mxu0
    %v2698 = vadd.f32 %v2473, %v2697
    %v2699 = vpop.f32.mrf.mxu0
    %v2700 = vadd.f32 %v2477, %v2699
    %2701 = vmatprep.mubr.f32.mxu0 0.0
    %2702 = vmatmul.mubr.f32.gmra.mxu0 %v2395
    %v2703 = vpop.f32.mrf.mxu0
    %v2704 = vadd.f32 %v2473, %v2703
    %v2705 = vpop.f32.mrf.mxu0
    %v2706 = vadd.f32 %v2477, %v2705
    %2707 = vdwg.mxu0
    %2708 = vst [vmem:[#allocation3] sm:$0xff] %v2549
    %2709 = vst [vmem:[#allocation3 + $0x8] sm:$0xff] %v2551
    %2710 = vst [vmem:[#allocation3 + $0x10] sm:$0xff] %v2662
    %2711 = vst [vmem:[#allocation3 + $0x18] sm:$0xff] %v2664
    %2712 = vst [vmem:[#allocation3 + $0x20] sm:$0xff] %v2555
    %2713 = vst [vmem:[#allocation3 + $0x28] sm:$0xff] %v2557
    %2714 = vst [vmem:[#allocation3 + $0x30] sm:$0xff] %v2668
    %2715 = vst [vmem:[#allocation3 + $0x38] sm:$0xff] %v2670
    %2716 = vst [vmem:[#allocation3 + $0x40] sm:$0xff] %v2561
    %2717 = vst [vmem:[#allocation3 + $0x48] sm:$0xff] %v2563
    %2718 = vst [vmem:[#allocation3 + $0x50] sm:$0xff] %v2674
    %2719 = vst [vmem:[#allocation3 + $0x58] sm:$0xff] %v2676
    %2720 = vst [vmem:[#allocation3 + $0x60] sm:$0xff] %v2567
    %2721 = vst [vmem:[#allocation3 + $0x68] sm:$0xff] %v2569
    %2722 = vst [vmem:[#allocation3 + $0x70] sm:$0xff] %v2680
    %2723 = vst [vmem:[#allocation3 + $0x78] sm:$0xff] %v2682
    %2724 = vst [vmem:[#allocation3 + $0x80] sm:$0xff] %v2573
    %2725 = vst [vmem:[#allocation3 + $0x88] sm:$0xff] %v2575
    %2726 = vst [vmem:[#allocation3 + $0x90] sm:$0xff] %v2686
    %2727 = vst [vmem:[#allocation3 + $0x98] sm:$0xff] %v2688
    %2728 = vst [vmem:[#allocation3 + $0xa0] sm:$0xff] %v2579
    %2729 = vst [vmem:[#allocation3 + $0xa8] sm:$0xff] %v2581
    %2730 = vst [vmem:[#allocation3 + $0xb0] sm:$0xff] %v2692
    %2731 = vst [vmem:[#allocation3 + $0xb8] sm:$0xff] %v2694
    %2732 = vst [vmem:[#allocation3 + $0xc0] sm:$0xff] %v2585
    %2733 = vst [vmem:[#allocation3 + $0xc8] sm:$0xff] %v2587
    %2734 = vst [vmem:[#allocation3 + $0xd0] sm:$0xff] %v2698
    %2735 = vst [vmem:[#allocation3 + $0xd8] sm:$0xff] %v2700
    %2736 = vst [vmem:[#allocation3 + $0xe0] sm:$0xff] %v2591
    %2737 = vst [vmem:[#allocation3 + $0xe8] sm:$0xff] %v2593
    %2738 = vst [vmem:[#allocation3 + $0xf0] sm:$0xff] %v2704
    %2739 = vst [vmem:[#allocation3 + $0xf8] sm:$0xff] %v2706
    %v2740 = vld [vmem:[#allocation3] sm:$0xff]
    %v2741 = vld [vmem:[#allocation3 + $0x8] sm:$0xff]
    %v2742 = vld [vmem:[#allocation3 + $0x10] sm:$0xff]
    %v2743 = vld [vmem:[#allocation3 + $0x18] sm:$0xff]
    %s2744 = scalar_lea.vmem [#allocation12], 512
    %v2745 = vld [vmem:[%s2744] sm:$0xff]
    %v2746 = vld [vmem:[%s2744 + $0x8] sm:$0xff]
    %v2747 = vld [vmem:[%s2744 + $0x10] sm:$0xff]
    %v2748 = vld [vmem:[%s2744 + $0x18] sm:$0xff]
    %v2749 = vld [vmem:[%s2744 + $0x20] sm:$0xff]
    %v2750 = vld [vmem:[%s2744 + $0x28] sm:$0xff]
    %v2751 = vld [vmem:[%s2744 + $0x30] sm:$0xff]
    %v2752 = vld [vmem:[%s2744 + $0x38] sm:$0xff]
    %v2753 = vld [vmem:[%s2744 + $0x40] sm:$0xff]
    %v2754 = vld [vmem:[%s2744 + $0x48] sm:$0xff]
    %v2755 = vld [vmem:[%s2744 + $0x50] sm:$0xff]
    %v2756 = vld [vmem:[%s2744 + $0x58] sm:$0xff]
    %v2757 = vld [vmem:[%s2744 + $0x60] sm:$0xff]
    %v2758 = vld [vmem:[%s2744 + $0x68] sm:$0xff]
    %v2759 = vld [vmem:[%s2744 + $0x70] sm:$0xff]
    %v2760 = vld [vmem:[%s2744 + $0x78] sm:$0xff]
    %v2761 = vld [vmem:[%s2744 + $0x80] sm:$0xff]
    %v2762 = vld [vmem:[%s2744 + $0x88] sm:$0xff]
    %v2763 = vld [vmem:[%s2744 + $0x90] sm:$0xff]
    %v2764 = vld [vmem:[%s2744 + $0x98] sm:$0xff]
    %v2765 = vld [vmem:[%s2744 + $0xa0] sm:$0xff]
    %v2766 = vld [vmem:[%s2744 + $0xa8] sm:$0xff]
    %v2767 = vld [vmem:[%s2744 + $0xb0] sm:$0xff]
    %v2768 = vld [vmem:[%s2744 + $0xb8] sm:$0xff]
    %v2769 = vld [vmem:[%s2744 + $0xc0] sm:$0xff]
    %v2770 = vld [vmem:[%s2744 + $0xc8] sm:$0xff]
    %v2771 = vld [vmem:[%s2744 + $0xd0] sm:$0xff]
    %v2772 = vld [vmem:[%s2744 + $0xd8] sm:$0xff]
    %v2773 = vld [vmem:[%s2744 + $0xe0] sm:$0xff]
    %v2774 = vld [vmem:[%s2744 + $0xe8] sm:$0xff]
    %v2775 = vld [vmem:[%s2744 + $0xf0] sm:$0xff]
    %v2776 = vld [vmem:[%s2744 + $0xf8] sm:$0xff]
    %v2777 = vld [vmem:[%s2744 + $0x100] sm:$0xff]
    %v2778 = vld [vmem:[%s2744 + $0x108] sm:$0xff]
    %v2779 = vld [vmem:[%s2744 + $0x110] sm:$0xff]
    %v2780 = vld [vmem:[%s2744 + $0x118] sm:$0xff]
    %v2781 = vld [vmem:[%s2744 + $0x120] sm:$0xff]
    %v2782 = vld [vmem:[%s2744 + $0x128] sm:$0xff]
    %v2783 = vld [vmem:[%s2744 + $0x130] sm:$0xff]
    %v2784 = vld [vmem:[%s2744 + $0x138] sm:$0xff]
    %v2785 = vld [vmem:[%s2744 + $0x140] sm:$0xff]
    %v2786 = vld [vmem:[%s2744 + $0x148] sm:$0xff]
    %v2787 = vld [vmem:[%s2744 + $0x150] sm:$0xff]
    %v2788 = vld [vmem:[%s2744 + $0x158] sm:$0xff]
    %v2789 = vld [vmem:[%s2744 + $0x160] sm:$0xff]
    %v2790 = vld [vmem:[%s2744 + $0x168] sm:$0xff]
    %v2791 = vld [vmem:[%s2744 + $0x170] sm:$0xff]
    %v2792 = vld [vmem:[%s2744 + $0x178] sm:$0xff]
    %v2793 = vld [vmem:[%s2744 + $0x180] sm:$0xff]
    %v2794 = vld [vmem:[%s2744 + $0x188] sm:$0xff]
    %v2795 = vld [vmem:[%s2744 + $0x190] sm:$0xff]
    %v2796 = vld [vmem:[%s2744 + $0x198] sm:$0xff]
    %v2797 = vld [vmem:[%s2744 + $0x1a0] sm:$0xff]
    %v2798 = vld [vmem:[%s2744 + $0x1a8] sm:$0xff]
    %v2799 = vld [vmem:[%s2744 + $0x1b0] sm:$0xff]
    %v2800 = vld [vmem:[%s2744 + $0x1b8] sm:$0xff]
    %v2801 = vld [vmem:[%s2744 + $0x1c0] sm:$0xff]
    %v2802 = vld [vmem:[%s2744 + $0x1c8] sm:$0xff]
    %v2803 = vld [vmem:[%s2744 + $0x1d0] sm:$0xff]
    %v2804 = vld [vmem:[%s2744 + $0x1d8] sm:$0xff]
    %v2805 = vld [vmem:[%s2744 + $0x1e0] sm:$0xff]
    %v2806 = vld [vmem:[%s2744 + $0x1e8] sm:$0xff]
    %v2807 = vld [vmem:[%s2744 + $0x1f0] sm:$0xff]
    %v2808 = vld [vmem:[%s2744 + $0x1f8] sm:$0xff]
    %2809 = vmatprep.subr.mxu0 %v2806
    %2810 = vmatpush1.msra.mxu0 %v2805
    %2811 = vmatprep.subr.mxu0 %v2802
    %2812 = vmatpush1.msra.mxu0 %v2801
    %2813 = vmatprep.subr.mxu0 %v2798
    %2814 = vmatpush1.msra.mxu0 %v2797
    %2815 = vmatprep.subr.mxu0 %v2794
    %2816 = vmatpush1.msra.mxu0 %v2793
    %2817 = vmatprep.subr.mxu0 %v2790
    %2818 = vmatpush1.msra.mxu0 %v2789
    %2819 = vmatprep.subr.mxu0 %v2786
    %2820 = vmatpush1.msra.mxu0 %v2785
    %2821 = vmatprep.subr.mxu0 %v2782
    %2822 = vmatpush1.msra.mxu0 %v2781
    %2823 = vmatprep.subr.mxu0 %v2778
    %2824 = vmatpush1.msra.mxu0 %v2777
    %2825 = vmatprep.subr.mxu0 %v2774
    %2826 = vmatpush1.msra.mxu0 %v2773
    %2827 = vmatprep.subr.mxu0 %v2770
    %2828 = vmatpush1.msra.mxu0 %v2769
    %2829 = vmatprep.subr.mxu0 %v2766
    %2830 = vmatpush1.msra.mxu0 %v2765
    %2831 = vmatprep.subr.mxu0 %v2762
    %2832 = vmatpush1.msra.mxu0 %v2761
    %2833 = vmatprep.subr.mxu0 %v2758
    %2834 = vmatpush1.msra.mxu0 %v2757
    %2835 = vmatprep.subr.mxu0 %v2754
    %2836 = vmatpush1.msra.mxu0 %v2753
    %2837 = vmatprep.subr.mxu0 %v2750
    %2838 = vmatpush1.msra.mxu0 %v2749
    %2839 = vmatprep.subr.mxu0 %v2746
    %2840 = vmatpush1.msra.mxu0 %v2745
    %2841 = vmatprep.subr.mxu0 0.0
    %2842 = vmatpush2.msra.mxu0 0.0
    %2843 = vmatprep.subr.mxu0 0.0
    %2844 = vmatpush2.msra.mxu0 0.0
    %2845 = vmatprep.subr.mxu0 0.0
    %2846 = vmatpush2.msra.mxu0 0.0
    %2847 = vmatprep.subr.mxu0 0.0
    %2848 = vmatpush2.msra.mxu0 0.0
    %2849 = vmatprep.subr.mxu0 0.0
    %2850 = vmatpush2.msra.mxu0 0.0
    %2851 = vmatprep.subr.mxu0 0.0
    %2852 = vmatpush2.msra.mxu0 0.0
    %2853 = vmatprep.subr.mxu0 0.0
    %2854 = vmatpush2.msra.mxu0 0.0
    %2855 = vmatprep.subr.mxu0 0.0
    %2856 = vmatpush2.msra.mxu0 0.0
    %2857 = vmatprep.subr.mxu0 0.0
    %2858 = vmatpush2.msra.mxu0 0.0
    %2859 = vmatprep.subr.mxu0 0.0
    %2860 = vmatpush2.msra.mxu0 0.0
    %2861 = vmatprep.subr.mxu0 0.0
    %2862 = vmatpush2.msra.mxu0 0.0
    %2863 = vmatprep.subr.mxu0 0.0
    %2864 = vmatpush2.msra.mxu0 0.0
    %2865 = vmatprep.subr.mxu0 0.0
    %2866 = vmatpush2.msra.mxu0 0.0
    %2867 = vmatprep.subr.mxu0 0.0
    %2868 = vmatpush2.msra.mxu0 0.0
    %2869 = vmatprep.subr.mxu0 0.0
    %2870 = vmatpush2.msra.mxu0 0.0
    %2871 = vmatprep.subr.mxu0 0.0
    %2872 = vmatpush2.msra.mxu0 0.0
    %2873 = vmatprep.mubr.f32.mxu0 0.0
    %2874 = vmatmul.mubr.f32.gmra.mxu0 0.0
    %v2875 = vpop.f32.mrf.mxu0
    %v2876 = vadd.f32 0.0, %v2875
    %v2877 = vpop.f32.mrf.mxu0
    %v2878 = vadd.f32 0.0, %v2877
    %2879 = vdwg.mxu0
    %2880 = vmatprep.subr.mxu0 %v2808
    %2881 = vmatpush1.msra.mxu0 %v2807
    %2882 = vmatprep.subr.mxu0 %v2804
    %2883 = vmatpush1.msra.mxu0 %v2803
    %2884 = vmatprep.subr.mxu0 %v2800
    %2885 = vmatpush1.msra.mxu0 %v2799
    %2886 = vmatprep.subr.mxu0 %v2796
    %2887 = vmatpush1.msra.mxu0 %v2795
    %2888 = vmatprep.subr.mxu0 %v2792
    %2889 = vmatpush1.msra.mxu0 %v2791
    %2890 = vmatprep.subr.mxu0 %v2788
    %2891 = vmatpush1.msra.mxu0 %v2787
    %2892 = vmatprep.subr.mxu0 %v2784
    %2893 = vmatpush1.msra.mxu0 %v2783
    %2894 = vmatprep.subr.mxu0 %v2780
    %2895 = vmatpush1.msra.mxu0 %v2779
    %2896 = vmatprep.subr.mxu0 %v2776
    %2897 = vmatpush1.msra.mxu0 %v2775
    %2898 = vmatprep.subr.mxu0 %v2772
    %2899 = vmatpush1.msra.mxu0 %v2771
    %2900 = vmatprep.subr.mxu0 %v2768
    %2901 = vmatpush1.msra.mxu0 %v2767
    %2902 = vmatprep.subr.mxu0 %v2764
    %2903 = vmatpush1.msra.mxu0 %v2763
    %2904 = vmatprep.subr.mxu0 %v2760
    %2905 = vmatpush1.msra.mxu0 %v2759
    %2906 = vmatprep.subr.mxu0 %v2756
    %2907 = vmatpush1.msra.mxu0 %v2755
    %2908 = vmatprep.subr.mxu0 %v2752
    %2909 = vmatpush1.msra.mxu0 %v2751
    %2910 = vmatprep.subr.mxu0 %v2748
    %2911 = vmatpush1.msra.mxu0 %v2747
    %2912 = vmatprep.subr.mxu0 0.0
    %2913 = vmatpush2.msra.mxu0 0.0
    %2914 = vmatprep.subr.mxu0 0.0
    %2915 = vmatpush2.msra.mxu0 0.0
    %2916 = vmatprep.subr.mxu0 0.0
    %2917 = vmatpush2.msra.mxu0 0.0
    %2918 = vmatprep.subr.mxu0 0.0
    %2919 = vmatpush2.msra.mxu0 0.0
    %2920 = vmatprep.subr.mxu0 0.0
    %2921 = vmatpush2.msra.mxu0 0.0
    %2922 = vmatprep.subr.mxu0 0.0
    %2923 = vmatpush2.msra.mxu0 0.0
    %2924 = vmatprep.subr.mxu0 0.0
    %2925 = vmatpush2.msra.mxu0 0.0
    %2926 = vmatprep.subr.mxu0 0.0
    %2927 = vmatpush2.msra.mxu0 0.0
    %2928 = vmatprep.subr.mxu0 0.0
    %2929 = vmatpush2.msra.mxu0 0.0
    %2930 = vmatprep.subr.mxu0 0.0
    %2931 = vmatpush2.msra.mxu0 0.0
    %2932 = vmatprep.subr.mxu0 0.0
    %2933 = vmatpush2.msra.mxu0 0.0
    %2934 = vmatprep.subr.mxu0 0.0
    %2935 = vmatpush2.msra.mxu0 0.0
    %2936 = vmatprep.subr.mxu0 0.0
    %2937 = vmatpush2.msra.mxu0 0.0
    %2938 = vmatprep.subr.mxu0 0.0
    %2939 = vmatpush2.msra.mxu0 0.0
    %2940 = vmatprep.subr.mxu0 0.0
    %2941 = vmatpush2.msra.mxu0 0.0
    %2942 = vmatprep.subr.mxu0 0.0
    %2943 = vmatpush2.msra.mxu0 0.0
    %2944 = vmatprep.mubr.f32.mxu0 0.0
    %2945 = vmatmul.mubr.f32.gmra.mxu0 0.0
    %v2946 = vpop.f32.mrf.mxu0
    %v2947 = vadd.f32 0.0, %v2946
    %v2948 = vpop.f32.mrf.mxu0
    %v2949 = vadd.f32 0.0, %v2948
    %2950 = vdwg.mxu0
    %v2951 = vadd.f32 %v2740, %v2876
    %v2952 = vadd.f32 %v2741, %v2878
    %v2953 = vadd.f32 %v2742, %v2947
    %v2954 = vadd.f32 %v2743, %v2949
    %v2955 = vxor.u32 %v2951, 2147483648
    %v2956 = vmul.f32 %v2955, 1.442695
    %v2957 = vpow.pop %v2956
    %v2958 = vadd.f32 %v2957, 1.0
    %v2959 = vrcp.pop %v2958
    %v2960 = vmul.f32 1.0, %v2959
    %v2961 = vxor.u32 %v2952, 2147483648
    %v2962 = vmul.f32 %v2961, 1.442695
    %v2963 = vpow.pop %v2962
    %v2964 = vadd.f32 %v2963, 1.0
    %v2965 = vrcp.pop %v2964
    %v2966 = vmul.f32 1.0, %v2965
    %v2967 = vtanh.pop %v2953
    %v2968 = vxor.u32 %v2954, 2147483648
    %v2969 = vmul.f32 %v2968, 1.442695
    %v2970 = vpow.pop %v2969
    %v2971 = vadd.f32 %v2970, 1.0
    %v2972 = vrcp.pop %v2971
    %v2973 = vmul.f32 1.0, %v2972
    %v2974 = vmul.f32 %v2966, 0.0
    %v2975 = vmul.f32 %v2960, %v2967
    %v2976 = vadd.f32 %v2974, %v2975
    %v2977 = vtanh.pop %v2976
    %v2978 = vmul.f32 %v2973, %v2977
    %2979 = vst [vmem:[#allocation2] sm:$0xff] %v2978
    %v2980 = vld [vmem:[%s701] sm:$0xff]
    %v2981 = vld [vmem:[%s701 + $0x8] sm:$0xff]
    %v2982 = vld [vmem:[%s701 + $0x10] sm:$0xff]
    %v2983 = vld [vmem:[%s701 + $0x18] sm:$0xff]
    %v2984 = vld [vmem:[%s2744] sm:$0xff]
    %v2985 = vld [vmem:[%s2744 + $0x8] sm:$0xff]
    %v2986 = vld [vmem:[%s2744 + $0x10] sm:$0xff]
    %v2987 = vld [vmem:[%s2744 + $0x18] sm:$0xff]
    %v2988 = vld [vmem:[%s2744 + $0x20] sm:$0xff]
    %v2989 = vld [vmem:[%s2744 + $0x28] sm:$0xff]
    %v2990 = vld [vmem:[%s2744 + $0x30] sm:$0xff]
    %v2991 = vld [vmem:[%s2744 + $0x38] sm:$0xff]
    %v2992 = vld [vmem:[%s2744 + $0x40] sm:$0xff]
    %v2993 = vld [vmem:[%s2744 + $0x48] sm:$0xff]
    %v2994 = vld [vmem:[%s2744 + $0x50] sm:$0xff]
    %v2995 = vld [vmem:[%s2744 + $0x58] sm:$0xff]
    %v2996 = vld [vmem:[%s2744 + $0x60] sm:$0xff]
    %v2997 = vld [vmem:[%s2744 + $0x68] sm:$0xff]
    %v2998 = vld [vmem:[%s2744 + $0x70] sm:$0xff]
    %v2999 = vld [vmem:[%s2744 + $0x78] sm:$0xff]
    %v3000 = vld [vmem:[%s2744 + $0x80] sm:$0xff]
    %v3001 = vld [vmem:[%s2744 + $0x88] sm:$0xff]
    %v3002 = vld [vmem:[%s2744 + $0x90] sm:$0xff]
    %v3003 = vld [vmem:[%s2744 + $0x98] sm:$0xff]
    %v3004 = vld [vmem:[%s2744 + $0xa0] sm:$0xff]
    %v3005 = vld [vmem:[%s2744 + $0xa8] sm:$0xff]
    %v3006 = vld [vmem:[%s2744 + $0xb0] sm:$0xff]
    %v3007 = vld [vmem:[%s2744 + $0xb8] sm:$0xff]
    %v3008 = vld [vmem:[%s2744 + $0xc0] sm:$0xff]
    %v3009 = vld [vmem:[%s2744 + $0xc8] sm:$0xff]
    %v3010 = vld [vmem:[%s2744 + $0xd0] sm:$0xff]
    %v3011 = vld [vmem:[%s2744 + $0xd8] sm:$0xff]
    %v3012 = vld [vmem:[%s2744 + $0xe0] sm:$0xff]
    %v3013 = vld [vmem:[%s2744 + $0xe8] sm:$0xff]
    %v3014 = vld [vmem:[%s2744 + $0xf0] sm:$0xff]
    %v3015 = vld [vmem:[%s2744 + $0xf8] sm:$0xff]
    %v3016 = vld [vmem:[%s2744 + $0x100] sm:$0xff]
    %v3017 = vld [vmem:[%s2744 + $0x108] sm:$0xff]
    %v3018 = vld [vmem:[%s2744 + $0x110] sm:$0xff]
    %v3019 = vld [vmem:[%s2744 + $0x118] sm:$0xff]
    %v3020 = vld [vmem:[%s2744 + $0x120] sm:$0xff]
    %v3021 = vld [vmem:[%s2744 + $0x128] sm:$0xff]
    %v3022 = vld [vmem:[%s2744 + $0x130] sm:$0xff]
    %v3023 = vld [vmem:[%s2744 + $0x138] sm:$0xff]
    %v3024 = vld [vmem:[%s2744 + $0x140] sm:$0xff]
    %v3025 = vld [vmem:[%s2744 + $0x148] sm:$0xff]
    %v3026 = vld [vmem:[%s2744 + $0x150] sm:$0xff]
    %v3027 = vld [vmem:[%s2744 + $0x158] sm:$0xff]
    %v3028 = vld [vmem:[%s2744 + $0x160] sm:$0xff]
    %v3029 = vld [vmem:[%s2744 + $0x168] sm:$0xff]
    %v3030 = vld [vmem:[%s2744 + $0x170] sm:$0xff]
    %v3031 = vld [vmem:[%s2744 + $0x178] sm:$0xff]
    %v3032 = vld [vmem:[%s2744 + $0x180] sm:$0xff]
    %v3033 = vld [vmem:[%s2744 + $0x188] sm:$0xff]
    %v3034 = vld [vmem:[%s2744 + $0x190] sm:$0xff]
    %v3035 = vld [vmem:[%s2744 + $0x198] sm:$0xff]
    %v3036 = vld [vmem:[%s2744 + $0x1a0] sm:$0xff]
    %v3037 = vld [vmem:[%s2744 + $0x1a8] sm:$0xff]
    %v3038 = vld [vmem:[%s2744 + $0x1b0] sm:$0xff]
    %v3039 = vld [vmem:[%s2744 + $0x1b8] sm:$0xff]
    %v3040 = vld [vmem:[%s2744 + $0x1c0] sm:$0xff]
    %v3041 = vld [vmem:[%s2744 + $0x1c8] sm:$0xff]
    %v3042 = vld [vmem:[%s2744 + $0x1d0] sm:$0xff]
    %v3043 = vld [vmem:[%s2744 + $0x1d8] sm:$0xff]
    %v3044 = vld [vmem:[%s2744 + $0x1e0] sm:$0xff]
    %v3045 = vld [vmem:[%s2744 + $0x1e8] sm:$0xff]
    %v3046 = vld [vmem:[%s2744 + $0x1f0] sm:$0xff]
    %v3047 = vld [vmem:[%s2744 + $0x1f8] sm:$0xff]
    %3048 = vmatprep.subr.mxu0 %v3045
    %3049 = vmatpush1.msra.mxu0 %v3044
    %3050 = vmatprep.subr.mxu0 %v3041
    %3051 = vmatpush1.msra.mxu0 %v3040
    %3052 = vmatprep.subr.mxu0 %v3037
    %3053 = vmatpush1.msra.mxu0 %v3036
    %3054 = vmatprep.subr.mxu0 %v3033
    %3055 = vmatpush1.msra.mxu0 %v3032
    %3056 = vmatprep.subr.mxu0 %v3029
    %3057 = vmatpush1.msra.mxu0 %v3028
    %3058 = vmatprep.subr.mxu0 %v3025
    %3059 = vmatpush1.msra.mxu0 %v3024
    %3060 = vmatprep.subr.mxu0 %v3021
    %3061 = vmatpush1.msra.mxu0 %v3020
    %3062 = vmatprep.subr.mxu0 %v3017
    %3063 = vmatpush1.msra.mxu0 %v3016
    %3064 = vmatprep.subr.mxu0 %v3013
    %3065 = vmatpush1.msra.mxu0 %v3012
    %3066 = vmatprep.subr.mxu0 %v3009
    %3067 = vmatpush1.msra.mxu0 %v3008
    %3068 = vmatprep.subr.mxu0 %v3005
    %3069 = vmatpush1.msra.mxu0 %v3004
    %3070 = vmatprep.subr.mxu0 %v3001
    %3071 = vmatpush1.msra.mxu0 %v3000
    %3072 = vmatprep.subr.mxu0 %v2997
    %3073 = vmatpush1.msra.mxu0 %v2996
    %3074 = vmatprep.subr.mxu0 %v2993
    %3075 = vmatpush1.msra.mxu0 %v2992
    %3076 = vmatprep.subr.mxu0 %v2989
    %3077 = vmatpush1.msra.mxu0 %v2988
    %3078 = vmatprep.subr.mxu0 %v2985
    %3079 = vmatpush1.msra.mxu0 %v2984
    %3080 = vmatprep.subr.mxu0 0.0
    %3081 = vmatpush2.msra.mxu0 0.0
    %3082 = vmatprep.subr.mxu0 0.0
    %3083 = vmatpush2.msra.mxu0 0.0
    %3084 = vmatprep.subr.mxu0 0.0
    %3085 = vmatpush2.msra.mxu0 0.0
    %3086 = vmatprep.subr.mxu0 0.0
    %3087 = vmatpush2.msra.mxu0 0.0
    %3088 = vmatprep.subr.mxu0 0.0
    %3089 = vmatpush2.msra.mxu0 0.0
    %3090 = vmatprep.subr.mxu0 0.0
    %3091 = vmatpush2.msra.mxu0 0.0
    %3092 = vmatprep.subr.mxu0 0.0
    %3093 = vmatpush2.msra.mxu0 0.0
    %3094 = vmatprep.subr.mxu0 0.0
    %3095 = vmatpush2.msra.mxu0 0.0
    %3096 = vmatprep.subr.mxu0 0.0
    %3097 = vmatpush2.msra.mxu0 0.0
    %3098 = vmatprep.subr.mxu0 0.0
    %3099 = vmatpush2.msra.mxu0 0.0
    %3100 = vmatprep.subr.mxu0 0.0
    %3101 = vmatpush2.msra.mxu0 0.0
    %3102 = vmatprep.subr.mxu0 0.0
    %3103 = vmatpush2.msra.mxu0 0.0
    %3104 = vmatprep.subr.mxu0 0.0
    %3105 = vmatpush2.msra.mxu0 0.0
    %3106 = vmatprep.subr.mxu0 0.0
    %3107 = vmatpush2.msra.mxu0 0.0
    %3108 = vmatprep.subr.mxu0 0.0
    %3109 = vmatpush2.msra.mxu0 0.0
    %3110 = vmatprep.subr.mxu0 0.0
    %3111 = vmatpush2.msra.mxu0 0.0
    %3112 = vmatprep.mubr.f32.mxu0 0.0
    %3113 = vmatmul.mubr.f32.gmra.mxu0 %v2978
    %v3114 = vpop.f32.mrf.mxu0
    %v3115 = vadd.f32 0.0, %v3114
    %v3116 = vpop.f32.mrf.mxu0
    %v3117 = vadd.f32 0.0, %v3116
    %3118 = vdwg.mxu0
    %3119 = vmatprep.subr.mxu0 %v3047
    %3120 = vmatpush1.msra.mxu0 %v3046
    %3121 = vmatprep.subr.mxu0 %v3043
    %3122 = vmatpush1.msra.mxu0 %v3042
    %3123 = vmatprep.subr.mxu0 %v3039
    %3124 = vmatpush1.msra.mxu0 %v3038
    %3125 = vmatprep.subr.mxu0 %v3035
    %3126 = vmatpush1.msra.mxu0 %v3034
    %3127 = vmatprep.subr.mxu0 %v3031
    %3128 = vmatpush1.msra.mxu0 %v3030
    %3129 = vmatprep.subr.mxu0 %v3027
    %3130 = vmatpush1.msra.mxu0 %v3026
    %3131 = vmatprep.subr.mxu0 %v3023
    %3132 = vmatpush1.msra.mxu0 %v3022
    %3133 = vmatprep.subr.mxu0 %v3019
    %3134 = vmatpush1.msra.mxu0 %v3018
    %3135 = vmatprep.subr.mxu0 %v3015
    %3136 = vmatpush1.msra.mxu0 %v3014
    %3137 = vmatprep.subr.mxu0 %v3011
    %3138 = vmatpush1.msra.mxu0 %v3010
    %3139 = vmatprep.subr.mxu0 %v3007
    %3140 = vmatpush1.msra.mxu0 %v3006
    %3141 = vmatprep.subr.mxu0 %v3003
    %3142 = vmatpush1.msra.mxu0 %v3002
    %3143 = vmatprep.subr.mxu0 %v2999
    %3144 = vmatpush1.msra.mxu0 %v2998
    %3145 = vmatprep.subr.mxu0 %v2995
    %3146 = vmatpush1.msra.mxu0 %v2994
    %3147 = vmatprep.subr.mxu0 %v2991
    %3148 = vmatpush1.msra.mxu0 %v2990
    %3149 = vmatprep.subr.mxu0 %v2987
    %3150 = vmatpush1.msra.mxu0 %v2986
    %3151 = vmatprep.subr.mxu0 0.0
    %3152 = vmatpush2.msra.mxu0 0.0
    %3153 = vmatprep.subr.mxu0 0.0
    %3154 = vmatpush2.msra.mxu0 0.0
    %3155 = vmatprep.subr.mxu0 0.0
    %3156 = vmatpush2.msra.mxu0 0.0
    %3157 = vmatprep.subr.mxu0 0.0
    %3158 = vmatpush2.msra.mxu0 0.0
    %3159 = vmatprep.subr.mxu0 0.0
    %3160 = vmatpush2.msra.mxu0 0.0
    %3161 = vmatprep.subr.mxu0 0.0
    %3162 = vmatpush2.msra.mxu0 0.0
    %3163 = vmatprep.subr.mxu0 0.0
    %3164 = vmatpush2.msra.mxu0 0.0
    %3165 = vmatprep.subr.mxu0 0.0
    %3166 = vmatpush2.msra.mxu0 0.0
    %3167 = vmatprep.subr.mxu0 0.0
    %3168 = vmatpush2.msra.mxu0 0.0
    %3169 = vmatprep.subr.mxu0 0.0
    %3170 = vmatpush2.msra.mxu0 0.0
    %3171 = vmatprep.subr.mxu0 0.0
    %3172 = vmatpush2.msra.mxu0 0.0
    %3173 = vmatprep.subr.mxu0 0.0
    %3174 = vmatpush2.msra.mxu0 0.0
    %3175 = vmatprep.subr.mxu0 0.0
    %3176 = vmatpush2.msra.mxu0 0.0
    %3177 = vmatprep.subr.mxu0 0.0
    %3178 = vmatpush2.msra.mxu0 0.0
    %3179 = vmatprep.subr.mxu0 0.0
    %3180 = vmatpush2.msra.mxu0 0.0
    %3181 = vmatprep.subr.mxu0 0.0
    %3182 = vmatpush2.msra.mxu0 0.0
    %3183 = vmatprep.mubr.f32.mxu0 0.0
    %3184 = vmatmul.mubr.f32.gmra.mxu0 %v2978
    %v3185 = vpop.f32.mrf.mxu0
    %v3186 = vadd.f32 0.0, %v3185
    %v3187 = vpop.f32.mrf.mxu0
    %v3188 = vadd.f32 0.0, %v3187
    %3189 = vdwg.mxu0
    %v3190 = vadd.f32 %v2980, %v3115
    %v3191 = vadd.f32 %v2981, %v3117
    %v3192 = vadd.f32 %v2982, %v3186
    %v3193 = vadd.f32 %v2983, %v3188
    %v3194 = vxor.u32 %v3190, 2147483648
    %v3195 = vmul.f32 %v3194, 1.442695
    %v3196 = vpow.pop %v3195
    %v3197 = vadd.f32 %v3196, 1.0
    %v3198 = vrcp.pop %v3197
    %v3199 = vmul.f32 1.0, %v3198
    %v3200 = vxor.u32 %v3191, 2147483648
    %v3201 = vmul.f32 %v3200, 1.442695
    %v3202 = vpow.pop %v3201
    %v3203 = vadd.f32 %v3202, 1.0
    %v3204 = vrcp.pop %v3203
    %v3205 = vmul.f32 1.0, %v3204
    %v3206 = vtanh.pop %v3192
    %v3207 = vxor.u32 %v3193, 2147483648
    %v3208 = vmul.f32 %v3207, 1.442695
    %v3209 = vpow.pop %v3208
    %v3210 = vadd.f32 %v3209, 1.0
    %v3211 = vrcp.pop %v3210
    %v3212 = vmul.f32 1.0, %v3211
    %v3213 = vmul.f32 %v3205, %v2976
    %v3214 = vmul.f32 %v3199, %v3206
    %v3215 = vadd.f32 %v3213, %v3214
    %v3216 = vtanh.pop %v3215
    %v3217 = vmul.f32 %v3212, %v3216
    %3218 = vst [vmem:[%s940] sm:$0xff] %v3217
    %v3219 = vld [vmem:[%s942] sm:$0xff]
    %v3220 = vld [vmem:[%s942 + $0x8] sm:$0xff]
    %v3221 = vld [vmem:[%s942 + $0x10] sm:$0xff]
    %v3222 = vld [vmem:[%s942 + $0x18] sm:$0xff]
    %v3223 = vld [vmem:[%s2744] sm:$0xff]
    %v3224 = vld [vmem:[%s2744 + $0x8] sm:$0xff]
    %v3225 = vld [vmem:[%s2744 + $0x10] sm:$0xff]
    %v3226 = vld [vmem:[%s2744 + $0x18] sm:$0xff]
    %v3227 = vld [vmem:[%s2744 + $0x20] sm:$0xff]
    %v3228 = vld [vmem:[%s2744 + $0x28] sm:$0xff]
    %v3229 = vld [vmem:[%s2744 + $0x30] sm:$0xff]
    %v3230 = vld [vmem:[%s2744 + $0x38] sm:$0xff]
    %v3231 = vld [vmem:[%s2744 + $0x40] sm:$0xff]
    %v3232 = vld [vmem:[%s2744 + $0x48] sm:$0xff]
    %v3233 = vld [vmem:[%s2744 + $0x50] sm:$0xff]
    %v3234 = vld [vmem:[%s2744 + $0x58] sm:$0xff]
    %v3235 = vld [vmem:[%s2744 + $0x60] sm:$0xff]
    %v3236 = vld [vmem:[%s2744 + $0x68] sm:$0xff]
    %v3237 = vld [vmem:[%s2744 + $0x70] sm:$0xff]
    %v3238 = vld [vmem:[%s2744 + $0x78] sm:$0xff]
    %v3239 = vld [vmem:[%s2744 + $0x80] sm:$0xff]
    %v3240 = vld [vmem:[%s2744 + $0x88] sm:$0xff]
    %v3241 = vld [vmem:[%s2744 + $0x90] sm:$0xff]
    %v3242 = vld [vmem:[%s2744 + $0x98] sm:$0xff]
    %v3243 = vld [vmem:[%s2744 + $0xa0] sm:$0xff]
    %v3244 = vld [vmem:[%s2744 + $0xa8] sm:$0xff]
    %v3245 = vld [vmem:[%s2744 + $0xb0] sm:$0xff]
    %v3246 = vld [vmem:[%s2744 + $0xb8] sm:$0xff]
    %v3247 = vld [vmem:[%s2744 + $0xc0] sm:$0xff]
    %v3248 = vld [vmem:[%s2744 + $0xc8] sm:$0xff]
    %v3249 = vld [vmem:[%s2744 + $0xd0] sm:$0xff]
    %v3250 = vld [vmem:[%s2744 + $0xd8] sm:$0xff]
    %v3251 = vld [vmem:[%s2744 + $0xe0] sm:$0xff]
    %v3252 = vld [vmem:[%s2744 + $0xe8] sm:$0xff]
    %v3253 = vld [vmem:[%s2744 + $0xf0] sm:$0xff]
    %v3254 = vld [vmem:[%s2744 + $0xf8] sm:$0xff]
    %v3255 = vld [vmem:[%s2744 + $0x100] sm:$0xff]
    %v3256 = vld [vmem:[%s2744 + $0x108] sm:$0xff]
    %v3257 = vld [vmem:[%s2744 + $0x110] sm:$0xff]
    %v3258 = vld [vmem:[%s2744 + $0x118] sm:$0xff]
    %v3259 = vld [vmem:[%s2744 + $0x120] sm:$0xff]
    %v3260 = vld [vmem:[%s2744 + $0x128] sm:$0xff]
    %v3261 = vld [vmem:[%s2744 + $0x130] sm:$0xff]
    %v3262 = vld [vmem:[%s2744 + $0x138] sm:$0xff]
    %v3263 = vld [vmem:[%s2744 + $0x140] sm:$0xff]
    %v3264 = vld [vmem:[%s2744 + $0x148] sm:$0xff]
    %v3265 = vld [vmem:[%s2744 + $0x150] sm:$0xff]
    %v3266 = vld [vmem:[%s2744 + $0x158] sm:$0xff]
    %v3267 = vld [vmem:[%s2744 + $0x160] sm:$0xff]
    %v3268 = vld [vmem:[%s2744 + $0x168] sm:$0xff]
    %v3269 = vld [vmem:[%s2744 + $0x170] sm:$0xff]
    %v3270 = vld [vmem:[%s2744 + $0x178] sm:$0xff]
    %v3271 = vld [vmem:[%s2744 + $0x180] sm:$0xff]
    %v3272 = vld [vmem:[%s2744 + $0x188] sm:$0xff]
    %v3273 = vld [vmem:[%s2744 + $0x190] sm:$0xff]
    %v3274 = vld [vmem:[%s2744 + $0x198] sm:$0xff]
    %v3275 = vld [vmem:[%s2744 + $0x1a0] sm:$0xff]
    %v3276 = vld [vmem:[%s2744 + $0x1a8] sm:$0xff]
    %v3277 = vld [vmem:[%s2744 + $0x1b0] sm:$0xff]
    %v3278 = vld [vmem:[%s2744 + $0x1b8] sm:$0xff]
    %v3279 = vld [vmem:[%s2744 + $0x1c0] sm:$0xff]
    %v3280 = vld [vmem:[%s2744 + $0x1c8] sm:$0xff]
    %v3281 = vld [vmem:[%s2744 + $0x1d0] sm:$0xff]
    %v3282 = vld [vmem:[%s2744 + $0x1d8] sm:$0xff]
    %v3283 = vld [vmem:[%s2744 + $0x1e0] sm:$0xff]
    %v3284 = vld [vmem:[%s2744 + $0x1e8] sm:$0xff]
    %v3285 = vld [vmem:[%s2744 + $0x1f0] sm:$0xff]
    %v3286 = vld [vmem:[%s2744 + $0x1f8] sm:$0xff]
    %3287 = vmatprep.subr.mxu0 %v3284
    %3288 = vmatpush1.msra.mxu0 %v3283
    %3289 = vmatprep.subr.mxu0 %v3280
    %3290 = vmatpush1.msra.mxu0 %v3279
    %3291 = vmatprep.subr.mxu0 %v3276
    %3292 = vmatpush1.msra.mxu0 %v3275
    %3293 = vmatprep.subr.mxu0 %v3272
    %3294 = vmatpush1.msra.mxu0 %v3271
    %3295 = vmatprep.subr.mxu0 %v3268
    %3296 = vmatpush1.msra.mxu0 %v3267
    %3297 = vmatprep.subr.mxu0 %v3264
    %3298 = vmatpush1.msra.mxu0 %v3263
    %3299 = vmatprep.subr.mxu0 %v3260
    %3300 = vmatpush1.msra.mxu0 %v3259
    %3301 = vmatprep.subr.mxu0 %v3256
    %3302 = vmatpush1.msra.mxu0 %v3255
    %3303 = vmatprep.subr.mxu0 %v3252
    %3304 = vmatpush1.msra.mxu0 %v3251
    %3305 = vmatprep.subr.mxu0 %v3248
    %3306 = vmatpush1.msra.mxu0 %v3247
    %3307 = vmatprep.subr.mxu0 %v3244
    %3308 = vmatpush1.msra.mxu0 %v3243
    %3309 = vmatprep.subr.mxu0 %v3240
    %3310 = vmatpush1.msra.mxu0 %v3239
    %3311 = vmatprep.subr.mxu0 %v3236
    %3312 = vmatpush1.msra.mxu0 %v3235
    %3313 = vmatprep.subr.mxu0 %v3232
    %3314 = vmatpush1.msra.mxu0 %v3231
    %3315 = vmatprep.subr.mxu0 %v3228
    %3316 = vmatpush1.msra.mxu0 %v3227
    %3317 = vmatprep.subr.mxu0 %v3224
    %3318 = vmatpush1.msra.mxu0 %v3223
    %3319 = vmatprep.subr.mxu0 0.0
    %3320 = vmatpush2.msra.mxu0 0.0
    %3321 = vmatprep.subr.mxu0 0.0
    %3322 = vmatpush2.msra.mxu0 0.0
    %3323 = vmatprep.subr.mxu0 0.0
    %3324 = vmatpush2.msra.mxu0 0.0
    %3325 = vmatprep.subr.mxu0 0.0
    %3326 = vmatpush2.msra.mxu0 0.0
    %3327 = vmatprep.subr.mxu0 0.0
    %3328 = vmatpush2.msra.mxu0 0.0
    %3329 = vmatprep.subr.mxu0 0.0
    %3330 = vmatpush2.msra.mxu0 0.0
    %3331 = vmatprep.subr.mxu0 0.0
    %3332 = vmatpush2.msra.mxu0 0.0
    %3333 = vmatprep.subr.mxu0 0.0
    %3334 = vmatpush2.msra.mxu0 0.0
    %3335 = vmatprep.subr.mxu0 0.0
    %3336 = vmatpush2.msra.mxu0 0.0
    %3337 = vmatprep.subr.mxu0 0.0
    %3338 = vmatpush2.msra.mxu0 0.0
    %3339 = vmatprep.subr.mxu0 0.0
    %3340 = vmatpush2.msra.mxu0 0.0
    %3341 = vmatprep.subr.mxu0 0.0
    %3342 = vmatpush2.msra.mxu0 0.0
    %3343 = vmatprep.subr.mxu0 0.0
    %3344 = vmatpush2.msra.mxu0 0.0
    %3345 = vmatprep.subr.mxu0 0.0
    %3346 = vmatpush2.msra.mxu0 0.0
    %3347 = vmatprep.subr.mxu0 0.0
    %3348 = vmatpush2.msra.mxu0 0.0
    %3349 = vmatprep.subr.mxu0 0.0
    %3350 = vmatpush2.msra.mxu0 0.0
    %3351 = vmatprep.mubr.f32.mxu0 0.0
    %3352 = vmatmul.mubr.f32.gmra.mxu0 %v3217
    %v3353 = vpop.f32.mrf.mxu0
    %v3354 = vadd.f32 0.0, %v3353
    %v3355 = vpop.f32.mrf.mxu0
    %v3356 = vadd.f32 0.0, %v3355
    %3357 = vdwg.mxu0
    %3358 = vmatprep.subr.mxu0 %v3286
    %3359 = vmatpush1.msra.mxu0 %v3285
    %3360 = vmatprep.subr.mxu0 %v3282
    %3361 = vmatpush1.msra.mxu0 %v3281
    %3362 = vmatprep.subr.mxu0 %v3278
    %3363 = vmatpush1.msra.mxu0 %v3277
    %3364 = vmatprep.subr.mxu0 %v3274
    %3365 = vmatpush1.msra.mxu0 %v3273
    %3366 = vmatprep.subr.mxu0 %v3270
    %3367 = vmatpush1.msra.mxu0 %v3269
    %3368 = vmatprep.subr.mxu0 %v3266
    %3369 = vmatpush1.msra.mxu0 %v3265
    %3370 = vmatprep.subr.mxu0 %v3262
    %3371 = vmatpush1.msra.mxu0 %v3261
    %3372 = vmatprep.subr.mxu0 %v3258
    %3373 = vmatpush1.msra.mxu0 %v3257
    %3374 = vmatprep.subr.mxu0 %v3254
    %3375 = vmatpush1.msra.mxu0 %v3253
    %3376 = vmatprep.subr.mxu0 %v3250
    %3377 = vmatpush1.msra.mxu0 %v3249
    %3378 = vmatprep.subr.mxu0 %v3246
    %3379 = vmatpush1.msra.mxu0 %v3245
    %3380 = vmatprep.subr.mxu0 %v3242
    %3381 = vmatpush1.msra.mxu0 %v3241
    %3382 = vmatprep.subr.mxu0 %v3238
    %3383 = vmatpush1.msra.mxu0 %v3237
    %3384 = vmatprep.subr.mxu0 %v3234
    %3385 = vmatpush1.msra.mxu0 %v3233
    %3386 = vmatprep.subr.mxu0 %v3230
    %3387 = vmatpush1.msra.mxu0 %v3229
    %3388 = vmatprep.subr.mxu0 %v3226
    %3389 = vmatpush1.msra.mxu0 %v3225
    %3390 = vmatprep.subr.mxu0 0.0
    %3391 = vmatpush2.msra.mxu0 0.0
    %3392 = vmatprep.subr.mxu0 0.0
    %3393 = vmatpush2.msra.mxu0 0.0
    %3394 = vmatprep.subr.mxu0 0.0
    %3395 = vmatpush2.msra.mxu0 0.0
    %3396 = vmatprep.subr.mxu0 0.0
    %3397 = vmatpush2.msra.mxu0 0.0
    %3398 = vmatprep.subr.mxu0 0.0
    %3399 = vmatpush2.msra.mxu0 0.0
    %3400 = vmatprep.subr.mxu0 0.0
    %3401 = vmatpush2.msra.mxu0 0.0
    %3402 = vmatprep.subr.mxu0 0.0
    %3403 = vmatpush2.msra.mxu0 0.0
    %3404 = vmatprep.subr.mxu0 0.0
    %3405 = vmatpush2.msra.mxu0 0.0
    %3406 = vmatprep.subr.mxu0 0.0
    %3407 = vmatpush2.msra.mxu0 0.0
    %3408 = vmatprep.subr.mxu0 0.0
    %3409 = vmatpush2.msra.mxu0 0.0
    %3410 = vmatprep.subr.mxu0 0.0
    %3411 = vmatpush2.msra.mxu0 0.0
    %3412 = vmatprep.subr.mxu0 0.0
    %3413 = vmatpush2.msra.mxu0 0.0
    %3414 = vmatprep.subr.mxu0 0.0
    %3415 = vmatpush2.msra.mxu0 0.0
    %3416 = vmatprep.subr.mxu0 0.0
    %3417 = vmatpush2.msra.mxu0 0.0
    %3418 = vmatprep.subr.mxu0 0.0
    %3419 = vmatpush2.msra.mxu0 0.0
    %3420 = vmatprep.subr.mxu0 0.0
    %3421 = vmatpush2.msra.mxu0 0.0
    %3422 = vmatprep.mubr.f32.mxu0 0.0
    %3423 = vmatmul.mubr.f32.gmra.mxu0 %v3217
    %v3424 = vpop.f32.mrf.mxu0
    %v3425 = vadd.f32 0.0, %v3424
    %v3426 = vpop.f32.mrf.mxu0
    %v3427 = vadd.f32 0.0, %v3426
    %3428 = vdwg.mxu0
    %v3429 = vadd.f32 %v3219, %v3354
    %v3430 = vadd.f32 %v3220, %v3356
    %v3431 = vadd.f32 %v3221, %v3425
    %v3432 = vadd.f32 %v3222, %v3427
    %v3433 = vxor.u32 %v3429, 2147483648
    %v3434 = vmul.f32 %v3433, 1.442695
    %v3435 = vpow.pop %v3434
    %v3436 = vadd.f32 %v3435, 1.0
    %v3437 = vrcp.pop %v3436
    %v3438 = vmul.f32 1.0, %v3437
    %v3439 = vxor.u32 %v3430, 2147483648
    %v3440 = vmul.f32 %v3439, 1.442695
    %v3441 = vpow.pop %v3440
    %v3442 = vadd.f32 %v3441, 1.0
    %v3443 = vrcp.pop %v3442
    %v3444 = vmul.f32 1.0, %v3443
    %v3445 = vtanh.pop %v3431
    %v3446 = vxor.u32 %v3432, 2147483648
    %v3447 = vmul.f32 %v3446, 1.442695
    %v3448 = vpow.pop %v3447
    %v3449 = vadd.f32 %v3448, 1.0
    %v3450 = vrcp.pop %v3449
    %v3451 = vmul.f32 1.0, %v3450
    %v3452 = vmul.f32 %v3444, %v3215
    %v3453 = vmul.f32 %v3438, %v3445
    %v3454 = vadd.f32 %v3452, %v3453
    %v3455 = vtanh.pop %v3454
    %v3456 = vmul.f32 %v3451, %v3455
    %3457 = vst [vmem:[%s1181] sm:$0xff] %v3456
    %v3458 = vld [vmem:[%s1183] sm:$0xff]
    %v3459 = vld [vmem:[%s1183 + $0x8] sm:$0xff]
    %v3460 = vld [vmem:[%s1183 + $0x10] sm:$0xff]
    %v3461 = vld [vmem:[%s1183 + $0x18] sm:$0xff]
    %v3462 = vld [vmem:[%s2744] sm:$0xff]
    %v3463 = vld [vmem:[%s2744 + $0x8] sm:$0xff]
    %v3464 = vld [vmem:[%s2744 + $0x10] sm:$0xff]
    %v3465 = vld [vmem:[%s2744 + $0x18] sm:$0xff]
    %v3466 = vld [vmem:[%s2744 + $0x20] sm:$0xff]
    %v3467 = vld [vmem:[%s2744 + $0x28] sm:$0xff]
    %v3468 = vld [vmem:[%s2744 + $0x30] sm:$0xff]
    %v3469 = vld [vmem:[%s2744 + $0x38] sm:$0xff]
    %v3470 = vld [vmem:[%s2744 + $0x40] sm:$0xff]
    %v3471 = vld [vmem:[%s2744 + $0x48] sm:$0xff]
    %v3472 = vld [vmem:[%s2744 + $0x50] sm:$0xff]
    %v3473 = vld [vmem:[%s2744 + $0x58] sm:$0xff]
    %v3474 = vld [vmem:[%s2744 + $0x60] sm:$0xff]
    %v3475 = vld [vmem:[%s2744 + $0x68] sm:$0xff]
    %v3476 = vld [vmem:[%s2744 + $0x70] sm:$0xff]
    %v3477 = vld [vmem:[%s2744 + $0x78] sm:$0xff]
    %v3478 = vld [vmem:[%s2744 + $0x80] sm:$0xff]
    %v3479 = vld [vmem:[%s2744 + $0x88] sm:$0xff]
    %v3480 = vld [vmem:[%s2744 + $0x90] sm:$0xff]
    %v3481 = vld [vmem:[%s2744 + $0x98] sm:$0xff]
    %v3482 = vld [vmem:[%s2744 + $0xa0] sm:$0xff]
    %v3483 = vld [vmem:[%s2744 + $0xa8] sm:$0xff]
    %v3484 = vld [vmem:[%s2744 + $0xb0] sm:$0xff]
    %v3485 = vld [vmem:[%s2744 + $0xb8] sm:$0xff]
    %v3486 = vld [vmem:[%s2744 + $0xc0] sm:$0xff]
    %v3487 = vld [vmem:[%s2744 + $0xc8] sm:$0xff]
    %v3488 = vld [vmem:[%s2744 + $0xd0] sm:$0xff]
    %v3489 = vld [vmem:[%s2744 + $0xd8] sm:$0xff]
    %v3490 = vld [vmem:[%s2744 + $0xe0] sm:$0xff]
    %v3491 = vld [vmem:[%s2744 + $0xe8] sm:$0xff]
    %v3492 = vld [vmem:[%s2744 + $0xf0] sm:$0xff]
    %v3493 = vld [vmem:[%s2744 + $0xf8] sm:$0xff]
    %v3494 = vld [vmem:[%s2744 + $0x100] sm:$0xff]
    %v3495 = vld [vmem:[%s2744 + $0x108] sm:$0xff]
    %v3496 = vld [vmem:[%s2744 + $0x110] sm:$0xff]
    %v3497 = vld [vmem:[%s2744 + $0x118] sm:$0xff]
    %v3498 = vld [vmem:[%s2744 + $0x120] sm:$0xff]
    %v3499 = vld [vmem:[%s2744 + $0x128] sm:$0xff]
    %v3500 = vld [vmem:[%s2744 + $0x130] sm:$0xff]
    %v3501 = vld [vmem:[%s2744 + $0x138] sm:$0xff]
    %v3502 = vld [vmem:[%s2744 + $0x140] sm:$0xff]
    %v3503 = vld [vmem:[%s2744 + $0x148] sm:$0xff]
    %v3504 = vld [vmem:[%s2744 + $0x150] sm:$0xff]
    %v3505 = vld [vmem:[%s2744 + $0x158] sm:$0xff]
    %v3506 = vld [vmem:[%s2744 + $0x160] sm:$0xff]
    %v3507 = vld [vmem:[%s2744 + $0x168] sm:$0xff]
    %v3508 = vld [vmem:[%s2744 + $0x170] sm:$0xff]
    %v3509 = vld [vmem:[%s2744 + $0x178] sm:$0xff]
    %v3510 = vld [vmem:[%s2744 + $0x180] sm:$0xff]
    %v3511 = vld [vmem:[%s2744 + $0x188] sm:$0xff]
    %v3512 = vld [vmem:[%s2744 + $0x190] sm:$0xff]
    %v3513 = vld [vmem:[%s2744 + $0x198] sm:$0xff]
    %v3514 = vld [vmem:[%s2744 + $0x1a0] sm:$0xff]
    %v3515 = vld [vmem:[%s2744 + $0x1a8] sm:$0xff]
    %v3516 = vld [vmem:[%s2744 + $0x1b0] sm:$0xff]
    %v3517 = vld [vmem:[%s2744 + $0x1b8] sm:$0xff]
    %v3518 = vld [vmem:[%s2744 + $0x1c0] sm:$0xff]
    %v3519 = vld [vmem:[%s2744 + $0x1c8] sm:$0xff]
    %v3520 = vld [vmem:[%s2744 + $0x1d0] sm:$0xff]
    %v3521 = vld [vmem:[%s2744 + $0x1d8] sm:$0xff]
    %v3522 = vld [vmem:[%s2744 + $0x1e0] sm:$0xff]
    %v3523 = vld [vmem:[%s2744 + $0x1e8] sm:$0xff]
    %v3524 = vld [vmem:[%s2744 + $0x1f0] sm:$0xff]
    %v3525 = vld [vmem:[%s2744 + $0x1f8] sm:$0xff]
    %3526 = vmatprep.subr.mxu0 %v3523
    %3527 = vmatpush1.msra.mxu0 %v3522
    %3528 = vmatprep.subr.mxu0 %v3519
    %3529 = vmatpush1.msra.mxu0 %v3518
    %3530 = vmatprep.subr.mxu0 %v3515
    %3531 = vmatpush1.msra.mxu0 %v3514
    %3532 = vmatprep.subr.mxu0 %v3511
    %3533 = vmatpush1.msra.mxu0 %v3510
    %3534 = vmatprep.subr.mxu0 %v3507
    %3535 = vmatpush1.msra.mxu0 %v3506
    %3536 = vmatprep.subr.mxu0 %v3503
    %3537 = vmatpush1.msra.mxu0 %v3502
    %3538 = vmatprep.subr.mxu0 %v3499
    %3539 = vmatpush1.msra.mxu0 %v3498
    %3540 = vmatprep.subr.mxu0 %v3495
    %3541 = vmatpush1.msra.mxu0 %v3494
    %3542 = vmatprep.subr.mxu0 %v3491
    %3543 = vmatpush1.msra.mxu0 %v3490
    %3544 = vmatprep.subr.mxu0 %v3487
    %3545 = vmatpush1.msra.mxu0 %v3486
    %3546 = vmatprep.subr.mxu0 %v3483
    %3547 = vmatpush1.msra.mxu0 %v3482
    %3548 = vmatprep.subr.mxu0 %v3479
    %3549 = vmatpush1.msra.mxu0 %v3478
    %3550 = vmatprep.subr.mxu0 %v3475
    %3551 = vmatpush1.msra.mxu0 %v3474
    %3552 = vmatprep.subr.mxu0 %v3471
    %3553 = vmatpush1.msra.mxu0 %v3470
    %3554 = vmatprep.subr.mxu0 %v3467
    %3555 = vmatpush1.msra.mxu0 %v3466
    %3556 = vmatprep.subr.mxu0 %v3463
    %3557 = vmatpush1.msra.mxu0 %v3462
    %3558 = vmatprep.subr.mxu0 0.0
    %3559 = vmatpush2.msra.mxu0 0.0
    %3560 = vmatprep.subr.mxu0 0.0
    %3561 = vmatpush2.msra.mxu0 0.0
    %3562 = vmatprep.subr.mxu0 0.0
    %3563 = vmatpush2.msra.mxu0 0.0
    %3564 = vmatprep.subr.mxu0 0.0
    %3565 = vmatpush2.msra.mxu0 0.0
    %3566 = vmatprep.subr.mxu0 0.0
    %3567 = vmatpush2.msra.mxu0 0.0
    %3568 = vmatprep.subr.mxu0 0.0
    %3569 = vmatpush2.msra.mxu0 0.0
    %3570 = vmatprep.subr.mxu0 0.0
    %3571 = vmatpush2.msra.mxu0 0.0
    %3572 = vmatprep.subr.mxu0 0.0
    %3573 = vmatpush2.msra.mxu0 0.0
    %3574 = vmatprep.subr.mxu0 0.0
    %3575 = vmatpush2.msra.mxu0 0.0
    %3576 = vmatprep.subr.mxu0 0.0
    %3577 = vmatpush2.msra.mxu0 0.0
    %3578 = vmatprep.subr.mxu0 0.0
    %3579 = vmatpush2.msra.mxu0 0.0
    %3580 = vmatprep.subr.mxu0 0.0
    %3581 = vmatpush2.msra.mxu0 0.0
    %3582 = vmatprep.subr.mxu0 0.0
    %3583 = vmatpush2.msra.mxu0 0.0
    %3584 = vmatprep.subr.mxu0 0.0
    %3585 = vmatpush2.msra.mxu0 0.0
    %3586 = vmatprep.subr.mxu0 0.0
    %3587 = vmatpush2.msra.mxu0 0.0
    %3588 = vmatprep.subr.mxu0 0.0
    %3589 = vmatpush2.msra.mxu0 0.0
    %3590 = vmatprep.mubr.f32.mxu0 0.0
    %3591 = vmatmul.mubr.f32.gmra.mxu0 %v3456
    %v3592 = vpop.f32.mrf.mxu0
    %v3593 = vadd.f32 0.0, %v3592
    %v3594 = vpop.f32.mrf.mxu0
    %v3595 = vadd.f32 0.0, %v3594
    %3596 = vdwg.mxu0
    %3597 = vmatprep.subr.mxu0 %v3525
    %3598 = vmatpush1.msra.mxu0 %v3524
    %3599 = vmatprep.subr.mxu0 %v3521
    %3600 = vmatpush1.msra.mxu0 %v3520
    %3601 = vmatprep.subr.mxu0 %v3517
    %3602 = vmatpush1.msra.mxu0 %v3516
    %3603 = vmatprep.subr.mxu0 %v3513
    %3604 = vmatpush1.msra.mxu0 %v3512
    %3605 = vmatprep.subr.mxu0 %v3509
    %3606 = vmatpush1.msra.mxu0 %v3508
    %3607 = vmatprep.subr.mxu0 %v3505
    %3608 = vmatpush1.msra.mxu0 %v3504
    %3609 = vmatprep.subr.mxu0 %v3501
    %3610 = vmatpush1.msra.mxu0 %v3500
    %3611 = vmatprep.subr.mxu0 %v3497
    %3612 = vmatpush1.msra.mxu0 %v3496
    %3613 = vmatprep.subr.mxu0 %v3493
    %3614 = vmatpush1.msra.mxu0 %v3492
    %3615 = vmatprep.subr.mxu0 %v3489
    %3616 = vmatpush1.msra.mxu0 %v3488
    %3617 = vmatprep.subr.mxu0 %v3485
    %3618 = vmatpush1.msra.mxu0 %v3484
    %3619 = vmatprep.subr.mxu0 %v3481
    %3620 = vmatpush1.msra.mxu0 %v3480
    %3621 = vmatprep.subr.mxu0 %v3477
    %3622 = vmatpush1.msra.mxu0 %v3476
    %3623 = vmatprep.subr.mxu0 %v3473
    %3624 = vmatpush1.msra.mxu0 %v3472
    %3625 = vmatprep.subr.mxu0 %v3469
    %3626 = vmatpush1.msra.mxu0 %v3468
    %3627 = vmatprep.subr.mxu0 %v3465
    %3628 = vmatpush1.msra.mxu0 %v3464
    %3629 = vmatprep.subr.mxu0 0.0
    %3630 = vmatpush2.msra.mxu0 0.0
    %3631 = vmatprep.subr.mxu0 0.0
    %3632 = vmatpush2.msra.mxu0 0.0
    %3633 = vmatprep.subr.mxu0 0.0
    %3634 = vmatpush2.msra.mxu0 0.0
    %3635 = vmatprep.subr.mxu0 0.0
    %3636 = vmatpush2.msra.mxu0 0.0
    %3637 = vmatprep.subr.mxu0 0.0
    %3638 = vmatpush2.msra.mxu0 0.0
    %3639 = vmatprep.subr.mxu0 0.0
    %3640 = vmatpush2.msra.mxu0 0.0
    %3641 = vmatprep.subr.mxu0 0.0
    %3642 = vmatpush2.msra.mxu0 0.0
    %3643 = vmatprep.subr.mxu0 0.0
    %3644 = vmatpush2.msra.mxu0 0.0
    %3645 = vmatprep.subr.mxu0 0.0
    %3646 = vmatpush2.msra.mxu0 0.0
    %3647 = vmatprep.subr.mxu0 0.0
    %3648 = vmatpush2.msra.mxu0 0.0
    %3649 = vmatprep.subr.mxu0 0.0
    %3650 = vmatpush2.msra.mxu0 0.0
    %3651 = vmatprep.subr.mxu0 0.0
    %3652 = vmatpush2.msra.mxu0 0.0
    %3653 = vmatprep.subr.mxu0 0.0
    %3654 = vmatpush2.msra.mxu0 0.0
    %3655 = vmatprep.subr.mxu0 0.0
    %3656 = vmatpush2.msra.mxu0 0.0
    %3657 = vmatprep.subr.mxu0 0.0
    %3658 = vmatpush2.msra.mxu0 0.0
    %3659 = vmatprep.subr.mxu0 0.0
    %3660 = vmatpush2.msra.mxu0 0.0
    %3661 = vmatprep.mubr.f32.mxu0 0.0
    %3662 = vmatmul.mubr.f32.gmra.mxu0 %v3456
    %v3663 = vpop.f32.mrf.mxu0
    %v3664 = vadd.f32 0.0, %v3663
    %v3665 = vpop.f32.mrf.mxu0
    %v3666 = vadd.f32 0.0, %v3665
    %3667 = vdwg.mxu0
    %v3668 = vadd.f32 %v3458, %v3593
    %v3669 = vadd.f32 %v3459, %v3595
    %v3670 = vadd.f32 %v3460, %v3664
    %v3671 = vadd.f32 %v3461, %v3666
    %v3672 = vxor.u32 %v3668, 2147483648
    %v3673 = vmul.f32 %v3672, 1.442695
    %v3674 = vpow.pop %v3673
    %v3675 = vadd.f32 %v3674, 1.0
    %v3676 = vrcp.pop %v3675
    %v3677 = vmul.f32 1.0, %v3676
    %v3678 = vxor.u32 %v3669, 2147483648
    %v3679 = vmul.f32 %v3678, 1.442695
    %v3680 = vpow.pop %v3679
    %v3681 = vadd.f32 %v3680, 1.0
    %v3682 = vrcp.pop %v3681
    %v3683 = vmul.f32 1.0, %v3682
    %v3684 = vtanh.pop %v3670
    %v3685 = vxor.u32 %v3671, 2147483648
    %v3686 = vmul.f32 %v3685, 1.442695
    %v3687 = vpow.pop %v3686
    %v3688 = vadd.f32 %v3687, 1.0
    %v3689 = vrcp.pop %v3688
    %v3690 = vmul.f32 1.0, %v3689
    %v3691 = vmul.f32 %v3683, %v3454
    %v3692 = vmul.f32 %v3677, %v3684
    %v3693 = vadd.f32 %v3691, %v3692
    %v3694 = vtanh.pop %v3693
    %v3695 = vmul.f32 %v3690, %v3694
    %3696 = vst [vmem:[%s1422] sm:$0xff] %v3695
    %v3697 = vld [vmem:[%s1424] sm:$0xff]
    %v3698 = vld [vmem:[%s1424 + $0x8] sm:$0xff]
    %v3699 = vld [vmem:[%s1424 + $0x10] sm:$0xff]
    %v3700 = vld [vmem:[%s1424 + $0x18] sm:$0xff]
    %v3701 = vld [vmem:[%s2744] sm:$0xff]
    %v3702 = vld [vmem:[%s2744 + $0x8] sm:$0xff]
    %v3703 = vld [vmem:[%s2744 + $0x10] sm:$0xff]
    %v3704 = vld [vmem:[%s2744 + $0x18] sm:$0xff]
    %v3705 = vld [vmem:[%s2744 + $0x20] sm:$0xff]
    %v3706 = vld [vmem:[%s2744 + $0x28] sm:$0xff]
    %v3707 = vld [vmem:[%s2744 + $0x30] sm:$0xff]
    %v3708 = vld [vmem:[%s2744 + $0x38] sm:$0xff]
    %v3709 = vld [vmem:[%s2744 + $0x40] sm:$0xff]
    %v3710 = vld [vmem:[%s2744 + $0x48] sm:$0xff]
    %v3711 = vld [vmem:[%s2744 + $0x50] sm:$0xff]
    %v3712 = vld [vmem:[%s2744 + $0x58] sm:$0xff]
    %v3713 = vld [vmem:[%s2744 + $0x60] sm:$0xff]
    %v3714 = vld [vmem:[%s2744 + $0x68] sm:$0xff]
    %v3715 = vld [vmem:[%s2744 + $0x70] sm:$0xff]
    %v3716 = vld [vmem:[%s2744 + $0x78] sm:$0xff]
    %v3717 = vld [vmem:[%s2744 + $0x80] sm:$0xff]
    %v3718 = vld [vmem:[%s2744 + $0x88] sm:$0xff]
    %v3719 = vld [vmem:[%s2744 + $0x90] sm:$0xff]
    %v3720 = vld [vmem:[%s2744 + $0x98] sm:$0xff]
    %v3721 = vld [vmem:[%s2744 + $0xa0] sm:$0xff]
    %v3722 = vld [vmem:[%s2744 + $0xa8] sm:$0xff]
    %v3723 = vld [vmem:[%s2744 + $0xb0] sm:$0xff]
    %v3724 = vld [vmem:[%s2744 + $0xb8] sm:$0xff]
    %v3725 = vld [vmem:[%s2744 + $0xc0] sm:$0xff]
    %v3726 = vld [vmem:[%s2744 + $0xc8] sm:$0xff]
    %v3727 = vld [vmem:[%s2744 + $0xd0] sm:$0xff]
    %v3728 = vld [vmem:[%s2744 + $0xd8] sm:$0xff]
    %v3729 = vld [vmem:[%s2744 + $0xe0] sm:$0xff]
    %v3730 = vld [vmem:[%s2744 + $0xe8] sm:$0xff]
    %v3731 = vld [vmem:[%s2744 + $0xf0] sm:$0xff]
    %v3732 = vld [vmem:[%s2744 + $0xf8] sm:$0xff]
    %v3733 = vld [vmem:[%s2744 + $0x100] sm:$0xff]
    %v3734 = vld [vmem:[%s2744 + $0x108] sm:$0xff]
    %v3735 = vld [vmem:[%s2744 + $0x110] sm:$0xff]
    %v3736 = vld [vmem:[%s2744 + $0x118] sm:$0xff]
    %v3737 = vld [vmem:[%s2744 + $0x120] sm:$0xff]
    %v3738 = vld [vmem:[%s2744 + $0x128] sm:$0xff]
    %v3739 = vld [vmem:[%s2744 + $0x130] sm:$0xff]
    %v3740 = vld [vmem:[%s2744 + $0x138] sm:$0xff]
    %v3741 = vld [vmem:[%s2744 + $0x140] sm:$0xff]
    %v3742 = vld [vmem:[%s2744 + $0x148] sm:$0xff]
    %v3743 = vld [vmem:[%s2744 + $0x150] sm:$0xff]
    %v3744 = vld [vmem:[%s2744 + $0x158] sm:$0xff]
    %v3745 = vld [vmem:[%s2744 + $0x160] sm:$0xff]
    %v3746 = vld [vmem:[%s2744 + $0x168] sm:$0xff]
    %v3747 = vld [vmem:[%s2744 + $0x170] sm:$0xff]
    %v3748 = vld [vmem:[%s2744 + $0x178] sm:$0xff]
    %v3749 = vld [vmem:[%s2744 + $0x180] sm:$0xff]
    %v3750 = vld [vmem:[%s2744 + $0x188] sm:$0xff]
    %v3751 = vld [vmem:[%s2744 + $0x190] sm:$0xff]
    %v3752 = vld [vmem:[%s2744 + $0x198] sm:$0xff]
    %v3753 = vld [vmem:[%s2744 + $0x1a0] sm:$0xff]
    %v3754 = vld [vmem:[%s2744 + $0x1a8] sm:$0xff]
    %v3755 = vld [vmem:[%s2744 + $0x1b0] sm:$0xff]
    %v3756 = vld [vmem:[%s2744 + $0x1b8] sm:$0xff]
    %v3757 = vld [vmem:[%s2744 + $0x1c0] sm:$0xff]
    %v3758 = vld [vmem:[%s2744 + $0x1c8] sm:$0xff]
    %v3759 = vld [vmem:[%s2744 + $0x1d0] sm:$0xff]
    %v3760 = vld [vmem:[%s2744 + $0x1d8] sm:$0xff]
    %v3761 = vld [vmem:[%s2744 + $0x1e0] sm:$0xff]
    %v3762 = vld [vmem:[%s2744 + $0x1e8] sm:$0xff]
    %v3763 = vld [vmem:[%s2744 + $0x1f0] sm:$0xff]
    %v3764 = vld [vmem:[%s2744 + $0x1f8] sm:$0xff]
    %3765 = vmatprep.subr.mxu0 %v3762
    %3766 = vmatpush1.msra.mxu0 %v3761
    %3767 = vmatprep.subr.mxu0 %v3758
    %3768 = vmatpush1.msra.mxu0 %v3757
    %3769 = vmatprep.subr.mxu0 %v3754
    %3770 = vmatpush1.msra.mxu0 %v3753
    %3771 = vmatprep.subr.mxu0 %v3750
    %3772 = vmatpush1.msra.mxu0 %v3749
    %3773 = vmatprep.subr.mxu0 %v3746
    %3774 = vmatpush1.msra.mxu0 %v3745
    %3775 = vmatprep.subr.mxu0 %v3742
    %3776 = vmatpush1.msra.mxu0 %v3741
    %3777 = vmatprep.subr.mxu0 %v3738
    %3778 = vmatpush1.msra.mxu0 %v3737
    %3779 = vmatprep.subr.mxu0 %v3734
    %3780 = vmatpush1.msra.mxu0 %v3733
    %3781 = vmatprep.subr.mxu0 %v3730
    %3782 = vmatpush1.msra.mxu0 %v3729
    %3783 = vmatprep.subr.mxu0 %v3726
    %3784 = vmatpush1.msra.mxu0 %v3725
    %3785 = vmatprep.subr.mxu0 %v3722
    %3786 = vmatpush1.msra.mxu0 %v3721
    %3787 = vmatprep.subr.mxu0 %v3718
    %3788 = vmatpush1.msra.mxu0 %v3717
    %3789 = vmatprep.subr.mxu0 %v3714
    %3790 = vmatpush1.msra.mxu0 %v3713
    %3791 = vmatprep.subr.mxu0 %v3710
    %3792 = vmatpush1.msra.mxu0 %v3709
    %3793 = vmatprep.subr.mxu0 %v3706
    %3794 = vmatpush1.msra.mxu0 %v3705
    %3795 = vmatprep.subr.mxu0 %v3702
    %3796 = vmatpush1.msra.mxu0 %v3701
    %3797 = vmatprep.subr.mxu0 0.0
    %3798 = vmatpush2.msra.mxu0 0.0
    %3799 = vmatprep.subr.mxu0 0.0
    %3800 = vmatpush2.msra.mxu0 0.0
    %3801 = vmatprep.subr.mxu0 0.0
    %3802 = vmatpush2.msra.mxu0 0.0
    %3803 = vmatprep.subr.mxu0 0.0
    %3804 = vmatpush2.msra.mxu0 0.0
    %3805 = vmatprep.subr.mxu0 0.0
    %3806 = vmatpush2.msra.mxu0 0.0
    %3807 = vmatprep.subr.mxu0 0.0
    %3808 = vmatpush2.msra.mxu0 0.0
    %3809 = vmatprep.subr.mxu0 0.0
    %3810 = vmatpush2.msra.mxu0 0.0
    %3811 = vmatprep.subr.mxu0 0.0
    %3812 = vmatpush2.msra.mxu0 0.0
    %3813 = vmatprep.subr.mxu0 0.0
    %3814 = vmatpush2.msra.mxu0 0.0
    %3815 = vmatprep.subr.mxu0 0.0
    %3816 = vmatpush2.msra.mxu0 0.0
    %3817 = vmatprep.subr.mxu0 0.0
    %3818 = vmatpush2.msra.mxu0 0.0
    %3819 = vmatprep.subr.mxu0 0.0
    %3820 = vmatpush2.msra.mxu0 0.0
    %3821 = vmatprep.subr.mxu0 0.0
    %3822 = vmatpush2.msra.mxu0 0.0
    %3823 = vmatprep.subr.mxu0 0.0
    %3824 = vmatpush2.msra.mxu0 0.0
    %3825 = vmatprep.subr.mxu0 0.0
    %3826 = vmatpush2.msra.mxu0 0.0
    %3827 = vmatprep.subr.mxu0 0.0
    %3828 = vmatpush2.msra.mxu0 0.0
    %3829 = vmatprep.mubr.f32.mxu0 0.0
    %3830 = vmatmul.mubr.f32.gmra.mxu0 %v3695
    %v3831 = vpop.f32.mrf.mxu0
    %v3832 = vadd.f32 0.0, %v3831
    %v3833 = vpop.f32.mrf.mxu0
    %v3834 = vadd.f32 0.0, %v3833
    %3835 = vdwg.mxu0
    %3836 = vmatprep.subr.mxu0 %v3764
    %3837 = vmatpush1.msra.mxu0 %v3763
    %3838 = vmatprep.subr.mxu0 %v3760
    %3839 = vmatpush1.msra.mxu0 %v3759
    %3840 = vmatprep.subr.mxu0 %v3756
    %3841 = vmatpush1.msra.mxu0 %v3755
    %3842 = vmatprep.subr.mxu0 %v3752
    %3843 = vmatpush1.msra.mxu0 %v3751
    %3844 = vmatprep.subr.mxu0 %v3748
    %3845 = vmatpush1.msra.mxu0 %v3747
    %3846 = vmatprep.subr.mxu0 %v3744
    %3847 = vmatpush1.msra.mxu0 %v3743
    %3848 = vmatprep.subr.mxu0 %v3740
    %3849 = vmatpush1.msra.mxu0 %v3739
    %3850 = vmatprep.subr.mxu0 %v3736
    %3851 = vmatpush1.msra.mxu0 %v3735
    %3852 = vmatprep.subr.mxu0 %v3732
    %3853 = vmatpush1.msra.mxu0 %v3731
    %3854 = vmatprep.subr.mxu0 %v3728
    %3855 = vmatpush1.msra.mxu0 %v3727
    %3856 = vmatprep.subr.mxu0 %v3724
    %3857 = vmatpush1.msra.mxu0 %v3723
    %3858 = vmatprep.subr.mxu0 %v3720
    %3859 = vmatpush1.msra.mxu0 %v3719
    %3860 = vmatprep.subr.mxu0 %v3716
    %3861 = vmatpush1.msra.mxu0 %v3715
    %3862 = vmatprep.subr.mxu0 %v3712
    %3863 = vmatpush1.msra.mxu0 %v3711
    %3864 = vmatprep.subr.mxu0 %v3708
    %3865 = vmatpush1.msra.mxu0 %v3707
    %3866 = vmatprep.subr.mxu0 %v3704
    %3867 = vmatpush1.msra.mxu0 %v3703
    %3868 = vmatprep.subr.mxu0 0.0
    %3869 = vmatpush2.msra.mxu0 0.0
    %3870 = vmatprep.subr.mxu0 0.0
    %3871 = vmatpush2.msra.mxu0 0.0
    %3872 = vmatprep.subr.mxu0 0.0
    %3873 = vmatpush2.msra.mxu0 0.0
    %3874 = vmatprep.subr.mxu0 0.0
    %3875 = vmatpush2.msra.mxu0 0.0
    %3876 = vmatprep.subr.mxu0 0.0
    %3877 = vmatpush2.msra.mxu0 0.0
    %3878 = vmatprep.subr.mxu0 0.0
    %3879 = vmatpush2.msra.mxu0 0.0
    %3880 = vmatprep.subr.mxu0 0.0
    %3881 = vmatpush2.msra.mxu0 0.0
    %3882 = vmatprep.subr.mxu0 0.0
    %3883 = vmatpush2.msra.mxu0 0.0
    %3884 = vmatprep.subr.mxu0 0.0
    %3885 = vmatpush2.msra.mxu0 0.0
    %3886 = vmatprep.subr.mxu0 0.0
    %3887 = vmatpush2.msra.mxu0 0.0
    %3888 = vmatprep.subr.mxu0 0.0
    %3889 = vmatpush2.msra.mxu0 0.0
    %3890 = vmatprep.subr.mxu0 0.0
    %3891 = vmatpush2.msra.mxu0 0.0
    %3892 = vmatprep.subr.mxu0 0.0
    %3893 = vmatpush2.msra.mxu0 0.0
    %3894 = vmatprep.subr.mxu0 0.0
    %3895 = vmatpush2.msra.mxu0 0.0
    %3896 = vmatprep.subr.mxu0 0.0
    %3897 = vmatpush2.msra.mxu0 0.0
    %3898 = vmatprep.subr.mxu0 0.0
    %3899 = vmatpush2.msra.mxu0 0.0
    %3900 = vmatprep.mubr.f32.mxu0 0.0
    %3901 = vmatmul.mubr.f32.gmra.mxu0 %v3695
    %v3902 = vpop.f32.mrf.mxu0
    %v3903 = vadd.f32 0.0, %v3902
    %v3904 = vpop.f32.mrf.mxu0
    %v3905 = vadd.f32 0.0, %v3904
    %3906 = vdwg.mxu0
    %v3907 = vadd.f32 %v3697, %v3832
    %v3908 = vadd.f32 %v3698, %v3834
    %v3909 = vadd.f32 %v3699, %v3903
    %v3910 = vadd.f32 %v3700, %v3905
    %v3911 = vxor.u32 %v3907, 2147483648
    %v3912 = vmul.f32 %v3911, 1.442695
    %v3913 = vpow.pop %v3912
    %v3914 = vadd.f32 %v3913, 1.0
    %v3915 = vrcp.pop %v3914
    %v3916 = vmul.f32 1.0, %v3915
    %v3917 = vxor.u32 %v3908, 2147483648
    %v3918 = vmul.f32 %v3917, 1.442695
    %v3919 = vpow.pop %v3918
    %v3920 = vadd.f32 %v3919, 1.0
    %v3921 = vrcp.pop %v3920
    %v3922 = vmul.f32 1.0, %v3921
    %v3923 = vtanh.pop %v3909
    %v3924 = vxor.u32 %v3910, 2147483648
    %v3925 = vmul.f32 %v3924, 1.442695
    %v3926 = vpow.pop %v3925
    %v3927 = vadd.f32 %v3926, 1.0
    %v3928 = vrcp.pop %v3927
    %v3929 = vmul.f32 1.0, %v3928
    %v3930 = vmul.f32 %v3922, %v3693
    %v3931 = vmul.f32 %v3916, %v3923
    %v3932 = vadd.f32 %v3930, %v3931
    %v3933 = vtanh.pop %v3932
    %v3934 = vmul.f32 %v3929, %v3933
    %3935 = vst [vmem:[%s1663] sm:$0xff] %v3934
    %v3936 = vld [vmem:[%s1665] sm:$0xff]
    %v3937 = vld [vmem:[%s1665 + $0x8] sm:$0xff]
    %v3938 = vld [vmem:[%s1665 + $0x10] sm:$0xff]
    %v3939 = vld [vmem:[%s1665 + $0x18] sm:$0xff]
    %v3940 = vld [vmem:[%s2744] sm:$0xff]
    %v3941 = vld [vmem:[%s2744 + $0x8] sm:$0xff]
    %v3942 = vld [vmem:[%s2744 + $0x10] sm:$0xff]
    %v3943 = vld [vmem:[%s2744 + $0x18] sm:$0xff]
    %v3944 = vld [vmem:[%s2744 + $0x20] sm:$0xff]
    %v3945 = vld [vmem:[%s2744 + $0x28] sm:$0xff]
    %v3946 = vld [vmem:[%s2744 + $0x30] sm:$0xff]
    %v3947 = vld [vmem:[%s2744 + $0x38] sm:$0xff]
    %v3948 = vld [vmem:[%s2744 + $0x40] sm:$0xff]
    %v3949 = vld [vmem:[%s2744 + $0x48] sm:$0xff]
    %v3950 = vld [vmem:[%s2744 + $0x50] sm:$0xff]
    %v3951 = vld [vmem:[%s2744 + $0x58] sm:$0xff]
    %v3952 = vld [vmem:[%s2744 + $0x60] sm:$0xff]
    %v3953 = vld [vmem:[%s2744 + $0x68] sm:$0xff]
    %v3954 = vld [vmem:[%s2744 + $0x70] sm:$0xff]
    %v3955 = vld [vmem:[%s2744 + $0x78] sm:$0xff]
    %v3956 = vld [vmem:[%s2744 + $0x80] sm:$0xff]
    %v3957 = vld [vmem:[%s2744 + $0x88] sm:$0xff]
    %v3958 = vld [vmem:[%s2744 + $0x90] sm:$0xff]
    %v3959 = vld [vmem:[%s2744 + $0x98] sm:$0xff]
    %v3960 = vld [vmem:[%s2744 + $0xa0] sm:$0xff]
    %v3961 = vld [vmem:[%s2744 + $0xa8] sm:$0xff]
    %v3962 = vld [vmem:[%s2744 + $0xb0] sm:$0xff]
    %v3963 = vld [vmem:[%s2744 + $0xb8] sm:$0xff]
    %v3964 = vld [vmem:[%s2744 + $0xc0] sm:$0xff]
    %v3965 = vld [vmem:[%s2744 + $0xc8] sm:$0xff]
    %v3966 = vld [vmem:[%s2744 + $0xd0] sm:$0xff]
    %v3967 = vld [vmem:[%s2744 + $0xd8] sm:$0xff]
    %v3968 = vld [vmem:[%s2744 + $0xe0] sm:$0xff]
    %v3969 = vld [vmem:[%s2744 + $0xe8] sm:$0xff]
    %v3970 = vld [vmem:[%s2744 + $0xf0] sm:$0xff]
    %v3971 = vld [vmem:[%s2744 + $0xf8] sm:$0xff]
    %v3972 = vld [vmem:[%s2744 + $0x100] sm:$0xff]
    %v3973 = vld [vmem:[%s2744 + $0x108] sm:$0xff]
    %v3974 = vld [vmem:[%s2744 + $0x110] sm:$0xff]
    %v3975 = vld [vmem:[%s2744 + $0x118] sm:$0xff]
    %v3976 = vld [vmem:[%s2744 + $0x120] sm:$0xff]
    %v3977 = vld [vmem:[%s2744 + $0x128] sm:$0xff]
    %v3978 = vld [vmem:[%s2744 + $0x130] sm:$0xff]
    %v3979 = vld [vmem:[%s2744 + $0x138] sm:$0xff]
    %v3980 = vld [vmem:[%s2744 + $0x140] sm:$0xff]
    %v3981 = vld [vmem:[%s2744 + $0x148] sm:$0xff]
    %v3982 = vld [vmem:[%s2744 + $0x150] sm:$0xff]
    %v3983 = vld [vmem:[%s2744 + $0x158] sm:$0xff]
    %v3984 = vld [vmem:[%s2744 + $0x160] sm:$0xff]
    %v3985 = vld [vmem:[%s2744 + $0x168] sm:$0xff]
    %v3986 = vld [vmem:[%s2744 + $0x170] sm:$0xff]
    %v3987 = vld [vmem:[%s2744 + $0x178] sm:$0xff]
    %v3988 = vld [vmem:[%s2744 + $0x180] sm:$0xff]
    %v3989 = vld [vmem:[%s2744 + $0x188] sm:$0xff]
    %v3990 = vld [vmem:[%s2744 + $0x190] sm:$0xff]
    %v3991 = vld [vmem:[%s2744 + $0x198] sm:$0xff]
    %v3992 = vld [vmem:[%s2744 + $0x1a0] sm:$0xff]
    %v3993 = vld [vmem:[%s2744 + $0x1a8] sm:$0xff]
    %v3994 = vld [vmem:[%s2744 + $0x1b0] sm:$0xff]
    %v3995 = vld [vmem:[%s2744 + $0x1b8] sm:$0xff]
    %v3996 = vld [vmem:[%s2744 + $0x1c0] sm:$0xff]
    %v3997 = vld [vmem:[%s2744 + $0x1c8] sm:$0xff]
    %v3998 = vld [vmem:[%s2744 + $0x1d0] sm:$0xff]
    %v3999 = vld [vmem:[%s2744 + $0x1d8] sm:$0xff]
    %v4000 = vld [vmem:[%s2744 + $0x1e0] sm:$0xff]
    %v4001 = vld [vmem:[%s2744 + $0x1e8] sm:$0xff]
    %v4002 = vld [vmem:[%s2744 + $0x1f0] sm:$0xff]
    %v4003 = vld [vmem:[%s2744 + $0x1f8] sm:$0xff]
    %4004 = vmatprep.subr.mxu0 %v4001
    %4005 = vmatpush1.msra.mxu0 %v4000
    %4006 = vmatprep.subr.mxu0 %v3997
    %4007 = vmatpush1.msra.mxu0 %v3996
    %4008 = vmatprep.subr.mxu0 %v3993
    %4009 = vmatpush1.msra.mxu0 %v3992
    %4010 = vmatprep.subr.mxu0 %v3989
    %4011 = vmatpush1.msra.mxu0 %v3988
    %4012 = vmatprep.subr.mxu0 %v3985
    %4013 = vmatpush1.msra.mxu0 %v3984
    %4014 = vmatprep.subr.mxu0 %v3981
    %4015 = vmatpush1.msra.mxu0 %v3980
    %4016 = vmatprep.subr.mxu0 %v3977
    %4017 = vmatpush1.msra.mxu0 %v3976
    %4018 = vmatprep.subr.mxu0 %v3973
    %4019 = vmatpush1.msra.mxu0 %v3972
    %4020 = vmatprep.subr.mxu0 %v3969
    %4021 = vmatpush1.msra.mxu0 %v3968
    %4022 = vmatprep.subr.mxu0 %v3965
    %4023 = vmatpush1.msra.mxu0 %v3964
    %4024 = vmatprep.subr.mxu0 %v3961
    %4025 = vmatpush1.msra.mxu0 %v3960
    %4026 = vmatprep.subr.mxu0 %v3957
    %4027 = vmatpush1.msra.mxu0 %v3956
    %4028 = vmatprep.subr.mxu0 %v3953
    %4029 = vmatpush1.msra.mxu0 %v3952
    %4030 = vmatprep.subr.mxu0 %v3949
    %4031 = vmatpush1.msra.mxu0 %v3948
    %4032 = vmatprep.subr.mxu0 %v3945
    %4033 = vmatpush1.msra.mxu0 %v3944
    %4034 = vmatprep.subr.mxu0 %v3941
    %4035 = vmatpush1.msra.mxu0 %v3940
    %4036 = vmatprep.subr.mxu0 0.0
    %4037 = vmatpush2.msra.mxu0 0.0
    %4038 = vmatprep.subr.mxu0 0.0
    %4039 = vmatpush2.msra.mxu0 0.0
    %4040 = vmatprep.subr.mxu0 0.0
    %4041 = vmatpush2.msra.mxu0 0.0
    %4042 = vmatprep.subr.mxu0 0.0
    %4043 = vmatpush2.msra.mxu0 0.0
    %4044 = vmatprep.subr.mxu0 0.0
    %4045 = vmatpush2.msra.mxu0 0.0
    %4046 = vmatprep.subr.mxu0 0.0
    %4047 = vmatpush2.msra.mxu0 0.0
    %4048 = vmatprep.subr.mxu0 0.0
    %4049 = vmatpush2.msra.mxu0 0.0
    %4050 = vmatprep.subr.mxu0 0.0
    %4051 = vmatpush2.msra.mxu0 0.0
    %4052 = vmatprep.subr.mxu0 0.0
    %4053 = vmatpush2.msra.mxu0 0.0
    %4054 = vmatprep.subr.mxu0 0.0
    %4055 = vmatpush2.msra.mxu0 0.0
    %4056 = vmatprep.subr.mxu0 0.0
    %4057 = vmatpush2.msra.mxu0 0.0
    %4058 = vmatprep.subr.mxu0 0.0
    %4059 = vmatpush2.msra.mxu0 0.0
    %4060 = vmatprep.subr.mxu0 0.0
    %4061 = vmatpush2.msra.mxu0 0.0
    %4062 = vmatprep.subr.mxu0 0.0
    %4063 = vmatpush2.msra.mxu0 0.0
    %4064 = vmatprep.subr.mxu0 0.0
    %4065 = vmatpush2.msra.mxu0 0.0
    %4066 = vmatprep.subr.mxu0 0.0
    %4067 = vmatpush2.msra.mxu0 0.0
    %4068 = vmatprep.mubr.f32.mxu0 0.0
    %4069 = vmatmul.mubr.f32.gmra.mxu0 %v3934
    %v4070 = vpop.f32.mrf.mxu0
    %v4071 = vadd.f32 0.0, %v4070
    %v4072 = vpop.f32.mrf.mxu0
    %v4073 = vadd.f32 0.0, %v4072
    %4074 = vdwg.mxu0
    %4075 = vmatprep.subr.mxu0 %v4003
    %4076 = vmatpush1.msra.mxu0 %v4002
    %4077 = vmatprep.subr.mxu0 %v3999
    %4078 = vmatpush1.msra.mxu0 %v3998
    %4079 = vmatprep.subr.mxu0 %v3995
    %4080 = vmatpush1.msra.mxu0 %v3994
    %4081 = vmatprep.subr.mxu0 %v3991
    %4082 = vmatpush1.msra.mxu0 %v3990
    %4083 = vmatprep.subr.mxu0 %v3987
    %4084 = vmatpush1.msra.mxu0 %v3986
    %4085 = vmatprep.subr.mxu0 %v3983
    %4086 = vmatpush1.msra.mxu0 %v3982
    %4087 = vmatprep.subr.mxu0 %v3979
    %4088 = vmatpush1.msra.mxu0 %v3978
    %4089 = vmatprep.subr.mxu0 %v3975
    %4090 = vmatpush1.msra.mxu0 %v3974
    %4091 = vmatprep.subr.mxu0 %v3971
    %4092 = vmatpush1.msra.mxu0 %v3970
    %4093 = vmatprep.subr.mxu0 %v3967
    %4094 = vmatpush1.msra.mxu0 %v3966
    %4095 = vmatprep.subr.mxu0 %v3963
    %4096 = vmatpush1.msra.mxu0 %v3962
    %4097 = vmatprep.subr.mxu0 %v3959
    %4098 = vmatpush1.msra.mxu0 %v3958
    %4099 = vmatprep.subr.mxu0 %v3955
    %4100 = vmatpush1.msra.mxu0 %v3954
    %4101 = vmatprep.subr.mxu0 %v3951
    %4102 = vmatpush1.msra.mxu0 %v3950
    %4103 = vmatprep.subr.mxu0 %v3947
    %4104 = vmatpush1.msra.mxu0 %v3946
    %4105 = vmatprep.subr.mxu0 %v3943
    %4106 = vmatpush1.msra.mxu0 %v3942
    %4107 = vmatprep.subr.mxu0 0.0
    %4108 = vmatpush2.msra.mxu0 0.0
    %4109 = vmatprep.subr.mxu0 0.0
    %4110 = vmatpush2.msra.mxu0 0.0
    %4111 = vmatprep.subr.mxu0 0.0
    %4112 = vmatpush2.msra.mxu0 0.0
    %4113 = vmatprep.subr.mxu0 0.0
    %4114 = vmatpush2.msra.mxu0 0.0
    %4115 = vmatprep.subr.mxu0 0.0
    %4116 = vmatpush2.msra.mxu0 0.0
    %4117 = vmatprep.subr.mxu0 0.0
    %4118 = vmatpush2.msra.mxu0 0.0
    %4119 = vmatprep.subr.mxu0 0.0
    %4120 = vmatpush2.msra.mxu0 0.0
    %4121 = vmatprep.subr.mxu0 0.0
    %4122 = vmatpush2.msra.mxu0 0.0
    %4123 = vmatprep.subr.mxu0 0.0
    %4124 = vmatpush2.msra.mxu0 0.0
    %4125 = vmatprep.subr.mxu0 0.0
    %4126 = vmatpush2.msra.mxu0 0.0
    %4127 = vmatprep.subr.mxu0 0.0
    %4128 = vmatpush2.msra.mxu0 0.0
    %4129 = vmatprep.subr.mxu0 0.0
    %4130 = vmatpush2.msra.mxu0 0.0
    %4131 = vmatprep.subr.mxu0 0.0
    %4132 = vmatpush2.msra.mxu0 0.0
    %4133 = vmatprep.subr.mxu0 0.0
    %4134 = vmatpush2.msra.mxu0 0.0
    %4135 = vmatprep.subr.mxu0 0.0
    %4136 = vmatpush2.msra.mxu0 0.0
    %4137 = vmatprep.subr.mxu0 0.0
    %4138 = vmatpush2.msra.mxu0 0.0
    %4139 = vmatprep.mubr.f32.mxu0 0.0
    %4140 = vmatmul.mubr.f32.gmra.mxu0 %v3934
    %v4141 = vpop.f32.mrf.mxu0
    %v4142 = vadd.f32 0.0, %v4141
    %v4143 = vpop.f32.mrf.mxu0
    %v4144 = vadd.f32 0.0, %v4143
    %4145 = vdwg.mxu0
    %v4146 = vadd.f32 %v3936, %v4071
    %v4147 = vadd.f32 %v3937, %v4073
    %v4148 = vadd.f32 %v3938, %v4142
    %v4149 = vadd.f32 %v3939, %v4144
    %v4150 = vxor.u32 %v4146, 2147483648
    %v4151 = vmul.f32 %v4150, 1.442695
    %v4152 = vpow.pop %v4151
    %v4153 = vadd.f32 %v4152, 1.0
    %v4154 = vrcp.pop %v4153
    %v4155 = vmul.f32 1.0, %v4154
    %v4156 = vxor.u32 %v4147, 2147483648
    %v4157 = vmul.f32 %v4156, 1.442695
    %v4158 = vpow.pop %v4157
    %v4159 = vadd.f32 %v4158, 1.0
    %v4160 = vrcp.pop %v4159
    %v4161 = vmul.f32 1.0, %v4160
    %v4162 = vtanh.pop %v4148
    %v4163 = vxor.u32 %v4149, 2147483648
    %v4164 = vmul.f32 %v4163, 1.442695
    %v4165 = vpow.pop %v4164
    %v4166 = vadd.f32 %v4165, 1.0
    %v4167 = vrcp.pop %v4166
    %v4168 = vmul.f32 1.0, %v4167
    %v4169 = vmul.f32 %v4161, %v3932
    %v4170 = vmul.f32 %v4155, %v4162
    %v4171 = vadd.f32 %v4169, %v4170
    %v4172 = vtanh.pop %v4171
    %v4173 = vmul.f32 %v4168, %v4172
    %4174 = vst [vmem:[%s1904] sm:$0xff] %v4173
    %v4175 = vld [vmem:[%s1906] sm:$0xff]
    %v4176 = vld [vmem:[%s1906 + $0x8] sm:$0xff]
    %v4177 = vld [vmem:[%s1906 + $0x10] sm:$0xff]
    %v4178 = vld [vmem:[%s1906 + $0x18] sm:$0xff]
    %v4179 = vld [vmem:[%s2744] sm:$0xff]
    %v4180 = vld [vmem:[%s2744 + $0x8] sm:$0xff]
    %v4181 = vld [vmem:[%s2744 + $0x10] sm:$0xff]
    %v4182 = vld [vmem:[%s2744 + $0x18] sm:$0xff]
    %v4183 = vld [vmem:[%s2744 + $0x20] sm:$0xff]
    %v4184 = vld [vmem:[%s2744 + $0x28] sm:$0xff]
    %v4185 = vld [vmem:[%s2744 + $0x30] sm:$0xff]
    %v4186 = vld [vmem:[%s2744 + $0x38] sm:$0xff]
    %v4187 = vld [vmem:[%s2744 + $0x40] sm:$0xff]
    %v4188 = vld [vmem:[%s2744 + $0x48] sm:$0xff]
    %v4189 = vld [vmem:[%s2744 + $0x50] sm:$0xff]
    %v4190 = vld [vmem:[%s2744 + $0x58] sm:$0xff]
    %v4191 = vld [vmem:[%s2744 + $0x60] sm:$0xff]
    %v4192 = vld [vmem:[%s2744 + $0x68] sm:$0xff]
    %v4193 = vld [vmem:[%s2744 + $0x70] sm:$0xff]
    %v4194 = vld [vmem:[%s2744 + $0x78] sm:$0xff]
    %v4195 = vld [vmem:[%s2744 + $0x80] sm:$0xff]
    %v4196 = vld [vmem:[%s2744 + $0x88] sm:$0xff]
    %v4197 = vld [vmem:[%s2744 + $0x90] sm:$0xff]
    %v4198 = vld [vmem:[%s2744 + $0x98] sm:$0xff]
    %v4199 = vld [vmem:[%s2744 + $0xa0] sm:$0xff]
    %v4200 = vld [vmem:[%s2744 + $0xa8] sm:$0xff]
    %v4201 = vld [vmem:[%s2744 + $0xb0] sm:$0xff]
    %v4202 = vld [vmem:[%s2744 + $0xb8] sm:$0xff]
    %v4203 = vld [vmem:[%s2744 + $0xc0] sm:$0xff]
    %v4204 = vld [vmem:[%s2744 + $0xc8] sm:$0xff]
    %v4205 = vld [vmem:[%s2744 + $0xd0] sm:$0xff]
    %v4206 = vld [vmem:[%s2744 + $0xd8] sm:$0xff]
    %v4207 = vld [vmem:[%s2744 + $0xe0] sm:$0xff]
    %v4208 = vld [vmem:[%s2744 + $0xe8] sm:$0xff]
    %v4209 = vld [vmem:[%s2744 + $0xf0] sm:$0xff]
    %v4210 = vld [vmem:[%s2744 + $0xf8] sm:$0xff]
    %v4211 = vld [vmem:[%s2744 + $0x100] sm:$0xff]
    %v4212 = vld [vmem:[%s2744 + $0x108] sm:$0xff]
    %v4213 = vld [vmem:[%s2744 + $0x110] sm:$0xff]
    %v4214 = vld [vmem:[%s2744 + $0x118] sm:$0xff]
    %v4215 = vld [vmem:[%s2744 + $0x120] sm:$0xff]
    %v4216 = vld [vmem:[%s2744 + $0x128] sm:$0xff]
    %v4217 = vld [vmem:[%s2744 + $0x130] sm:$0xff]
    %v4218 = vld [vmem:[%s2744 + $0x138] sm:$0xff]
    %v4219 = vld [vmem:[%s2744 + $0x140] sm:$0xff]
    %v4220 = vld [vmem:[%s2744 + $0x148] sm:$0xff]
    %v4221 = vld [vmem:[%s2744 + $0x150] sm:$0xff]
    %v4222 = vld [vmem:[%s2744 + $0x158] sm:$0xff]
    %v4223 = vld [vmem:[%s2744 + $0x160] sm:$0xff]
    %v4224 = vld [vmem:[%s2744 + $0x168] sm:$0xff]
    %v4225 = vld [vmem:[%s2744 + $0x170] sm:$0xff]
    %v4226 = vld [vmem:[%s2744 + $0x178] sm:$0xff]
    %v4227 = vld [vmem:[%s2744 + $0x180] sm:$0xff]
    %v4228 = vld [vmem:[%s2744 + $0x188] sm:$0xff]
    %v4229 = vld [vmem:[%s2744 + $0x190] sm:$0xff]
    %v4230 = vld [vmem:[%s2744 + $0x198] sm:$0xff]
    %v4231 = vld [vmem:[%s2744 + $0x1a0] sm:$0xff]
    %v4232 = vld [vmem:[%s2744 + $0x1a8] sm:$0xff]
    %v4233 = vld [vmem:[%s2744 + $0x1b0] sm:$0xff]
    %v4234 = vld [vmem:[%s2744 + $0x1b8] sm:$0xff]
    %v4235 = vld [vmem:[%s2744 + $0x1c0] sm:$0xff]
    %v4236 = vld [vmem:[%s2744 + $0x1c8] sm:$0xff]
    %v4237 = vld [vmem:[%s2744 + $0x1d0] sm:$0xff]
    %v4238 = vld [vmem:[%s2744 + $0x1d8] sm:$0xff]
    %v4239 = vld [vmem:[%s2744 + $0x1e0] sm:$0xff]
    %v4240 = vld [vmem:[%s2744 + $0x1e8] sm:$0xff]
    %v4241 = vld [vmem:[%s2744 + $0x1f0] sm:$0xff]
    %v4242 = vld [vmem:[%s2744 + $0x1f8] sm:$0xff]
    %4243 = vmatprep.subr.mxu0 %v4240
    %4244 = vmatpush1.msra.mxu0 %v4239
    %4245 = vmatprep.subr.mxu0 %v4236
    %4246 = vmatpush1.msra.mxu0 %v4235
    %4247 = vmatprep.subr.mxu0 %v4232
    %4248 = vmatpush1.msra.mxu0 %v4231
    %4249 = vmatprep.subr.mxu0 %v4228
    %4250 = vmatpush1.msra.mxu0 %v4227
    %4251 = vmatprep.subr.mxu0 %v4224
    %4252 = vmatpush1.msra.mxu0 %v4223
    %4253 = vmatprep.subr.mxu0 %v4220
    %4254 = vmatpush1.msra.mxu0 %v4219
    %4255 = vmatprep.subr.mxu0 %v4216
    %4256 = vmatpush1.msra.mxu0 %v4215
    %4257 = vmatprep.subr.mxu0 %v4212
    %4258 = vmatpush1.msra.mxu0 %v4211
    %4259 = vmatprep.subr.mxu0 %v4208
    %4260 = vmatpush1.msra.mxu0 %v4207
    %4261 = vmatprep.subr.mxu0 %v4204
    %4262 = vmatpush1.msra.mxu0 %v4203
    %4263 = vmatprep.subr.mxu0 %v4200
    %4264 = vmatpush1.msra.mxu0 %v4199
    %4265 = vmatprep.subr.mxu0 %v4196
    %4266 = vmatpush1.msra.mxu0 %v4195
    %4267 = vmatprep.subr.mxu0 %v4192
    %4268 = vmatpush1.msra.mxu0 %v4191
    %4269 = vmatprep.subr.mxu0 %v4188
    %4270 = vmatpush1.msra.mxu0 %v4187
    %4271 = vmatprep.subr.mxu0 %v4184
    %4272 = vmatpush1.msra.mxu0 %v4183
    %4273 = vmatprep.subr.mxu0 %v4180
    %4274 = vmatpush1.msra.mxu0 %v4179
    %4275 = vmatprep.subr.mxu0 0.0
    %4276 = vmatpush2.msra.mxu0 0.0
    %4277 = vmatprep.subr.mxu0 0.0
    %4278 = vmatpush2.msra.mxu0 0.0
    %4279 = vmatprep.subr.mxu0 0.0
    %4280 = vmatpush2.msra.mxu0 0.0
    %4281 = vmatprep.subr.mxu0 0.0
    %4282 = vmatpush2.msra.mxu0 0.0
    %4283 = vmatprep.subr.mxu0 0.0
    %4284 = vmatpush2.msra.mxu0 0.0
    %4285 = vmatprep.subr.mxu0 0.0
    %4286 = vmatpush2.msra.mxu0 0.0
    %4287 = vmatprep.subr.mxu0 0.0
    %4288 = vmatpush2.msra.mxu0 0.0
    %4289 = vmatprep.subr.mxu0 0.0
    %4290 = vmatpush2.msra.mxu0 0.0
    %4291 = vmatprep.subr.mxu0 0.0
    %4292 = vmatpush2.msra.mxu0 0.0
    %4293 = vmatprep.subr.mxu0 0.0
    %4294 = vmatpush2.msra.mxu0 0.0
    %4295 = vmatprep.subr.mxu0 0.0
    %4296 = vmatpush2.msra.mxu0 0.0
    %4297 = vmatprep.subr.mxu0 0.0
    %4298 = vmatpush2.msra.mxu0 0.0
    %4299 = vmatprep.subr.mxu0 0.0
    %4300 = vmatpush2.msra.mxu0 0.0
    %4301 = vmatprep.subr.mxu0 0.0
    %4302 = vmatpush2.msra.mxu0 0.0
    %4303 = vmatprep.subr.mxu0 0.0
    %4304 = vmatpush2.msra.mxu0 0.0
    %4305 = vmatprep.subr.mxu0 0.0
    %4306 = vmatpush2.msra.mxu0 0.0
    %4307 = vmatprep.mubr.f32.mxu0 0.0
    %4308 = vmatmul.mubr.f32.gmra.mxu0 %v4173
    %v4309 = vpop.f32.mrf.mxu0
    %v4310 = vadd.f32 0.0, %v4309
    %v4311 = vpop.f32.mrf.mxu0
    %v4312 = vadd.f32 0.0, %v4311
    %4313 = vdwg.mxu0
    %4314 = vmatprep.subr.mxu0 %v4242
    %4315 = vmatpush1.msra.mxu0 %v4241
    %4316 = vmatprep.subr.mxu0 %v4238
    %4317 = vmatpush1.msra.mxu0 %v4237
    %4318 = vmatprep.subr.mxu0 %v4234
    %4319 = vmatpush1.msra.mxu0 %v4233
    %4320 = vmatprep.subr.mxu0 %v4230
    %4321 = vmatpush1.msra.mxu0 %v4229
    %4322 = vmatprep.subr.mxu0 %v4226
    %4323 = vmatpush1.msra.mxu0 %v4225
    %4324 = vmatprep.subr.mxu0 %v4222
    %4325 = vmatpush1.msra.mxu0 %v4221
    %4326 = vmatprep.subr.mxu0 %v4218
    %4327 = vmatpush1.msra.mxu0 %v4217
    %4328 = vmatprep.subr.mxu0 %v4214
    %4329 = vmatpush1.msra.mxu0 %v4213
    %4330 = vmatprep.subr.mxu0 %v4210
    %4331 = vmatpush1.msra.mxu0 %v4209
    %4332 = vmatprep.subr.mxu0 %v4206
    %4333 = vmatpush1.msra.mxu0 %v4205
    %4334 = vmatprep.subr.mxu0 %v4202
    %4335 = vmatpush1.msra.mxu0 %v4201
    %4336 = vmatprep.subr.mxu0 %v4198
    %4337 = vmatpush1.msra.mxu0 %v4197
    %4338 = vmatprep.subr.mxu0 %v4194
    %4339 = vmatpush1.msra.mxu0 %v4193
    %4340 = vmatprep.subr.mxu0 %v4190
    %4341 = vmatpush1.msra.mxu0 %v4189
    %4342 = vmatprep.subr.mxu0 %v4186
    %4343 = vmatpush1.msra.mxu0 %v4185
    %4344 = vmatprep.subr.mxu0 %v4182
    %4345 = vmatpush1.msra.mxu0 %v4181
    %4346 = vmatprep.subr.mxu0 0.0
    %4347 = vmatpush2.msra.mxu0 0.0
    %4348 = vmatprep.subr.mxu0 0.0
    %4349 = vmatpush2.msra.mxu0 0.0
    %4350 = vmatprep.subr.mxu0 0.0
    %4351 = vmatpush2.msra.mxu0 0.0
    %4352 = vmatprep.subr.mxu0 0.0
    %4353 = vmatpush2.msra.mxu0 0.0
    %4354 = vmatprep.subr.mxu0 0.0
    %4355 = vmatpush2.msra.mxu0 0.0
    %4356 = vmatprep.subr.mxu0 0.0
    %4357 = vmatpush2.msra.mxu0 0.0
    %4358 = vmatprep.subr.mxu0 0.0
    %4359 = vmatpush2.msra.mxu0 0.0
    %4360 = vmatprep.subr.mxu0 0.0
    %4361 = vmatpush2.msra.mxu0 0.0
    %4362 = vmatprep.subr.mxu0 0.0
    %4363 = vmatpush2.msra.mxu0 0.0
    %4364 = vmatprep.subr.mxu0 0.0
    %4365 = vmatpush2.msra.mxu0 0.0
    %4366 = vmatprep.subr.mxu0 0.0
    %4367 = vmatpush2.msra.mxu0 0.0
    %4368 = vmatprep.subr.mxu0 0.0
    %4369 = vmatpush2.msra.mxu0 0.0
    %4370 = vmatprep.subr.mxu0 0.0
    %4371 = vmatpush2.msra.mxu0 0.0
    %4372 = vmatprep.subr.mxu0 0.0
    %4373 = vmatpush2.msra.mxu0 0.0
    %4374 = vmatprep.subr.mxu0 0.0
    %4375 = vmatpush2.msra.mxu0 0.0
    %4376 = vmatprep.subr.mxu0 0.0
    %4377 = vmatpush2.msra.mxu0 0.0
    %4378 = vmatprep.mubr.f32.mxu0 0.0
    %4379 = vmatmul.mubr.f32.gmra.mxu0 %v4173
    %v4380 = vpop.f32.mrf.mxu0
    %v4381 = vadd.f32 0.0, %v4380
    %v4382 = vpop.f32.mrf.mxu0
    %v4383 = vadd.f32 0.0, %v4382
    %4384 = vdwg.mxu0
    %v4385 = vadd.f32 %v4175, %v4310
    %v4386 = vadd.f32 %v4176, %v4312
    %v4387 = vadd.f32 %v4177, %v4381
    %v4388 = vadd.f32 %v4178, %v4383
    %v4389 = vxor.u32 %v4385, 2147483648
    %v4390 = vmul.f32 %v4389, 1.442695
    %v4391 = vpow.pop %v4390
    %v4392 = vadd.f32 %v4391, 1.0
    %v4393 = vrcp.pop %v4392
    %v4394 = vmul.f32 1.0, %v4393
    %v4395 = vxor.u32 %v4386, 2147483648
    %v4396 = vmul.f32 %v4395, 1.442695
    %v4397 = vpow.pop %v4396
    %v4398 = vadd.f32 %v4397, 1.0
    %v4399 = vrcp.pop %v4398
    %v4400 = vmul.f32 1.0, %v4399
    %v4401 = vtanh.pop %v4387
    %v4402 = vxor.u32 %v4388, 2147483648
    %v4403 = vmul.f32 %v4402, 1.442695
    %v4404 = vpow.pop %v4403
    %v4405 = vadd.f32 %v4404, 1.0
    %v4406 = vrcp.pop %v4405
    %v4407 = vmul.f32 1.0, %v4406
    %v4408 = vmul.f32 %v4400, %v4171
    %v4409 = vmul.f32 %v4394, %v4401
    %v4410 = vadd.f32 %v4408, %v4409
    %v4411 = vtanh.pop %v4410
    %v4412 = vmul.f32 %v4407, %v4411
    %4413 = vst [vmem:[%s2145] sm:$0xff] %v4412
    %v4414 = vld [vmem:[%s2147] sm:$0xff]
    %v4415 = vld [vmem:[%s2147 + $0x8] sm:$0xff]
    %v4416 = vld [vmem:[%s2147 + $0x10] sm:$0xff]
    %v4417 = vld [vmem:[%s2147 + $0x18] sm:$0xff]
    %v4418 = vld [vmem:[%s2744] sm:$0xff]
    %v4419 = vld [vmem:[%s2744 + $0x8] sm:$0xff]
    %v4420 = vld [vmem:[%s2744 + $0x10] sm:$0xff]
    %v4421 = vld [vmem:[%s2744 + $0x18] sm:$0xff]
    %v4422 = vld [vmem:[%s2744 + $0x20] sm:$0xff]
    %v4423 = vld [vmem:[%s2744 + $0x28] sm:$0xff]
    %v4424 = vld [vmem:[%s2744 + $0x30] sm:$0xff]
    %v4425 = vld [vmem:[%s2744 + $0x38] sm:$0xff]
    %v4426 = vld [vmem:[%s2744 + $0x40] sm:$0xff]
    %v4427 = vld [vmem:[%s2744 + $0x48] sm:$0xff]
    %v4428 = vld [vmem:[%s2744 + $0x50] sm:$0xff]
    %v4429 = vld [vmem:[%s2744 + $0x58] sm:$0xff]
    %v4430 = vld [vmem:[%s2744 + $0x60] sm:$0xff]
    %v4431 = vld [vmem:[%s2744 + $0x68] sm:$0xff]
    %v4432 = vld [vmem:[%s2744 + $0x70] sm:$0xff]
    %v4433 = vld [vmem:[%s2744 + $0x78] sm:$0xff]
    %v4434 = vld [vmem:[%s2744 + $0x80] sm:$0xff]
    %v4435 = vld [vmem:[%s2744 + $0x88] sm:$0xff]
    %v4436 = vld [vmem:[%s2744 + $0x90] sm:$0xff]
    %v4437 = vld [vmem:[%s2744 + $0x98] sm:$0xff]
    %v4438 = vld [vmem:[%s2744 + $0xa0] sm:$0xff]
    %v4439 = vld [vmem:[%s2744 + $0xa8] sm:$0xff]
    %v4440 = vld [vmem:[%s2744 + $0xb0] sm:$0xff]
    %v4441 = vld [vmem:[%s2744 + $0xb8] sm:$0xff]
    %v4442 = vld [vmem:[%s2744 + $0xc0] sm:$0xff]
    %v4443 = vld [vmem:[%s2744 + $0xc8] sm:$0xff]
    %v4444 = vld [vmem:[%s2744 + $0xd0] sm:$0xff]
    %v4445 = vld [vmem:[%s2744 + $0xd8] sm:$0xff]
    %v4446 = vld [vmem:[%s2744 + $0xe0] sm:$0xff]
    %v4447 = vld [vmem:[%s2744 + $0xe8] sm:$0xff]
    %v4448 = vld [vmem:[%s2744 + $0xf0] sm:$0xff]
    %v4449 = vld [vmem:[%s2744 + $0xf8] sm:$0xff]
    %v4450 = vld [vmem:[%s2744 + $0x100] sm:$0xff]
    %v4451 = vld [vmem:[%s2744 + $0x108] sm:$0xff]
    %v4452 = vld [vmem:[%s2744 + $0x110] sm:$0xff]
    %v4453 = vld [vmem:[%s2744 + $0x118] sm:$0xff]
    %v4454 = vld [vmem:[%s2744 + $0x120] sm:$0xff]
    %v4455 = vld [vmem:[%s2744 + $0x128] sm:$0xff]
    %v4456 = vld [vmem:[%s2744 + $0x130] sm:$0xff]
    %v4457 = vld [vmem:[%s2744 + $0x138] sm:$0xff]
    %v4458 = vld [vmem:[%s2744 + $0x140] sm:$0xff]
    %v4459 = vld [vmem:[%s2744 + $0x148] sm:$0xff]
    %v4460 = vld [vmem:[%s2744 + $0x150] sm:$0xff]
    %v4461 = vld [vmem:[%s2744 + $0x158] sm:$0xff]
    %v4462 = vld [vmem:[%s2744 + $0x160] sm:$0xff]
    %v4463 = vld [vmem:[%s2744 + $0x168] sm:$0xff]
    %v4464 = vld [vmem:[%s2744 + $0x170] sm:$0xff]
    %v4465 = vld [vmem:[%s2744 + $0x178] sm:$0xff]
    %v4466 = vld [vmem:[%s2744 + $0x180] sm:$0xff]
    %v4467 = vld [vmem:[%s2744 + $0x188] sm:$0xff]
    %v4468 = vld [vmem:[%s2744 + $0x190] sm:$0xff]
    %v4469 = vld [vmem:[%s2744 + $0x198] sm:$0xff]
    %v4470 = vld [vmem:[%s2744 + $0x1a0] sm:$0xff]
    %v4471 = vld [vmem:[%s2744 + $0x1a8] sm:$0xff]
    %v4472 = vld [vmem:[%s2744 + $0x1b0] sm:$0xff]
    %v4473 = vld [vmem:[%s2744 + $0x1b8] sm:$0xff]
    %v4474 = vld [vmem:[%s2744 + $0x1c0] sm:$0xff]
    %v4475 = vld [vmem:[%s2744 + $0x1c8] sm:$0xff]
    %v4476 = vld [vmem:[%s2744 + $0x1d0] sm:$0xff]
    %v4477 = vld [vmem:[%s2744 + $0x1d8] sm:$0xff]
    %v4478 = vld [vmem:[%s2744 + $0x1e0] sm:$0xff]
    %v4479 = vld [vmem:[%s2744 + $0x1e8] sm:$0xff]
    %v4480 = vld [vmem:[%s2744 + $0x1f0] sm:$0xff]
    %v4481 = vld [vmem:[%s2744 + $0x1f8] sm:$0xff]
    %4482 = vmatprep.subr.mxu0 %v4479
    %4483 = vmatpush1.msra.mxu0 %v4478
    %4484 = vmatprep.subr.mxu0 %v4475
    %4485 = vmatpush1.msra.mxu0 %v4474
    %4486 = vmatprep.subr.mxu0 %v4471
    %4487 = vmatpush1.msra.mxu0 %v4470
    %4488 = vmatprep.subr.mxu0 %v4467
    %4489 = vmatpush1.msra.mxu0 %v4466
    %4490 = vmatprep.subr.mxu0 %v4463
    %4491 = vmatpush1.msra.mxu0 %v4462
    %4492 = vmatprep.subr.mxu0 %v4459
    %4493 = vmatpush1.msra.mxu0 %v4458
    %4494 = vmatprep.subr.mxu0 %v4455
    %4495 = vmatpush1.msra.mxu0 %v4454
    %4496 = vmatprep.subr.mxu0 %v4451
    %4497 = vmatpush1.msra.mxu0 %v4450
    %4498 = vmatprep.subr.mxu0 %v4447
    %4499 = vmatpush1.msra.mxu0 %v4446
    %4500 = vmatprep.subr.mxu0 %v4443
    %4501 = vmatpush1.msra.mxu0 %v4442
    %4502 = vmatprep.subr.mxu0 %v4439
    %4503 = vmatpush1.msra.mxu0 %v4438
    %4504 = vmatprep.subr.mxu0 %v4435
    %4505 = vmatpush1.msra.mxu0 %v4434
    %4506 = vmatprep.subr.mxu0 %v4431
    %4507 = vmatpush1.msra.mxu0 %v4430
    %4508 = vmatprep.subr.mxu0 %v4427
    %4509 = vmatpush1.msra.mxu0 %v4426
    %4510 = vmatprep.subr.mxu0 %v4423
    %4511 = vmatpush1.msra.mxu0 %v4422
    %4512 = vmatprep.subr.mxu0 %v4419
    %4513 = vmatpush1.msra.mxu0 %v4418
    %4514 = vmatprep.subr.mxu0 0.0
    %4515 = vmatpush2.msra.mxu0 0.0
    %4516 = vmatprep.subr.mxu0 0.0
    %4517 = vmatpush2.msra.mxu0 0.0
    %4518 = vmatprep.subr.mxu0 0.0
    %4519 = vmatpush2.msra.mxu0 0.0
    %4520 = vmatprep.subr.mxu0 0.0
    %4521 = vmatpush2.msra.mxu0 0.0
    %4522 = vmatprep.subr.mxu0 0.0
    %4523 = vmatpush2.msra.mxu0 0.0
    %4524 = vmatprep.subr.mxu0 0.0
    %4525 = vmatpush2.msra.mxu0 0.0
    %4526 = vmatprep.subr.mxu0 0.0
    %4527 = vmatpush2.msra.mxu0 0.0
    %4528 = vmatprep.subr.mxu0 0.0
    %4529 = vmatpush2.msra.mxu0 0.0
    %4530 = vmatprep.subr.mxu0 0.0
    %4531 = vmatpush2.msra.mxu0 0.0
    %4532 = vmatprep.subr.mxu0 0.0
    %4533 = vmatpush2.msra.mxu0 0.0
    %4534 = vmatprep.subr.mxu0 0.0
    %4535 = vmatpush2.msra.mxu0 0.0
    %4536 = vmatprep.subr.mxu0 0.0
    %4537 = vmatpush2.msra.mxu0 0.0
    %4538 = vmatprep.subr.mxu0 0.0
    %4539 = vmatpush2.msra.mxu0 0.0
    %4540 = vmatprep.subr.mxu0 0.0
    %4541 = vmatpush2.msra.mxu0 0.0
    %4542 = vmatprep.subr.mxu0 0.0
    %4543 = vmatpush2.msra.mxu0 0.0
    %4544 = vmatprep.subr.mxu0 0.0
    %4545 = vmatpush2.msra.mxu0 0.0
    %4546 = vmatprep.mubr.f32.mxu0 0.0
    %4547 = vmatmul.mubr.f32.gmra.mxu0 %v4412
    %v4548 = vpop.f32.mrf.mxu0
    %v4549 = vadd.f32 0.0, %v4548
    %v4550 = vpop.f32.mrf.mxu0
    %v4551 = vadd.f32 0.0, %v4550
    %4552 = vdwg.mxu0
    %4553 = vmatprep.subr.mxu0 %v4481
    %4554 = vmatpush1.msra.mxu0 %v4480
    %4555 = vmatprep.subr.mxu0 %v4477
    %4556 = vmatpush1.msra.mxu0 %v4476
    %4557 = vmatprep.subr.mxu0 %v4473
    %4558 = vmatpush1.msra.mxu0 %v4472
    %4559 = vmatprep.subr.mxu0 %v4469
    %4560 = vmatpush1.msra.mxu0 %v4468
    %4561 = vmatprep.subr.mxu0 %v4465
    %4562 = vmatpush1.msra.mxu0 %v4464
    %4563 = vmatprep.subr.mxu0 %v4461
    %4564 = vmatpush1.msra.mxu0 %v4460
    %4565 = vmatprep.subr.mxu0 %v4457
    %4566 = vmatpush1.msra.mxu0 %v4456
    %4567 = vmatprep.subr.mxu0 %v4453
    %4568 = vmatpush1.msra.mxu0 %v4452
    %4569 = vmatprep.subr.mxu0 %v4449
    %4570 = vmatpush1.msra.mxu0 %v4448
    %4571 = vmatprep.subr.mxu0 %v4445
    %4572 = vmatpush1.msra.mxu0 %v4444
    %4573 = vmatprep.subr.mxu0 %v4441
    %4574 = vmatpush1.msra.mxu0 %v4440
    %4575 = vmatprep.subr.mxu0 %v4437
    %4576 = vmatpush1.msra.mxu0 %v4436
    %4577 = vmatprep.subr.mxu0 %v4433
    %4578 = vmatpush1.msra.mxu0 %v4432
    %4579 = vmatprep.subr.mxu0 %v4429
    %4580 = vmatpush1.msra.mxu0 %v4428
    %4581 = vmatprep.subr.mxu0 %v4425
    %4582 = vmatpush1.msra.mxu0 %v4424
    %4583 = vmatprep.subr.mxu0 %v4421
    %4584 = vmatpush1.msra.mxu0 %v4420
    %4585 = vmatprep.subr.mxu0 0.0
    %4586 = vmatpush2.msra.mxu0 0.0
    %4587 = vmatprep.subr.mxu0 0.0
    %4588 = vmatpush2.msra.mxu0 0.0
    %4589 = vmatprep.subr.mxu0 0.0
    %4590 = vmatpush2.msra.mxu0 0.0
    %4591 = vmatprep.subr.mxu0 0.0
    %4592 = vmatpush2.msra.mxu0 0.0
    %4593 = vmatprep.subr.mxu0 0.0
    %4594 = vmatpush2.msra.mxu0 0.0
    %4595 = vmatprep.subr.mxu0 0.0
    %4596 = vmatpush2.msra.mxu0 0.0
    %4597 = vmatprep.subr.mxu0 0.0
    %4598 = vmatpush2.msra.mxu0 0.0
    %4599 = vmatprep.subr.mxu0 0.0
    %4600 = vmatpush2.msra.mxu0 0.0
    %4601 = vmatprep.subr.mxu0 0.0
    %4602 = vmatpush2.msra.mxu0 0.0
    %4603 = vmatprep.subr.mxu0 0.0
    %4604 = vmatpush2.msra.mxu0 0.0
    %4605 = vmatprep.subr.mxu0 0.0
    %4606 = vmatpush2.msra.mxu0 0.0
    %4607 = vmatprep.subr.mxu0 0.0
    %4608 = vmatpush2.msra.mxu0 0.0
    %4609 = vmatprep.subr.mxu0 0.0
    %4610 = vmatpush2.msra.mxu0 0.0
    %4611 = vmatprep.subr.mxu0 0.0
    %4612 = vmatpush2.msra.mxu0 0.0
    %4613 = vmatprep.subr.mxu0 0.0
    %4614 = vmatpush2.msra.mxu0 0.0
    %4615 = vmatprep.subr.mxu0 0.0
    %4616 = vmatpush2.msra.mxu0 0.0
    %4617 = vmatprep.mubr.f32.mxu0 0.0
    %4618 = vmatmul.mubr.f32.gmra.mxu0 %v4412
    %v4619 = vpop.f32.mrf.mxu0
    %v4620 = vadd.f32 0.0, %v4619
    %v4621 = vpop.f32.mrf.mxu0
    %v4622 = vadd.f32 0.0, %v4621
    %4623 = vdwg.mxu0
    %v4624 = vadd.f32 %v4414, %v4549
    %v4625 = vadd.f32 %v4415, %v4551
    %v4626 = vadd.f32 %v4416, %v4620
    %v4627 = vadd.f32 %v4417, %v4622
    %v4628 = vxor.u32 %v4624, 2147483648
    %v4629 = vmul.f32 %v4628, 1.442695
    %v4630 = vpow.pop %v4629
    %v4631 = vadd.f32 %v4630, 1.0
    %v4632 = vrcp.pop %v4631
    %v4633 = vmul.f32 1.0, %v4632
    %v4634 = vxor.u32 %v4625, 2147483648
    %v4635 = vmul.f32 %v4634, 1.442695
    %v4636 = vpow.pop %v4635
    %v4637 = vadd.f32 %v4636, 1.0
    %v4638 = vrcp.pop %v4637
    %v4639 = vmul.f32 1.0, %v4638
    %v4640 = vtanh.pop %v4626
    %v4641 = vxor.u32 %v4627, 2147483648
    %v4642 = vmul.f32 %v4641, 1.442695
    %v4643 = vpow.pop %v4642
    %v4644 = vadd.f32 %v4643, 1.0
    %v4645 = vrcp.pop %v4644
    %v4646 = vmul.f32 1.0, %v4645
    %v4647 = vmul.f32 %v4639, %v4410
    %v4648 = vmul.f32 %v4633, %v4640
    %v4649 = vadd.f32 %v4647, %v4648
    %v4650 = vtanh.pop %v4649
    %v4651 = vmul.f32 %v4646, %v4650
    %4652 = vst [vmem:[%s2386] sm:$0xff] %v4651
    %v4653 = vld [vmem:[#allocation13] sm:$0xff]
    %v4654 = vld [vmem:[#allocation13 + $0x8] sm:$0xff]
    %v4655 = vld [vmem:[#allocation13 + $0x10] sm:$0xff]
    %v4656 = vld [vmem:[#allocation13 + $0x18] sm:$0xff]
    %v4657 = vld [vmem:[#allocation13 + $0x20] sm:$0xff]
    %v4658 = vld [vmem:[#allocation13 + $0x28] sm:$0xff]
    %v4659 = vld [vmem:[#allocation13 + $0x30] sm:$0xff]
    %v4660 = vld [vmem:[#allocation13 + $0x38] sm:$0xff]
    %v4661 = vld [vmem:[#allocation13 + $0x40] sm:$0xff]
    %v4662 = vld [vmem:[#allocation13 + $0x48] sm:$0xff]
    %v4663 = vld [vmem:[#allocation13 + $0x50] sm:$0xff]
    %v4664 = vld [vmem:[#allocation13 + $0x58] sm:$0xff]
    %v4665 = vld [vmem:[#allocation13 + $0x60] sm:$0xff]
    %v4666 = vld [vmem:[#allocation13 + $0x68] sm:$0xff]
    %v4667 = vld [vmem:[#allocation13 + $0x70] sm:$0xff]
    %v4668 = vld [vmem:[#allocation13 + $0x78] sm:$0xff]
    %v4669 = vld [vmem:[%s7] sm:$0x1]
    %v4671 = vlaneseq
    %v4672 = vshrl.u32 %v4671, 7
    %v4673 = vsub.s32 0, %v4672
    %v4674 = vrot.slane %v4669, %v4673
    %4676 = vmatprep.subr.mxu0 0.0
    %4677 = vmatpush1.msra.mxu0 %v4668
    %4678 = vmatprep.subr.mxu0 0.0
    %4679 = vmatpush1.msra.mxu0 %v4667
    %4680 = vmatprep.subr.mxu0 0.0
    %4681 = vmatpush1.msra.mxu0 %v4666
    %4682 = vmatprep.subr.mxu0 0.0
    %4683 = vmatpush1.msra.mxu0 %v4665
    %4684 = vmatprep.subr.mxu0 0.0
    %4685 = vmatpush1.msra.mxu0 %v4664
    %4686 = vmatprep.subr.mxu0 0.0
    %4687 = vmatpush1.msra.mxu0 %v4663
    %4688 = vmatprep.subr.mxu0 0.0
    %4689 = vmatpush1.msra.mxu0 %v4662
    %4690 = vmatprep.subr.mxu0 0.0
    %4691 = vmatpush1.msra.mxu0 %v4661
    %4692 = vmatprep.subr.mxu0 0.0
    %4693 = vmatpush1.msra.mxu0 %v4660
    %4694 = vmatprep.subr.mxu0 0.0
    %4695 = vmatpush1.msra.mxu0 %v4659
    %4696 = vmatprep.subr.mxu0 0.0
    %4697 = vmatpush1.msra.mxu0 %v4658
    %4698 = vmatprep.subr.mxu0 0.0
    %4699 = vmatpush1.msra.mxu0 %v4657
    %4700 = vmatprep.subr.mxu0 0.0
    %4701 = vmatpush1.msra.mxu0 %v4656
    %4702 = vmatprep.subr.mxu0 0.0
    %4703 = vmatpush1.msra.mxu0 %v4655
    %4704 = vmatprep.subr.mxu0 0.0
    %4705 = vmatpush1.msra.mxu0 %v4654
    %4706 = vmatprep.subr.mxu0 0.0
    %4707 = vmatpush1.msra.mxu0 %v4653
    %4708 = vmatprep.subr.mxu0 0.0
    %4709 = vmatpush2.msra.mxu0 0.0
    %4710 = vmatprep.subr.mxu0 0.0
    %4711 = vmatpush2.msra.mxu0 0.0
    %4712 = vmatprep.subr.mxu0 0.0
    %4713 = vmatpush2.msra.mxu0 0.0
    %4714 = vmatprep.subr.mxu0 0.0
    %4715 = vmatpush2.msra.mxu0 0.0
    %4716 = vmatprep.subr.mxu0 0.0
    %4717 = vmatpush2.msra.mxu0 0.0
    %4718 = vmatprep.subr.mxu0 0.0
    %4719 = vmatpush2.msra.mxu0 0.0
    %4720 = vmatprep.subr.mxu0 0.0
    %4721 = vmatpush2.msra.mxu0 0.0
    %4722 = vmatprep.subr.mxu0 0.0
    %4723 = vmatpush2.msra.mxu0 0.0
    %4724 = vmatprep.subr.mxu0 0.0
    %4725 = vmatpush2.msra.mxu0 0.0
    %4726 = vmatprep.subr.mxu0 0.0
    %4727 = vmatpush2.msra.mxu0 0.0
    %4728 = vmatprep.subr.mxu0 0.0
    %4729 = vmatpush2.msra.mxu0 0.0
    %4730 = vmatprep.subr.mxu0 0.0
    %4731 = vmatpush2.msra.mxu0 0.0
    %4732 = vmatprep.subr.mxu0 0.0
    %4733 = vmatpush2.msra.mxu0 0.0
    %4734 = vmatprep.subr.mxu0 0.0
    %4735 = vmatpush2.msra.mxu0 0.0
    %4736 = vmatprep.subr.mxu0 0.0
    %4737 = vmatpush2.msra.mxu0 0.0
    %4738 = vmatprep.subr.mxu0 0.0
    %4739 = vmatpush2.msra.mxu0 0.0
    %4740 = vmatprep.mubr.f32.mxu0 0.0
    %4741 = vmatmul.mubr.f32.gmra.mxu0 %v4651
    %v4742 = vpop.f32.mrf.mxu0
    %v4743 = vadd.f32 %v4674, %v4742
    %v4744 = vpop.f32.mrf.mxu0
    %4745 = vdwg.mxu0
    %4746 = vst [vmem:[#allocation15] sm:$0xff] %v4743
    // Predicated region
    $region58: #{tpu_custom_call.1} parent=1 // pred_check
      _
    $region59: #{tpu_custom_call.1} parent=1 // pred_check_branch
      %4748 = sbr.rel (0) target = $region61
    $region60: #{tpu_custom_call.1} parent=1 // pred_region
      %s4750 = ssub.s32 128, 128
      %4751 = vsyncadd [#allocation6], %s4750
      %s4753 = sshll.u32 [#allocation15], 4
      %s4754 = int_to_ptr.vmem [resolvable:$true] %s4753
      %4756 = dma.vmem_to_hbm [thread:$0]  %s4754, 128, %s8, [#allocation6]
    $region61: #{tpu_custom_call.1} parent=1 // pred_fallthru
      _
    // Predicated region
    $region62: #{tpu_custom_call.1} parent=1 // pred_check
      _
    $region63: #{tpu_custom_call.1} parent=1 // pred_check_branch
      %4758 = sbr.rel (0) target = $region65
    $region64: #{tpu_custom_call.1} parent=1 // pred_region
      %4759 = dma.done [#allocation6], 128
    $region65: #{tpu_custom_call.1} parent=1 // pred_fallthru
      _
    %4760 = vsyncpa [#allocation5], 1
    %4761 = vsyncpa [#allocation8], 1
    %4762 = vsyncpa [#allocation11], 1
    %4763 = vsyncpa [#allocation14], 1
    %4764 = vsyncpa [#allocation6], 1

</llo_original>
